<compile_context>
chip_gen: v6e
topology: v6e:2x2x1
jax: 0.10.0
libtpu: 0.0.40
codegen_flags: <defaults>
</compile_context>

<pallas_src>
import math
import functools

import jax
import jax.numpy as jnp
from jax.experimental import pallas as pl
from jax.experimental.pallas import tpu as pltpu

NEG_INF = -1e30


# --------------------------- per-generation capabilities -----------------------

def _tpu_caps():
    kind = ""
    try:
        kind = jax.devices()[0].device_kind.lower()
    except Exception:
        pass
    vmem_cap = None
    try:
        vmem_cap = int(pltpu.get_tpu_info().vmem_capacity_bytes)
    except Exception:
        vmem_cap = None
    if not vmem_cap:
        vmem_cap = (64 if "v7" in kind else 128) * 1024 * 1024
    vmem_limit = max(int(vmem_cap * 3 // 4), 32 * 1024 * 1024)
    is_v6_plus = ("v6" in kind) or ("v7" in kind)
    return vmem_limit, is_v6_plus


def _probe_bf16_exp():
    """bf16 transcendentals are worth it only if Mosaic lowers them on this chip."""
    try:
        def k(x_ref, o_ref):
            o_ref[...] = jnp.exp(x_ref[...])
        y = pl.pallas_call(
            k, out_shape=jax.ShapeDtypeStruct((16, 128), jnp.bfloat16)
        )(jnp.zeros((16, 128), jnp.bfloat16))
        jax.block_until_ready(y)
        return True
    except Exception:
        return False


VMEM_LIMIT, _IS_V6_PLUS = _tpu_caps()
BF16_EXP = _IS_V6_PLUS and _probe_bf16_exp()      # f32 exp on v5e / unknown chips

if VMEM_LIMIT >= 80 * 1024 * 1024:                # v5e / v6e (128 MiB physical VMEM)
    _TM_CAP, _TN_CAP, _TK_CAP = 512, 512, 512
else:                                             # v7x (64 MiB physical VMEM)
    _TM_CAP, _TN_CAP, _TK_CAP = 256, 256, 512


def _round_up(v, m):
    return ((v + m - 1) // m) * m


def _tiles(dim, cap, align):
    """Return (padded_dim, tile).

    Full-dim single block if dim <= cap (no padding, Mosaic allows block == full dim);
    otherwise prefer an exact-divisor tile (no padding); pad only as a last resort.
    """
    if dim <= cap:
        return dim, dim
    t = (cap // align) * align
    while t >= align:
        if dim % t == 0:
            return dim, t
        t -= align
    t = (cap // align) * align
    return _round_up(dim, t), t


# ----------------------------- Pallas kernels -------------------------------

def _dense_kernel(*refs, activation, k_steps, has_ln, has_res, eps):
    it = iter(refs)
    x_ref = next(it)
    if has_ln:
        g_ref = next(it)
        bg_ref = next(it)
    w_ref = next(it)
    b_ref = next(it)
    r_ref = next(it) if has_res else None
    o_ref = next(it)
    acc_ref = next(it)

    k = pl.program_id(2)

    @pl.when(k == 0)
    def _init():
        acc_ref[...] = jnp.zeros_like(acc_ref)

    x = x_ref[...]
    if has_ln:
        # LayerNorm prologue (stats in f32); requires the full K row in one block.
        xf = x.astype(jnp.float32)
        mean = jnp.mean(xf, axis=-1, keepdims=True)
        var = jnp.mean(jnp.square(xf - mean), axis=-1, keepdims=True)
        xf = (xf - mean) * jax.lax.rsqrt(var + eps)
        x = (xf * g_ref[...] + bg_ref[...]).astype(w_ref.dtype)
    acc_ref[...] += jnp.dot(x, w_ref[...], preferred_element_type=jnp.float32)

    @pl.when(k == k_steps - 1)
    def _finalize():
        acc = acc_ref[...] + b_ref[...]
        if activation == "relu":
            acc = jnp.maximum(acc, 0.0)
        elif activation == "log_softmax":
            # full (unpadded) vocab row resides in this block -> no column masking needed
            acc = acc - jnp.max(acc, axis=-1, keepdims=True)
            acc = acc - jnp.log(jnp.sum(jnp.exp(acc), axis=-1, keepdims=True))
        if has_res:
            acc = acc + r_ref[...].astype(jnp.float32)
        o_ref[...] = acc.astype(o_ref.dtype)


def dense(x, w, b, *, activation=None, ln=None, residual=None,
          out_dtype=jnp.bfloat16, eps=1e-12,
          tm_cap=None, tn_cap=None, tk_cap=None):
    """y = act(LN?(x) @ w + b) (+ residual).  x:(M,K), w:(K,N) bf16, b:(N,) f32."""
    tm_cap = tm_cap or _TM_CAP
    tn_cap = tn_cap or _TN_CAP
    tk_cap = tk_cap or _TK_CAP

    M, K = x.shape
    N = w.shape[1]
    has_ln = ln is not None
    has_res = residual is not None

    x = x.astype(w.dtype)                       # bf16 operands on the MXU

    Mp, tm = _tiles(M, tm_cap, 16)              # bf16 packs (16,128) sublanes
    if has_ln:                                  # LN needs the full feature row
        Kp, tk = K, K
    else:
        Kp, tk = _tiles(K, tk_cap, 128)
    if activation == "log_softmax":             # softmax needs the full vocab row
        Np, tn = N, N
    else:
        Np, tn = _tiles(N, tn_cap, 128)

    # Pads below are no-ops for typical shapes (full-dim or divisor tiles above).
    xp = x if (Mp == M and Kp == K) else jnp.pad(x, ((0, Mp - M), (0, Kp - K)))
    wp = w if (Kp == K and Np == N) else jnp.pad(w, ((0, Kp - K), (0, Np - N)))
    bp = (b if Np == N else jnp.pad(b, (0, Np - N))).reshape(1, Np).astype(jnp.float32)

    grid = (Mp // tm, Np // tn, Kp // tk)
    k_steps = grid[2]

    in_specs = [pl.BlockSpec((tm, tk), lambda i, j, k: (i, k))]
    args = [xp]
    if has_ln:
        in_specs += [pl.BlockSpec((1, Kp), lambda i, j, k: (0, 0)),
                     pl.BlockSpec((1, Kp), lambda i, j, k: (0, 0))]
        args += [ln["g"].reshape(1, K).astype(jnp.float32),
                 ln["b"].reshape(1, K).astype(jnp.float32)]
    in_specs += [pl.BlockSpec((tk, tn), lambda i, j, k: (k, j)),
                 pl.BlockSpec((1, tn), lambda i, j, k: (0, j))]
    args += [wp, bp]
    if has_res:
        rp = residual if (Mp == M and Np == N) else jnp.pad(
            residual, ((0, Mp - M), (0, Np - N)))
        in_specs += [pl.BlockSpec((tm, tn), lambda i, j, k: (i, j))]
        args += [rp]

    out = pl.pallas_call(
        functools.partial(_dense_kernel, activation=activation,
                          k_steps=k_steps, has_ln=has_ln, has_res=has_res, eps=eps),
        out_shape=jax.ShapeDtypeStruct((Mp, Np), out_dtype),
        grid=grid,
        in_specs=in_specs,
        out_specs=pl.BlockSpec((tm, tn), lambda i, j, k: (i, j)),
        scratch_shapes=[pltpu.VMEM((tm, tn), jnp.float32)],
        compiler_params=pltpu.CompilerParams(
            dimension_semantics=("parallel", "parallel", "arbitrary"),
            vmem_limit_bytes=VMEM_LIMIT),
    )(*args)

    if Mp != M or Np != N:
        out = out[:M, :N]
    return out


def _layernorm_kernel(x_ref, g_ref, b_ref, o_ref, *, eps):
    x = x_ref[...].astype(jnp.float32)
    mean = jnp.mean(x, axis=-1, keepdims=True)
    var = jnp.mean(jnp.square(x - mean), axis=-1, keepdims=True)
    y = (x - mean) * jax.lax.rsqrt(var + eps)
    o_ref[...] = (y * g_ref[...] + b_ref[...]).astype(o_ref.dtype)


def layer_norm(x, g, b, eps=1e-12, out_dtype=jnp.bfloat16, tm_cap=None):
    tm_cap = tm_cap or _TM_CAP
    shp = x.shape
    D = shp[-1]
    x2 = x.reshape(-1, D)
    M = x2.shape[0]
    Mp, tm = _tiles(M, tm_cap, 16)
    xp = x2 if Mp == M else jnp.pad(x2, ((0, Mp - M), (0, 0)))
    out = pl.pallas_call(
        functools.partial(_layernorm_kernel, eps=eps),
        out_shape=jax.ShapeDtypeStruct((Mp, D), out_dtype),
        grid=(Mp // tm,),
        in_specs=[pl.BlockSpec((tm, D), lambda i: (i, 0)),
                  pl.BlockSpec((1, D), lambda i: (0, 0)),
                  pl.BlockSpec((1, D), lambda i: (0, 0))],
        out_specs=pl.BlockSpec((tm, D), lambda i: (i, 0)),
        compiler_params=pltpu.CompilerParams(
            dimension_semantics=("parallel",),
            vmem_limit_bytes=VMEM_LIMIT),
    )(xp, g.reshape(1, D).astype(jnp.float32), b.reshape(1, D).astype(jnp.float32))
    out = out[:M] if Mp != M else out
    return out.reshape(shp)


def _ffn_kernel(x_ref, g_ref, bg_ref, w1_ref, b1_ref, w2_ref, b2_ref, o_ref, *, eps):
    # out = x + FF2(relu(FF1(LN(x))))  — intermediate stays in VMEM.
    x = x_ref[...].astype(jnp.float32)
    mean = jnp.mean(x, axis=-1, keepdims=True)
    var = jnp.mean(jnp.square(x - mean), axis=-1, keepdims=True)
    y = (x - mean) * jax.lax.rsqrt(var + eps)
    y = (y * g_ref[...] + bg_ref[...]).astype(w1_ref.dtype)
    h = jnp.dot(y, w1_ref[...], preferred_element_type=jnp.float32) + b1_ref[...]
    h = jnp.maximum(h, 0.0).astype(w2_ref.dtype)
    out = jnp.dot(h, w2_ref[...], preferred_element_type=jnp.float32) + b2_ref[...]
    o_ref[...] = (x + out).astype(o_ref.dtype)


def ffn_block(ln, p1, p2, x, *, eps=1e-12, tm_cap=None):
    """x:(B,T,D) bf16  ->  x + FFN(LN(x)), LN/relu/residual fused into one kernel."""
    B, T, D = x.shape
    E = p1["w"].shape[1]
    tm_cap = tm_cap or _TM_CAP

    # K/E-tiled fallback when the resident bf16 weights would blow the per-generation
    # VMEM budget (pipeline double-buffers them; keep well under the scoped limit).
    weight_bytes = 2 * 2 * D * E
    if weight_bytes > VMEM_LIMIT // 3:
        x2 = x.reshape(B * T, D).astype(jnp.bfloat16)
        h = dense(x2, p1["w"], p1["b"], activation="relu", ln=ln)
        out = dense(h, p2["w"], p2["b"], residual=x2)
        return out.reshape(B, T, D)

    x2 = x.reshape(B * T, D).astype(jnp.bfloat16)
    M = B * T
    Mp, tm = _tiles(M, tm_cap, 16)
    xp = x2 if Mp == M else jnp.pad(x2, ((0, Mp - M), (0, 0)))
    # TODO(synk): mark the grid-invariant weight/bias specs with pipeline_mode=pl.Buffered(1)
    # once single-buffering is confirmed supported, to halve resident weight VMEM on v7x.
    out = pl.pallas_call(
        functools.partial(_ffn_kernel, eps=eps),
        out_shape=jax.ShapeDtypeStruct((Mp, D), jnp.bfloat16),
        grid=(Mp // tm,),
        in_specs=[pl.BlockSpec((tm, D), lambda i: (i, 0)),
                  pl.BlockSpec((1, D), lambda i: (0, 0)),
                  pl.BlockSpec((1, D), lambda i: (0, 0)),
                  pl.BlockSpec((D, E), lambda i: (0, 0)),
                  pl.BlockSpec((1, E), lambda i: (0, 0)),
                  pl.BlockSpec((E, D), lambda i: (0, 0)),
                  pl.BlockSpec((1, D), lambda i: (0, 0))],
        out_specs=pl.BlockSpec((tm, D), lambda i: (i, 0)),
        compiler_params=pltpu.CompilerParams(
            dimension_semantics=("parallel",),
            vmem_limit_bytes=VMEM_LIMIT),
    )(xp,
      ln["g"].reshape(1, D).astype(jnp.float32),
      ln["b"].reshape(1, D).astype(jnp.float32),
      p1["w"], p1["b"].reshape(1, E).astype(jnp.float32),
      p2["w"], p2["b"].reshape(1, D).astype(jnp.float32))
    out = out[:M] if Mp != M else out
    return out.reshape(B, T, D)


# ----------------------------- attention kernels ------------------------------

def _attention_heads(get_qkv, bias_ref, o_ref, *, n_heads, dh, bf16_exp):
    """Shared per-head attention body.  Heads are sliced with static lane offsets;
    1/sqrt(dh) is already folded into the Q projection weights."""
    bias = bias_ref[...].astype(jnp.float32)              # (Mq, Tk) additive 0 / -1e30
    for h in range(n_heads):                               # unrolled at trace time
        q, k, v = get_qkv(h)                               # (Tq,dh), (Tk,dh), (Tk,dh) bf16
        s = jax.lax.dot_general(q, k, (((1,), (1,)), ((), ())),
                                preferred_element_type=jnp.float32)     # (Tq, Tk)
        s = s + bias                                       # one VPU add (no compares)
        m = jnp.max(s, axis=-1, keepdims=True)             # f32 row max
        row_ok = (m > 0.5 * NEG_INF).astype(jnp.float32)   # zero fully-masked rows (ESPnet)
        if bf16_exp:                                       # bf16 EUP on v6e/v7x
            p = jnp.exp((s - m).astype(jnp.bfloat16))
            denom = jnp.sum(p.astype(jnp.float32), axis=-1, keepdims=True)
        else:                                              # f32 path (v5e and older)
            pf = jnp.exp(s - m)
            denom = jnp.sum(pf, axis=-1, keepdims=True)
            p = pf.astype(jnp.bfloat16)
        inv = pl.reciprocal(denom + 1e-30, approx=True) * row_ok        # f32
        ctx = jnp.dot(p, v, preferred_element_type=jnp.float32)         # (Tq, dh)
        c = h * dh
        o_ref[:, c:c + dh] = (ctx * inv).astype(o_ref.dtype)
    # TODO(synk): for long sequences on v7x, tile over heads/Tq via a grid axis or
    # lax.fori_loop with pl.ds so per-step score temporaries stay bounded.


def _mha_self_kernel(qkv_ref, bias_ref, o_ref, *, n_heads, dh, d, bf16_exp):
    def get_qkv(h):
        c = h * dh
        return (qkv_ref[:, c:c + dh],
                qkv_ref[:, d + c:d + c + dh],
                qkv_ref[:, 2 * d + c:2 * d + c + dh])
    _attention_heads(get_qkv, bias_ref, o_ref, n_heads=n_heads, dh=dh, bf16_exp=bf16_exp)


def _mha_cross_kernel(q_ref, kv_ref, bias_ref, o_ref, *, n_heads, dh, d, bf16_exp):
    def get_qkv(h):
        c = h * dh
        return (q_ref[:, c:c + dh],
                kv_ref[:, c:c + dh],
                kv_ref[:, d + c:d + c + dh])
    _attention_heads(get_qkv, bias_ref, o_ref, n_heads=n_heads, dh=dh, bf16_exp=bf16_exp)


def mha_self_core(qkv, bias, n_heads, d):
    """qkv:(B,Tq,3D) bf16 fused Q|K|V, bias:(B,Mq,Tq) bf16 additive.  Returns (B,Tq,D)."""
    B, Tq, _ = qkv.shape
    Mq, Tk = bias.shape[1], bias.shape[2]
    dh = d // n_heads
    return pl.pallas_call(
        functools.partial(_mha_self_kernel, n_heads=n_heads, dh=dh, d=d, bf16_exp=BF16_EXP),
        out_shape=jax.ShapeDtypeStruct((B, Tq, d), jnp.bfloat16),
        grid=(B,),
        in_specs=[pl.BlockSpec((None, Tq, 3 * d), lambda b: (b, 0, 0)),
                  pl.BlockSpec((None, Mq, Tk), lambda b: (b, 0, 0))],
        out_specs=pl.BlockSpec((None, Tq, d), lambda b: (b, 0, 0)),
        compiler_params=pltpu.CompilerParams(
            dimension_semantics=("parallel",),
            vmem_limit_bytes=VMEM_LIMIT),
    )(qkv.astype(jnp.bfloat16), bias)


def mha_cross_core(q, kv, bias, n_heads, d):
    """q:(B,Tq,D), kv:(B,Tk,2D) bf16 fused K|V, bias:(B,Mq,Tk) bf16 additive."""
    B, Tq, _ = q.shape
    Tk = kv.shape[1]
    Mq = bias.shape[1]
    dh = d // n_heads
    return pl.pallas_call(
        functools.partial(_mha_cross_kernel, n_heads=n_heads, dh=dh, d=d, bf16_exp=BF16_EXP),
        out_shape=jax.ShapeDtypeStruct((B, Tq, d), jnp.bfloat16),
        grid=(B,),
        in_specs=[pl.BlockSpec((None, Tq, d), lambda b: (b, 0, 0)),
                  pl.BlockSpec((None, Tk, 2 * d), lambda b: (b, 0, 0)),
                  pl.BlockSpec((None, Mq, Tk), lambda b: (b, 0, 0))],
        out_specs=pl.BlockSpec((None, Tq, d), lambda b: (b, 0, 0)),
        compiler_params=pltpu.CompilerParams(
            dimension_semantics=("parallel",),
            vmem_limit_bytes=VMEM_LIMIT),
    )(q.astype(jnp.bfloat16), kv.astype(jnp.bfloat16), bias)


def mask_to_bias(mask_bool):
    """bool keep-mask -> additive bf16 bias (0 keep / -1e30 drop)."""
    return jnp.where(mask_bool, 0.0, NEG_INF).astype(jnp.bfloat16)


# ----------------------------- parameters ------------------------------------

def linear_params(key, fan_in, fan_out, q_scale=None, q_cols=None):
    w = jax.random.normal(key, (fan_in, fan_out), jnp.float32) / math.sqrt(fan_in)
    b = jnp.zeros((fan_out,), jnp.float32)
    if q_scale is not None:
        cols = fan_out if q_cols is None else q_cols
        w = w.at[:, :cols].multiply(q_scale)      # fold 1/sqrt(Dh) into the Q projection
        b = b.at[:cols].multiply(q_scale)
    return {"w": w.astype(jnp.bfloat16), "b": b}


def ln_params(dim):
    return {"g": jnp.ones((dim,), jnp.float32), "b": jnp.zeros((dim,), jnp.float32)}


def init_raven_params(key, cfg):
    ks = jax.random.split(key, 64)
    it = iter(range(64))
    nk = lambda: ks[next(it)]

    D = cfg["adim"]
    q_scale_e = 1.0 / math.sqrt(D // cfg["aheads"])
    enc = {"embed": linear_params(nk(), cfg["idim"], D),
           "after_norm": ln_params(D),
           "layers": []}
    for _ in range(cfg["elayers"]):
        enc["layers"].append({
            "ln1": ln_params(D),
            "self": {"qkv": linear_params(nk(), D, 3 * D, q_scale=q_scale_e, q_cols=D),
                     "o": linear_params(nk(), D, D)},
            "ln2": ln_params(D),
            "ff1": linear_params(nk(), D, cfg["eunits"]),
            "ff2": linear_params(nk(), cfg["eunits"], D),
        })

    Dd = cfg["ddim"]
    q_scale_d = 1.0 / math.sqrt(Dd // cfg["dheads"])
    dec = {"embed": jax.random.normal(nk(), (cfg["odim"], Dd), jnp.float32) * 0.02,
           "after_norm": ln_params(Dd),
           "out": linear_params(nk(), Dd, cfg["odim"]),
           "layers": []}
    for _ in range(cfg["dlayers"]):
        dec["layers"].append({
            "ln1": ln_params(Dd),
            "self": {"qkv": linear_params(nk(), Dd, 3 * Dd, q_scale=q_scale_d, q_cols=Dd),
                     "o": linear_params(nk(), Dd, Dd)},
            "ln2": ln_params(Dd),
            "src": {"q": linear_params(nk(), Dd, Dd, q_scale=q_scale_d),
                    "kv": linear_params(nk(), Dd, 2 * Dd),   # fused K/V projection
                    "o": linear_params(nk(), Dd, Dd)},
            "ln3": ln_params(Dd),
            "ff1": linear_params(nk(), Dd, cfg["dunits"]),
            "ff2": linear_params(nk(), cfg["dunits"], Dd),
        })

    return {"encoder": enc,
            "ctc": linear_params(nk(), D, cfg["odim"]),
            "decoder": dec}


# ----------------------------- model pieces -----------------------------------

def sinusoidal_pe(T, d):
    pos = jnp.arange(T, dtype=jnp.float32)[:, None]
    div = jnp.exp(jnp.arange(0, d, 2, dtype=jnp.float32) * (-math.log(10000.0) / d))
    pe = jnp.zeros((T, d), jnp.float32)
    pe = pe.at[:, 0::2].set(jnp.sin(pos * div))
    pe = pe.at[:, 1::2].set(jnp.cos(pos * div))
    return pe


def mha_block(p, ln, query, memory, bias, n_heads, self_attn):
    """Pre-norm residual attention sub-layer: query + Wo @ MHA(LN(query), memory, memory)."""
    B, Tq, D = query.shape
    q2 = query.reshape(B * Tq, D)

    if self_attn:
        # fused QKV projection with the LN prologue; heads split inside the kernel
        qkv = dense(q2, p["qkv"]["w"], p["qkv"]["b"], ln=ln)
        ctx = mha_self_core(qkv.reshape(B, Tq, 3 * D), bias, n_heads, D)
    else:
        q = dense(q2, p["q"]["w"], p["q"]["b"], ln=ln)
        Tk = memory.shape[1]
        kv = dense(memory.reshape(B * Tk, D), p["kv"]["w"], p["kv"]["b"])
        ctx = mha_cross_core(q.reshape(B, Tq, D), kv.reshape(B, Tk, 2 * D), bias, n_heads, D)

    out = dense(ctx.reshape(B * Tq, D), p["o"]["w"], p["o"]["b"], residual=q2)
    return out.reshape(B, Tq, D)


def encoder_forward(p, x, padding_mask, n_heads):
    """x: (B,T,idim); padding_mask: (B,1,T) bool, True = valid frame."""
    B, T, _ = x.shape
    D = p["embed"]["w"].shape[1]
    h = dense(x.reshape(B * T, -1), p["embed"]["w"], p["embed"]["b"]).reshape(B, T, D)
    h = (h.astype(jnp.float32) * math.sqrt(D) + sinusoidal_pe(T, D)[None]).astype(jnp.bfloat16)
    enc_bias = mask_to_bias(padding_mask.reshape(B, 1, T))   # keys-only mask (ESPnet)
    for lp in p["layers"]:
        h = mha_block(lp["self"], lp["ln1"], h, h, enc_bias, n_heads, self_attn=True)
        h = ffn_block(lp["ln2"], lp["ff1"], lp["ff2"], h)
    h = layer_norm(h, p["after_norm"]["g"], p["after_norm"]["b"])
    return h, padding_mask


def ctc_log_probs(p_ctc, hs):
    B, T, D = hs.shape
    V = p_ctc["w"].shape[1]
    lp = dense(hs.reshape(B * T, D), p_ctc["w"], p_ctc["b"],
               activation="log_softmax", out_dtype=jnp.float32)
    return lp.reshape(B, T, V)


def _ctc_nll_single(logp, in_len, tgt, blank):
    # TODO(synk): CTC forward DP is inherently sequential; kept as a plain-JAX lax.scan.
    T, _ = logp.shape
    L = tgt.shape[0]
    S = 2 * L + 1
    ext = jnp.full((S,), blank, jnp.int32).at[1::2].set(tgt.astype(jnp.int32))
    ext_prev2 = jnp.concatenate([jnp.full((2,), -1, jnp.int32), ext[:-2]])
    allow_skip = (ext != blank) & (ext != ext_prev2)
    alpha = jnp.full((S,), NEG_INF, jnp.float32)
    alpha = alpha.at[0].set(logp[0, blank])
    alpha = alpha.at[1].set(logp[0, ext[1]])

    def body(a, t):
        lp_t = logp[t]
        a1 = jnp.concatenate([jnp.full((1,), NEG_INF, jnp.float32), a[:-1]])
        a2 = jnp.concatenate([jnp.full((2,), NEG_INF, jnp.float32), a[:-2]])
        a2 = jnp.where(allow_skip, a2, NEG_INF)
        new = jnp.logaddexp(jnp.logaddexp(a, a1), a2) + lp_t[ext]
        new = jnp.where(t < in_len, new, a)
        return new, None

    alpha, _ = jax.lax.scan(body, alpha, jnp.arange(1, T))
    ll = jnp.logaddexp(alpha[S - 1], alpha[S - 2])
    return -ll


def ctc_loss(p_ctc, hs, hlens, label, blank=0):
    logp = ctc_log_probs(p_ctc, hs)
    nll = jax.vmap(lambda lp, il, tg: _ctc_nll_single(lp, il, tg, blank))(logp, hlens, label)
    # ESPnet builtin CTC: reduction="sum" then divide by batch size.
    return jnp.mean(nll)


def add_sos_eos(label, sos, eos, ignore_id):
    # TODO(synk): assumes labels carry no ignore_id padding (ragged labels would need per-row repacking).
    B = label.shape[0]
    sos_col = jnp.full((B, 1), sos, label.dtype)
    eos_col = jnp.full((B, 1), eos, label.dtype)
    return jnp.concatenate([sos_col, label], axis=1), jnp.concatenate([label, eos_col], axis=1)


def target_mask(ys_in, ignore_id):
    B, Td = ys_in.shape
    key_valid = (ys_in != ignore_id)[:, None, :]
    sub = jnp.tril(jnp.ones((Td, Td), bool))[None]
    return key_valid & sub                        # (B, Td, Td) bool


def decoder_forward(p, ys_in, tgt_mask, memory, memory_mask, n_heads):
    B, Td = ys_in.shape
    D = p["embed"].shape[1]
    Tm = memory.shape[1]
    h = (jnp.take(p["embed"], ys_in, axis=0) * math.sqrt(D)
         + sinusoidal_pe(Td, D)[None]).astype(jnp.bfloat16)
    self_bias = mask_to_bias(tgt_mask)                          # (B, Td, Td)
    src_bias = mask_to_bias(memory_mask.reshape(B, 1, Tm))      # (B, 1, Tm)
    for lp in p["layers"]:
        h = mha_block(lp["self"], lp["ln1"], h, h, self_bias, n_heads, self_attn=True)
        h = mha_block(lp["src"], lp["ln2"], h, memory, src_bias, n_heads, self_attn=False)
        h = ffn_block(lp["ln3"], lp["ff1"], lp["ff2"], h)
    # decoder after_norm fused into the output projection (LN prologue), logits in f32
    logits = dense(h.reshape(B * Td, D), p["out"]["w"], p["out"]["b"],
                   ln=p["after_norm"], out_dtype=jnp.float32)
    return logits.reshape(B, Td, -1)


def label_smoothing_loss(logits, target, size, padding_idx, smoothing):
    B = logits.shape[0]
    x = logits.reshape(-1, size).astype(jnp.float32)
    t = target.reshape(-1)
    confidence = 1.0 - smoothing
    ignore = (t == padding_idx)
    t_safe = jnp.where(ignore, 0, t)
    true_dist = jnp.full((x.shape[0], size), smoothing / (size - 1), jnp.float32)
    true_dist = true_dist.at[jnp.arange(x.shape[0]), t_safe].set(confidence)
    logprob = jax.nn.log_softmax(x, axis=-1)
    kl = true_dist * (jnp.log(true_dist) - logprob)
    kl = jnp.where(ignore[:, None], 0.0, kl)
    return jnp.sum(kl) / B   # length_normalized_loss = False -> divide by batch size


def th_accuracy(logits, target, ignore_label):
    pred = jnp.argmax(logits, axis=-1)
    mask = target != ignore_label
    num = jnp.sum(jnp.where(mask, pred == target, False))
    den = jnp.maximum(jnp.sum(mask), 1)
    return num.astype(jnp.float32) / den.astype(jnp.float32)


def raven_forward(params, cfg, x, padding_mask, lengths, label):
    hs, _ = encoder_forward(params["encoder"], x, padding_mask, cfg["aheads"])
    loss_ctc = ctc_loss(params["ctc"], hs, lengths, label, blank=0)
    sos = eos = cfg["odim"] - 1
    ys_in, ys_out = add_sos_eos(label, sos, eos, cfg["ignore_id"])
    ys_mask = target_mask(ys_in, cfg["ignore_id"])
    pred = decoder_forward(params["decoder"], ys_in, ys_mask, hs, padding_mask, cfg["dheads"])
    loss_att = label_smoothing_loss(pred, ys_out, cfg["odim"], cfg["ignore_id"], cfg["lsm_weight"])
    loss = cfg["mtlalpha"] * loss_ctc + (1.0 - cfg["mtlalpha"]) * loss_att
    acc = th_accuracy(pred, ys_out, cfg["ignore_id"])
    return hs, loss, loss_ctc, loss_att, acc


# ----------------------------- main -------------------------------------------

if __name__ == "__main__":
    cfg = dict(idim=32, adim=32, aheads=4, eunits=64, elayers=2,
               ddim=32, dheads=4, dunits=64, dlayers=2,
               odim=6, ignore_id=-1, lsm_weight=0.1, mtlalpha=0.3)

    key = jax.random.PRNGKey(0)
    kp, kx = jax.random.split(key)
    params = init_raven_params(kp, cfg)

    B, T, L = 2, 8, 4
    x = jax.random.normal(kx, (B, T, cfg["idim"]), jnp.float32)
    lengths = jnp.array([8, 6], jnp.int32)
    padding_mask = (jnp.arange(T)[None, None, :] < lengths[:, None, None])   # (B,1,T) bool
    label = jnp.array([[1, 2, 3, 4], [2, 3, 1, 4]], jnp.int32)               # no adjacent repeats

    fwd = jax.jit(functools.partial(raven_forward, params, cfg))
    hs, loss, loss_ctc, loss_att, acc = fwd(x, padding_mask, lengths, label)
    jax.block_until_ready((hs, loss, loss_ctc, loss_att, acc))
    print("KERNEL_OK")
</pallas_src>

<mosaic_0001>
module attributes {stable_mosaic.version = 11 : i64} {
  func.func @_dense_kernel(%arg0: i32, %arg1: i32, %arg2: i32, %arg3: memref<16x32xbf16, #tpu.memory_space<vmem>>, %arg4: memref<32x32xbf16, #tpu.memory_space<vmem>>, %arg5: memref<1x32xf32, #tpu.memory_space<vmem>>, %arg6: memref<16x32xbf16, #tpu.memory_space<vmem>>, %arg7: memref<16x32xf32, #tpu.memory_space<vmem>>) attributes {dimension_semantics = [#tpu.dimension_semantics<parallel>, #tpu.dimension_semantics<parallel>, #tpu.dimension_semantics<arbitrary>], iteration_bounds = array<i64: 1, 1, 1>, scalar_prefetch = 0 : i64, scratch_operands = 1 : i64, tpu.core_type = #tpu.core_type<tc>, window_params = [{transform_indices = @transform_0, window_bounds = array<i64: 16, 32>}, {transform_indices = @transform_1, window_bounds = array<i64: 32, 32>}, {transform_indices = @transform_2, window_bounds = array<i64: 1, 32>}, {transform_indices = @transform_3, window_bounds = array<i64: 16, 32>}]} {
    %c0_i32 = arith.constant 0 : i32
    %0 = arith.cmpi eq, %arg2, %c0_i32 : i32
    %1 = arith.extui %0 : i1 to i32
    %c0_i32_0 = arith.constant 0 : i32
    %2 = arith.cmpi ne, %1, %c0_i32_0 : i32
    scf.if %2 {
      %cst_10 = arith.constant 0.000000e+00 : f32
      %12 = vector.broadcast %cst_10 : f32 to vector<16x32xf32>
      %c0_11 = arith.constant 0 : index
      %c0_12 = arith.constant 0 : index
      %13 = vector.load %arg7[%c0_11, %c0_12] : memref<16x32xf32, #tpu.memory_space<vmem>>, vector<16x32xf32>
      tpu.vector_store %arg7[%c0_11, %c0_12], %12 {strides = array<i32>} : memref<16x32xf32, #tpu.memory_space<vmem>>, vector<16x32xf32>,
    } else {
    }
    %c0 = arith.constant 0 : index
    %c0_1 = arith.constant 0 : index
    %3 = vector.load %arg3[%c0, %c0_1] : memref<16x32xbf16, #tpu.memory_space<vmem>>, vector<16x32xbf16>
    %c0_2 = arith.constant 0 : index
    %c0_3 = arith.constant 0 : index
    %4 = vector.load %arg7[%c0_2, %c0_3] : memref<16x32xf32, #tpu.memory_space<vmem>>, vector<16x32xf32>
    %c0_4 = arith.constant 0 : index
    %c0_5 = arith.constant 0 : index
    %5 = vector.load %arg4[%c0_4, %c0_5] : memref<32x32xbf16, #tpu.memory_space<vmem>>, vector<32x32xbf16>
    %cst = arith.constant dense<0.000000e+00> : vector<16x32xf32>
    %6 = tpu.matmul %3, %5, %cst {dimension_numbers = #tpu.dot_dimension_numbers<[1], [0], [0], [1], [0, 0, 1, 1], [], []>} : vector<16x32xbf16>, vector<32x32xbf16>, vector<16x32xf32> -> vector<16x32xf32>
    %7 = arith.addf %4, %6 : vector<16x32xf32>
    %c0_6 = arith.constant 0 : index
    %c0_7 = arith.constant 0 : index
    %8 = vector.load %arg7[%c0_6, %c0_7] : memref<16x32xf32, #tpu.memory_space<vmem>>, vector<16x32xf32>
    tpu.vector_store %arg7[%c0_6, %c0_7], %7 {strides = array<i32>} : memref<16x32xf32, #tpu.memory_space<vmem>>, vector<16x32xf32>,
    %c0_i32_8 = arith.constant 0 : i32
    %9 = arith.cmpi eq, %arg2, %c0_i32_8 : i32
    %10 = arith.extui %9 : i1 to i32
    %c0_i32_9 = arith.constant 0 : i32
    %11 = arith.cmpi ne, %10, %c0_i32_9 : i32
    scf.if %11 {
      %c0_10 = arith.constant 0 : index
      %c0_11 = arith.constant 0 : index
      %12 = vector.load %arg7[%c0_10, %c0_11] : memref<16x32xf32, #tpu.memory_space<vmem>>, vector<16x32xf32>
      %c0_12 = arith.constant 0 : index
      %c0_13 = arith.constant 0 : index
      %13 = vector.load %arg5[%c0_12, %c0_13] : memref<1x32xf32, #tpu.memory_space<vmem>>, vector<1x32xf32>
      %14 = vector.broadcast %13 : vector<1x32xf32> to vector<16x32xf32>
      %15 = arith.addf %12, %14 : vector<16x32xf32>
      %16 = arith.truncf %15 : vector<16x32xf32> to vector<16x32xbf16>
      %c0_14 = arith.constant 0 : index
      %c0_15 = arith.constant 0 : index
      %17 = vector.load %arg6[%c0_14, %c0_15] : memref<16x32xbf16, #tpu.memory_space<vmem>>, vector<16x32xbf16>
      tpu.vector_store %arg6[%c0_14, %c0_15], %16 {strides = array<i32>} : memref<16x32xbf16, #tpu.memory_space<vmem>>, vector<16x32xbf16>,
    } else {
    }
    return
  }
  func.func @transform_0(%arg0: i32, %arg1: i32, %arg2: i32) -> (i32, i32) {
    %c0_i32 = arith.constant 0 : i32
    return %arg0, %arg2 : i32, i32
  }
  func.func @transform_1(%arg0: i32, %arg1: i32, %arg2: i32) -> (i32, i32) {
    %c0_i32 = arith.constant 0 : i32
    return %arg2, %arg1 : i32, i32
  }
  func.func @transform_2(%arg0: i32, %arg1: i32, %arg2: i32) -> (i32, i32) {
    %c0_i32 = arith.constant 0 : i32
    %c0_i32_0 = arith.constant 0 : i32
    return %c0_i32, %arg1 : i32, i32
  }
  func.func @transform_3(%arg0: i32, %arg1: i32, %arg2: i32) -> (i32, i32) {
    %c0_i32 = arith.constant 0 : i32
    return %arg0, %arg1 : i32, i32
  }
}

module attributes {stable_mosaic.version = 11 : i64} {
  func.func @_dense_kernel(%arg0: i32, %arg1: i32, %arg2: i32, %arg3: memref<16x32xbf16, #tpu.memory_space<vmem>>, %arg4: memref<32x32xbf16, #tpu.memory_space<vmem>>, %arg5: memref<1x32xf32, #tpu.memory_space<vmem>>, %arg6: memref<16x32xbf16, #tpu.memory_space<vmem>>, %arg7: memref<16x32xbf16, #tpu.memory_space<vmem>>, %arg8: memref<16x32xf32, #tpu.memory_space<vmem>>) attributes {dimension_semantics = [#tpu.dimension_semantics<parallel>, #tpu.dimension_semantics<parallel>, #tpu.dimension_semantics<arbitrary>], iteration_bounds = array<i64: 1, 1, 1>, scalar_prefetch = 0 : i64, scratch_operands = 1 : i64, tpu.core_type = #tpu.core_type<tc>, window_params = [{transform_indices = @transform_0, window_bounds = array<i64: 16, 32>}, {transform_indices = @transform_1, window_bounds = array<i64: 32, 32>}, {transform_indices = @transform_2, window_bounds = array<i64: 1, 32>}, {transform_indices = @transform_3, window_bounds = array<i64: 16, 32>}, {transform_indices = @transform_4, window_bounds = array<i64: 16, 32>}]} {
    %c0_i32 = arith.constant 0 : i32
    %0 = arith.cmpi eq, %arg2, %c0_i32 : i32
    %1 = arith.extui %0 : i1 to i32
    %c0_i32_0 = arith.constant 0 : i32
    %2 = arith.cmpi ne, %1, %c0_i32_0 : i32
    scf.if %2 {
      %cst_10 = arith.constant 0.000000e+00 : f32
      %12 = vector.broadcast %cst_10 : f32 to vector<16x32xf32>
      %c0_11 = arith.constant 0 : index
      %c0_12 = arith.constant 0 : index
      %13 = vector.load %arg8[%c0_11, %c0_12] : memref<16x32xf32, #tpu.memory_space<vmem>>, vector<16x32xf32>
      tpu.vector_store %arg8[%c0_11, %c0_12], %12 {strides = array<i32>} : memref<16x32xf32, #tpu.memory_space<vmem>>, vector<16x32xf32>,
    } else {
    }
    %c0 = arith.constant 0 : index
    %c0_1 = arith.constant 0 : index
    %3 = vector.load %arg3[%c0, %c0_1] : memref<16x32xbf16, #tpu.memory_space<vmem>>, vector<16x32xbf16>
    %c0_2 = arith.constant 0 : index
    %c0_3 = arith.constant 0 : index
    %4 = vector.load %arg8[%c0_2, %c0_3] : memref<16x32xf32, #tpu.memory_space<vmem>>, vector<16x32xf32>
    %c0_4 = arith.constant 0 : index
    %c0_5 = arith.constant 0 : index
    %5 = vector.load %arg4[%c0_4, %c0_5] : memref<32x32xbf16, #tpu.memory_space<vmem>>, vector<32x32xbf16>
    %cst = arith.constant dense<0.000000e+00> : vector<16x32xf32>
    %6 = tpu.matmul %3, %5, %cst {dimension_numbers = #tpu.dot_dimension_numbers<[1], [0], [0], [1], [0, 0, 1, 1], [], []>} : vector<16x32xbf16>, vector<32x32xbf16>, vector<16x32xf32> -> vector<16x32xf32>
    %7 = arith.addf %4, %6 : vector<16x32xf32>
    %c0_6 = arith.constant 0 : index
    %c0_7 = arith.constant 0 : index
    %8 = vector.load %arg8[%c0_6, %c0_7] : memref<16x32xf32, #tpu.memory_space<vmem>>, vector<16x32xf32>
    tpu.vector_store %arg8[%c0_6, %c0_7], %7 {strides = array<i32>} : memref<16x32xf32, #tpu.memory_space<vmem>>, vector<16x32xf32>,
    %c0_i32_8 = arith.constant 0 : i32
    %9 = arith.cmpi eq, %arg2, %c0_i32_8 : i32
    %10 = arith.extui %9 : i1 to i32
    %c0_i32_9 = arith.constant 0 : i32
    %11 = arith.cmpi ne, %10, %c0_i32_9 : i32
    scf.if %11 {
      %c0_10 = arith.constant 0 : index
      %c0_11 = arith.constant 0 : index
      %12 = vector.load %arg8[%c0_10, %c0_11] : memref<16x32xf32, #tpu.memory_space<vmem>>, vector<16x32xf32>
      %c0_12 = arith.constant 0 : index
      %c0_13 = arith.constant 0 : index
      %13 = vector.load %arg5[%c0_12, %c0_13] : memref<1x32xf32, #tpu.memory_space<vmem>>, vector<1x32xf32>
      %14 = vector.broadcast %13 : vector<1x32xf32> to vector<16x32xf32>
      %15 = arith.addf %12, %14 : vector<16x32xf32>
      %c0_14 = arith.constant 0 : index
      %c0_15 = arith.constant 0 : index
      %16 = vector.load %arg6[%c0_14, %c0_15] : memref<16x32xbf16, #tpu.memory_space<vmem>>, vector<16x32xbf16>
      %17 = arith.extf %16 : vector<16x32xbf16> to vector<16x32xf32>
      %18 = arith.addf %15, %17 : vector<16x32xf32>
      %19 = arith.truncf %18 : vector<16x32xf32> to vector<16x32xbf16>
      %c0_16 = arith.constant 0 : index
      %c0_17 = arith.constant 0 : index
      %20 = vector.load %arg7[%c0_16, %c0_17] : memref<16x32xbf16, #tpu.memory_space<vmem>>, vector<16x32xbf16>
      tpu.vector_store %arg7[%c0_16, %c0_17], %19 {strides = array<i32>} : memref<16x32xbf16, #tpu.memory_space<vmem>>, vector<16x32xbf16>,
    } else {
    }
    return
  }
  func.func @transform_0(%arg0: i32, %arg1: i32, %arg2: i32) -> (i32, i32) {
    %c0_i32 = arith.constant 0 : i32
    return %arg0, %arg2 : i32, i32
  }
  func.func @transform_1(%arg0: i32, %arg1: i32, %arg2: i32) -> (i32, i32) {
    %c0_i32 = arith.constant 0 : i32
    return %arg2, %arg1 : i32, i32
  }
  func.func @transform_2(%arg0: i32, %arg1: i32, %arg2: i32) -> (i32, i32) {
    %c0_i32 = arith.constant 0 : i32
    %c0_i32_0 = arith.constant 0 : i32
    return %c0_i32, %arg1 : i32, i32
  }
  func.func @transform_3(%arg0: i32, %arg1: i32, %arg2: i32) -> (i32, i32) {
    %c0_i32 = arith.constant 0 : i32
    return %arg0, %arg1 : i32, i32
  }
  func.func @transform_4(%arg0: i32, %arg1: i32, %arg2: i32) -> (i32, i32) {
    %c0_i32 = arith.constant 0 : i32
    return %arg0, %arg1 : i32, i32
  }
}

module attributes {stable_mosaic.version = 11 : i64} {
  func.func @_dense_kernel(%arg0: i32, %arg1: i32, %arg2: i32, %arg3: memref<16x32xbf16, #tpu.memory_space<vmem>>, %arg4: memref<1x32xf32, #tpu.memory_space<vmem>>, %arg5: memref<1x32xf32, #tpu.memory_space<vmem>>, %arg6: memref<32x96xbf16, #tpu.memory_space<vmem>>, %arg7: memref<1x96xf32, #tpu.memory_space<vmem>>, %arg8: memref<16x96xbf16, #tpu.memory_space<vmem>>, %arg9: memref<16x96xf32, #tpu.memory_space<vmem>>) attributes {dimension_semantics = [#tpu.dimension_semantics<parallel>, #tpu.dimension_semantics<parallel>, #tpu.dimension_semantics<arbitrary>], iteration_bounds = array<i64: 1, 1, 1>, scalar_prefetch = 0 : i64, scratch_operands = 1 : i64, tpu.core_type = #tpu.core_type<tc>, window_params = [{transform_indices = @transform_0, window_bounds = array<i64: 16, 32>}, {pipeline_mode = #tpu.pipeline_mode<synchronous>, transform_indices = @transform_1, window_bounds = array<i64: 1, 32>}, {pipeline_mode = #tpu.pipeline_mode<synchronous>, transform_indices = @transform_2, window_bounds = array<i64: 1, 32>}, {transform_indices = @transform_3, window_bounds = array<i64: 32, 96>}, {transform_indices = @transform_4, window_bounds = array<i64: 1, 96>}, {transform_indices = @transform_5, window_bounds = array<i64: 16, 96>}]} {
    %c0_i32 = arith.constant 0 : i32
    %0 = arith.cmpi eq, %arg2, %c0_i32 : i32
    %1 = arith.extui %0 : i1 to i32
    %c0_i32_0 = arith.constant 0 : i32
    %2 = arith.cmpi ne, %1, %c0_i32_0 : i32
    scf.if %2 {
      %cst_19 = arith.constant 0.000000e+00 : f32
      %38 = vector.broadcast %cst_19 : f32 to vector<16x96xf32>
      %c0_20 = arith.constant 0 : index
      %c0_21 = arith.constant 0 : index
      %39 = vector.load %arg9[%c0_20, %c0_21] : memref<16x96xf32, #tpu.memory_space<vmem>>, vector<16x96xf32>
      tpu.vector_store %arg9[%c0_20, %c0_21], %38 {strides = array<i32>} : memref<16x96xf32, #tpu.memory_space<vmem>>, vector<16x96xf32>,
    } else {
    }
    %c0 = arith.constant 0 : index
    %c0_1 = arith.constant 0 : index
    %3 = vector.load %arg3[%c0, %c0_1] : memref<16x32xbf16, #tpu.memory_space<vmem>>, vector<16x32xbf16>
    %4 = arith.extf %3 : vector<16x32xbf16> to vector<16x32xf32>
    %cst = arith.constant dense<0.000000e+00> : vector<16xf32>
    %5 = vector.multi_reduction <add>, %4, %cst [1] : vector<16x32xf32> to vector<16xf32>
    %6 = vector.shape_cast %5 : vector<16xf32> to vector<16x1xf32>
    %cst_2 = arith.constant 3.200000e+01 : f32
    %7 = vector.broadcast %cst_2 : f32 to vector<16x1xf32>
    %8 = arith.divf %6, %7 : vector<16x1xf32>
    %9 = vector.broadcast %8 : vector<16x1xf32> to vector<16x32xf32>
    %10 = arith.subf %4, %9 : vector<16x32xf32>
    %11 = arith.mulf %10, %10 : vector<16x32xf32>
    %cst_3 = arith.constant dense<0.000000e+00> : vector<16xf32>
    %12 = vector.multi_reduction <add>, %11, %cst_3 [1] : vector<16x32xf32> to vector<16xf32>
    %13 = vector.shape_cast %12 : vector<16xf32> to vector<16x1xf32>
    %cst_4 = arith.constant 3.200000e+01 : f32
    %14 = vector.broadcast %cst_4 : f32 to vector<16x1xf32>
    %15 = arith.divf %13, %14 : vector<16x1xf32>
    %16 = vector.broadcast %8 : vector<16x1xf32> to vector<16x32xf32>
    %17 = arith.subf %4, %16 : vector<16x32xf32>
    %cst_5 = arith.constant 9.99999996E-13 : f32
    %18 = vector.broadcast %cst_5 : f32 to vector<16x1xf32>
    %19 = arith.addf %15, %18 : vector<16x1xf32>
    %20 = math.rsqrt %19 : vector<16x1xf32>
    %21 = vector.broadcast %20 : vector<16x1xf32> to vector<16x32xf32>
    %22 = arith.mulf %17, %21 : vector<16x32xf32>
    %c0_6 = arith.constant 0 : index
    %c0_7 = arith.constant 0 : index
    %23 = vector.load %arg4[%c0_6, %c0_7] : memref<1x32xf32, #tpu.memory_space<vmem>>, vector<1x32xf32>
    %24 = vector.broadcast %23 : vector<1x32xf32> to vector<16x32xf32>
    %25 = arith.mulf %22, %24 : vector<16x32xf32>
    %c0_8 = arith.constant 0 : index
    %c0_9 = arith.constant 0 : index
    %26 = vector.load %arg5[%c0_8, %c0_9] : memref<1x32xf32, #tpu.memory_space<vmem>>, vector<1x32xf32>
    %27 = vector.broadcast %26 : vector<1x32xf32> to vector<16x32xf32>
    %28 = arith.addf %25, %27 : vector<16x32xf32>
    %29 = arith.truncf %28 : vector<16x32xf32> to vector<16x32xbf16>
    %c0_10 = arith.constant 0 : index
    %c0_11 = arith.constant 0 : index
    %30 = vector.load %arg9[%c0_10, %c0_11] : memref<16x96xf32, #tpu.memory_space<vmem>>, vector<16x96xf32>
    %c0_12 = arith.constant 0 : index
    %c0_13 = arith.constant 0 : index
    %31 = vector.load %arg6[%c0_12, %c0_13] : memref<32x96xbf16, #tpu.memory_space<vmem>>, vector<32x96xbf16>
    %cst_14 = arith.constant dense<0.000000e+00> : vector<16x96xf32>
    %32 = tpu.matmul %29, %31, %cst_14 {dimension_numbers = #tpu.dot_dimension_numbers<[1], [0], [0], [1], [0, 0, 1, 1], [], []>} : vector<16x32xbf16>, vector<32x96xbf16>, vector<16x96xf32> -> vector<16x96xf32>
    %33 = arith.addf %30, %32 : vector<16x96xf32>
    %c0_15 = arith.constant 0 : index
    %c0_16 = arith.constant 0 : index
    %34 = vector.load %arg9[%c0_15, %c0_16] : memref<16x96xf32, #tpu.memory_space<vmem>>, vector<16x96xf32>
    tpu.vector_store %arg9[%c0_15, %c0_16], %33 {strides = array<i32>} : memref<16x96xf32, #tpu.memory_space<vmem>>, vector<16x96xf32>,
    %c0_i32_17 = arith.constant 0 : i32
    %35 = arith.cmpi eq, %arg2, %c0_i32_17 : i32
    %36 = arith.extui %35 : i1 to i32
    %c0_i32_18 = arith.constant 0 : i32
    %37 = arith.cmpi ne, %36, %c0_i32_18 : i32
    scf.if %37 {
      %c0_19 = arith.constant 0 : index
      %c0_20 = arith.constant 0 : index
      %38 = vector.load %arg9[%c0_19, %c0_20] : memref<16x96xf32, #tpu.memory_space<vmem>>, vector<16x96xf32>
      %c0_21 = arith.constant 0 : index
      %c0_22 = arith.constant 0 : index
      %39 = vector.load %arg7[%c0_21, %c0_22] : memref<1x96xf32, #tpu.memory_space<vmem>>, vector<1x96xf32>
      %40 = vector.broadcast %39 : vector<1x96xf32> to vector<16x96xf32>
      %41 = arith.addf %38, %40 : vector<16x96xf32>
      %42 = arith.truncf %41 : vector<16x96xf32> to vector<16x96xbf16>
      %c0_23 = arith.constant 0 : index
      %c0_24 = arith.constant 0 : index
      %43 = vector.load %arg8[%c0_23, %c0_24] : memref<16x96xbf16, #tpu.memory_space<vmem>>, vector<16x96xbf16>
      tpu.vector_store %arg8[%c0_23, %c0_24], %42 {strides = array<i32>} : memref<16x96xbf16, #tpu.memory_space<vmem>>, vector<16x96xbf16>,
    } else {
    }
    return
  }
  func.func @transform_0(%arg0: i32, %arg1: i32, %arg2: i32) -> (i32, i32) {
    %c0_i32 = arith.constant 0 : i32
    return %arg0, %arg2 : i32, i32
  }
  func.func @transform_1(%arg0: i32, %arg1: i32, %arg2: i32) -> (i32, i32) {
    %c0_i32 = arith.constant 0 : i32
    %c0_i32_0 = arith.constant 0 : i32
    %c0_i32_1 = arith.constant 0 : i32
    return %c0_i32, %c0_i32_0 : i32, i32
  }
  func.func @transform_2(%arg0: i32, %arg1: i32, %arg2: i32) -> (i32, i32) {
    %c0_i32 = arith.constant 0 : i32
    %c0_i32_0 = arith.constant 0 : i32
    %c0_i32_1 = arith.constant 0 : i32
    return %c0_i32, %c0_i32_0 : i32, i32
  }
  func.func @transform_3(%arg0: i32, %arg1: i32, %arg2: i32) -> (i32, i32) {
    %c0_i32 = arith.constant 0 : i32
    return %arg2, %arg1 : i32, i32
  }
  func.func @transform_4(%arg0: i32, %arg1: i32, %arg2: i32) -> (i32, i32) {
    %c0_i32 = arith.constant 0 : i32
    %c0_i32_0 = arith.constant 0 : i32
    return %c0_i32, %arg1 : i32, i32
  }
  func.func @transform_5(%arg0: i32, %arg1: i32, %arg2: i32) -> (i32, i32) {
    %c0_i32 = arith.constant 0 : i32
    return %arg0, %arg1 : i32, i32
  }
}

module attributes {stable_mosaic.version = 11 : i64} {
  func.func @_mha_self_kernel(%arg0: i32, %arg1: memref<1x8x96xbf16, #tpu.memory_space<vmem>>, %arg2: memref<1x1x8xbf16, #tpu.memory_space<vmem>>, %arg3: memref<1x8x32xbf16, #tpu.memory_space<vmem>>) attributes {dimension_semantics = [#tpu.dimension_semantics<parallel>], iteration_bounds = array<i64: 2>, scalar_prefetch = 0 : i64, scratch_operands = 0 : i64, tpu.core_type = #tpu.core_type<tc>, window_params = [{transform_indices = @transform_0, window_bounds = array<i64: 1, 8, 96>}, {transform_indices = @transform_1, window_bounds = array<i64: 1, 1, 8>}, {transform_indices = @transform_2, window_bounds = array<i64: 1, 8, 32>}]} {
    %c0 = arith.constant 0 : index
    %c0_0 = arith.constant 0 : index
    %c0_1 = arith.constant 0 : index
    %0 = vector.load %arg2[%c0, %c0_0, %c0_1] : memref<1x1x8xbf16, #tpu.memory_space<vmem>>, vector<1x1x8xbf16>
    %1 = vector.shape_cast %0 : vector<1x1x8xbf16> to vector<1x8xbf16>
    %2 = arith.extf %1 : vector<1x8xbf16> to vector<1x8xf32>
    %c0_2 = arith.constant 0 : index
    %c0_3 = arith.constant 0 : index
    %c0_4 = arith.constant 0 : index
    %3 = vector.load %arg1[%c0_2, %c0_3, %c0_4] : memref<1x8x96xbf16, #tpu.memory_space<vmem>>, vector<1x8x8xbf16>
    %4 = vector.shape_cast %3 : vector<1x8x8xbf16> to vector<8x8xbf16>
    %c0_5 = arith.constant 0 : index
    %c0_6 = arith.constant 0 : index
    %c32 = arith.constant 32 : index
    %5 = vector.load %arg1[%c0_5, %c0_6, %c32] : memref<1x8x96xbf16, #tpu.memory_space<vmem>>, vector<1x8x8xbf16>
    %6 = vector.shape_cast %5 : vector<1x8x8xbf16> to vector<8x8xbf16>
    %c0_7 = arith.constant 0 : index
    %c0_8 = arith.constant 0 : index
    %c64 = arith.constant 64 : index
    %7 = vector.load %arg1[%c0_7, %c0_8, %c64] : memref<1x8x96xbf16, #tpu.memory_space<vmem>>, vector<1x8x8xbf16>
    %8 = vector.shape_cast %7 : vector<1x8x8xbf16> to vector<8x8xbf16>
    %cst = arith.constant dense<0.000000e+00> : vector<8x8xf32>
    %9 = tpu.matmul %4, %6, %cst {dimension_numbers = #tpu.dot_dimension_numbers<[1], [1], [0], [0], [0, 0, 1, 0], [], []>} : vector<8x8xbf16>, vector<8x8xbf16>, vector<8x8xf32> -> vector<8x8xf32>
    %10 = vector.broadcast %2 : vector<1x8xf32> to vector<8x8xf32>
    %11 = arith.addf %9, %10 : vector<8x8xf32>
    %cst_9 = arith.constant dense<0xFF800000> : vector<8xf32>
    %12 = vector.multi_reduction <maximumf>, %11, %cst_9 [1] : vector<8x8xf32> to vector<8xf32>
    %13 = vector.shape_cast %12 : vector<8xf32> to vector<8x1xf32>
    %cst_10 = arith.constant -5.000000e+29 : f32
    %14 = vector.broadcast %cst_10 : f32 to vector<8x1xf32>
    %15 = arith.cmpf ogt, %13, %14 : vector<8x1xf32>
    %16 = arith.extui %15 : vector<8x1xi1> to vector<8x1xi32>
    %17 = arith.sitofp %16 : vector<8x1xi32> to vector<8x1xf32>
    %18 = vector.broadcast %13 : vector<8x1xf32> to vector<8x8xf32>
    %19 = arith.subf %11, %18 : vector<8x8xf32>
    %20 = math.exp %19 : vector<8x8xf32>
    %cst_11 = arith.constant dense<0.000000e+00> : vector<8xf32>
    %21 = vector.multi_reduction <add>, %20, %cst_11 [1] : vector<8x8xf32> to vector<8xf32>
    %22 = vector.shape_cast %21 : vector<8xf32> to vector<8x1xf32>
    %23 = arith.truncf %20 : vector<8x8xf32> to vector<8x8xbf16>
    %cst_12 = arith.constant 1.000000e-30 : f32
    %24 = vector.broadcast %cst_12 : f32 to vector<8x1xf32>
    %25 = arith.addf %22, %24 : vector<8x1xf32>
    %26 = tpu.reciprocal %25 {approx = true} : vector<8x1xf32> -> vector<8x1xf32>
    %27 = arith.mulf %26, %17 : vector<8x1xf32>
    %cst_13 = arith.constant dense<0.000000e+00> : vector<8x8xf32>
    %28 = tpu.matmul %23, %8, %cst_13 {dimension_numbers = #tpu.dot_dimension_numbers<[1], [0], [0], [1], [0, 0, 1, 1], [], []>} : vector<8x8xbf16>, vector<8x8xbf16>, vector<8x8xf32> -> vector<8x8xf32>
    %29 = vector.broadcast %27 : vector<8x1xf32> to vector<8x8xf32>
    %30 = arith.mulf %28, %29 : vector<8x8xf32>
    %31 = arith.truncf %30 : vector<8x8xf32> to vector<8x8xbf16>
    %c0_14 = arith.constant 0 : index
    %c0_15 = arith.constant 0 : index
    %c0_16 = arith.constant 0 : index
    %32 = vector.load %arg3[%c0_14, %c0_15, %c0_16] : memref<1x8x32xbf16, #tpu.memory_space<vmem>>, vector<1x8x8xbf16>
    %33 = vector.shape_cast %32 : vector<1x8x8xbf16> to vector<8x8xbf16>
    %34 = vector.shape_cast %31 : vector<8x8xbf16> to vector<1x8x8xbf16>
    tpu.vector_store %arg3[%c0_14, %c0_15, %c0_16], %34 {strides = array<i32>} : memref<1x8x32xbf16, #tpu.memory_space<vmem>>, vector<1x8x8xbf16>,
    %c0_17 = arith.constant 0 : index
    %c0_18 = arith.constant 0 : index
    %c8 = arith.constant 8 : index
    %35 = vector.load %arg1[%c0_17, %c0_18, %c8] : memref<1x8x96xbf16, #tpu.memory_space<vmem>>, vector<1x8x8xbf16>
    %36 = vector.shape_cast %35 : vector<1x8x8xbf16> to vector<8x8xbf16>
    %c0_19 = arith.constant 0 : index
    %c0_20 = arith.constant 0 : index
    %c40 = arith.constant 40 : index
    %37 = vector.load %arg1[%c0_19, %c0_20, %c40] : memref<1x8x96xbf16, #tpu.memory_space<vmem>>, vector<1x8x8xbf16>
    %38 = vector.shape_cast %37 : vector<1x8x8xbf16> to vector<8x8xbf16>
    %c0_21 = arith.constant 0 : index
    %c0_22 = arith.constant 0 : index
    %c72 = arith.constant 72 : index
    %39 = vector.load %arg1[%c0_21, %c0_22, %c72] : memref<1x8x96xbf16, #tpu.memory_space<vmem>>, vector<1x8x8xbf16>
    %40 = vector.shape_cast %39 : vector<1x8x8xbf16> to vector<8x8xbf16>
    %cst_23 = arith.constant dense<0.000000e+00> : vector<8x8xf32>
    %41 = tpu.matmul %36, %38, %cst_23 {dimension_numbers = #tpu.dot_dimension_numbers<[1], [1], [0], [0], [0, 0, 1, 0], [], []>} : vector<8x8xbf16>, vector<8x8xbf16>, vector<8x8xf32> -> vector<8x8xf32>
    %42 = vector.broadcast %2 : vector<1x8xf32> to vector<8x8xf32>
    %43 = arith.addf %41, %42 : vector<8x8xf32>
    %cst_24 = arith.constant dense<0xFF800000> : vector<8xf32>
    %44 = vector.multi_reduction <maximumf>, %43, %cst_24 [1] : vector<8x8xf32> to vector<8xf32>
    %45 = vector.shape_cast %44 : vector<8xf32> to vector<8x1xf32>
    %cst_25 = arith.constant -5.000000e+29 : f32
    %46 = vector.broadcast %cst_25 : f32 to vector<8x1xf32>
    %47 = arith.cmpf ogt, %45, %46 : vector<8x1xf32>
    %48 = arith.extui %47 : vector<8x1xi1> to vector<8x1xi32>
    %49 = arith.sitofp %48 : vector<8x1xi32> to vector<8x1xf32>
    %50 = vector.broadcast %45 : vector<8x1xf32> to vector<8x8xf32>
    %51 = arith.subf %43, %50 : vector<8x8xf32>
    %52 = math.exp %51 : vector<8x8xf32>
    %cst_26 = arith.constant dense<0.000000e+00> : vector<8xf32>
    %53 = vector.multi_reduction <add>, %52, %cst_26 [1] : vector<8x8xf32> to vector<8xf32>
    %54 = vector.shape_cast %53 : vector<8xf32> to vector<8x1xf32>
    %55 = arith.truncf %52 : vector<8x8xf32> to vector<8x8xbf16>
    %cst_27 = arith.constant 1.000000e-30 : f32
    %56 = vector.broadcast %cst_27 : f32 to vector<8x1xf32>
    %57 = arith.addf %54, %56 : vector<8x1xf32>
    %58 = tpu.reciprocal %57 {approx = true} : vector<8x1xf32> -> vector<8x1xf32>
    %59 = arith.mulf %58, %49 : vector<8x1xf32>
    %cst_28 = arith.constant dense<0.000000e+00> : vector<8x8xf32>
    %60 = tpu.matmul %55, %40, %cst_28 {dimension_numbers = #tpu.dot_dimension_numbers<[1], [0], [0], [1], [0, 0, 1, 1], [], []>} : vector<8x8xbf16>, vector<8x8xbf16>, vector<8x8xf32> -> vector<8x8xf32>
    %61 = vector.broadcast %59 : vector<8x1xf32> to vector<8x8xf32>
    %62 = arith.mulf %60, %61 : vector<8x8xf32>
    %63 = arith.truncf %62 : vector<8x8xf32> to vector<8x8xbf16>
    %c0_29 = arith.constant 0 : index
    %c0_30 = arith.constant 0 : index
    %c8_31 = arith.constant 8 : index
    %64 = vector.load %arg3[%c0_29, %c0_30, %c8_31] : memref<1x8x32xbf16, #tpu.memory_space<vmem>>, vector<1x8x8xbf16>
    %65 = vector.shape_cast %64 : vector<1x8x8xbf16> to vector<8x8xbf16>
    %66 = vector.shape_cast %63 : vector<8x8xbf16> to vector<1x8x8xbf16>
    tpu.vector_store %arg3[%c0_29, %c0_30, %c8_31], %66 {strides = array<i32>} : memref<1x8x32xbf16, #tpu.memory_space<vmem>>, vector<1x8x8xbf16>,
    %c0_32 = arith.constant 0 : index
    %c0_33 = arith.constant 0 : index
    %c16 = arith.constant 16 : index
    %67 = vector.load %arg1[%c0_32, %c0_33, %c16] : memref<1x8x96xbf16, #tpu.memory_space<vmem>>, vector<1x8x8xbf16>
    %68 = vector.shape_cast %67 : vector<1x8x8xbf16> to vector<8x8xbf16>
    %c0_34 = arith.constant 0 : index
    %c0_35 = arith.constant 0 : index
    %c48 = arith.constant 48 : index
    %69 = vector.load %arg1[%c0_34, %c0_35, %c48] : memref<1x8x96xbf16, #tpu.memory_space<vmem>>, vector<1x8x8xbf16>
    %70 = vector.shape_cast %69 : vector<1x8x8xbf16> to vector<8x8xbf16>
    %c0_36 = arith.constant 0 : index
    %c0_37 = arith.constant 0 : index
    %c80 = arith.constant 80 : index
    %71 = vector.load %arg1[%c0_36, %c0_37, %c80] : memref<1x8x96xbf16, #tpu.memory_space<vmem>>, vector<1x8x8xbf16>
    %72 = vector.shape_cast %71 : vector<1x8x8xbf16> to vector<8x8xbf16>
    %cst_38 = arith.constant dense<0.000000e+00> : vector<8x8xf32>
    %73 = tpu.matmul %68, %70, %cst_38 {dimension_numbers = #tpu.dot_dimension_numbers<[1], [1], [0], [0], [0, 0, 1, 0], [], []>} : vector<8x8xbf16>, vector<8x8xbf16>, vector<8x8xf32> -> vector<8x8xf32>
    %74 = vector.broadcast %2 : vector<1x8xf32> to vector<8x8xf32>
    %75 = arith.addf %73, %74 : vector<8x8xf32>
    %cst_39 = arith.constant dense<0xFF800000> : vector<8xf32>
    %76 = vector.multi_reduction <maximumf>, %75, %cst_39 [1] : vector<8x8xf32> to vector<8xf32>
    %77 = vector.shape_cast %76 : vector<8xf32> to vector<8x1xf32>
    %cst_40 = arith.constant -5.000000e+29 : f32
    %78 = vector.broadcast %cst_40 : f32 to vector<8x1xf32>
    %79 = arith.cmpf ogt, %77, %78 : vector<8x1xf32>
    %80 = arith.extui %79 : vector<8x1xi1> to vector<8x1xi32>
    %81 = arith.sitofp %80 : vector<8x1xi32> to vector<8x1xf32>
    %82 = vector.broadcast %77 : vector<8x1xf32> to vector<8x8xf32>
    %83 = arith.subf %75, %82 : vector<8x8xf32>
    %84 = math.exp %83 : vector<8x8xf32>
    %cst_41 = arith.constant dense<0.000000e+00> : vector<8xf32>
    %85 = vector.multi_reduction <add>, %84, %cst_41 [1] : vector<8x8xf32> to vector<8xf32>
    %86 = vector.shape_cast %85 : vector<8xf32> to vector<8x1xf32>
    %87 = arith.truncf %84 : vector<8x8xf32> to vector<8x8xbf16>
    %cst_42 = arith.constant 1.000000e-30 : f32
    %88 = vector.broadcast %cst_42 : f32 to vector<8x1xf32>
    %89 = arith.addf %86, %88 : vector<8x1xf32>
    %90 = tpu.reciprocal %89 {approx = true} : vector<8x1xf32> -> vector<8x1xf32>
    %91 = arith.mulf %90, %81 : vector<8x1xf32>
    %cst_43 = arith.constant dense<0.000000e+00> : vector<8x8xf32>
    %92 = tpu.matmul %87, %72, %cst_43 {dimension_numbers = #tpu.dot_dimension_numbers<[1], [0], [0], [1], [0, 0, 1, 1], [], []>} : vector<8x8xbf16>, vector<8x8xbf16>, vector<8x8xf32> -> vector<8x8xf32>
    %93 = vector.broadcast %91 : vector<8x1xf32> to vector<8x8xf32>
    %94 = arith.mulf %92, %93 : vector<8x8xf32>
    %95 = arith.truncf %94 : vector<8x8xf32> to vector<8x8xbf16>
    %c0_44 = arith.constant 0 : index
    %c0_45 = arith.constant 0 : index
    %c16_46 = arith.constant 16 : index
    %96 = vector.load %arg3[%c0_44, %c0_45, %c16_46] : memref<1x8x32xbf16, #tpu.memory_space<vmem>>, vector<1x8x8xbf16>
    %97 = vector.shape_cast %96 : vector<1x8x8xbf16> to vector<8x8xbf16>
    %98 = vector.shape_cast %95 : vector<8x8xbf16> to vector<1x8x8xbf16>
    tpu.vector_store %arg3[%c0_44, %c0_45, %c16_46], %98 {strides = array<i32>} : memref<1x8x32xbf16, #tpu.memory_space<vmem>>, vector<1x8x8xbf16>,
    %c0_47 = arith.constant 0 : index
    %c0_48 = arith.constant 0 : index
    %c24 = arith.constant 24 : index
    %99 = vector.load %arg1[%c0_47, %c0_48, %c24] : memref<1x8x96xbf16, #tpu.memory_space<vmem>>, vector<1x8x8xbf16>
    %100 = vector.shape_cast %99 : vector<1x8x8xbf16> to vector<8x8xbf16>
    %c0_49 = arith.constant 0 : index
    %c0_50 = arith.constant 0 : index
    %c56 = arith.constant 56 : index
    %101 = vector.load %arg1[%c0_49, %c0_50, %c56] : memref<1x8x96xbf16, #tpu.memory_space<vmem>>, vector<1x8x8xbf16>
    %102 = vector.shape_cast %101 : vector<1x8x8xbf16> to vector<8x8xbf16>
    %c0_51 = arith.constant 0 : index
    %c0_52 = arith.constant 0 : index
    %c88 = arith.constant 88 : index
    %103 = vector.load %arg1[%c0_51, %c0_52, %c88] : memref<1x8x96xbf16, #tpu.memory_space<vmem>>, vector<1x8x8xbf16>
    %104 = vector.shape_cast %103 : vector<1x8x8xbf16> to vector<8x8xbf16>
    %cst_53 = arith.constant dense<0.000000e+00> : vector<8x8xf32>
    %105 = tpu.matmul %100, %102, %cst_53 {dimension_numbers = #tpu.dot_dimension_numbers<[1], [1], [0], [0], [0, 0, 1, 0], [], []>} : vector<8x8xbf16>, vector<8x8xbf16>, vector<8x8xf32> -> vector<8x8xf32>
    %106 = vector.broadcast %2 : vector<1x8xf32> to vector<8x8xf32>
    %107 = arith.addf %105, %106 : vector<8x8xf32>
    %cst_54 = arith.constant dense<0xFF800000> : vector<8xf32>
    %108 = vector.multi_reduction <maximumf>, %107, %cst_54 [1] : vector<8x8xf32> to vector<8xf32>
    %109 = vector.shape_cast %108 : vector<8xf32> to vector<8x1xf32>
    %cst_55 = arith.constant -5.000000e+29 : f32
    %110 = vector.broadcast %cst_55 : f32 to vector<8x1xf32>
    %111 = arith.cmpf ogt, %109, %110 : vector<8x1xf32>
    %112 = arith.extui %111 : vector<8x1xi1> to vector<8x1xi32>
    %113 = arith.sitofp %112 : vector<8x1xi32> to vector<8x1xf32>
    %114 = vector.broadcast %109 : vector<8x1xf32> to vector<8x8xf32>
    %115 = arith.subf %107, %114 : vector<8x8xf32>
    %116 = math.exp %115 : vector<8x8xf32>
    %cst_56 = arith.constant dense<0.000000e+00> : vector<8xf32>
    %117 = vector.multi_reduction <add>, %116, %cst_56 [1] : vector<8x8xf32> to vector<8xf32>
    %118 = vector.shape_cast %117 : vector<8xf32> to vector<8x1xf32>
    %119 = arith.truncf %116 : vector<8x8xf32> to vector<8x8xbf16>
    %cst_57 = arith.constant 1.000000e-30 : f32
    %120 = vector.broadcast %cst_57 : f32 to vector<8x1xf32>
    %121 = arith.addf %118, %120 : vector<8x1xf32>
    %122 = tpu.reciprocal %121 {approx = true} : vector<8x1xf32> -> vector<8x1xf32>
    %123 = arith.mulf %122, %113 : vector<8x1xf32>
    %cst_58 = arith.constant dense<0.000000e+00> : vector<8x8xf32>
    %124 = tpu.matmul %119, %104, %cst_58 {dimension_numbers = #tpu.dot_dimension_numbers<[1], [0], [0], [1], [0, 0, 1, 1], [], []>} : vector<8x8xbf16>, vector<8x8xbf16>, vector<8x8xf32> -> vector<8x8xf32>
    %125 = vector.broadcast %123 : vector<8x1xf32> to vector<8x8xf32>
    %126 = arith.mulf %124, %125 : vector<8x8xf32>
    %127 = arith.truncf %126 : vector<8x8xf32> to vector<8x8xbf16>
    %c0_59 = arith.constant 0 : index
    %c0_60 = arith.constant 0 : index
    %c24_61 = arith.constant 24 : index
    %128 = vector.load %arg3[%c0_59, %c0_60, %c24_61] : memref<1x8x32xbf16, #tpu.memory_space<vmem>>, vector<1x8x8xbf16>
    %129 = vector.shape_cast %128 : vector<1x8x8xbf16> to vector<8x8xbf16>
    %130 = vector.shape_cast %127 : vector<8x8xbf16> to vector<1x8x8xbf16>
    tpu.vector_store %arg3[%c0_59, %c0_60, %c24_61], %130 {strides = array<i32>} : memref<1x8x32xbf16, #tpu.memory_space<vmem>>, vector<1x8x8xbf16>,
    return
  }
  func.func @transform_0(%arg0: i32) -> (i32, i32, i32) {
    %c0_i32 = arith.constant 0 : i32
    %c0_i32_0 = arith.constant 0 : i32
    %c0_i32_1 = arith.constant 0 : i32
    return %arg0, %c0_i32, %c0_i32_0 : i32, i32, i32
  }
  func.func @transform_1(%arg0: i32) -> (i32, i32, i32) {
    %c0_i32 = arith.constant 0 : i32
    %c0_i32_0 = arith.constant 0 : i32
    %c0_i32_1 = arith.constant 0 : i32
    return %arg0, %c0_i32, %c0_i32_0 : i32, i32, i32
  }
  func.func @transform_2(%arg0: i32) -> (i32, i32, i32) {
    %c0_i32 = arith.constant 0 : i32
    %c0_i32_0 = arith.constant 0 : i32
    %c0_i32_1 = arith.constant 0 : i32
    return %arg0, %c0_i32, %c0_i32_0 : i32, i32, i32
  }
}

module attributes {stable_mosaic.version = 11 : i64} {
  func.func @_ffn_kernel(%arg0: i32, %arg1: memref<16x32xbf16, #tpu.memory_space<vmem>>, %arg2: memref<1x32xf32, #tpu.memory_space<vmem>>, %arg3: memref<1x32xf32, #tpu.memory_space<vmem>>, %arg4: memref<32x64xbf16, #tpu.memory_space<vmem>>, %arg5: memref<1x64xf32, #tpu.memory_space<vmem>>, %arg6: memref<64x32xbf16, #tpu.memory_space<vmem>>, %arg7: memref<1x32xf32, #tpu.memory_space<vmem>>, %arg8: memref<16x32xbf16, #tpu.memory_space<vmem>>) attributes {dimension_semantics = [#tpu.dimension_semantics<parallel>], iteration_bounds = array<i64: 1>, scalar_prefetch = 0 : i64, scratch_operands = 0 : i64, tpu.core_type = #tpu.core_type<tc>, window_params = [{transform_indices = @transform_0, window_bounds = array<i64: 16, 32>}, {pipeline_mode = #tpu.pipeline_mode<synchronous>, transform_indices = @transform_1, window_bounds = array<i64: 1, 32>}, {pipeline_mode = #tpu.pipeline_mode<synchronous>, transform_indices = @transform_2, window_bounds = array<i64: 1, 32>}, {pipeline_mode = #tpu.pipeline_mode<synchronous>, transform_indices = @transform_3, window_bounds = array<i64: 32, 64>}, {pipeline_mode = #tpu.pipeline_mode<synchronous>, transform_indices = @transform_4, window_bounds = array<i64: 1, 64>}, {pipeline_mode = #tpu.pipeline_mode<synchronous>, transform_indices = @transform_5, window_bounds = array<i64: 64, 32>}, {pipeline_mode = #tpu.pipeline_mode<synchronous>, transform_indices = @transform_6, window_bounds = array<i64: 1, 32>}, {transform_indices = @transform_7, window_bounds = array<i64: 16, 32>}]} {
    %c0 = arith.constant 0 : index
    %c0_0 = arith.constant 0 : index
    %0 = vector.load %arg1[%c0, %c0_0] : memref<16x32xbf16, #tpu.memory_space<vmem>>, vector<16x32xbf16>
    %1 = arith.extf %0 : vector<16x32xbf16> to vector<16x32xf32>
    %cst = arith.constant dense<0.000000e+00> : vector<16xf32>
    %2 = vector.multi_reduction <add>, %1, %cst [1] : vector<16x32xf32> to vector<16xf32>
    %3 = vector.shape_cast %2 : vector<16xf32> to vector<16x1xf32>
    %cst_1 = arith.constant 3.200000e+01 : f32
    %4 = vector.broadcast %cst_1 : f32 to vector<16x1xf32>
    %5 = arith.divf %3, %4 : vector<16x1xf32>
    %6 = vector.broadcast %5 : vector<16x1xf32> to vector<16x32xf32>
    %7 = arith.subf %1, %6 : vector<16x32xf32>
    %8 = arith.mulf %7, %7 : vector<16x32xf32>
    %cst_2 = arith.constant dense<0.000000e+00> : vector<16xf32>
    %9 = vector.multi_reduction <add>, %8, %cst_2 [1] : vector<16x32xf32> to vector<16xf32>
    %10 = vector.shape_cast %9 : vector<16xf32> to vector<16x1xf32>
    %cst_3 = arith.constant 3.200000e+01 : f32
    %11 = vector.broadcast %cst_3 : f32 to vector<16x1xf32>
    %12 = arith.divf %10, %11 : vector<16x1xf32>
    %13 = vector.broadcast %5 : vector<16x1xf32> to vector<16x32xf32>
    %14 = arith.subf %1, %13 : vector<16x32xf32>
    %cst_4 = arith.constant 9.99999996E-13 : f32
    %15 = vector.broadcast %cst_4 : f32 to vector<16x1xf32>
    %16 = arith.addf %12, %15 : vector<16x1xf32>
    %17 = math.rsqrt %16 : vector<16x1xf32>
    %18 = vector.broadcast %17 : vector<16x1xf32> to vector<16x32xf32>
    %19 = arith.mulf %14, %18 : vector<16x32xf32>
    %c0_5 = arith.constant 0 : index
    %c0_6 = arith.constant 0 : index
    %20 = vector.load %arg2[%c0_5, %c0_6] : memref<1x32xf32, #tpu.memory_space<vmem>>, vector<1x32xf32>
    %21 = vector.broadcast %20 : vector<1x32xf32> to vector<16x32xf32>
    %22 = arith.mulf %19, %21 : vector<16x32xf32>
    %c0_7 = arith.constant 0 : index
    %c0_8 = arith.constant 0 : index
    %23 = vector.load %arg3[%c0_7, %c0_8] : memref<1x32xf32, #tpu.memory_space<vmem>>, vector<1x32xf32>
    %24 = vector.broadcast %23 : vector<1x32xf32> to vector<16x32xf32>
    %25 = arith.addf %22, %24 : vector<16x32xf32>
    %26 = arith.truncf %25 : vector<16x32xf32> to vector<16x32xbf16>
    %c0_9 = arith.constant 0 : index
    %c0_10 = arith.constant 0 : index
    %27 = vector.load %arg4[%c0_9, %c0_10] : memref<32x64xbf16, #tpu.memory_space<vmem>>, vector<32x64xbf16>
    %cst_11 = arith.constant dense<0.000000e+00> : vector<16x64xf32>
    %28 = tpu.matmul %26, %27, %cst_11 {dimension_numbers = #tpu.dot_dimension_numbers<[1], [0], [0], [1], [0, 0, 1, 1], [], []>} : vector<16x32xbf16>, vector<32x64xbf16>, vector<16x64xf32> -> vector<16x64xf32>
    %c0_12 = arith.constant 0 : index
    %c0_13 = arith.constant 0 : index
    %29 = vector.load %arg5[%c0_12, %c0_13] : memref<1x64xf32, #tpu.memory_space<vmem>>, vector<1x64xf32>
    %30 = vector.broadcast %29 : vector<1x64xf32> to vector<16x64xf32>
    %31 = arith.addf %28, %30 : vector<16x64xf32>
    %cst_14 = arith.constant 0.000000e+00 : f32
    %32 = vector.broadcast %cst_14 : f32 to vector<16x64xf32>
    %33 = arith.maximumf %31, %32 : vector<16x64xf32>
    %34 = arith.truncf %33 : vector<16x64xf32> to vector<16x64xbf16>
    %c0_15 = arith.constant 0 : index
    %c0_16 = arith.constant 0 : index
    %35 = vector.load %arg6[%c0_15, %c0_16] : memref<64x32xbf16, #tpu.memory_space<vmem>>, vector<64x32xbf16>
    %cst_17 = arith.constant dense<0.000000e+00> : vector<16x32xf32>
    %36 = tpu.matmul %34, %35, %cst_17 {dimension_numbers = #tpu.dot_dimension_numbers<[1], [0], [0], [1], [0, 0, 1, 1], [], []>} : vector<16x64xbf16>, vector<64x32xbf16>, vector<16x32xf32> -> vector<16x32xf32>
    %c0_18 = arith.constant 0 : index
    %c0_19 = arith.constant 0 : index
    %37 = vector.load %arg7[%c0_18, %c0_19] : memref<1x32xf32, #tpu.memory_space<vmem>>, vector<1x32xf32>
    %38 = vector.broadcast %37 : vector<1x32xf32> to vector<16x32xf32>
    %39 = arith.addf %36, %38 : vector<16x32xf32>
    %40 = arith.addf %1, %39 : vector<16x32xf32>
    %41 = arith.truncf %40 : vector<16x32xf32> to vector<16x32xbf16>
    %c0_20 = arith.constant 0 : index
    %c0_21 = arith.constant 0 : index
    %42 = vector.load %arg8[%c0_20, %c0_21] : memref<16x32xbf16, #tpu.memory_space<vmem>>, vector<16x32xbf16>
    tpu.vector_store %arg8[%c0_20, %c0_21], %41 {strides = array<i32>} : memref<16x32xbf16, #tpu.memory_space<vmem>>, vector<16x32xbf16>,
    return
  }
  func.func @transform_0(%arg0: i32) -> (i32, i32) {
    %c0_i32 = arith.constant 0 : i32
    %c0_i32_0 = arith.constant 0 : i32
    return %arg0, %c0_i32 : i32, i32
  }
  func.func @transform_1(%arg0: i32) -> (i32, i32) {
    %c0_i32 = arith.constant 0 : i32
    %c0_i32_0 = arith.constant 0 : i32
    %c0_i32_1 = arith.constant 0 : i32
    return %c0_i32, %c0_i32_0 : i32, i32
  }
  func.func @transform_2(%arg0: i32) -> (i32, i32) {
    %c0_i32 = arith.constant 0 : i32
    %c0_i32_0 = arith.constant 0 : i32
    %c0_i32_1 = arith.constant 0 : i32
    return %c0_i32, %c0_i32_0 : i32, i32
  }
  func.func @transform_3(%arg0: i32) -> (i32, i32) {
    %c0_i32 = arith.constant 0 : i32
    %c0_i32_0 = arith.constant 0 : i32
    %c0_i32_1 = arith.constant 0 : i32
    return %c0_i32, %c0_i32_0 : i32, i32
  }
  func.func @transform_4(%arg0: i32) -> (i32, i32) {
    %c0_i32 = arith.constant 0 : i32
    %c0_i32_0 = arith.constant 0 : i32
    %c0_i32_1 = arith.constant 0 : i32
    return %c0_i32, %c0_i32_0 : i32, i32
  }
  func.func @transform_5(%arg0: i32) -> (i32, i32) {
    %c0_i32 = arith.constant 0 : i32
    %c0_i32_0 = arith.constant 0 : i32
    %c0_i32_1 = arith.constant 0 : i32
    return %c0_i32, %c0_i32_0 : i32, i32
  }
  func.func @transform_6(%arg0: i32) -> (i32, i32) {
    %c0_i32 = arith.constant 0 : i32
    %c0_i32_0 = arith.constant 0 : i32
    %c0_i32_1 = arith.constant 0 : i32
    return %c0_i32, %c0_i32_0 : i32, i32
  }
  func.func @transform_7(%arg0: i32) -> (i32, i32) {
    %c0_i32 = arith.constant 0 : i32
    %c0_i32_0 = arith.constant 0 : i32
    return %arg0, %c0_i32 : i32, i32
  }
}

module attributes {stable_mosaic.version = 11 : i64} {
  func.func @_layernorm_kernel(%arg0: i32, %arg1: memref<16x32xbf16, #tpu.memory_space<vmem>>, %arg2: memref<1x32xf32, #tpu.memory_space<vmem>>, %arg3: memref<1x32xf32, #tpu.memory_space<vmem>>, %arg4: memref<16x32xbf16, #tpu.memory_space<vmem>>) attributes {dimension_semantics = [#tpu.dimension_semantics<parallel>], iteration_bounds = array<i64: 1>, scalar_prefetch = 0 : i64, scratch_operands = 0 : i64, tpu.core_type = #tpu.core_type<tc>, window_params = [{transform_indices = @transform_0, window_bounds = array<i64: 16, 32>}, {pipeline_mode = #tpu.pipeline_mode<synchronous>, transform_indices = @transform_1, window_bounds = array<i64: 1, 32>}, {pipeline_mode = #tpu.pipeline_mode<synchronous>, transform_indices = @transform_2, window_bounds = array<i64: 1, 32>}, {transform_indices = @transform_3, window_bounds = array<i64: 16, 32>}]} {
    %c0 = arith.constant 0 : index
    %c0_0 = arith.constant 0 : index
    %0 = vector.load %arg1[%c0, %c0_0] : memref<16x32xbf16, #tpu.memory_space<vmem>>, vector<16x32xbf16>
    %1 = arith.extf %0 : vector<16x32xbf16> to vector<16x32xf32>
    %cst = arith.constant dense<0.000000e+00> : vector<16xf32>
    %2 = vector.multi_reduction <add>, %1, %cst [1] : vector<16x32xf32> to vector<16xf32>
    %3 = vector.shape_cast %2 : vector<16xf32> to vector<16x1xf32>
    %cst_1 = arith.constant 3.200000e+01 : f32
    %4 = vector.broadcast %cst_1 : f32 to vector<16x1xf32>
    %5 = arith.divf %3, %4 : vector<16x1xf32>
    %6 = vector.broadcast %5 : vector<16x1xf32> to vector<16x32xf32>
    %7 = arith.subf %1, %6 : vector<16x32xf32>
    %8 = arith.mulf %7, %7 : vector<16x32xf32>
    %cst_2 = arith.constant dense<0.000000e+00> : vector<16xf32>
    %9 = vector.multi_reduction <add>, %8, %cst_2 [1] : vector<16x32xf32> to vector<16xf32>
    %10 = vector.shape_cast %9 : vector<16xf32> to vector<16x1xf32>
    %cst_3 = arith.constant 3.200000e+01 : f32
    %11 = vector.broadcast %cst_3 : f32 to vector<16x1xf32>
    %12 = arith.divf %10, %11 : vector<16x1xf32>
    %13 = vector.broadcast %5 : vector<16x1xf32> to vector<16x32xf32>
    %14 = arith.subf %1, %13 : vector<16x32xf32>
    %cst_4 = arith.constant 9.99999996E-13 : f32
    %15 = vector.broadcast %cst_4 : f32 to vector<16x1xf32>
    %16 = arith.addf %12, %15 : vector<16x1xf32>
    %17 = math.rsqrt %16 : vector<16x1xf32>
    %18 = vector.broadcast %17 : vector<16x1xf32> to vector<16x32xf32>
    %19 = arith.mulf %14, %18 : vector<16x32xf32>
    %c0_5 = arith.constant 0 : index
    %c0_6 = arith.constant 0 : index
    %20 = vector.load %arg2[%c0_5, %c0_6] : memref<1x32xf32, #tpu.memory_space<vmem>>, vector<1x32xf32>
    %21 = vector.broadcast %20 : vector<1x32xf32> to vector<16x32xf32>
    %22 = arith.mulf %19, %21 : vector<16x32xf32>
    %c0_7 = arith.constant 0 : index
    %c0_8 = arith.constant 0 : index
    %23 = vector.load %arg3[%c0_7, %c0_8] : memref<1x32xf32, #tpu.memory_space<vmem>>, vector<1x32xf32>
    %24 = vector.broadcast %23 : vector<1x32xf32> to vector<16x32xf32>
    %25 = arith.addf %22, %24 : vector<16x32xf32>
    %26 = arith.truncf %25 : vector<16x32xf32> to vector<16x32xbf16>
    %c0_9 = arith.constant 0 : index
    %c0_10 = arith.constant 0 : index
    %27 = vector.load %arg4[%c0_9, %c0_10] : memref<16x32xbf16, #tpu.memory_space<vmem>>, vector<16x32xbf16>
    tpu.vector_store %arg4[%c0_9, %c0_10], %26 {strides = array<i32>} : memref<16x32xbf16, #tpu.memory_space<vmem>>, vector<16x32xbf16>,
    return
  }
  func.func @transform_0(%arg0: i32) -> (i32, i32) {
    %c0_i32 = arith.constant 0 : i32
    %c0_i32_0 = arith.constant 0 : i32
    return %arg0, %c0_i32 : i32, i32
  }
  func.func @transform_1(%arg0: i32) -> (i32, i32) {
    %c0_i32 = arith.constant 0 : i32
    %c0_i32_0 = arith.constant 0 : i32
    %c0_i32_1 = arith.constant 0 : i32
    return %c0_i32, %c0_i32_0 : i32, i32
  }
  func.func @transform_2(%arg0: i32) -> (i32, i32) {
    %c0_i32 = arith.constant 0 : i32
    %c0_i32_0 = arith.constant 0 : i32
    %c0_i32_1 = arith.constant 0 : i32
    return %c0_i32, %c0_i32_0 : i32, i32
  }
  func.func @transform_3(%arg0: i32) -> (i32, i32) {
    %c0_i32 = arith.constant 0 : i32
    %c0_i32_0 = arith.constant 0 : i32
    return %arg0, %c0_i32 : i32, i32
  }
}

module attributes {stable_mosaic.version = 11 : i64} {
  func.func @_dense_kernel(%arg0: i32, %arg1: i32, %arg2: i32, %arg3: memref<16x32xbf16, #tpu.memory_space<vmem>>, %arg4: memref<32x64xbf16, #tpu.memory_space<vmem>>, %arg5: memref<1x64xf32, #tpu.memory_space<vmem>>, %arg6: memref<16x64xbf16, #tpu.memory_space<vmem>>, %arg7: memref<16x64xf32, #tpu.memory_space<vmem>>) attributes {dimension_semantics = [#tpu.dimension_semantics<parallel>, #tpu.dimension_semantics<parallel>, #tpu.dimension_semantics<arbitrary>], iteration_bounds = array<i64: 1, 1, 1>, scalar_prefetch = 0 : i64, scratch_operands = 1 : i64, tpu.core_type = #tpu.core_type<tc>, window_params = [{transform_indices = @transform_0, window_bounds = array<i64: 16, 32>}, {transform_indices = @transform_1, window_bounds = array<i64: 32, 64>}, {transform_indices = @transform_2, window_bounds = array<i64: 1, 64>}, {transform_indices = @transform_3, window_bounds = array<i64: 16, 64>}]} {
    %c0_i32 = arith.constant 0 : i32
    %0 = arith.cmpi eq, %arg2, %c0_i32 : i32
    %1 = arith.extui %0 : i1 to i32
    %c0_i32_0 = arith.constant 0 : i32
    %2 = arith.cmpi ne, %1, %c0_i32_0 : i32
    scf.if %2 {
      %cst_10 = arith.constant 0.000000e+00 : f32
      %12 = vector.broadcast %cst_10 : f32 to vector<16x64xf32>
      %c0_11 = arith.constant 0 : index
      %c0_12 = arith.constant 0 : index
      %13 = vector.load %arg7[%c0_11, %c0_12] : memref<16x64xf32, #tpu.memory_space<vmem>>, vector<16x64xf32>
      tpu.vector_store %arg7[%c0_11, %c0_12], %12 {strides = array<i32>} : memref<16x64xf32, #tpu.memory_space<vmem>>, vector<16x64xf32>,
    } else {
    }
    %c0 = arith.constant 0 : index
    %c0_1 = arith.constant 0 : index
    %3 = vector.load %arg3[%c0, %c0_1] : memref<16x32xbf16, #tpu.memory_space<vmem>>, vector<16x32xbf16>
    %c0_2 = arith.constant 0 : index
    %c0_3 = arith.constant 0 : index
    %4 = vector.load %arg7[%c0_2, %c0_3] : memref<16x64xf32, #tpu.memory_space<vmem>>, vector<16x64xf32>
    %c0_4 = arith.constant 0 : index
    %c0_5 = arith.constant 0 : index
    %5 = vector.load %arg4[%c0_4, %c0_5] : memref<32x64xbf16, #tpu.memory_space<vmem>>, vector<32x64xbf16>
    %cst = arith.constant dense<0.000000e+00> : vector<16x64xf32>
    %6 = tpu.matmul %3, %5, %cst {dimension_numbers = #tpu.dot_dimension_numbers<[1], [0], [0], [1], [0, 0, 1, 1], [], []>} : vector<16x32xbf16>, vector<32x64xbf16>, vector<16x64xf32> -> vector<16x64xf32>
    %7 = arith.addf %4, %6 : vector<16x64xf32>
    %c0_6 = arith.constant 0 : index
    %c0_7 = arith.constant 0 : index
    %8 = vector.load %arg7[%c0_6, %c0_7] : memref<16x64xf32, #tpu.memory_space<vmem>>, vector<16x64xf32>
    tpu.vector_store %arg7[%c0_6, %c0_7], %7 {strides = array<i32>} : memref<16x64xf32, #tpu.memory_space<vmem>>, vector<16x64xf32>,
    %c0_i32_8 = arith.constant 0 : i32
    %9 = arith.cmpi eq, %arg2, %c0_i32_8 : i32
    %10 = arith.extui %9 : i1 to i32
    %c0_i32_9 = arith.constant 0 : i32
    %11 = arith.cmpi ne, %10, %c0_i32_9 : i32
    scf.if %11 {
      %c0_10 = arith.constant 0 : index
      %c0_11 = arith.constant 0 : index
      %12 = vector.load %arg7[%c0_10, %c0_11] : memref<16x64xf32, #tpu.memory_space<vmem>>, vector<16x64xf32>
      %c0_12 = arith.constant 0 : index
      %c0_13 = arith.constant 0 : index
      %13 = vector.load %arg5[%c0_12, %c0_13] : memref<1x64xf32, #tpu.memory_space<vmem>>, vector<1x64xf32>
      %14 = vector.broadcast %13 : vector<1x64xf32> to vector<16x64xf32>
      %15 = arith.addf %12, %14 : vector<16x64xf32>
      %16 = arith.truncf %15 : vector<16x64xf32> to vector<16x64xbf16>
      %c0_14 = arith.constant 0 : index
      %c0_15 = arith.constant 0 : index
      %17 = vector.load %arg6[%c0_14, %c0_15] : memref<16x64xbf16, #tpu.memory_space<vmem>>, vector<16x64xbf16>
      tpu.vector_store %arg6[%c0_14, %c0_15], %16 {strides = array<i32>} : memref<16x64xbf16, #tpu.memory_space<vmem>>, vector<16x64xbf16>,
    } else {
    }
    return
  }
  func.func @transform_0(%arg0: i32, %arg1: i32, %arg2: i32) -> (i32, i32) {
    %c0_i32 = arith.constant 0 : i32
    return %arg0, %arg2 : i32, i32
  }
  func.func @transform_1(%arg0: i32, %arg1: i32, %arg2: i32) -> (i32, i32) {
    %c0_i32 = arith.constant 0 : i32
    return %arg2, %arg1 : i32, i32
  }
  func.func @transform_2(%arg0: i32, %arg1: i32, %arg2: i32) -> (i32, i32) {
    %c0_i32 = arith.constant 0 : i32
    %c0_i32_0 = arith.constant 0 : i32
    return %c0_i32, %arg1 : i32, i32
  }
  func.func @transform_3(%arg0: i32, %arg1: i32, %arg2: i32) -> (i32, i32) {
    %c0_i32 = arith.constant 0 : i32
    return %arg0, %arg1 : i32, i32
  }
}

module attributes {stable_mosaic.version = 11 : i64} {
  func.func @_dense_kernel(%arg0: i32, %arg1: i32, %arg2: i32, %arg3: memref<10x32xbf16, #tpu.memory_space<vmem>>, %arg4: memref<1x32xf32, #tpu.memory_space<vmem>>, %arg5: memref<1x32xf32, #tpu.memory_space<vmem>>, %arg6: memref<32x96xbf16, #tpu.memory_space<vmem>>, %arg7: memref<1x96xf32, #tpu.memory_space<vmem>>, %arg8: memref<10x96xbf16, #tpu.memory_space<vmem>>, %arg9: memref<10x96xf32, #tpu.memory_space<vmem>>) attributes {dimension_semantics = [#tpu.dimension_semantics<parallel>, #tpu.dimension_semantics<parallel>, #tpu.dimension_semantics<arbitrary>], iteration_bounds = array<i64: 1, 1, 1>, scalar_prefetch = 0 : i64, scratch_operands = 1 : i64, tpu.core_type = #tpu.core_type<tc>, window_params = [{transform_indices = @transform_0, window_bounds = array<i64: 10, 32>}, {pipeline_mode = #tpu.pipeline_mode<synchronous>, transform_indices = @transform_1, window_bounds = array<i64: 1, 32>}, {pipeline_mode = #tpu.pipeline_mode<synchronous>, transform_indices = @transform_2, window_bounds = array<i64: 1, 32>}, {transform_indices = @transform_3, window_bounds = array<i64: 32, 96>}, {transform_indices = @transform_4, window_bounds = array<i64: 1, 96>}, {transform_indices = @transform_5, window_bounds = array<i64: 10, 96>}]} {
    %c0_i32 = arith.constant 0 : i32
    %0 = arith.cmpi eq, %arg2, %c0_i32 : i32
    %1 = arith.extui %0 : i1 to i32
    %c0_i32_0 = arith.constant 0 : i32
    %2 = arith.cmpi ne, %1, %c0_i32_0 : i32
    scf.if %2 {
      %cst_19 = arith.constant 0.000000e+00 : f32
      %38 = vector.broadcast %cst_19 : f32 to vector<10x96xf32>
      %c0_20 = arith.constant 0 : index
      %c0_21 = arith.constant 0 : index
      %39 = vector.load %arg9[%c0_20, %c0_21] : memref<10x96xf32, #tpu.memory_space<vmem>>, vector<10x96xf32>
      tpu.vector_store %arg9[%c0_20, %c0_21], %38 {strides = array<i32>} : memref<10x96xf32, #tpu.memory_space<vmem>>, vector<10x96xf32>,
    } else {
    }
    %c0 = arith.constant 0 : index
    %c0_1 = arith.constant 0 : index
    %3 = vector.load %arg3[%c0, %c0_1] : memref<10x32xbf16, #tpu.memory_space<vmem>>, vector<10x32xbf16>
    %4 = arith.extf %3 : vector<10x32xbf16> to vector<10x32xf32>
    %cst = arith.constant dense<0.000000e+00> : vector<10xf32>
    %5 = vector.multi_reduction <add>, %4, %cst [1] : vector<10x32xf32> to vector<10xf32>
    %6 = vector.shape_cast %5 : vector<10xf32> to vector<10x1xf32>
    %cst_2 = arith.constant 3.200000e+01 : f32
    %7 = vector.broadcast %cst_2 : f32 to vector<10x1xf32>
    %8 = arith.divf %6, %7 : vector<10x1xf32>
    %9 = vector.broadcast %8 : vector<10x1xf32> to vector<10x32xf32>
    %10 = arith.subf %4, %9 : vector<10x32xf32>
    %11 = arith.mulf %10, %10 : vector<10x32xf32>
    %cst_3 = arith.constant dense<0.000000e+00> : vector<10xf32>
    %12 = vector.multi_reduction <add>, %11, %cst_3 [1] : vector<10x32xf32> to vector<10xf32>
    %13 = vector.shape_cast %12 : vector<10xf32> to vector<10x1xf32>
    %cst_4 = arith.constant 3.200000e+01 : f32
    %14 = vector.broadcast %cst_4 : f32 to vector<10x1xf32>
    %15 = arith.divf %13, %14 : vector<10x1xf32>
    %16 = vector.broadcast %8 : vector<10x1xf32> to vector<10x32xf32>
    %17 = arith.subf %4, %16 : vector<10x32xf32>
    %cst_5 = arith.constant 9.99999996E-13 : f32
    %18 = vector.broadcast %cst_5 : f32 to vector<10x1xf32>
    %19 = arith.addf %15, %18 : vector<10x1xf32>
    %20 = math.rsqrt %19 : vector<10x1xf32>
    %21 = vector.broadcast %20 : vector<10x1xf32> to vector<10x32xf32>
    %22 = arith.mulf %17, %21 : vector<10x32xf32>
    %c0_6 = arith.constant 0 : index
    %c0_7 = arith.constant 0 : index
    %23 = vector.load %arg4[%c0_6, %c0_7] : memref<1x32xf32, #tpu.memory_space<vmem>>, vector<1x32xf32>
    %24 = vector.broadcast %23 : vector<1x32xf32> to vector<10x32xf32>
    %25 = arith.mulf %22, %24 : vector<10x32xf32>
    %c0_8 = arith.constant 0 : index
    %c0_9 = arith.constant 0 : index
    %26 = vector.load %arg5[%c0_8, %c0_9] : memref<1x32xf32, #tpu.memory_space<vmem>>, vector<1x32xf32>
    %27 = vector.broadcast %26 : vector<1x32xf32> to vector<10x32xf32>
    %28 = arith.addf %25, %27 : vector<10x32xf32>
    %29 = arith.truncf %28 : vector<10x32xf32> to vector<10x32xbf16>
    %c0_10 = arith.constant 0 : index
    %c0_11 = arith.constant 0 : index
    %30 = vector.load %arg9[%c0_10, %c0_11] : memref<10x96xf32, #tpu.memory_space<vmem>>, vector<10x96xf32>
    %c0_12 = arith.constant 0 : index
    %c0_13 = arith.constant 0 : index
    %31 = vector.load %arg6[%c0_12, %c0_13] : memref<32x96xbf16, #tpu.memory_space<vmem>>, vector<32x96xbf16>
    %cst_14 = arith.constant dense<0.000000e+00> : vector<10x96xf32>
    %32 = tpu.matmul %29, %31, %cst_14 {dimension_numbers = #tpu.dot_dimension_numbers<[1], [0], [0], [1], [0, 0, 1, 1], [], []>} : vector<10x32xbf16>, vector<32x96xbf16>, vector<10x96xf32> -> vector<10x96xf32>
    %33 = arith.addf %30, %32 : vector<10x96xf32>
    %c0_15 = arith.constant 0 : index
    %c0_16 = arith.constant 0 : index
    %34 = vector.load %arg9[%c0_15, %c0_16] : memref<10x96xf32, #tpu.memory_space<vmem>>, vector<10x96xf32>
    tpu.vector_store %arg9[%c0_15, %c0_16], %33 {strides = array<i32>} : memref<10x96xf32, #tpu.memory_space<vmem>>, vector<10x96xf32>,
    %c0_i32_17 = arith.constant 0 : i32
    %35 = arith.cmpi eq, %arg2, %c0_i32_17 : i32
    %36 = arith.extui %35 : i1 to i32
    %c0_i32_18 = arith.constant 0 : i32
    %37 = arith.cmpi ne, %36, %c0_i32_18 : i32
    scf.if %37 {
      %c0_19 = arith.constant 0 : index
      %c0_20 = arith.constant 0 : index
      %38 = vector.load %arg9[%c0_19, %c0_20] : memref<10x96xf32, #tpu.memory_space<vmem>>, vector<10x96xf32>
      %c0_21 = arith.constant 0 : index
      %c0_22 = arith.constant 0 : index
      %39 = vector.load %arg7[%c0_21, %c0_22] : memref<1x96xf32, #tpu.memory_space<vmem>>, vector<1x96xf32>
      %40 = vector.broadcast %39 : vector<1x96xf32> to vector<10x96xf32>
      %41 = arith.addf %38, %40 : vector<10x96xf32>
      %42 = arith.truncf %41 : vector<10x96xf32> to vector<10x96xbf16>
      %c0_23 = arith.constant 0 : index
      %c0_24 = arith.constant 0 : index
      %43 = vector.load %arg8[%c0_23, %c0_24] : memref<10x96xbf16, #tpu.memory_space<vmem>>, vector<10x96xbf16>
      tpu.vector_store %arg8[%c0_23, %c0_24], %42 {strides = array<i32>} : memref<10x96xbf16, #tpu.memory_space<vmem>>, vector<10x96xbf16>,
    } else {
    }
    return
  }
  func.func @transform_0(%arg0: i32, %arg1: i32, %arg2: i32) -> (i32, i32) {
    %c0_i32 = arith.constant 0 : i32
    return %arg0, %arg2 : i32, i32
  }
  func.func @transform_1(%arg0: i32, %arg1: i32, %arg2: i32) -> (i32, i32) {
    %c0_i32 = arith.constant 0 : i32
    %c0_i32_0 = arith.constant 0 : i32
    %c0_i32_1 = arith.constant 0 : i32
    return %c0_i32, %c0_i32_0 : i32, i32
  }
  func.func @transform_2(%arg0: i32, %arg1: i32, %arg2: i32) -> (i32, i32) {
    %c0_i32 = arith.constant 0 : i32
    %c0_i32_0 = arith.constant 0 : i32
    %c0_i32_1 = arith.constant 0 : i32
    return %c0_i32, %c0_i32_0 : i32, i32
  }
  func.func @transform_3(%arg0: i32, %arg1: i32, %arg2: i32) -> (i32, i32) {
    %c0_i32 = arith.constant 0 : i32
    return %arg2, %arg1 : i32, i32
  }
  func.func @transform_4(%arg0: i32, %arg1: i32, %arg2: i32) -> (i32, i32) {
    %c0_i32 = arith.constant 0 : i32
    %c0_i32_0 = arith.constant 0 : i32
    return %c0_i32, %arg1 : i32, i32
  }
  func.func @transform_5(%arg0: i32, %arg1: i32, %arg2: i32) -> (i32, i32) {
    %c0_i32 = arith.constant 0 : i32
    return %arg0, %arg1 : i32, i32
  }
}

module attributes {stable_mosaic.version = 11 : i64} {
  func.func @_mha_self_kernel(%arg0: i32, %arg1: memref<1x5x96xbf16, #tpu.memory_space<vmem>>, %arg2: memref<1x5x5xbf16, #tpu.memory_space<vmem>>, %arg3: memref<1x5x32xbf16, #tpu.memory_space<vmem>>) attributes {dimension_semantics = [#tpu.dimension_semantics<parallel>], iteration_bounds = array<i64: 2>, scalar_prefetch = 0 : i64, scratch_operands = 0 : i64, tpu.core_type = #tpu.core_type<tc>, window_params = [{transform_indices = @transform_0, window_bounds = array<i64: 1, 5, 96>}, {transform_indices = @transform_1, window_bounds = array<i64: 1, 5, 5>}, {transform_indices = @transform_2, window_bounds = array<i64: 1, 5, 32>}]} {
    %c0 = arith.constant 0 : index
    %c0_0 = arith.constant 0 : index
    %c0_1 = arith.constant 0 : index
    %0 = vector.load %arg2[%c0, %c0_0, %c0_1] : memref<1x5x5xbf16, #tpu.memory_space<vmem>>, vector<1x5x5xbf16>
    %1 = vector.shape_cast %0 : vector<1x5x5xbf16> to vector<5x5xbf16>
    %2 = arith.extf %1 : vector<5x5xbf16> to vector<5x5xf32>
    %c0_2 = arith.constant 0 : index
    %c0_3 = arith.constant 0 : index
    %c0_4 = arith.constant 0 : index
    %3 = vector.load %arg1[%c0_2, %c0_3, %c0_4] : memref<1x5x96xbf16, #tpu.memory_space<vmem>>, vector<1x5x8xbf16>
    %4 = vector.shape_cast %3 : vector<1x5x8xbf16> to vector<5x8xbf16>
    %c0_5 = arith.constant 0 : index
    %c0_6 = arith.constant 0 : index
    %c32 = arith.constant 32 : index
    %5 = vector.load %arg1[%c0_5, %c0_6, %c32] : memref<1x5x96xbf16, #tpu.memory_space<vmem>>, vector<1x5x8xbf16>
    %6 = vector.shape_cast %5 : vector<1x5x8xbf16> to vector<5x8xbf16>
    %c0_7 = arith.constant 0 : index
    %c0_8 = arith.constant 0 : index
    %c64 = arith.constant 64 : index
    %7 = vector.load %arg1[%c0_7, %c0_8, %c64] : memref<1x5x96xbf16, #tpu.memory_space<vmem>>, vector<1x5x8xbf16>
    %8 = vector.shape_cast %7 : vector<1x5x8xbf16> to vector<5x8xbf16>
    %cst = arith.constant dense<0.000000e+00> : vector<5x5xf32>
    %9 = tpu.matmul %4, %6, %cst {dimension_numbers = #tpu.dot_dimension_numbers<[1], [1], [0], [0], [0, 0, 1, 0], [], []>} : vector<5x8xbf16>, vector<5x8xbf16>, vector<5x5xf32> -> vector<5x5xf32>
    %10 = arith.addf %9, %2 : vector<5x5xf32>
    %cst_9 = arith.constant dense<0xFF800000> : vector<5xf32>
    %11 = vector.multi_reduction <maximumf>, %10, %cst_9 [1] : vector<5x5xf32> to vector<5xf32>
    %12 = vector.shape_cast %11 : vector<5xf32> to vector<5x1xf32>
    %cst_10 = arith.constant -5.000000e+29 : f32
    %13 = vector.broadcast %cst_10 : f32 to vector<5x1xf32>
    %14 = arith.cmpf ogt, %12, %13 : vector<5x1xf32>
    %15 = arith.extui %14 : vector<5x1xi1> to vector<5x1xi32>
    %16 = arith.sitofp %15 : vector<5x1xi32> to vector<5x1xf32>
    %17 = vector.broadcast %12 : vector<5x1xf32> to vector<5x5xf32>
    %18 = arith.subf %10, %17 : vector<5x5xf32>
    %19 = math.exp %18 : vector<5x5xf32>
    %cst_11 = arith.constant dense<0.000000e+00> : vector<5xf32>
    %20 = vector.multi_reduction <add>, %19, %cst_11 [1] : vector<5x5xf32> to vector<5xf32>
    %21 = vector.shape_cast %20 : vector<5xf32> to vector<5x1xf32>
    %22 = arith.truncf %19 : vector<5x5xf32> to vector<5x5xbf16>
    %cst_12 = arith.constant 1.000000e-30 : f32
    %23 = vector.broadcast %cst_12 : f32 to vector<5x1xf32>
    %24 = arith.addf %21, %23 : vector<5x1xf32>
    %25 = tpu.reciprocal %24 {approx = true} : vector<5x1xf32> -> vector<5x1xf32>
    %26 = arith.mulf %25, %16 : vector<5x1xf32>
    %cst_13 = arith.constant dense<0.000000e+00> : vector<5x8xf32>
    %27 = tpu.matmul %22, %8, %cst_13 {dimension_numbers = #tpu.dot_dimension_numbers<[1], [0], [0], [1], [0, 0, 1, 1], [], []>} : vector<5x5xbf16>, vector<5x8xbf16>, vector<5x8xf32> -> vector<5x8xf32>
    %28 = vector.broadcast %26 : vector<5x1xf32> to vector<5x8xf32>
    %29 = arith.mulf %27, %28 : vector<5x8xf32>
    %30 = arith.truncf %29 : vector<5x8xf32> to vector<5x8xbf16>
    %c0_14 = arith.constant 0 : index
    %c0_15 = arith.constant 0 : index
    %c0_16 = arith.constant 0 : index
    %31 = vector.load %arg3[%c0_14, %c0_15, %c0_16] : memref<1x5x32xbf16, #tpu.memory_space<vmem>>, vector<1x5x8xbf16>
    %32 = vector.shape_cast %31 : vector<1x5x8xbf16> to vector<5x8xbf16>
    %33 = vector.shape_cast %30 : vector<5x8xbf16> to vector<1x5x8xbf16>
    tpu.vector_store %arg3[%c0_14, %c0_15, %c0_16], %33 {strides = array<i32>} : memref<1x5x32xbf16, #tpu.memory_space<vmem>>, vector<1x5x8xbf16>,
    %c0_17 = arith.constant 0 : index
    %c0_18 = arith.constant 0 : index
    %c8 = arith.constant 8 : index
    %34 = vector.load %arg1[%c0_17, %c0_18, %c8] : memref<1x5x96xbf16, #tpu.memory_space<vmem>>, vector<1x5x8xbf16>
    %35 = vector.shape_cast %34 : vector<1x5x8xbf16> to vector<5x8xbf16>
    %c0_19 = arith.constant 0 : index
    %c0_20 = arith.constant 0 : index
    %c40 = arith.constant 40 : index
    %36 = vector.load %arg1[%c0_19, %c0_20, %c40] : memref<1x5x96xbf16, #tpu.memory_space<vmem>>, vector<1x5x8xbf16>
    %37 = vector.shape_cast %36 : vector<1x5x8xbf16> to vector<5x8xbf16>
    %c0_21 = arith.constant 0 : index
    %c0_22 = arith.constant 0 : index
    %c72 = arith.constant 72 : index
    %38 = vector.load %arg1[%c0_21, %c0_22, %c72] : memref<1x5x96xbf16, #tpu.memory_space<vmem>>, vector<1x5x8xbf16>
    %39 = vector.shape_cast %38 : vector<1x5x8xbf16> to vector<5x8xbf16>
    %cst_23 = arith.constant dense<0.000000e+00> : vector<5x5xf32>
    %40 = tpu.matmul %35, %37, %cst_23 {dimension_numbers = #tpu.dot_dimension_numbers<[1], [1], [0], [0], [0, 0, 1, 0], [], []>} : vector<5x8xbf16>, vector<5x8xbf16>, vector<5x5xf32> -> vector<5x5xf32>
    %41 = arith.addf %40, %2 : vector<5x5xf32>
    %cst_24 = arith.constant dense<0xFF800000> : vector<5xf32>
    %42 = vector.multi_reduction <maximumf>, %41, %cst_24 [1] : vector<5x5xf32> to vector<5xf32>
    %43 = vector.shape_cast %42 : vector<5xf32> to vector<5x1xf32>
    %cst_25 = arith.constant -5.000000e+29 : f32
    %44 = vector.broadcast %cst_25 : f32 to vector<5x1xf32>
    %45 = arith.cmpf ogt, %43, %44 : vector<5x1xf32>
    %46 = arith.extui %45 : vector<5x1xi1> to vector<5x1xi32>
    %47 = arith.sitofp %46 : vector<5x1xi32> to vector<5x1xf32>
    %48 = vector.broadcast %43 : vector<5x1xf32> to vector<5x5xf32>
    %49 = arith.subf %41, %48 : vector<5x5xf32>
    %50 = math.exp %49 : vector<5x5xf32>
    %cst_26 = arith.constant dense<0.000000e+00> : vector<5xf32>
    %51 = vector.multi_reduction <add>, %50, %cst_26 [1] : vector<5x5xf32> to vector<5xf32>
    %52 = vector.shape_cast %51 : vector<5xf32> to vector<5x1xf32>
    %53 = arith.truncf %50 : vector<5x5xf32> to vector<5x5xbf16>
    %cst_27 = arith.constant 1.000000e-30 : f32
    %54 = vector.broadcast %cst_27 : f32 to vector<5x1xf32>
    %55 = arith.addf %52, %54 : vector<5x1xf32>
    %56 = tpu.reciprocal %55 {approx = true} : vector<5x1xf32> -> vector<5x1xf32>
    %57 = arith.mulf %56, %47 : vector<5x1xf32>
    %cst_28 = arith.constant dense<0.000000e+00> : vector<5x8xf32>
    %58 = tpu.matmul %53, %39, %cst_28 {dimension_numbers = #tpu.dot_dimension_numbers<[1], [0], [0], [1], [0, 0, 1, 1], [], []>} : vector<5x5xbf16>, vector<5x8xbf16>, vector<5x8xf32> -> vector<5x8xf32>
    %59 = vector.broadcast %57 : vector<5x1xf32> to vector<5x8xf32>
    %60 = arith.mulf %58, %59 : vector<5x8xf32>
    %61 = arith.truncf %60 : vector<5x8xf32> to vector<5x8xbf16>
    %c0_29 = arith.constant 0 : index
    %c0_30 = arith.constant 0 : index
    %c8_31 = arith.constant 8 : index
    %62 = vector.load %arg3[%c0_29, %c0_30, %c8_31] : memref<1x5x32xbf16, #tpu.memory_space<vmem>>, vector<1x5x8xbf16>
    %63 = vector.shape_cast %62 : vector<1x5x8xbf16> to vector<5x8xbf16>
    %64 = vector.shape_cast %61 : vector<5x8xbf16> to vector<1x5x8xbf16>
    tpu.vector_store %arg3[%c0_29, %c0_30, %c8_31], %64 {strides = array<i32>} : memref<1x5x32xbf16, #tpu.memory_space<vmem>>, vector<1x5x8xbf16>,
    %c0_32 = arith.constant 0 : index
    %c0_33 = arith.constant 0 : index
    %c16 = arith.constant 16 : index
    %65 = vector.load %arg1[%c0_32, %c0_33, %c16] : memref<1x5x96xbf16, #tpu.memory_space<vmem>>, vector<1x5x8xbf16>
    %66 = vector.shape_cast %65 : vector<1x5x8xbf16> to vector<5x8xbf16>
    %c0_34 = arith.constant 0 : index
    %c0_35 = arith.constant 0 : index
    %c48 = arith.constant 48 : index
    %67 = vector.load %arg1[%c0_34, %c0_35, %c48] : memref<1x5x96xbf16, #tpu.memory_space<vmem>>, vector<1x5x8xbf16>
    %68 = vector.shape_cast %67 : vector<1x5x8xbf16> to vector<5x8xbf16>
    %c0_36 = arith.constant 0 : index
    %c0_37 = arith.constant 0 : index
    %c80 = arith.constant 80 : index
    %69 = vector.load %arg1[%c0_36, %c0_37, %c80] : memref<1x5x96xbf16, #tpu.memory_space<vmem>>, vector<1x5x8xbf16>
    %70 = vector.shape_cast %69 : vector<1x5x8xbf16> to vector<5x8xbf16>
    %cst_38 = arith.constant dense<0.000000e+00> : vector<5x5xf32>
    %71 = tpu.matmul %66, %68, %cst_38 {dimension_numbers = #tpu.dot_dimension_numbers<[1], [1], [0], [0], [0, 0, 1, 0], [], []>} : vector<5x8xbf16>, vector<5x8xbf16>, vector<5x5xf32> -> vector<5x5xf32>
    %72 = arith.addf %71, %2 : vector<5x5xf32>
    %cst_39 = arith.constant dense<0xFF800000> : vector<5xf32>
    %73 = vector.multi_reduction <maximumf>, %72, %cst_39 [1] : vector<5x5xf32> to vector<5xf32>
    %74 = vector.shape_cast %73 : vector<5xf32> to vector<5x1xf32>
    %cst_40 = arith.constant -5.000000e+29 : f32
    %75 = vector.broadcast %cst_40 : f32 to vector<5x1xf32>
    %76 = arith.cmpf ogt, %74, %75 : vector<5x1xf32>
    %77 = arith.extui %76 : vector<5x1xi1> to vector<5x1xi32>
    %78 = arith.sitofp %77 : vector<5x1xi32> to vector<5x1xf32>
    %79 = vector.broadcast %74 : vector<5x1xf32> to vector<5x5xf32>
    %80 = arith.subf %72, %79 : vector<5x5xf32>
    %81 = math.exp %80 : vector<5x5xf32>
    %cst_41 = arith.constant dense<0.000000e+00> : vector<5xf32>
    %82 = vector.multi_reduction <add>, %81, %cst_41 [1] : vector<5x5xf32> to vector<5xf32>
    %83 = vector.shape_cast %82 : vector<5xf32> to vector<5x1xf32>
    %84 = arith.truncf %81 : vector<5x5xf32> to vector<5x5xbf16>
    %cst_42 = arith.constant 1.000000e-30 : f32
    %85 = vector.broadcast %cst_42 : f32 to vector<5x1xf32>
    %86 = arith.addf %83, %85 : vector<5x1xf32>
    %87 = tpu.reciprocal %86 {approx = true} : vector<5x1xf32> -> vector<5x1xf32>
    %88 = arith.mulf %87, %78 : vector<5x1xf32>
    %cst_43 = arith.constant dense<0.000000e+00> : vector<5x8xf32>
    %89 = tpu.matmul %84, %70, %cst_43 {dimension_numbers = #tpu.dot_dimension_numbers<[1], [0], [0], [1], [0, 0, 1, 1], [], []>} : vector<5x5xbf16>, vector<5x8xbf16>, vector<5x8xf32> -> vector<5x8xf32>
    %90 = vector.broadcast %88 : vector<5x1xf32> to vector<5x8xf32>
    %91 = arith.mulf %89, %90 : vector<5x8xf32>
    %92 = arith.truncf %91 : vector<5x8xf32> to vector<5x8xbf16>
    %c0_44 = arith.constant 0 : index
    %c0_45 = arith.constant 0 : index
    %c16_46 = arith.constant 16 : index
    %93 = vector.load %arg3[%c0_44, %c0_45, %c16_46] : memref<1x5x32xbf16, #tpu.memory_space<vmem>>, vector<1x5x8xbf16>
    %94 = vector.shape_cast %93 : vector<1x5x8xbf16> to vector<5x8xbf16>
    %95 = vector.shape_cast %92 : vector<5x8xbf16> to vector<1x5x8xbf16>
    tpu.vector_store %arg3[%c0_44, %c0_45, %c16_46], %95 {strides = array<i32>} : memref<1x5x32xbf16, #tpu.memory_space<vmem>>, vector<1x5x8xbf16>,
    %c0_47 = arith.constant 0 : index
    %c0_48 = arith.constant 0 : index
    %c24 = arith.constant 24 : index
    %96 = vector.load %arg1[%c0_47, %c0_48, %c24] : memref<1x5x96xbf16, #tpu.memory_space<vmem>>, vector<1x5x8xbf16>
    %97 = vector.shape_cast %96 : vector<1x5x8xbf16> to vector<5x8xbf16>
    %c0_49 = arith.constant 0 : index
    %c0_50 = arith.constant 0 : index
    %c56 = arith.constant 56 : index
    %98 = vector.load %arg1[%c0_49, %c0_50, %c56] : memref<1x5x96xbf16, #tpu.memory_space<vmem>>, vector<1x5x8xbf16>
    %99 = vector.shape_cast %98 : vector<1x5x8xbf16> to vector<5x8xbf16>
    %c0_51 = arith.constant 0 : index
    %c0_52 = arith.constant 0 : index
    %c88 = arith.constant 88 : index
    %100 = vector.load %arg1[%c0_51, %c0_52, %c88] : memref<1x5x96xbf16, #tpu.memory_space<vmem>>, vector<1x5x8xbf16>
    %101 = vector.shape_cast %100 : vector<1x5x8xbf16> to vector<5x8xbf16>
    %cst_53 = arith.constant dense<0.000000e+00> : vector<5x5xf32>
    %102 = tpu.matmul %97, %99, %cst_53 {dimension_numbers = #tpu.dot_dimension_numbers<[1], [1], [0], [0], [0, 0, 1, 0], [], []>} : vector<5x8xbf16>, vector<5x8xbf16>, vector<5x5xf32> -> vector<5x5xf32>
    %103 = arith.addf %102, %2 : vector<5x5xf32>
    %cst_54 = arith.constant dense<0xFF800000> : vector<5xf32>
    %104 = vector.multi_reduction <maximumf>, %103, %cst_54 [1] : vector<5x5xf32> to vector<5xf32>
    %105 = vector.shape_cast %104 : vector<5xf32> to vector<5x1xf32>
    %cst_55 = arith.constant -5.000000e+29 : f32
    %106 = vector.broadcast %cst_55 : f32 to vector<5x1xf32>
    %107 = arith.cmpf ogt, %105, %106 : vector<5x1xf32>
    %108 = arith.extui %107 : vector<5x1xi1> to vector<5x1xi32>
    %109 = arith.sitofp %108 : vector<5x1xi32> to vector<5x1xf32>
    %110 = vector.broadcast %105 : vector<5x1xf32> to vector<5x5xf32>
    %111 = arith.subf %103, %110 : vector<5x5xf32>
    %112 = math.exp %111 : vector<5x5xf32>
    %cst_56 = arith.constant dense<0.000000e+00> : vector<5xf32>
    %113 = vector.multi_reduction <add>, %112, %cst_56 [1] : vector<5x5xf32> to vector<5xf32>
    %114 = vector.shape_cast %113 : vector<5xf32> to vector<5x1xf32>
    %115 = arith.truncf %112 : vector<5x5xf32> to vector<5x5xbf16>
    %cst_57 = arith.constant 1.000000e-30 : f32
    %116 = vector.broadcast %cst_57 : f32 to vector<5x1xf32>
    %117 = arith.addf %114, %116 : vector<5x1xf32>
    %118 = tpu.reciprocal %117 {approx = true} : vector<5x1xf32> -> vector<5x1xf32>
    %119 = arith.mulf %118, %109 : vector<5x1xf32>
    %cst_58 = arith.constant dense<0.000000e+00> : vector<5x8xf32>
    %120 = tpu.matmul %115, %101, %cst_58 {dimension_numbers = #tpu.dot_dimension_numbers<[1], [0], [0], [1], [0, 0, 1, 1], [], []>} : vector<5x5xbf16>, vector<5x8xbf16>, vector<5x8xf32> -> vector<5x8xf32>
    %121 = vector.broadcast %119 : vector<5x1xf32> to vector<5x8xf32>
    %122 = arith.mulf %120, %121 : vector<5x8xf32>
    %123 = arith.truncf %122 : vector<5x8xf32> to vector<5x8xbf16>
    %c0_59 = arith.constant 0 : index
    %c0_60 = arith.constant 0 : index
    %c24_61 = arith.constant 24 : index
    %124 = vector.load %arg3[%c0_59, %c0_60, %c24_61] : memref<1x5x32xbf16, #tpu.memory_space<vmem>>, vector<1x5x8xbf16>
    %125 = vector.shape_cast %124 : vector<1x5x8xbf16> to vector<5x8xbf16>
    %126 = vector.shape_cast %123 : vector<5x8xbf16> to vector<1x5x8xbf16>
    tpu.vector_store %arg3[%c0_59, %c0_60, %c24_61], %126 {strides = array<i32>} : memref<1x5x32xbf16, #tpu.memory_space<vmem>>, vector<1x5x8xbf16>,
    return
  }
  func.func @transform_0(%arg0: i32) -> (i32, i32, i32) {
    %c0_i32 = arith.constant 0 : i32
    %c0_i32_0 = arith.constant 0 : i32
    %c0_i32_1 = arith.constant 0 : i32
    return %arg0, %c0_i32, %c0_i32_0 : i32, i32, i32
  }
  func.func @transform_1(%arg0: i32) -> (i32, i32, i32) {
    %c0_i32 = arith.constant 0 : i32
    %c0_i32_0 = arith.constant 0 : i32
    %c0_i32_1 = arith.constant 0 : i32
    return %arg0, %c0_i32, %c0_i32_0 : i32, i32, i32
  }
  func.func @transform_2(%arg0: i32) -> (i32, i32, i32) {
    %c0_i32 = arith.constant 0 : i32
    %c0_i32_0 = arith.constant 0 : i32
    %c0_i32_1 = arith.constant 0 : i32
    return %arg0, %c0_i32, %c0_i32_0 : i32, i32, i32
  }
}

module attributes {stable_mosaic.version = 11 : i64} {
  func.func @_dense_kernel(%arg0: i32, %arg1: i32, %arg2: i32, %arg3: memref<10x32xbf16, #tpu.memory_space<vmem>>, %arg4: memref<32x32xbf16, #tpu.memory_space<vmem>>, %arg5: memref<1x32xf32, #tpu.memory_space<vmem>>, %arg6: memref<10x32xbf16, #tpu.memory_space<vmem>>, %arg7: memref<10x32xbf16, #tpu.memory_space<vmem>>, %arg8: memref<10x32xf32, #tpu.memory_space<vmem>>) attributes {dimension_semantics = [#tpu.dimension_semantics<parallel>, #tpu.dimension_semantics<parallel>, #tpu.dimension_semantics<arbitrary>], iteration_bounds = array<i64: 1, 1, 1>, scalar_prefetch = 0 : i64, scratch_operands = 1 : i64, tpu.core_type = #tpu.core_type<tc>, window_params = [{transform_indices = @transform_0, window_bounds = array<i64: 10, 32>}, {transform_indices = @transform_1, window_bounds = array<i64: 32, 32>}, {transform_indices = @transform_2, window_bounds = array<i64: 1, 32>}, {transform_indices = @transform_3, window_bounds = array<i64: 10, 32>}, {transform_indices = @transform_4, window_bounds = array<i64: 10, 32>}]} {
    %c0_i32 = arith.constant 0 : i32
    %0 = arith.cmpi eq, %arg2, %c0_i32 : i32
    %1 = arith.extui %0 : i1 to i32
    %c0_i32_0 = arith.constant 0 : i32
    %2 = arith.cmpi ne, %1, %c0_i32_0 : i32
    scf.if %2 {
      %cst_10 = arith.constant 0.000000e+00 : f32
      %12 = vector.broadcast %cst_10 : f32 to vector<10x32xf32>
      %c0_11 = arith.constant 0 : index
      %c0_12 = arith.constant 0 : index
      %13 = vector.load %arg8[%c0_11, %c0_12] : memref<10x32xf32, #tpu.memory_space<vmem>>, vector<10x32xf32>
      tpu.vector_store %arg8[%c0_11, %c0_12], %12 {strides = array<i32>} : memref<10x32xf32, #tpu.memory_space<vmem>>, vector<10x32xf32>,
    } else {
    }
    %c0 = arith.constant 0 : index
    %c0_1 = arith.constant 0 : index
    %3 = vector.load %arg3[%c0, %c0_1] : memref<10x32xbf16, #tpu.memory_space<vmem>>, vector<10x32xbf16>
    %c0_2 = arith.constant 0 : index
    %c0_3 = arith.constant 0 : index
    %4 = vector.load %arg8[%c0_2, %c0_3] : memref<10x32xf32, #tpu.memory_space<vmem>>, vector<10x32xf32>
    %c0_4 = arith.constant 0 : index
    %c0_5 = arith.constant 0 : index
    %5 = vector.load %arg4[%c0_4, %c0_5] : memref<32x32xbf16, #tpu.memory_space<vmem>>, vector<32x32xbf16>
    %cst = arith.constant dense<0.000000e+00> : vector<10x32xf32>
    %6 = tpu.matmul %3, %5, %cst {dimension_numbers = #tpu.dot_dimension_numbers<[1], [0], [0], [1], [0, 0, 1, 1], [], []>} : vector<10x32xbf16>, vector<32x32xbf16>, vector<10x32xf32> -> vector<10x32xf32>
    %7 = arith.addf %4, %6 : vector<10x32xf32>
    %c0_6 = arith.constant 0 : index
    %c0_7 = arith.constant 0 : index
    %8 = vector.load %arg8[%c0_6, %c0_7] : memref<10x32xf32, #tpu.memory_space<vmem>>, vector<10x32xf32>
    tpu.vector_store %arg8[%c0_6, %c0_7], %7 {strides = array<i32>} : memref<10x32xf32, #tpu.memory_space<vmem>>, vector<10x32xf32>,
    %c0_i32_8 = arith.constant 0 : i32
    %9 = arith.cmpi eq, %arg2, %c0_i32_8 : i32
    %10 = arith.extui %9 : i1 to i32
    %c0_i32_9 = arith.constant 0 : i32
    %11 = arith.cmpi ne, %10, %c0_i32_9 : i32
    scf.if %11 {
      %c0_10 = arith.constant 0 : index
      %c0_11 = arith.constant 0 : index
      %12 = vector.load %arg8[%c0_10, %c0_11] : memref<10x32xf32, #tpu.memory_space<vmem>>, vector<10x32xf32>
      %c0_12 = arith.constant 0 : index
      %c0_13 = arith.constant 0 : index
      %13 = vector.load %arg5[%c0_12, %c0_13] : memref<1x32xf32, #tpu.memory_space<vmem>>, vector<1x32xf32>
      %14 = vector.broadcast %13 : vector<1x32xf32> to vector<10x32xf32>
      %15 = arith.addf %12, %14 : vector<10x32xf32>
      %c0_14 = arith.constant 0 : index
      %c0_15 = arith.constant 0 : index
      %16 = vector.load %arg6[%c0_14, %c0_15] : memref<10x32xbf16, #tpu.memory_space<vmem>>, vector<10x32xbf16>
      %17 = arith.extf %16 : vector<10x32xbf16> to vector<10x32xf32>
      %18 = arith.addf %15, %17 : vector<10x32xf32>
      %19 = arith.truncf %18 : vector<10x32xf32> to vector<10x32xbf16>
      %c0_16 = arith.constant 0 : index
      %c0_17 = arith.constant 0 : index
      %20 = vector.load %arg7[%c0_16, %c0_17] : memref<10x32xbf16, #tpu.memory_space<vmem>>, vector<10x32xbf16>
      tpu.vector_store %arg7[%c0_16, %c0_17], %19 {strides = array<i32>} : memref<10x32xbf16, #tpu.memory_space<vmem>>, vector<10x32xbf16>,
    } else {
    }
    return
  }
  func.func @transform_0(%arg0: i32, %arg1: i32, %arg2: i32) -> (i32, i32) {
    %c0_i32 = arith.constant 0 : i32
    return %arg0, %arg2 : i32, i32
  }
  func.func @transform_1(%arg0: i32, %arg1: i32, %arg2: i32) -> (i32, i32) {
    %c0_i32 = arith.constant 0 : i32
    return %arg2, %arg1 : i32, i32
  }
  func.func @transform_2(%arg0: i32, %arg1: i32, %arg2: i32) -> (i32, i32) {
    %c0_i32 = arith.constant 0 : i32
    %c0_i32_0 = arith.constant 0 : i32
    return %c0_i32, %arg1 : i32, i32
  }
  func.func @transform_3(%arg0: i32, %arg1: i32, %arg2: i32) -> (i32, i32) {
    %c0_i32 = arith.constant 0 : i32
    return %arg0, %arg1 : i32, i32
  }
  func.func @transform_4(%arg0: i32, %arg1: i32, %arg2: i32) -> (i32, i32) {
    %c0_i32 = arith.constant 0 : i32
    return %arg0, %arg1 : i32, i32
  }
}

module attributes {stable_mosaic.version = 11 : i64} {
  func.func @_dense_kernel(%arg0: i32, %arg1: i32, %arg2: i32, %arg3: memref<10x32xbf16, #tpu.memory_space<vmem>>, %arg4: memref<1x32xf32, #tpu.memory_space<vmem>>, %arg5: memref<1x32xf32, #tpu.memory_space<vmem>>, %arg6: memref<32x32xbf16, #tpu.memory_space<vmem>>, %arg7: memref<1x32xf32, #tpu.memory_space<vmem>>, %arg8: memref<10x32xbf16, #tpu.memory_space<vmem>>, %arg9: memref<10x32xf32, #tpu.memory_space<vmem>>) attributes {dimension_semantics = [#tpu.dimension_semantics<parallel>, #tpu.dimension_semantics<parallel>, #tpu.dimension_semantics<arbitrary>], iteration_bounds = array<i64: 1, 1, 1>, scalar_prefetch = 0 : i64, scratch_operands = 1 : i64, tpu.core_type = #tpu.core_type<tc>, window_params = [{transform_indices = @transform_0, window_bounds = array<i64: 10, 32>}, {pipeline_mode = #tpu.pipeline_mode<synchronous>, transform_indices = @transform_1, window_bounds = array<i64: 1, 32>}, {pipeline_mode = #tpu.pipeline_mode<synchronous>, transform_indices = @transform_2, window_bounds = array<i64: 1, 32>}, {transform_indices = @transform_3, window_bounds = array<i64: 32, 32>}, {transform_indices = @transform_4, window_bounds = array<i64: 1, 32>}, {transform_indices = @transform_5, window_bounds = array<i64: 10, 32>}]} {
    %c0_i32 = arith.constant 0 : i32
    %0 = arith.cmpi eq, %arg2, %c0_i32 : i32
    %1 = arith.extui %0 : i1 to i32
    %c0_i32_0 = arith.constant 0 : i32
    %2 = arith.cmpi ne, %1, %c0_i32_0 : i32
    scf.if %2 {
      %cst_19 = arith.constant 0.000000e+00 : f32
      %38 = vector.broadcast %cst_19 : f32 to vector<10x32xf32>
      %c0_20 = arith.constant 0 : index
      %c0_21 = arith.constant 0 : index
      %39 = vector.load %arg9[%c0_20, %c0_21] : memref<10x32xf32, #tpu.memory_space<vmem>>, vector<10x32xf32>
      tpu.vector_store %arg9[%c0_20, %c0_21], %38 {strides = array<i32>} : memref<10x32xf32, #tpu.memory_space<vmem>>, vector<10x32xf32>,
    } else {
    }
    %c0 = arith.constant 0 : index
    %c0_1 = arith.constant 0 : index
    %3 = vector.load %arg3[%c0, %c0_1] : memref<10x32xbf16, #tpu.memory_space<vmem>>, vector<10x32xbf16>
    %4 = arith.extf %3 : vector<10x32xbf16> to vector<10x32xf32>
    %cst = arith.constant dense<0.000000e+00> : vector<10xf32>
    %5 = vector.multi_reduction <add>, %4, %cst [1] : vector<10x32xf32> to vector<10xf32>
    %6 = vector.shape_cast %5 : vector<10xf32> to vector<10x1xf32>
    %cst_2 = arith.constant 3.200000e+01 : f32
    %7 = vector.broadcast %cst_2 : f32 to vector<10x1xf32>
    %8 = arith.divf %6, %7 : vector<10x1xf32>
    %9 = vector.broadcast %8 : vector<10x1xf32> to vector<10x32xf32>
    %10 = arith.subf %4, %9 : vector<10x32xf32>
    %11 = arith.mulf %10, %10 : vector<10x32xf32>
    %cst_3 = arith.constant dense<0.000000e+00> : vector<10xf32>
    %12 = vector.multi_reduction <add>, %11, %cst_3 [1] : vector<10x32xf32> to vector<10xf32>
    %13 = vector.shape_cast %12 : vector<10xf32> to vector<10x1xf32>
    %cst_4 = arith.constant 3.200000e+01 : f32
    %14 = vector.broadcast %cst_4 : f32 to vector<10x1xf32>
    %15 = arith.divf %13, %14 : vector<10x1xf32>
    %16 = vector.broadcast %8 : vector<10x1xf32> to vector<10x32xf32>
    %17 = arith.subf %4, %16 : vector<10x32xf32>
    %cst_5 = arith.constant 9.99999996E-13 : f32
    %18 = vector.broadcast %cst_5 : f32 to vector<10x1xf32>
    %19 = arith.addf %15, %18 : vector<10x1xf32>
    %20 = math.rsqrt %19 : vector<10x1xf32>
    %21 = vector.broadcast %20 : vector<10x1xf32> to vector<10x32xf32>
    %22 = arith.mulf %17, %21 : vector<10x32xf32>
    %c0_6 = arith.constant 0 : index
    %c0_7 = arith.constant 0 : index
    %23 = vector.load %arg4[%c0_6, %c0_7] : memref<1x32xf32, #tpu.memory_space<vmem>>, vector<1x32xf32>
    %24 = vector.broadcast %23 : vector<1x32xf32> to vector<10x32xf32>
    %25 = arith.mulf %22, %24 : vector<10x32xf32>
    %c0_8 = arith.constant 0 : index
    %c0_9 = arith.constant 0 : index
    %26 = vector.load %arg5[%c0_8, %c0_9] : memref<1x32xf32, #tpu.memory_space<vmem>>, vector<1x32xf32>
    %27 = vector.broadcast %26 : vector<1x32xf32> to vector<10x32xf32>
    %28 = arith.addf %25, %27 : vector<10x32xf32>
    %29 = arith.truncf %28 : vector<10x32xf32> to vector<10x32xbf16>
    %c0_10 = arith.constant 0 : index
    %c0_11 = arith.constant 0 : index
    %30 = vector.load %arg9[%c0_10, %c0_11] : memref<10x32xf32, #tpu.memory_space<vmem>>, vector<10x32xf32>
    %c0_12 = arith.constant 0 : index
    %c0_13 = arith.constant 0 : index
    %31 = vector.load %arg6[%c0_12, %c0_13] : memref<32x32xbf16, #tpu.memory_space<vmem>>, vector<32x32xbf16>
    %cst_14 = arith.constant dense<0.000000e+00> : vector<10x32xf32>
    %32 = tpu.matmul %29, %31, %cst_14 {dimension_numbers = #tpu.dot_dimension_numbers<[1], [0], [0], [1], [0, 0, 1, 1], [], []>} : vector<10x32xbf16>, vector<32x32xbf16>, vector<10x32xf32> -> vector<10x32xf32>
    %33 = arith.addf %30, %32 : vector<10x32xf32>
    %c0_15 = arith.constant 0 : index
    %c0_16 = arith.constant 0 : index
    %34 = vector.load %arg9[%c0_15, %c0_16] : memref<10x32xf32, #tpu.memory_space<vmem>>, vector<10x32xf32>
    tpu.vector_store %arg9[%c0_15, %c0_16], %33 {strides = array<i32>} : memref<10x32xf32, #tpu.memory_space<vmem>>, vector<10x32xf32>,
    %c0_i32_17 = arith.constant 0 : i32
    %35 = arith.cmpi eq, %arg2, %c0_i32_17 : i32
    %36 = arith.extui %35 : i1 to i32
    %c0_i32_18 = arith.constant 0 : i32
    %37 = arith.cmpi ne, %36, %c0_i32_18 : i32
    scf.if %37 {
      %c0_19 = arith.constant 0 : index
      %c0_20 = arith.constant 0 : index
      %38 = vector.load %arg9[%c0_19, %c0_20] : memref<10x32xf32, #tpu.memory_space<vmem>>, vector<10x32xf32>
      %c0_21 = arith.constant 0 : index
      %c0_22 = arith.constant 0 : index
      %39 = vector.load %arg7[%c0_21, %c0_22] : memref<1x32xf32, #tpu.memory_space<vmem>>, vector<1x32xf32>
      %40 = vector.broadcast %39 : vector<1x32xf32> to vector<10x32xf32>
      %41 = arith.addf %38, %40 : vector<10x32xf32>
      %42 = arith.truncf %41 : vector<10x32xf32> to vector<10x32xbf16>
      %c0_23 = arith.constant 0 : index
      %c0_24 = arith.constant 0 : index
      %43 = vector.load %arg8[%c0_23, %c0_24] : memref<10x32xbf16, #tpu.memory_space<vmem>>, vector<10x32xbf16>
      tpu.vector_store %arg8[%c0_23, %c0_24], %42 {strides = array<i32>} : memref<10x32xbf16, #tpu.memory_space<vmem>>, vector<10x32xbf16>,
    } else {
    }
    return
  }
  func.func @transform_0(%arg0: i32, %arg1: i32, %arg2: i32) -> (i32, i32) {
    %c0_i32 = arith.constant 0 : i32
    return %arg0, %arg2 : i32, i32
  }
  func.func @transform_1(%arg0: i32, %arg1: i32, %arg2: i32) -> (i32, i32) {
    %c0_i32 = arith.constant 0 : i32
    %c0_i32_0 = arith.constant 0 : i32
    %c0_i32_1 = arith.constant 0 : i32
    return %c0_i32, %c0_i32_0 : i32, i32
  }
  func.func @transform_2(%arg0: i32, %arg1: i32, %arg2: i32) -> (i32, i32) {
    %c0_i32 = arith.constant 0 : i32
    %c0_i32_0 = arith.constant 0 : i32
    %c0_i32_1 = arith.constant 0 : i32
    return %c0_i32, %c0_i32_0 : i32, i32
  }
  func.func @transform_3(%arg0: i32, %arg1: i32, %arg2: i32) -> (i32, i32) {
    %c0_i32 = arith.constant 0 : i32
    return %arg2, %arg1 : i32, i32
  }
  func.func @transform_4(%arg0: i32, %arg1: i32, %arg2: i32) -> (i32, i32) {
    %c0_i32 = arith.constant 0 : i32
    %c0_i32_0 = arith.constant 0 : i32
    return %c0_i32, %arg1 : i32, i32
  }
  func.func @transform_5(%arg0: i32, %arg1: i32, %arg2: i32) -> (i32, i32) {
    %c0_i32 = arith.constant 0 : i32
    return %arg0, %arg1 : i32, i32
  }
}

module attributes {stable_mosaic.version = 11 : i64} {
  func.func @_ffn_kernel(%arg0: i32, %arg1: memref<10x32xbf16, #tpu.memory_space<vmem>>, %arg2: memref<1x32xf32, #tpu.memory_space<vmem>>, %arg3: memref<1x32xf32, #tpu.memory_space<vmem>>, %arg4: memref<32x64xbf16, #tpu.memory_space<vmem>>, %arg5: memref<1x64xf32, #tpu.memory_space<vmem>>, %arg6: memref<64x32xbf16, #tpu.memory_space<vmem>>, %arg7: memref<1x32xf32, #tpu.memory_space<vmem>>, %arg8: memref<10x32xbf16, #tpu.memory_space<vmem>>) attributes {dimension_semantics = [#tpu.dimension_semantics<parallel>], iteration_bounds = array<i64: 1>, scalar_prefetch = 0 : i64, scratch_operands = 0 : i64, tpu.core_type = #tpu.core_type<tc>, window_params = [{transform_indices = @transform_0, window_bounds = array<i64: 10, 32>}, {pipeline_mode = #tpu.pipeline_mode<synchronous>, transform_indices = @transform_1, window_bounds = array<i64: 1, 32>}, {pipeline_mode = #tpu.pipeline_mode<synchronous>, transform_indices = @transform_2, window_bounds = array<i64: 1, 32>}, {pipeline_mode = #tpu.pipeline_mode<synchronous>, transform_indices = @transform_3, window_bounds = array<i64: 32, 64>}, {pipeline_mode = #tpu.pipeline_mode<synchronous>, transform_indices = @transform_4, window_bounds = array<i64: 1, 64>}, {pipeline_mode = #tpu.pipeline_mode<synchronous>, transform_indices = @transform_5, window_bounds = array<i64: 64, 32>}, {pipeline_mode = #tpu.pipeline_mode<synchronous>, transform_indices = @transform_6, window_bounds = array<i64: 1, 32>}, {transform_indices = @transform_7, window_bounds = array<i64: 10, 32>}]} {
    %c0 = arith.constant 0 : index
    %c0_0 = arith.constant 0 : index
    %0 = vector.load %arg1[%c0, %c0_0] : memref<10x32xbf16, #tpu.memory_space<vmem>>, vector<10x32xbf16>
    %1 = arith.extf %0 : vector<10x32xbf16> to vector<10x32xf32>
    %cst = arith.constant dense<0.000000e+00> : vector<10xf32>
    %2 = vector.multi_reduction <add>, %1, %cst [1] : vector<10x32xf32> to vector<10xf32>
    %3 = vector.shape_cast %2 : vector<10xf32> to vector<10x1xf32>
    %cst_1 = arith.constant 3.200000e+01 : f32
    %4 = vector.broadcast %cst_1 : f32 to vector<10x1xf32>
    %5 = arith.divf %3, %4 : vector<10x1xf32>
    %6 = vector.broadcast %5 : vector<10x1xf32> to vector<10x32xf32>
    %7 = arith.subf %1, %6 : vector<10x32xf32>
    %8 = arith.mulf %7, %7 : vector<10x32xf32>
    %cst_2 = arith.constant dense<0.000000e+00> : vector<10xf32>
    %9 = vector.multi_reduction <add>, %8, %cst_2 [1] : vector<10x32xf32> to vector<10xf32>
    %10 = vector.shape_cast %9 : vector<10xf32> to vector<10x1xf32>
    %cst_3 = arith.constant 3.200000e+01 : f32
    %11 = vector.broadcast %cst_3 : f32 to vector<10x1xf32>
    %12 = arith.divf %10, %11 : vector<10x1xf32>
    %13 = vector.broadcast %5 : vector<10x1xf32> to vector<10x32xf32>
    %14 = arith.subf %1, %13 : vector<10x32xf32>
    %cst_4 = arith.constant 9.99999996E-13 : f32
    %15 = vector.broadcast %cst_4 : f32 to vector<10x1xf32>
    %16 = arith.addf %12, %15 : vector<10x1xf32>
    %17 = math.rsqrt %16 : vector<10x1xf32>
    %18 = vector.broadcast %17 : vector<10x1xf32> to vector<10x32xf32>
    %19 = arith.mulf %14, %18 : vector<10x32xf32>
    %c0_5 = arith.constant 0 : index
    %c0_6 = arith.constant 0 : index
    %20 = vector.load %arg2[%c0_5, %c0_6] : memref<1x32xf32, #tpu.memory_space<vmem>>, vector<1x32xf32>
    %21 = vector.broadcast %20 : vector<1x32xf32> to vector<10x32xf32>
    %22 = arith.mulf %19, %21 : vector<10x32xf32>
    %c0_7 = arith.constant 0 : index
    %c0_8 = arith.constant 0 : index
    %23 = vector.load %arg3[%c0_7, %c0_8] : memref<1x32xf32, #tpu.memory_space<vmem>>, vector<1x32xf32>
    %24 = vector.broadcast %23 : vector<1x32xf32> to vector<10x32xf32>
    %25 = arith.addf %22, %24 : vector<10x32xf32>
    %26 = arith.truncf %25 : vector<10x32xf32> to vector<10x32xbf16>
    %c0_9 = arith.constant 0 : index
    %c0_10 = arith.constant 0 : index
    %27 = vector.load %arg4[%c0_9, %c0_10] : memref<32x64xbf16, #tpu.memory_space<vmem>>, vector<32x64xbf16>
    %cst_11 = arith.constant dense<0.000000e+00> : vector<10x64xf32>
    %28 = tpu.matmul %26, %27, %cst_11 {dimension_numbers = #tpu.dot_dimension_numbers<[1], [0], [0], [1], [0, 0, 1, 1], [], []>} : vector<10x32xbf16>, vector<32x64xbf16>, vector<10x64xf32> -> vector<10x64xf32>
    %c0_12 = arith.constant 0 : index
    %c0_13 = arith.constant 0 : index
    %29 = vector.load %arg5[%c0_12, %c0_13] : memref<1x64xf32, #tpu.memory_space<vmem>>, vector<1x64xf32>
    %30 = vector.broadcast %29 : vector<1x64xf32> to vector<10x64xf32>
    %31 = arith.addf %28, %30 : vector<10x64xf32>
    %cst_14 = arith.constant 0.000000e+00 : f32
    %32 = vector.broadcast %cst_14 : f32 to vector<10x64xf32>
    %33 = arith.maximumf %31, %32 : vector<10x64xf32>
    %34 = arith.truncf %33 : vector<10x64xf32> to vector<10x64xbf16>
    %c0_15 = arith.constant 0 : index
    %c0_16 = arith.constant 0 : index
    %35 = vector.load %arg6[%c0_15, %c0_16] : memref<64x32xbf16, #tpu.memory_space<vmem>>, vector<64x32xbf16>
    %cst_17 = arith.constant dense<0.000000e+00> : vector<10x32xf32>
    %36 = tpu.matmul %34, %35, %cst_17 {dimension_numbers = #tpu.dot_dimension_numbers<[1], [0], [0], [1], [0, 0, 1, 1], [], []>} : vector<10x64xbf16>, vector<64x32xbf16>, vector<10x32xf32> -> vector<10x32xf32>
    %c0_18 = arith.constant 0 : index
    %c0_19 = arith.constant 0 : index
    %37 = vector.load %arg7[%c0_18, %c0_19] : memref<1x32xf32, #tpu.memory_space<vmem>>, vector<1x32xf32>
    %38 = vector.broadcast %37 : vector<1x32xf32> to vector<10x32xf32>
    %39 = arith.addf %36, %38 : vector<10x32xf32>
    %40 = arith.addf %1, %39 : vector<10x32xf32>
    %41 = arith.truncf %40 : vector<10x32xf32> to vector<10x32xbf16>
    %c0_20 = arith.constant 0 : index
    %c0_21 = arith.constant 0 : index
    %42 = vector.load %arg8[%c0_20, %c0_21] : memref<10x32xbf16, #tpu.memory_space<vmem>>, vector<10x32xbf16>
    tpu.vector_store %arg8[%c0_20, %c0_21], %41 {strides = array<i32>} : memref<10x32xbf16, #tpu.memory_space<vmem>>, vector<10x32xbf16>,
    return
  }
  func.func @transform_0(%arg0: i32) -> (i32, i32) {
    %c0_i32 = arith.constant 0 : i32
    %c0_i32_0 = arith.constant 0 : i32
    return %arg0, %c0_i32 : i32, i32
  }
  func.func @transform_1(%arg0: i32) -> (i32, i32) {
    %c0_i32 = arith.constant 0 : i32
    %c0_i32_0 = arith.constant 0 : i32
    %c0_i32_1 = arith.constant 0 : i32
    return %c0_i32, %c0_i32_0 : i32, i32
  }
  func.func @transform_2(%arg0: i32) -> (i32, i32) {
    %c0_i32 = arith.constant 0 : i32
    %c0_i32_0 = arith.constant 0 : i32
    %c0_i32_1 = arith.constant 0 : i32
    return %c0_i32, %c0_i32_0 : i32, i32
  }
  func.func @transform_3(%arg0: i32) -> (i32, i32) {
    %c0_i32 = arith.constant 0 : i32
    %c0_i32_0 = arith.constant 0 : i32
    %c0_i32_1 = arith.constant 0 : i32
    return %c0_i32, %c0_i32_0 : i32, i32
  }
  func.func @transform_4(%arg0: i32) -> (i32, i32) {
    %c0_i32 = arith.constant 0 : i32
    %c0_i32_0 = arith.constant 0 : i32
    %c0_i32_1 = arith.constant 0 : i32
    return %c0_i32, %c0_i32_0 : i32, i32
  }
  func.func @transform_5(%arg0: i32) -> (i32, i32) {
    %c0_i32 = arith.constant 0 : i32
    %c0_i32_0 = arith.constant 0 : i32
    %c0_i32_1 = arith.constant 0 : i32
    return %c0_i32, %c0_i32_0 : i32, i32
  }
  func.func @transform_6(%arg0: i32) -> (i32, i32) {
    %c0_i32 = arith.constant 0 : i32
    %c0_i32_0 = arith.constant 0 : i32
    %c0_i32_1 = arith.constant 0 : i32
    return %c0_i32, %c0_i32_0 : i32, i32
  }
  func.func @transform_7(%arg0: i32) -> (i32, i32) {
    %c0_i32 = arith.constant 0 : i32
    %c0_i32_0 = arith.constant 0 : i32
    return %arg0, %c0_i32 : i32, i32
  }
}

module attributes {stable_mosaic.version = 11 : i64} {
  func.func @_mha_cross_kernel(%arg0: i32, %arg1: memref<1x5x32xbf16, #tpu.memory_space<vmem>>, %arg2: memref<1x8x64xbf16, #tpu.memory_space<vmem>>, %arg3: memref<1x1x8xbf16, #tpu.memory_space<vmem>>, %arg4: memref<1x5x32xbf16, #tpu.memory_space<vmem>>) attributes {dimension_semantics = [#tpu.dimension_semantics<parallel>], iteration_bounds = array<i64: 2>, scalar_prefetch = 0 : i64, scratch_operands = 0 : i64, tpu.core_type = #tpu.core_type<tc>, window_params = [{transform_indices = @transform_0, window_bounds = array<i64: 1, 5, 32>}, {transform_indices = @transform_1, window_bounds = array<i64: 1, 8, 64>}, {transform_indices = @transform_2, window_bounds = array<i64: 1, 1, 8>}, {transform_indices = @transform_3, window_bounds = array<i64: 1, 5, 32>}]} {
    %c0 = arith.constant 0 : index
    %c0_0 = arith.constant 0 : index
    %c0_1 = arith.constant 0 : index
    %0 = vector.load %arg3[%c0, %c0_0, %c0_1] : memref<1x1x8xbf16, #tpu.memory_space<vmem>>, vector<1x1x8xbf16>
    %1 = vector.shape_cast %0 : vector<1x1x8xbf16> to vector<1x8xbf16>
    %2 = arith.extf %1 : vector<1x8xbf16> to vector<1x8xf32>
    %c0_2 = arith.constant 0 : index
    %c0_3 = arith.constant 0 : index
    %c0_4 = arith.constant 0 : index
    %3 = vector.load %arg1[%c0_2, %c0_3, %c0_4] : memref<1x5x32xbf16, #tpu.memory_space<vmem>>, vector<1x5x8xbf16>
    %4 = vector.shape_cast %3 : vector<1x5x8xbf16> to vector<5x8xbf16>
    %c0_5 = arith.constant 0 : index
    %c0_6 = arith.constant 0 : index
    %c0_7 = arith.constant 0 : index
    %5 = vector.load %arg2[%c0_5, %c0_6, %c0_7] : memref<1x8x64xbf16, #tpu.memory_space<vmem>>, vector<1x8x8xbf16>
    %6 = vector.shape_cast %5 : vector<1x8x8xbf16> to vector<8x8xbf16>
    %c0_8 = arith.constant 0 : index
    %c0_9 = arith.constant 0 : index
    %c32 = arith.constant 32 : index
    %7 = vector.load %arg2[%c0_8, %c0_9, %c32] : memref<1x8x64xbf16, #tpu.memory_space<vmem>>, vector<1x8x8xbf16>
    %8 = vector.shape_cast %7 : vector<1x8x8xbf16> to vector<8x8xbf16>
    %cst = arith.constant dense<0.000000e+00> : vector<5x8xf32>
    %9 = tpu.matmul %4, %6, %cst {dimension_numbers = #tpu.dot_dimension_numbers<[1], [1], [0], [0], [0, 0, 1, 0], [], []>} : vector<5x8xbf16>, vector<8x8xbf16>, vector<5x8xf32> -> vector<5x8xf32>
    %10 = vector.broadcast %2 : vector<1x8xf32> to vector<5x8xf32>
    %11 = arith.addf %9, %10 : vector<5x8xf32>
    %cst_10 = arith.constant dense<0xFF800000> : vector<5xf32>
    %12 = vector.multi_reduction <maximumf>, %11, %cst_10 [1] : vector<5x8xf32> to vector<5xf32>
    %13 = vector.shape_cast %12 : vector<5xf32> to vector<5x1xf32>
    %cst_11 = arith.constant -5.000000e+29 : f32
    %14 = vector.broadcast %cst_11 : f32 to vector<5x1xf32>
    %15 = arith.cmpf ogt, %13, %14 : vector<5x1xf32>
    %16 = arith.extui %15 : vector<5x1xi1> to vector<5x1xi32>
    %17 = arith.sitofp %16 : vector<5x1xi32> to vector<5x1xf32>
    %18 = vector.broadcast %13 : vector<5x1xf32> to vector<5x8xf32>
    %19 = arith.subf %11, %18 : vector<5x8xf32>
    %20 = math.exp %19 : vector<5x8xf32>
    %cst_12 = arith.constant dense<0.000000e+00> : vector<5xf32>
    %21 = vector.multi_reduction <add>, %20, %cst_12 [1] : vector<5x8xf32> to vector<5xf32>
    %22 = vector.shape_cast %21 : vector<5xf32> to vector<5x1xf32>
    %23 = arith.truncf %20 : vector<5x8xf32> to vector<5x8xbf16>
    %cst_13 = arith.constant 1.000000e-30 : f32
    %24 = vector.broadcast %cst_13 : f32 to vector<5x1xf32>
    %25 = arith.addf %22, %24 : vector<5x1xf32>
    %26 = tpu.reciprocal %25 {approx = true} : vector<5x1xf32> -> vector<5x1xf32>
    %27 = arith.mulf %26, %17 : vector<5x1xf32>
    %cst_14 = arith.constant dense<0.000000e+00> : vector<5x8xf32>
    %28 = tpu.matmul %23, %8, %cst_14 {dimension_numbers = #tpu.dot_dimension_numbers<[1], [0], [0], [1], [0, 0, 1, 1], [], []>} : vector<5x8xbf16>, vector<8x8xbf16>, vector<5x8xf32> -> vector<5x8xf32>
    %29 = vector.broadcast %27 : vector<5x1xf32> to vector<5x8xf32>
    %30 = arith.mulf %28, %29 : vector<5x8xf32>
    %31 = arith.truncf %30 : vector<5x8xf32> to vector<5x8xbf16>
    %c0_15 = arith.constant 0 : index
    %c0_16 = arith.constant 0 : index
    %c0_17 = arith.constant 0 : index
    %32 = vector.load %arg4[%c0_15, %c0_16, %c0_17] : memref<1x5x32xbf16, #tpu.memory_space<vmem>>, vector<1x5x8xbf16>
    %33 = vector.shape_cast %32 : vector<1x5x8xbf16> to vector<5x8xbf16>
    %34 = vector.shape_cast %31 : vector<5x8xbf16> to vector<1x5x8xbf16>
    tpu.vector_store %arg4[%c0_15, %c0_16, %c0_17], %34 {strides = array<i32>} : memref<1x5x32xbf16, #tpu.memory_space<vmem>>, vector<1x5x8xbf16>,
    %c0_18 = arith.constant 0 : index
    %c0_19 = arith.constant 0 : index
    %c8 = arith.constant 8 : index
    %35 = vector.load %arg1[%c0_18, %c0_19, %c8] : memref<1x5x32xbf16, #tpu.memory_space<vmem>>, vector<1x5x8xbf16>
    %36 = vector.shape_cast %35 : vector<1x5x8xbf16> to vector<5x8xbf16>
    %c0_20 = arith.constant 0 : index
    %c0_21 = arith.constant 0 : index
    %c8_22 = arith.constant 8 : index
    %37 = vector.load %arg2[%c0_20, %c0_21, %c8_22] : memref<1x8x64xbf16, #tpu.memory_space<vmem>>, vector<1x8x8xbf16>
    %38 = vector.shape_cast %37 : vector<1x8x8xbf16> to vector<8x8xbf16>
    %c0_23 = arith.constant 0 : index
    %c0_24 = arith.constant 0 : index
    %c40 = arith.constant 40 : index
    %39 = vector.load %arg2[%c0_23, %c0_24, %c40] : memref<1x8x64xbf16, #tpu.memory_space<vmem>>, vector<1x8x8xbf16>
    %40 = vector.shape_cast %39 : vector<1x8x8xbf16> to vector<8x8xbf16>
    %cst_25 = arith.constant dense<0.000000e+00> : vector<5x8xf32>
    %41 = tpu.matmul %36, %38, %cst_25 {dimension_numbers = #tpu.dot_dimension_numbers<[1], [1], [0], [0], [0, 0, 1, 0], [], []>} : vector<5x8xbf16>, vector<8x8xbf16>, vector<5x8xf32> -> vector<5x8xf32>
    %42 = vector.broadcast %2 : vector<1x8xf32> to vector<5x8xf32>
    %43 = arith.addf %41, %42 : vector<5x8xf32>
    %cst_26 = arith.constant dense<0xFF800000> : vector<5xf32>
    %44 = vector.multi_reduction <maximumf>, %43, %cst_26 [1] : vector<5x8xf32> to vector<5xf32>
    %45 = vector.shape_cast %44 : vector<5xf32> to vector<5x1xf32>
    %cst_27 = arith.constant -5.000000e+29 : f32
    %46 = vector.broadcast %cst_27 : f32 to vector<5x1xf32>
    %47 = arith.cmpf ogt, %45, %46 : vector<5x1xf32>
    %48 = arith.extui %47 : vector<5x1xi1> to vector<5x1xi32>
    %49 = arith.sitofp %48 : vector<5x1xi32> to vector<5x1xf32>
    %50 = vector.broadcast %45 : vector<5x1xf32> to vector<5x8xf32>
    %51 = arith.subf %43, %50 : vector<5x8xf32>
    %52 = math.exp %51 : vector<5x8xf32>
    %cst_28 = arith.constant dense<0.000000e+00> : vector<5xf32>
    %53 = vector.multi_reduction <add>, %52, %cst_28 [1] : vector<5x8xf32> to vector<5xf32>
    %54 = vector.shape_cast %53 : vector<5xf32> to vector<5x1xf32>
    %55 = arith.truncf %52 : vector<5x8xf32> to vector<5x8xbf16>
    %cst_29 = arith.constant 1.000000e-30 : f32
    %56 = vector.broadcast %cst_29 : f32 to vector<5x1xf32>
    %57 = arith.addf %54, %56 : vector<5x1xf32>
    %58 = tpu.reciprocal %57 {approx = true} : vector<5x1xf32> -> vector<5x1xf32>
    %59 = arith.mulf %58, %49 : vector<5x1xf32>
    %cst_30 = arith.constant dense<0.000000e+00> : vector<5x8xf32>
    %60 = tpu.matmul %55, %40, %cst_30 {dimension_numbers = #tpu.dot_dimension_numbers<[1], [0], [0], [1], [0, 0, 1, 1], [], []>} : vector<5x8xbf16>, vector<8x8xbf16>, vector<5x8xf32> -> vector<5x8xf32>
    %61 = vector.broadcast %59 : vector<5x1xf32> to vector<5x8xf32>
    %62 = arith.mulf %60, %61 : vector<5x8xf32>
    %63 = arith.truncf %62 : vector<5x8xf32> to vector<5x8xbf16>
    %c0_31 = arith.constant 0 : index
    %c0_32 = arith.constant 0 : index
    %c8_33 = arith.constant 8 : index
    %64 = vector.load %arg4[%c0_31, %c0_32, %c8_33] : memref<1x5x32xbf16, #tpu.memory_space<vmem>>, vector<1x5x8xbf16>
    %65 = vector.shape_cast %64 : vector<1x5x8xbf16> to vector<5x8xbf16>
    %66 = vector.shape_cast %63 : vector<5x8xbf16> to vector<1x5x8xbf16>
    tpu.vector_store %arg4[%c0_31, %c0_32, %c8_33], %66 {strides = array<i32>} : memref<1x5x32xbf16, #tpu.memory_space<vmem>>, vector<1x5x8xbf16>,
    %c0_34 = arith.constant 0 : index
    %c0_35 = arith.constant 0 : index
    %c16 = arith.constant 16 : index
    %67 = vector.load %arg1[%c0_34, %c0_35, %c16] : memref<1x5x32xbf16, #tpu.memory_space<vmem>>, vector<1x5x8xbf16>
    %68 = vector.shape_cast %67 : vector<1x5x8xbf16> to vector<5x8xbf16>
    %c0_36 = arith.constant 0 : index
    %c0_37 = arith.constant 0 : index
    %c16_38 = arith.constant 16 : index
    %69 = vector.load %arg2[%c0_36, %c0_37, %c16_38] : memref<1x8x64xbf16, #tpu.memory_space<vmem>>, vector<1x8x8xbf16>
    %70 = vector.shape_cast %69 : vector<1x8x8xbf16> to vector<8x8xbf16>
    %c0_39 = arith.constant 0 : index
    %c0_40 = arith.constant 0 : index
    %c48 = arith.constant 48 : index
    %71 = vector.load %arg2[%c0_39, %c0_40, %c48] : memref<1x8x64xbf16, #tpu.memory_space<vmem>>, vector<1x8x8xbf16>
    %72 = vector.shape_cast %71 : vector<1x8x8xbf16> to vector<8x8xbf16>
    %cst_41 = arith.constant dense<0.000000e+00> : vector<5x8xf32>
    %73 = tpu.matmul %68, %70, %cst_41 {dimension_numbers = #tpu.dot_dimension_numbers<[1], [1], [0], [0], [0, 0, 1, 0], [], []>} : vector<5x8xbf16>, vector<8x8xbf16>, vector<5x8xf32> -> vector<5x8xf32>
    %74 = vector.broadcast %2 : vector<1x8xf32> to vector<5x8xf32>
    %75 = arith.addf %73, %74 : vector<5x8xf32>
    %cst_42 = arith.constant dense<0xFF800000> : vector<5xf32>
    %76 = vector.multi_reduction <maximumf>, %75, %cst_42 [1] : vector<5x8xf32> to vector<5xf32>
    %77 = vector.shape_cast %76 : vector<5xf32> to vector<5x1xf32>
    %cst_43 = arith.constant -5.000000e+29 : f32
    %78 = vector.broadcast %cst_43 : f32 to vector<5x1xf32>
    %79 = arith.cmpf ogt, %77, %78 : vector<5x1xf32>
    %80 = arith.extui %79 : vector<5x1xi1> to vector<5x1xi32>
    %81 = arith.sitofp %80 : vector<5x1xi32> to vector<5x1xf32>
    %82 = vector.broadcast %77 : vector<5x1xf32> to vector<5x8xf32>
    %83 = arith.subf %75, %82 : vector<5x8xf32>
    %84 = math.exp %83 : vector<5x8xf32>
    %cst_44 = arith.constant dense<0.000000e+00> : vector<5xf32>
    %85 = vector.multi_reduction <add>, %84, %cst_44 [1] : vector<5x8xf32> to vector<5xf32>
    %86 = vector.shape_cast %85 : vector<5xf32> to vector<5x1xf32>
    %87 = arith.truncf %84 : vector<5x8xf32> to vector<5x8xbf16>
    %cst_45 = arith.constant 1.000000e-30 : f32
    %88 = vector.broadcast %cst_45 : f32 to vector<5x1xf32>
    %89 = arith.addf %86, %88 : vector<5x1xf32>
    %90 = tpu.reciprocal %89 {approx = true} : vector<5x1xf32> -> vector<5x1xf32>
    %91 = arith.mulf %90, %81 : vector<5x1xf32>
    %cst_46 = arith.constant dense<0.000000e+00> : vector<5x8xf32>
    %92 = tpu.matmul %87, %72, %cst_46 {dimension_numbers = #tpu.dot_dimension_numbers<[1], [0], [0], [1], [0, 0, 1, 1], [], []>} : vector<5x8xbf16>, vector<8x8xbf16>, vector<5x8xf32> -> vector<5x8xf32>
    %93 = vector.broadcast %91 : vector<5x1xf32> to vector<5x8xf32>
    %94 = arith.mulf %92, %93 : vector<5x8xf32>
    %95 = arith.truncf %94 : vector<5x8xf32> to vector<5x8xbf16>
    %c0_47 = arith.constant 0 : index
    %c0_48 = arith.constant 0 : index
    %c16_49 = arith.constant 16 : index
    %96 = vector.load %arg4[%c0_47, %c0_48, %c16_49] : memref<1x5x32xbf16, #tpu.memory_space<vmem>>, vector<1x5x8xbf16>
    %97 = vector.shape_cast %96 : vector<1x5x8xbf16> to vector<5x8xbf16>
    %98 = vector.shape_cast %95 : vector<5x8xbf16> to vector<1x5x8xbf16>
    tpu.vector_store %arg4[%c0_47, %c0_48, %c16_49], %98 {strides = array<i32>} : memref<1x5x32xbf16, #tpu.memory_space<vmem>>, vector<1x5x8xbf16>,
    %c0_50 = arith.constant 0 : index
    %c0_51 = arith.constant 0 : index
    %c24 = arith.constant 24 : index
    %99 = vector.load %arg1[%c0_50, %c0_51, %c24] : memref<1x5x32xbf16, #tpu.memory_space<vmem>>, vector<1x5x8xbf16>
    %100 = vector.shape_cast %99 : vector<1x5x8xbf16> to vector<5x8xbf16>
    %c0_52 = arith.constant 0 : index
    %c0_53 = arith.constant 0 : index
    %c24_54 = arith.constant 24 : index
    %101 = vector.load %arg2[%c0_52, %c0_53, %c24_54] : memref<1x8x64xbf16, #tpu.memory_space<vmem>>, vector<1x8x8xbf16>
    %102 = vector.shape_cast %101 : vector<1x8x8xbf16> to vector<8x8xbf16>
    %c0_55 = arith.constant 0 : index
    %c0_56 = arith.constant 0 : index
    %c56 = arith.constant 56 : index
    %103 = vector.load %arg2[%c0_55, %c0_56, %c56] : memref<1x8x64xbf16, #tpu.memory_space<vmem>>, vector<1x8x8xbf16>
    %104 = vector.shape_cast %103 : vector<1x8x8xbf16> to vector<8x8xbf16>
    %cst_57 = arith.constant dense<0.000000e+00> : vector<5x8xf32>
    %105 = tpu.matmul %100, %102, %cst_57 {dimension_numbers = #tpu.dot_dimension_numbers<[1], [1], [0], [0], [0, 0, 1, 0], [], []>} : vector<5x8xbf16>, vector<8x8xbf16>, vector<5x8xf32> -> vector<5x8xf32>
    %106 = vector.broadcast %2 : vector<1x8xf32> to vector<5x8xf32>
    %107 = arith.addf %105, %106 : vector<5x8xf32>
    %cst_58 = arith.constant dense<0xFF800000> : vector<5xf32>
    %108 = vector.multi_reduction <maximumf>, %107, %cst_58 [1] : vector<5x8xf32> to vector<5xf32>
    %109 = vector.shape_cast %108 : vector<5xf32> to vector<5x1xf32>
    %cst_59 = arith.constant -5.000000e+29 : f32
    %110 = vector.broadcast %cst_59 : f32 to vector<5x1xf32>
    %111 = arith.cmpf ogt, %109, %110 : vector<5x1xf32>
    %112 = arith.extui %111 : vector<5x1xi1> to vector<5x1xi32>
    %113 = arith.sitofp %112 : vector<5x1xi32> to vector<5x1xf32>
    %114 = vector.broadcast %109 : vector<5x1xf32> to vector<5x8xf32>
    %115 = arith.subf %107, %114 : vector<5x8xf32>
    %116 = math.exp %115 : vector<5x8xf32>
    %cst_60 = arith.constant dense<0.000000e+00> : vector<5xf32>
    %117 = vector.multi_reduction <add>, %116, %cst_60 [1] : vector<5x8xf32> to vector<5xf32>
    %118 = vector.shape_cast %117 : vector<5xf32> to vector<5x1xf32>
    %119 = arith.truncf %116 : vector<5x8xf32> to vector<5x8xbf16>
    %cst_61 = arith.constant 1.000000e-30 : f32
    %120 = vector.broadcast %cst_61 : f32 to vector<5x1xf32>
    %121 = arith.addf %118, %120 : vector<5x1xf32>
    %122 = tpu.reciprocal %121 {approx = true} : vector<5x1xf32> -> vector<5x1xf32>
    %123 = arith.mulf %122, %113 : vector<5x1xf32>
    %cst_62 = arith.constant dense<0.000000e+00> : vector<5x8xf32>
    %124 = tpu.matmul %119, %104, %cst_62 {dimension_numbers = #tpu.dot_dimension_numbers<[1], [0], [0], [1], [0, 0, 1, 1], [], []>} : vector<5x8xbf16>, vector<8x8xbf16>, vector<5x8xf32> -> vector<5x8xf32>
    %125 = vector.broadcast %123 : vector<5x1xf32> to vector<5x8xf32>
    %126 = arith.mulf %124, %125 : vector<5x8xf32>
    %127 = arith.truncf %126 : vector<5x8xf32> to vector<5x8xbf16>
    %c0_63 = arith.constant 0 : index
    %c0_64 = arith.constant 0 : index
    %c24_65 = arith.constant 24 : index
    %128 = vector.load %arg4[%c0_63, %c0_64, %c24_65] : memref<1x5x32xbf16, #tpu.memory_space<vmem>>, vector<1x5x8xbf16>
    %129 = vector.shape_cast %128 : vector<1x5x8xbf16> to vector<5x8xbf16>
    %130 = vector.shape_cast %127 : vector<5x8xbf16> to vector<1x5x8xbf16>
    tpu.vector_store %arg4[%c0_63, %c0_64, %c24_65], %130 {strides = array<i32>} : memref<1x5x32xbf16, #tpu.memory_space<vmem>>, vector<1x5x8xbf16>,
    return
  }
  func.func @transform_0(%arg0: i32) -> (i32, i32, i32) {
    %c0_i32 = arith.constant 0 : i32
    %c0_i32_0 = arith.constant 0 : i32
    %c0_i32_1 = arith.constant 0 : i32
    return %arg0, %c0_i32, %c0_i32_0 : i32, i32, i32
  }
  func.func @transform_1(%arg0: i32) -> (i32, i32, i32) {
    %c0_i32 = arith.constant 0 : i32
    %c0_i32_0 = arith.constant 0 : i32
    %c0_i32_1 = arith.constant 0 : i32
    return %arg0, %c0_i32, %c0_i32_0 : i32, i32, i32
  }
  func.func @transform_2(%arg0: i32) -> (i32, i32, i32) {
    %c0_i32 = arith.constant 0 : i32
    %c0_i32_0 = arith.constant 0 : i32
    %c0_i32_1 = arith.constant 0 : i32
    return %arg0, %c0_i32, %c0_i32_0 : i32, i32, i32
  }
  func.func @transform_3(%arg0: i32) -> (i32, i32, i32) {
    %c0_i32 = arith.constant 0 : i32
    %c0_i32_0 = arith.constant 0 : i32
    %c0_i32_1 = arith.constant 0 : i32
    return %arg0, %c0_i32, %c0_i32_0 : i32, i32, i32
  }
}

module attributes {stable_mosaic.version = 11 : i64} {
  func.func @_dense_kernel(%arg0: i32, %arg1: i32, %arg2: i32, %arg3: memref<10x32xbf16, #tpu.memory_space<vmem>>, %arg4: memref<1x32xf32, #tpu.memory_space<vmem>>, %arg5: memref<1x32xf32, #tpu.memory_space<vmem>>, %arg6: memref<32x6xbf16, #tpu.memory_space<vmem>>, %arg7: memref<1x6xf32, #tpu.memory_space<vmem>>, %arg8: memref<10x6xf32, #tpu.memory_space<vmem>>, %arg9: memref<10x6xf32, #tpu.memory_space<vmem>>) attributes {dimension_semantics = [#tpu.dimension_semantics<parallel>, #tpu.dimension_semantics<parallel>, #tpu.dimension_semantics<arbitrary>], iteration_bounds = array<i64: 1, 1, 1>, scalar_prefetch = 0 : i64, scratch_operands = 1 : i64, tpu.core_type = #tpu.core_type<tc>, window_params = [{transform_indices = @transform_0, window_bounds = array<i64: 10, 32>}, {pipeline_mode = #tpu.pipeline_mode<synchronous>, transform_indices = @transform_1, window_bounds = array<i64: 1, 32>}, {pipeline_mode = #tpu.pipeline_mode<synchronous>, transform_indices = @transform_2, window_bounds = array<i64: 1, 32>}, {transform_indices = @transform_3, window_bounds = array<i64: 32, 6>}, {transform_indices = @transform_4, window_bounds = array<i64: 1, 6>}, {transform_indices = @transform_5, window_bounds = array<i64: 10, 6>}]} {
    %c0_i32 = arith.constant 0 : i32
    %0 = arith.cmpi eq, %arg2, %c0_i32 : i32
    %1 = arith.extui %0 : i1 to i32
    %c0_i32_0 = arith.constant 0 : i32
    %2 = arith.cmpi ne, %1, %c0_i32_0 : i32
    scf.if %2 {
      %cst_19 = arith.constant 0.000000e+00 : f32
      %38 = vector.broadcast %cst_19 : f32 to vector<10x6xf32>
      %c0_20 = arith.constant 0 : index
      %c0_21 = arith.constant 0 : index
      %39 = vector.load %arg9[%c0_20, %c0_21] : memref<10x6xf32, #tpu.memory_space<vmem>>, vector<10x6xf32>
      tpu.vector_store %arg9[%c0_20, %c0_21], %38 {strides = array<i32>} : memref<10x6xf32, #tpu.memory_space<vmem>>, vector<10x6xf32>,
    } else {
    }
    %c0 = arith.constant 0 : index
    %c0_1 = arith.constant 0 : index
    %3 = vector.load %arg3[%c0, %c0_1] : memref<10x32xbf16, #tpu.memory_space<vmem>>, vector<10x32xbf16>
    %4 = arith.extf %3 : vector<10x32xbf16> to vector<10x32xf32>
    %cst = arith.constant dense<0.000000e+00> : vector<10xf32>
    %5 = vector.multi_reduction <add>, %4, %cst [1] : vector<10x32xf32> to vector<10xf32>
    %6 = vector.shape_cast %5 : vector<10xf32> to vector<10x1xf32>
    %cst_2 = arith.constant 3.200000e+01 : f32
    %7 = vector.broadcast %cst_2 : f32 to vector<10x1xf32>
    %8 = arith.divf %6, %7 : vector<10x1xf32>
    %9 = vector.broadcast %8 : vector<10x1xf32> to vector<10x32xf32>
    %10 = arith.subf %4, %9 : vector<10x32xf32>
    %11 = arith.mulf %10, %10 : vector<10x32xf32>
    %cst_3 = arith.constant dense<0.000000e+00> : vector<10xf32>
    %12 = vector.multi_reduction <add>, %11, %cst_3 [1] : vector<10x32xf32> to vector<10xf32>
    %13 = vector.shape_cast %12 : vector<10xf32> to vector<10x1xf32>
    %cst_4 = arith.constant 3.200000e+01 : f32
    %14 = vector.broadcast %cst_4 : f32 to vector<10x1xf32>
    %15 = arith.divf %13, %14 : vector<10x1xf32>
    %16 = vector.broadcast %8 : vector<10x1xf32> to vector<10x32xf32>
    %17 = arith.subf %4, %16 : vector<10x32xf32>
    %cst_5 = arith.constant 9.99999996E-13 : f32
    %18 = vector.broadcast %cst_5 : f32 to vector<10x1xf32>
    %19 = arith.addf %15, %18 : vector<10x1xf32>
    %20 = math.rsqrt %19 : vector<10x1xf32>
    %21 = vector.broadcast %20 : vector<10x1xf32> to vector<10x32xf32>
    %22 = arith.mulf %17, %21 : vector<10x32xf32>
    %c0_6 = arith.constant 0 : index
    %c0_7 = arith.constant 0 : index
    %23 = vector.load %arg4[%c0_6, %c0_7] : memref<1x32xf32, #tpu.memory_space<vmem>>, vector<1x32xf32>
    %24 = vector.broadcast %23 : vector<1x32xf32> to vector<10x32xf32>
    %25 = arith.mulf %22, %24 : vector<10x32xf32>
    %c0_8 = arith.constant 0 : index
    %c0_9 = arith.constant 0 : index
    %26 = vector.load %arg5[%c0_8, %c0_9] : memref<1x32xf32, #tpu.memory_space<vmem>>, vector<1x32xf32>
    %27 = vector.broadcast %26 : vector<1x32xf32> to vector<10x32xf32>
    %28 = arith.addf %25, %27 : vector<10x32xf32>
    %29 = arith.truncf %28 : vector<10x32xf32> to vector<10x32xbf16>
    %c0_10 = arith.constant 0 : index
    %c0_11 = arith.constant 0 : index
    %30 = vector.load %arg9[%c0_10, %c0_11] : memref<10x6xf32, #tpu.memory_space<vmem>>, vector<10x6xf32>
    %c0_12 = arith.constant 0 : index
    %c0_13 = arith.constant 0 : index
    %31 = vector.load %arg6[%c0_12, %c0_13] : memref<32x6xbf16, #tpu.memory_space<vmem>>, vector<32x6xbf16>
    %cst_14 = arith.constant dense<0.000000e+00> : vector<10x6xf32>
    %32 = tpu.matmul %29, %31, %cst_14 {dimension_numbers = #tpu.dot_dimension_numbers<[1], [0], [0], [1], [0, 0, 1, 1], [], []>} : vector<10x32xbf16>, vector<32x6xbf16>, vector<10x6xf32> -> vector<10x6xf32>
    %33 = arith.addf %30, %32 : vector<10x6xf32>
    %c0_15 = arith.constant 0 : index
    %c0_16 = arith.constant 0 : index
    %34 = vector.load %arg9[%c0_15, %c0_16] : memref<10x6xf32, #tpu.memory_space<vmem>>, vector<10x6xf32>
    tpu.vector_store %arg9[%c0_15, %c0_16], %33 {strides = array<i32>} : memref<10x6xf32, #tpu.memory_space<vmem>>, vector<10x6xf32>,
    %c0_i32_17 = arith.constant 0 : i32
    %35 = arith.cmpi eq, %arg2, %c0_i32_17 : i32
    %36 = arith.extui %35 : i1 to i32
    %c0_i32_18 = arith.constant 0 : i32
    %37 = arith.cmpi ne, %36, %c0_i32_18 : i32
    scf.if %37 {
      %c0_19 = arith.constant 0 : index
      %c0_20 = arith.constant 0 : index
      %38 = vector.load %arg9[%c0_19, %c0_20] : memref<10x6xf32, #tpu.memory_space<vmem>>, vector<10x6xf32>
      %c0_21 = arith.constant 0 : index
      %c0_22 = arith.constant 0 : index
      %39 = vector.load %arg7[%c0_21, %c0_22] : memref<1x6xf32, #tpu.memory_space<vmem>>, vector<1x6xf32>
      %40 = vector.broadcast %39 : vector<1x6xf32> to vector<10x6xf32>
      %41 = arith.addf %38, %40 : vector<10x6xf32>
      %c0_23 = arith.constant 0 : index
      %c0_24 = arith.constant 0 : index
      %42 = vector.load %arg8[%c0_23, %c0_24] : memref<10x6xf32, #tpu.memory_space<vmem>>, vector<10x6xf32>
      tpu.vector_store %arg8[%c0_23, %c0_24], %41 {strides = array<i32>} : memref<10x6xf32, #tpu.memory_space<vmem>>, vector<10x6xf32>,
    } else {
    }
    return
  }
  func.func @transform_0(%arg0: i32, %arg1: i32, %arg2: i32) -> (i32, i32) {
    %c0_i32 = arith.constant 0 : i32
    return %arg0, %arg2 : i32, i32
  }
  func.func @transform_1(%arg0: i32, %arg1: i32, %arg2: i32) -> (i32, i32) {
    %c0_i32 = arith.constant 0 : i32
    %c0_i32_0 = arith.constant 0 : i32
    %c0_i32_1 = arith.constant 0 : i32
    return %c0_i32, %c0_i32_0 : i32, i32
  }
  func.func @transform_2(%arg0: i32, %arg1: i32, %arg2: i32) -> (i32, i32) {
    %c0_i32 = arith.constant 0 : i32
    %c0_i32_0 = arith.constant 0 : i32
    %c0_i32_1 = arith.constant 0 : i32
    return %c0_i32, %c0_i32_0 : i32, i32
  }
  func.func @transform_3(%arg0: i32, %arg1: i32, %arg2: i32) -> (i32, i32) {
    %c0_i32 = arith.constant 0 : i32
    return %arg2, %arg1 : i32, i32
  }
  func.func @transform_4(%arg0: i32, %arg1: i32, %arg2: i32) -> (i32, i32) {
    %c0_i32 = arith.constant 0 : i32
    %c0_i32_0 = arith.constant 0 : i32
    return %c0_i32, %arg1 : i32, i32
  }
  func.func @transform_5(%arg0: i32, %arg1: i32, %arg2: i32) -> (i32, i32) {
    %c0_i32 = arith.constant 0 : i32
    return %arg0, %arg1 : i32, i32
  }
}

module attributes {stable_mosaic.version = 11 : i64} {
  func.func @_dense_kernel(%arg0: i32, %arg1: i32, %arg2: i32, %arg3: memref<16x32xbf16, #tpu.memory_space<vmem>>, %arg4: memref<32x6xbf16, #tpu.memory_space<vmem>>, %arg5: memref<1x6xf32, #tpu.memory_space<vmem>>, %arg6: memref<16x6xf32, #tpu.memory_space<vmem>>, %arg7: memref<16x6xf32, #tpu.memory_space<vmem>>) attributes {dimension_semantics = [#tpu.dimension_semantics<parallel>, #tpu.dimension_semantics<parallel>, #tpu.dimension_semantics<arbitrary>], iteration_bounds = array<i64: 1, 1, 1>, scalar_prefetch = 0 : i64, scratch_operands = 1 : i64, tpu.core_type = #tpu.core_type<tc>, window_params = [{transform_indices = @transform_0, window_bounds = array<i64: 16, 32>}, {transform_indices = @transform_1, window_bounds = array<i64: 32, 6>}, {transform_indices = @transform_2, window_bounds = array<i64: 1, 6>}, {transform_indices = @transform_3, window_bounds = array<i64: 16, 6>}]} {
    %c0_i32 = arith.constant 0 : i32
    %0 = arith.cmpi eq, %arg2, %c0_i32 : i32
    %1 = arith.extui %0 : i1 to i32
    %c0_i32_0 = arith.constant 0 : i32
    %2 = arith.cmpi ne, %1, %c0_i32_0 : i32
    scf.if %2 {
      %cst_10 = arith.constant 0.000000e+00 : f32
      %12 = vector.broadcast %cst_10 : f32 to vector<16x6xf32>
      %c0_11 = arith.constant 0 : index
      %c0_12 = arith.constant 0 : index
      %13 = vector.load %arg7[%c0_11, %c0_12] : memref<16x6xf32, #tpu.memory_space<vmem>>, vector<16x6xf32>
      tpu.vector_store %arg7[%c0_11, %c0_12], %12 {strides = array<i32>} : memref<16x6xf32, #tpu.memory_space<vmem>>, vector<16x6xf32>,
    } else {
    }
    %c0 = arith.constant 0 : index
    %c0_1 = arith.constant 0 : index
    %3 = vector.load %arg3[%c0, %c0_1] : memref<16x32xbf16, #tpu.memory_space<vmem>>, vector<16x32xbf16>
    %c0_2 = arith.constant 0 : index
    %c0_3 = arith.constant 0 : index
    %4 = vector.load %arg7[%c0_2, %c0_3] : memref<16x6xf32, #tpu.memory_space<vmem>>, vector<16x6xf32>
    %c0_4 = arith.constant 0 : index
    %c0_5 = arith.constant 0 : index
    %5 = vector.load %arg4[%c0_4, %c0_5] : memref<32x6xbf16, #tpu.memory_space<vmem>>, vector<32x6xbf16>
    %cst = arith.constant dense<0.000000e+00> : vector<16x6xf32>
    %6 = tpu.matmul %3, %5, %cst {dimension_numbers = #tpu.dot_dimension_numbers<[1], [0], [0], [1], [0, 0, 1, 1], [], []>} : vector<16x32xbf16>, vector<32x6xbf16>, vector<16x6xf32> -> vector<16x6xf32>
    %7 = arith.addf %4, %6 : vector<16x6xf32>
    %c0_6 = arith.constant 0 : index
    %c0_7 = arith.constant 0 : index
    %8 = vector.load %arg7[%c0_6, %c0_7] : memref<16x6xf32, #tpu.memory_space<vmem>>, vector<16x6xf32>
    tpu.vector_store %arg7[%c0_6, %c0_7], %7 {strides = array<i32>} : memref<16x6xf32, #tpu.memory_space<vmem>>, vector<16x6xf32>,
    %c0_i32_8 = arith.constant 0 : i32
    %9 = arith.cmpi eq, %arg2, %c0_i32_8 : i32
    %10 = arith.extui %9 : i1 to i32
    %c0_i32_9 = arith.constant 0 : i32
    %11 = arith.cmpi ne, %10, %c0_i32_9 : i32
    scf.if %11 {
      %c0_10 = arith.constant 0 : index
      %c0_11 = arith.constant 0 : index
      %12 = vector.load %arg7[%c0_10, %c0_11] : memref<16x6xf32, #tpu.memory_space<vmem>>, vector<16x6xf32>
      %c0_12 = arith.constant 0 : index
      %c0_13 = arith.constant 0 : index
      %13 = vector.load %arg5[%c0_12, %c0_13] : memref<1x6xf32, #tpu.memory_space<vmem>>, vector<1x6xf32>
      %14 = vector.broadcast %13 : vector<1x6xf32> to vector<16x6xf32>
      %15 = arith.addf %12, %14 : vector<16x6xf32>
      %cst_14 = arith.constant dense<0xFF800000> : vector<16xf32>
      %16 = vector.multi_reduction <maximumf>, %15, %cst_14 [1] : vector<16x6xf32> to vector<16xf32>
      %17 = vector.shape_cast %16 : vector<16xf32> to vector<16x1xf32>
      %18 = vector.broadcast %17 : vector<16x1xf32> to vector<16x6xf32>
      %19 = arith.subf %15, %18 : vector<16x6xf32>
      %20 = math.exp %19 : vector<16x6xf32>
      %cst_15 = arith.constant dense<0.000000e+00> : vector<16xf32>
      %21 = vector.multi_reduction <add>, %20, %cst_15 [1] : vector<16x6xf32> to vector<16xf32>
      %22 = vector.shape_cast %21 : vector<16xf32> to vector<16x1xf32>
      %23 = math.log %22 : vector<16x1xf32>
      %24 = vector.broadcast %23 : vector<16x1xf32> to vector<16x6xf32>
      %25 = arith.subf %19, %24 : vector<16x6xf32>
      %c0_16 = arith.constant 0 : index
      %c0_17 = arith.constant 0 : index
      %26 = vector.load %arg6[%c0_16, %c0_17] : memref<16x6xf32, #tpu.memory_space<vmem>>, vector<16x6xf32>
      tpu.vector_store %arg6[%c0_16, %c0_17], %25 {strides = array<i32>} : memref<16x6xf32, #tpu.memory_space<vmem>>, vector<16x6xf32>,
    } else {
    }
    return
  }
  func.func @transform_0(%arg0: i32, %arg1: i32, %arg2: i32) -> (i32, i32) {
    %c0_i32 = arith.constant 0 : i32
    return %arg0, %arg2 : i32, i32
  }
  func.func @transform_1(%arg0: i32, %arg1: i32, %arg2: i32) -> (i32, i32) {
    %c0_i32 = arith.constant 0 : i32
    return %arg2, %arg1 : i32, i32
  }
  func.func @transform_2(%arg0: i32, %arg1: i32, %arg2: i32) -> (i32, i32) {
    %c0_i32 = arith.constant 0 : i32
    %c0_i32_0 = arith.constant 0 : i32
    return %c0_i32, %arg1 : i32, i32
  }
  func.func @transform_3(%arg0: i32, %arg1: i32, %arg2: i32) -> (i32, i32) {
    %c0_i32 = arith.constant 0 : i32
    return %arg0, %arg1 : i32, i32
  }
}

</mosaic_0001>

<llo_original>
// kernel: raven_forward.28
$region0: #{raven_forward.28}
  #allocation0 [shape = 'u32[]', space=smem, size = 0x4, offset = 0x4, fixed_abs, tag = 'smem constant byte address 0x4 - core index']
  #allocation1 [shape = 'u32[144,128]{1,0:T(1,128)}', space=vmem, size = 0x12000, scoped, tag = 'internal scratch']
  #allocation2 [shape = 'f32[16,32]{1,0:T(8,128)}', space=vmem, size = 0x2000, scoped, tag = 'scratch operand']
  %s0 = inlined_call_operand.vmem [shape: bf16[16,32], index: 0, kind: input, shape index: {}]
  %s1 = inlined_call_operand.vmem [shape: bf16[32,32], index: 1, kind: input, shape index: {}]
  %s2 = inlined_call_operand.vmem [shape: f32[1,32], index: 2, kind: input, shape index: {}]
  %s3 = inlined_call_operand.vmem [shape: bf16[16,32], index: 3, kind: output, shape index: {}]
  %s4 = sld [smem:[#allocation0]]
  $region30: #{raven_forward.28} parent=0
    _
  %s6 = ssub.s32 1, %s4
  %s7 = scalar_select 0, %s6, %s4
  // Predicated region
  $region2: #{raven_forward.28} parent=0 // pred_check
    _
  $region3: #{raven_forward.28} parent=0 // pred_check_branch
    %9 = sbr.rel (0) target = $region5
  $region4: #{raven_forward.28} parent=0 // pred_region
    _
  $region5: #{raven_forward.28} parent=0 // pred_fallthru
    _
  // Predicated region
  $region6: #{raven_forward.28} parent=0 // pred_check
    _
  $region7: #{raven_forward.28} parent=0 // pred_check_branch
    %11 = sbr.rel (0) target = $region9
  $region8: #{raven_forward.28} parent=0 // pred_region
    _
  $region9: #{raven_forward.28} parent=0 // pred_fallthru
    _
  // Predicated region
  $region10: #{raven_forward.28} parent=0 // pred_check
    _
  $region11: #{raven_forward.28} parent=0 // pred_check_branch
    %13 = sbr.rel (0) target = $region13
  $region12: #{raven_forward.28} parent=0 // pred_region
    _
  $region13: #{raven_forward.28} parent=0 // pred_fallthru
    _
  %p15 = scmp.eq.s32.totalorder 0, 0
  // Predicated region
  $region14: #{raven_forward.28} parent=0 // pred_check
    %p16 = pneg %p15
  $region15: #{raven_forward.28} parent=0 // pred_check_branch
    %18 = sbr.rel (%p16) target = $region17
  $region16: #{raven_forward.28} parent=0 // pred_region
    %vm19 = vcmask 261120
    %20 = vst.msk [vmem:[#allocation2] sm:$0xff] %vm19, 0.0
    %21 = vst.msk [vmem:[#allocation2 + $0x8] sm:$0xff] %vm19, 0.0
  $region17: #{raven_forward.28} parent=0 // pred_fallthru
    _
  %v22 = vld [vmem:[%s0] sm:$0xf]
  %v23 = vld [vmem:[%s0 + $0x4] sm:$0xf]
  %v24 = vld [vmem:[#allocation2] sm:$0xff]
  %v25 = vld [vmem:[#allocation2 + $0x8] sm:$0xff]
  %v26 = vld [vmem:[%s1] sm:$0xf]
  %v27 = vld [vmem:[%s1 + $0x4] sm:$0xf]
  %v28 = vld [vmem:[%s1 + $0x8] sm:$0xf]
  %v29 = vld [vmem:[%s1 + $0xc] sm:$0xf]
  %v32 = vunpack.c.l.b16 %v22
  %v33 = vunpack.c.l.b16 %v23
  %v34 = vpack.c.b16 %v33, %v32
  %v39 = vunpack.c.l.b16 %v26
  %v40 = vunpack.c.l.b16 %v27
  %v41 = vunpack.c.l.b16 %v28
  %v42 = vunpack.c.l.b16 %v29
  %v43 = vpack.c.b16 %v40, %v39
  %v44 = vpack.c.b16 %v42, %v41
  %vm47 = vcmask 261120
  %v49 = vsel %vm47, %v34, 0
  %51 = vmatprep.subr.bf16.mxu0 0
  %52 = vmatpush1.bf16.msra.mxu0 0
  %53 = vmatprep.subr.bf16.mxu0 0
  %54 = vmatpush1.bf16.msra.mxu0 0
  %55 = vmatprep.subr.bf16.mxu0 0
  %56 = vmatpush1.bf16.msra.mxu0 0
  %57 = vmatprep.subr.bf16.mxu0 0
  %58 = vmatpush1.bf16.msra.mxu0 0
  %59 = vmatprep.subr.bf16.mxu0 0
  %60 = vmatpush1.bf16.msra.mxu0 0
  %61 = vmatprep.subr.bf16.mxu0 0
  %62 = vmatpush1.bf16.msra.mxu0 0
  %63 = vmatprep.subr.bf16.mxu0 0
  %64 = vmatpush1.bf16.msra.mxu0 %v44
  %65 = vmatprep.subr.bf16.mxu0 0
  %66 = vmatpush1.bf16.msra.mxu0 %v43
  %67 = vmatprep.subr.bf16.mxu0 0
  %68 = vmatpush2.bf16.msra.mxu0 0
  %69 = vmatprep.subr.bf16.mxu0 0
  %70 = vmatpush2.bf16.msra.mxu0 0
  %71 = vmatprep.subr.bf16.mxu0 0
  %72 = vmatpush2.bf16.msra.mxu0 0
  %73 = vmatprep.subr.bf16.mxu0 0
  %74 = vmatpush2.bf16.msra.mxu0 0
  %75 = vmatprep.subr.bf16.mxu0 0
  %76 = vmatpush2.bf16.msra.mxu0 0
  %77 = vmatprep.subr.bf16.mxu0 0
  %78 = vmatpush2.bf16.msra.mxu0 0
  %79 = vmatprep.subr.bf16.mxu0 0
  %80 = vmatpush2.bf16.msra.mxu0 0
  %81 = vmatprep.subr.bf16.mxu0 0
  %82 = vmatpush2.bf16.msra.mxu0 0
  %83 = vmatprep.mubr.bf16.mxu0 0
  %84 = vmatmul.mubr.bf16.gmra.mxu0 %v49
  %v85 = vpop.f32.mrf.mxu0
  %v86 = vadd.f32 0.0, %v85
  %v87 = vpop.f32.mrf.mxu0
  %v88 = vpop.f32.mrf.mxu0
  %v89 = vadd.f32 0.0, %v88
  %v90 = vpop.f32.mrf.mxu0
  %91 = vdwg.mxu0
  %v92 = vadd.f32 %v24, %v86
  %v93 = vadd.f32 %v25, %v89
  %94 = vst.msk [vmem:[#allocation2] sm:$0xff] %vm47, %v92
  %95 = vst.msk [vmem:[#allocation2 + $0x8] sm:$0xff] %vm47, %v93
  // Predicated region
  $region18: #{raven_forward.28} parent=0 // pred_check
    %p96 = pneg %p15
  $region19: #{raven_forward.28} parent=0 // pred_check_branch
    %98 = sbr.rel (%p96) target = $region21
  $region20: #{raven_forward.28} parent=0 // pred_region
    %v99 = vld [vmem:[#allocation2] sm:$0xff]
    %v100 = vld [vmem:[#allocation2 + $0x8] sm:$0xff]
    %v101 = vld [vmem:[%s2] sm:$0x1]
    %v103 = vlaneseq
    %v104 = vshrl.u32 %v103, 7
    %v105 = vsub.s32 0, %v104
    %v106 = vrot.slane %v101, %v105
    %v108 = vadd.f32 %v99, %v106
    %v109 = vadd.f32 %v100, %v106
    %v110 = vpack.c.bf16 %v109, %v108
    %v112 = vunpack.c.l.b16 %v110
    %v113 = vunpack.c.h.b16 %v110
    %v114 = vpack.c.b16 %v112, %v112
    %v115 = vpack.c.b16 %v113, %v113
    %vm118 = vcmask 257024
    %119 = vst.msk [vmem:[%s3] sm:$0xf] %vm118, %v114
    %120 = vst.msk [vmem:[%s3 + $0x4] sm:$0xf] %vm118, %v115
  $region21: #{raven_forward.28} parent=0 // pred_fallthru
    _
  // Predicated region
  $region22: #{raven_forward.28} parent=0 // pred_check
    _
  $region23: #{raven_forward.28} parent=0 // pred_check_branch
    %122 = sbr.rel (0) target = $region25
  $region24: #{raven_forward.28} parent=0 // pred_region
    _
  $region25: #{raven_forward.28} parent=0 // pred_fallthru
    _
  // Predicated region
  $region26: #{raven_forward.28} parent=0 // pred_check
    _
  $region27: #{raven_forward.28} parent=0 // pred_check_branch
    %124 = sbr.rel (0) target = $region29
  $region28: #{raven_forward.28} parent=0 // pred_region
    _
  $region29: #{raven_forward.28} parent=0 // pred_fallthru
    _

// kernel: raven_forward.31
$region0: #{raven_forward.31}
  #allocation0 [shape = 'u32[]', space=smem, size = 0x4, offset = 0x4, fixed_abs, tag = 'smem constant byte address 0x4 - core index']
  #allocation1 [shape = 'u32[144,128]{1,0:T(1,128)}', space=vmem, size = 0x12000, scoped, tag = 'internal scratch']
  #allocation2 [shape = 'f32[16,32]{1,0:T(8,128)}', space=vmem, size = 0x2000, scoped, tag = 'scratch operand']
  %s0 = inlined_call_operand.vmem [shape: bf16[16,32], index: 0, kind: input, shape index: {}]
  %s1 = inlined_call_operand.vmem [shape: bf16[32,32], index: 1, kind: input, shape index: {}]
  %s2 = inlined_call_operand.vmem [shape: f32[1,32], index: 2, kind: input, shape index: {}]
  %s3 = inlined_call_operand.vmem [shape: bf16[16,32], index: 3, kind: input, shape index: {}]
  %s4 = inlined_call_operand.vmem [shape: bf16[16,32], index: 4, kind: output, shape index: {}]
  %s5 = sld [smem:[#allocation0]]
  $region34: #{raven_forward.31} parent=0
    _
  %s7 = ssub.s32 1, %s5
  %s8 = scalar_select 0, %s7, %s5
  // Predicated region
  $region2: #{raven_forward.31} parent=0 // pred_check
    _
  $region3: #{raven_forward.31} parent=0 // pred_check_branch
    %10 = sbr.rel (0) target = $region5
  $region4: #{raven_forward.31} parent=0 // pred_region
    _
  $region5: #{raven_forward.31} parent=0 // pred_fallthru
    _
  // Predicated region
  $region6: #{raven_forward.31} parent=0 // pred_check
    _
  $region7: #{raven_forward.31} parent=0 // pred_check_branch
    %12 = sbr.rel (0) target = $region9
  $region8: #{raven_forward.31} parent=0 // pred_region
    _
  $region9: #{raven_forward.31} parent=0 // pred_fallthru
    _
  // Predicated region
  $region10: #{raven_forward.31} parent=0 // pred_check
    _
  $region11: #{raven_forward.31} parent=0 // pred_check_branch
    %14 = sbr.rel (0) target = $region13
  $region12: #{raven_forward.31} parent=0 // pred_region
    _
  $region13: #{raven_forward.31} parent=0 // pred_fallthru
    _
  // Predicated region
  $region14: #{raven_forward.31} parent=0 // pred_check
    _
  $region15: #{raven_forward.31} parent=0 // pred_check_branch
    %16 = sbr.rel (0) target = $region17
  $region16: #{raven_forward.31} parent=0 // pred_region
    _
  $region17: #{raven_forward.31} parent=0 // pred_fallthru
    _
  %p18 = scmp.eq.s32.totalorder 0, 0
  // Predicated region
  $region18: #{raven_forward.31} parent=0 // pred_check
    %p19 = pneg %p18
  $region19: #{raven_forward.31} parent=0 // pred_check_branch
    %21 = sbr.rel (%p19) target = $region21
  $region20: #{raven_forward.31} parent=0 // pred_region
    %vm22 = vcmask 261120
    %23 = vst.msk [vmem:[#allocation2] sm:$0xff] %vm22, 0.0
    %24 = vst.msk [vmem:[#allocation2 + $0x8] sm:$0xff] %vm22, 0.0
  $region21: #{raven_forward.31} parent=0 // pred_fallthru
    _
  %v25 = vld [vmem:[%s0] sm:$0xf]
  %v26 = vld [vmem:[%s0 + $0x4] sm:$0xf]
  %v27 = vld [vmem:[#allocation2] sm:$0xff]
  %v28 = vld [vmem:[#allocation2 + $0x8] sm:$0xff]
  %v29 = vld [vmem:[%s1] sm:$0xf]
  %v30 = vld [vmem:[%s1 + $0x4] sm:$0xf]
  %v31 = vld [vmem:[%s1 + $0x8] sm:$0xf]
  %v32 = vld [vmem:[%s1 + $0xc] sm:$0xf]
  %v35 = vunpack.c.l.b16 %v25
  %v36 = vunpack.c.l.b16 %v26
  %v37 = vpack.c.b16 %v36, %v35
  %v42 = vunpack.c.l.b16 %v29
  %v43 = vunpack.c.l.b16 %v30
  %v44 = vunpack.c.l.b16 %v31
  %v45 = vunpack.c.l.b16 %v32
  %v46 = vpack.c.b16 %v43, %v42
  %v47 = vpack.c.b16 %v45, %v44
  %vm50 = vcmask 261120
  %v52 = vsel %vm50, %v37, 0
  %54 = vmatprep.subr.bf16.mxu0 0
  %55 = vmatpush1.bf16.msra.mxu0 0
  %56 = vmatprep.subr.bf16.mxu0 0
  %57 = vmatpush1.bf16.msra.mxu0 0
  %58 = vmatprep.subr.bf16.mxu0 0
  %59 = vmatpush1.bf16.msra.mxu0 0
  %60 = vmatprep.subr.bf16.mxu0 0
  %61 = vmatpush1.bf16.msra.mxu0 0
  %62 = vmatprep.subr.bf16.mxu0 0
  %63 = vmatpush1.bf16.msra.mxu0 0
  %64 = vmatprep.subr.bf16.mxu0 0
  %65 = vmatpush1.bf16.msra.mxu0 0
  %66 = vmatprep.subr.bf16.mxu0 0
  %67 = vmatpush1.bf16.msra.mxu0 %v47
  %68 = vmatprep.subr.bf16.mxu0 0
  %69 = vmatpush1.bf16.msra.mxu0 %v46
  %70 = vmatprep.subr.bf16.mxu0 0
  %71 = vmatpush2.bf16.msra.mxu0 0
  %72 = vmatprep.subr.bf16.mxu0 0
  %73 = vmatpush2.bf16.msra.mxu0 0
  %74 = vmatprep.subr.bf16.mxu0 0
  %75 = vmatpush2.bf16.msra.mxu0 0
  %76 = vmatprep.subr.bf16.mxu0 0
  %77 = vmatpush2.bf16.msra.mxu0 0
  %78 = vmatprep.subr.bf16.mxu0 0
  %79 = vmatpush2.bf16.msra.mxu0 0
  %80 = vmatprep.subr.bf16.mxu0 0
  %81 = vmatpush2.bf16.msra.mxu0 0
  %82 = vmatprep.subr.bf16.mxu0 0
  %83 = vmatpush2.bf16.msra.mxu0 0
  %84 = vmatprep.subr.bf16.mxu0 0
  %85 = vmatpush2.bf16.msra.mxu0 0
  %86 = vmatprep.mubr.bf16.mxu0 0
  %87 = vmatmul.mubr.bf16.gmra.mxu0 %v52
  %v88 = vpop.f32.mrf.mxu0
  %v89 = vadd.f32 0.0, %v88
  %v90 = vpop.f32.mrf.mxu0
  %v91 = vpop.f32.mrf.mxu0
  %v92 = vadd.f32 0.0, %v91
  %v93 = vpop.f32.mrf.mxu0
  %94 = vdwg.mxu0
  %v95 = vadd.f32 %v27, %v89
  %v96 = vadd.f32 %v28, %v92
  %97 = vst.msk [vmem:[#allocation2] sm:$0xff] %vm50, %v95
  %98 = vst.msk [vmem:[#allocation2 + $0x8] sm:$0xff] %vm50, %v96
  // Predicated region
  $region22: #{raven_forward.31} parent=0 // pred_check
    %p99 = pneg %p18
  $region23: #{raven_forward.31} parent=0 // pred_check_branch
    %101 = sbr.rel (%p99) target = $region25
  $region24: #{raven_forward.31} parent=0 // pred_region
    %v102 = vld [vmem:[#allocation2] sm:$0xff]
    %v103 = vld [vmem:[#allocation2 + $0x8] sm:$0xff]
    %v104 = vld [vmem:[%s2] sm:$0x1]
    %v106 = vlaneseq
    %v107 = vshrl.u32 %v106, 7
    %v108 = vsub.s32 0, %v107
    %v109 = vrot.slane %v104, %v108
    %v111 = vadd.f32 %v102, %v109
    %v112 = vadd.f32 %v103, %v109
    %v113 = vld [vmem:[%s3] sm:$0xf]
    %v114 = vld [vmem:[%s3 + $0x4] sm:$0xf]
    %v115 = vunpack.c.l.bf16 %v113
    %v116 = vunpack.c.l.bf16 %v114
    %v117 = vadd.f32 %v111, %v115
    %v118 = vadd.f32 %v112, %v116
    %v119 = vpack.c.bf16 %v118, %v117
    %v121 = vunpack.c.l.b16 %v119
    %v122 = vunpack.c.h.b16 %v119
    %v123 = vpack.c.b16 %v121, %v121
    %v124 = vpack.c.b16 %v122, %v122
    %vm127 = vcmask 257024
    %128 = vst.msk [vmem:[%s4] sm:$0xf] %vm127, %v123
    %129 = vst.msk [vmem:[%s4 + $0x4] sm:$0xf] %vm127, %v124
  $region25: #{raven_forward.31} parent=0 // pred_fallthru
    _
  // Predicated region
  $region26: #{raven_forward.31} parent=0 // pred_check
    _
  $region27: #{raven_forward.31} parent=0 // pred_check_branch
    %131 = sbr.rel (0) target = $region29
  $region28: #{raven_forward.31} parent=0 // pred_region
    _
  $region29: #{raven_forward.31} parent=0 // pred_fallthru
    _
  // Predicated region
  $region30: #{raven_forward.31} parent=0 // pred_check
    _
  $region31: #{raven_forward.31} parent=0 // pred_check_branch
    %133 = sbr.rel (0) target = $region33
  $region32: #{raven_forward.31} parent=0 // pred_region
    _
  $region33: #{raven_forward.31} parent=0 // pred_fallthru
    _

// kernel: raven_forward.29
$region0: #{raven_forward.29}
  #allocation0 [shape = 'u32[]', space=smem, size = 0x4, offset = 0x4, fixed_abs, tag = 'smem constant byte address 0x4 - core index']
  #allocation1 [shape = 'u32[144,128]{1,0:T(1,128)}', space=vmem, size = 0x12000, scoped, tag = 'internal scratch']
  #allocation2 [shape = 'f32[16,96]{1,0:T(8,128)}', space=vmem, size = 0x2000, scoped, tag = 'scratch operand']
  %s0 = inlined_call_operand.vmem [shape: bf16[16,32], index: 0, kind: input, shape index: {}]
  %s1 = inlined_call_operand.vmem [shape: f32[1,32], index: 1, kind: input, shape index: {}]
  %s2 = inlined_call_operand.vmem [shape: f32[1,32], index: 2, kind: input, shape index: {}]
  %s3 = inlined_call_operand.vmem [shape: bf16[32,96], index: 3, kind: input, shape index: {}]
  %s4 = inlined_call_operand.vmem [shape: f32[1,96], index: 4, kind: input, shape index: {}]
  %s5 = inlined_call_operand.vmem [shape: bf16[16,96], index: 5, kind: output, shape index: {}]
  %s6 = sld [smem:[#allocation0]]
  $region38: #{raven_forward.29} parent=0
    _
  %s8 = ssub.s32 1, %s6
  %s9 = scalar_select 0, %s8, %s6
  // Predicated region
  $region2: #{raven_forward.29} parent=0 // pred_check
    _
  $region3: #{raven_forward.29} parent=0 // pred_check_branch
    %11 = sbr.rel (0) target = $region5
  $region4: #{raven_forward.29} parent=0 // pred_region
    _
  $region5: #{raven_forward.29} parent=0 // pred_fallthru
    _
  // Predicated region
  $region6: #{raven_forward.29} parent=0 // pred_check
    _
  $region7: #{raven_forward.29} parent=0 // pred_check_branch
    %13 = sbr.rel (0) target = $region9
  $region8: #{raven_forward.29} parent=0 // pred_region
    _
  $region9: #{raven_forward.29} parent=0 // pred_fallthru
    _
  // Predicated region
  $region10: #{raven_forward.29} parent=0 // pred_check
    _
  $region11: #{raven_forward.29} parent=0 // pred_check_branch
    %15 = sbr.rel (0) target = $region13
  $region12: #{raven_forward.29} parent=0 // pred_region
    _
  $region13: #{raven_forward.29} parent=0 // pred_fallthru
    _
  // Predicated region
  $region14: #{raven_forward.29} parent=0 // pred_check
    _
  $region15: #{raven_forward.29} parent=0 // pred_check_branch
    %17 = sbr.rel (0) target = $region17
  $region16: #{raven_forward.29} parent=0 // pred_region
    _
  $region17: #{raven_forward.29} parent=0 // pred_fallthru
    _
  // Predicated region
  $region18: #{raven_forward.29} parent=0 // pred_check
    _
  $region19: #{raven_forward.29} parent=0 // pred_check_branch
    %19 = sbr.rel (0) target = $region21
  $region20: #{raven_forward.29} parent=0 // pred_region
    _
  $region21: #{raven_forward.29} parent=0 // pred_fallthru
    _
  %p21 = scmp.eq.s32.totalorder 0, 0
  // Predicated region
  $region22: #{raven_forward.29} parent=0 // pred_check
    %p22 = pneg %p21
  $region23: #{raven_forward.29} parent=0 // pred_check_branch
    %24 = sbr.rel (%p22) target = $region25
  $region24: #{raven_forward.29} parent=0 // pred_region
    %vm25 = vcmask 785408
    %26 = vst.msk [vmem:[#allocation2] sm:$0xff] %vm25, 0.0
    %27 = vst.msk [vmem:[#allocation2 + $0x8] sm:$0xff] %vm25, 0.0
  $region25: #{raven_forward.29} parent=0 // pred_fallthru
    _
  %v28 = vld [vmem:[%s0] sm:$0xf]
  %v29 = vld [vmem:[%s0 + $0x4] sm:$0xf]
  %v30 = vunpack.c.l.bf16 %v28
  %v31 = vunpack.c.l.bf16 %v29
  %vm32 = vcmask 261120
  %v33 = vsel %vm32, %v30, 0.0
  %34 = vadd.xlane.f32.xlu0 %v33
  %v35 = vpop.xlane.xlu0 %34
  %v36 = vsel %vm32, %v31, 0.0
  %37 = vadd.xlane.f32.xlu0 %v36
  %v38 = vpop.xlane.xlu0 %37
  %v39 = vrcp.pop 32.0
  %v40 = vmul.f32 %v35, %v39
  %v41 = vmul.f32 %v38, %v39
  %v42 = vsub.f32 %v30, %v40
  %v43 = vsub.f32 %v31, %v41
  %v44 = vmul.f32 %v42, %v42
  %v45 = vmul.f32 %v43, %v43
  %v46 = vsel %vm32, %v44, 0.0
  %47 = vadd.xlane.f32.xlu0 %v46
  %v48 = vpop.xlane.xlu0 %47
  %v49 = vsel %vm32, %v45, 0.0
  %50 = vadd.xlane.f32.xlu0 %v49
  %v51 = vpop.xlane.xlu0 %50
  %v52 = vmul.f32 %v48, %v39
  %v53 = vmul.f32 %v51, %v39
  %v54 = vadd.f32 %v52, 1e-12
  %v55 = vadd.f32 %v53, 1e-12
  %v56 = vrsqrt.pop %v54
  %v57 = vrsqrt.pop %v55
  %v58 = vmul.f32 %v42, %v56
  %v59 = vmul.f32 %v43, %v57
  %v60 = vld [vmem:[%s1] sm:$0x1]
  %v62 = vlaneseq
  %v63 = vshrl.u32 %v62, 7
  %v64 = vsub.s32 0, %v63
  %v65 = vrot.slane %v60, %v64
  %v67 = vmul.f32 %v58, %v65
  %v68 = vmul.f32 %v59, %v65
  %v69 = vld [vmem:[%s2] sm:$0x1]
  %v71 = vlaneseq
  %v72 = vshrl.u32 %v71, 7
  %v73 = vsub.s32 0, %v72
  %v74 = vrot.slane %v69, %v73
  %v76 = vadd.f32 %v67, %v74
  %v77 = vadd.f32 %v68, %v74
  %v78 = vpack.c.bf16 %v77, %v76
  %v79 = vld [vmem:[#allocation2] sm:$0xff]
  %v80 = vld [vmem:[#allocation2 + $0x8] sm:$0xff]
  %v81 = vld [vmem:[%s3] sm:$0xf]
  %v82 = vld [vmem:[%s3 + $0x4] sm:$0xf]
  %v83 = vld [vmem:[%s3 + $0x8] sm:$0xf]
  %v84 = vld [vmem:[%s3 + $0xc] sm:$0xf]
  %v89 = vunpack.c.l.b16 %v81
  %v90 = vunpack.c.l.b16 %v82
  %v91 = vunpack.c.l.b16 %v83
  %v92 = vunpack.c.l.b16 %v84
  %v93 = vpack.c.b16 %v90, %v89
  %v94 = vpack.c.b16 %v92, %v91
  %v98 = vsel %vm32, %v78, 0
  %100 = vmatprep.subr.bf16.mxu0 0
  %101 = vmatpush1.bf16.msra.mxu0 0
  %102 = vmatprep.subr.bf16.mxu0 0
  %103 = vmatpush1.bf16.msra.mxu0 0
  %104 = vmatprep.subr.bf16.mxu0 0
  %105 = vmatpush1.bf16.msra.mxu0 0
  %106 = vmatprep.subr.bf16.mxu0 0
  %107 = vmatpush1.bf16.msra.mxu0 0
  %108 = vmatprep.subr.bf16.mxu0 0
  %109 = vmatpush1.bf16.msra.mxu0 0
  %110 = vmatprep.subr.bf16.mxu0 0
  %111 = vmatpush1.bf16.msra.mxu0 0
  %112 = vmatprep.subr.bf16.mxu0 0
  %113 = vmatpush1.bf16.msra.mxu0 %v94
  %114 = vmatprep.subr.bf16.mxu0 0
  %115 = vmatpush1.bf16.msra.mxu0 %v93
  %116 = vmatprep.subr.bf16.mxu0 0
  %117 = vmatpush2.bf16.msra.mxu0 0
  %118 = vmatprep.subr.bf16.mxu0 0
  %119 = vmatpush2.bf16.msra.mxu0 0
  %120 = vmatprep.subr.bf16.mxu0 0
  %121 = vmatpush2.bf16.msra.mxu0 0
  %122 = vmatprep.subr.bf16.mxu0 0
  %123 = vmatpush2.bf16.msra.mxu0 0
  %124 = vmatprep.subr.bf16.mxu0 0
  %125 = vmatpush2.bf16.msra.mxu0 0
  %126 = vmatprep.subr.bf16.mxu0 0
  %127 = vmatpush2.bf16.msra.mxu0 0
  %128 = vmatprep.subr.bf16.mxu0 0
  %129 = vmatpush2.bf16.msra.mxu0 0
  %130 = vmatprep.subr.bf16.mxu0 0
  %131 = vmatpush2.bf16.msra.mxu0 0
  %132 = vmatprep.mubr.bf16.mxu0 0
  %133 = vmatmul.mubr.bf16.gmra.mxu0 %v98
  %v134 = vpop.f32.mrf.mxu0
  %v135 = vadd.f32 0.0, %v134
  %v136 = vpop.f32.mrf.mxu0
  %v137 = vpop.f32.mrf.mxu0
  %v138 = vadd.f32 0.0, %v137
  %v139 = vpop.f32.mrf.mxu0
  %140 = vdwg.mxu0
  %v141 = vadd.f32 %v79, %v135
  %v142 = vadd.f32 %v80, %v138
  %vm143 = vcmask 785408
  %144 = vst.msk [vmem:[#allocation2] sm:$0xff] %vm143, %v141
  %145 = vst.msk [vmem:[#allocation2 + $0x8] sm:$0xff] %vm143, %v142
  // Predicated region
  $region26: #{raven_forward.29} parent=0 // pred_check
    %p146 = pneg %p21
  $region27: #{raven_forward.29} parent=0 // pred_check_branch
    %148 = sbr.rel (%p146) target = $region29
  $region28: #{raven_forward.29} parent=0 // pred_region
    %v149 = vld [vmem:[#allocation2] sm:$0xff]
    %v150 = vld [vmem:[#allocation2 + $0x8] sm:$0xff]
    %v151 = vld [vmem:[%s4] sm:$0x1]
    %v153 = vlaneseq
    %v154 = vshrl.u32 %v153, 7
    %v155 = vsub.s32 0, %v154
    %v156 = vrot.slane %v151, %v155
    %v158 = vadd.f32 %v149, %v156
    %v159 = vadd.f32 %v150, %v156
    %v160 = vpack.c.bf16 %v159, %v158
    %v162 = vunpack.c.l.b16 %v160
    %v163 = vunpack.c.h.b16 %v160
    %v164 = vpack.c.b16 %v162, %v162
    %v165 = vpack.c.b16 %v163, %v163
    %vm168 = vcmask 781312
    %169 = vst.msk [vmem:[%s5] sm:$0xf] %vm168, %v164
    %170 = vst.msk [vmem:[%s5 + $0x4] sm:$0xf] %vm168, %v165
  $region29: #{raven_forward.29} parent=0 // pred_fallthru
    _
  // Predicated region
  $region30: #{raven_forward.29} parent=0 // pred_check
    _
  $region31: #{raven_forward.29} parent=0 // pred_check_branch
    %172 = sbr.rel (0) target = $region33
  $region32: #{raven_forward.29} parent=0 // pred_region
    _
  $region33: #{raven_forward.29} parent=0 // pred_fallthru
    _
  // Predicated region
  $region34: #{raven_forward.29} parent=0 // pred_check
    _
  $region35: #{raven_forward.29} parent=0 // pred_check_branch
    %174 = sbr.rel (0) target = $region37
  $region36: #{raven_forward.29} parent=0 // pred_region
    _
  $region37: #{raven_forward.29} parent=0 // pred_fallthru
    _

// kernel: raven_forward.32
$region0: #{raven_forward.32}
  #allocation0 [shape = 'u32[]', space=smem, size = 0x4, offset = 0x4, fixed_abs, tag = 'smem constant byte address 0x4 - core index']
  #allocation1 [shape = 'u32[144,128]{1,0:T(1,128)}', space=vmem, size = 0x12000, scoped, tag = 'internal scratch']
  %s0 = inlined_call_operand.vmem [shape: bf16[16,32], index: 0, kind: input, shape index: {}]
  %s1 = inlined_call_operand.vmem [shape: f32[1,32], index: 1, kind: input, shape index: {}]
  %s2 = inlined_call_operand.vmem [shape: f32[1,32], index: 2, kind: input, shape index: {}, may-alias: {2,6}]
  %s3 = inlined_call_operand.vmem [shape: bf16[32,64], index: 3, kind: input, shape index: {}]
  %s4 = inlined_call_operand.vmem [shape: f32[1,64], index: 4, kind: input, shape index: {}]
  %s5 = inlined_call_operand.vmem [shape: bf16[64,32], index: 5, kind: input, shape index: {}]
  %s6 = inlined_call_operand.vmem [shape: f32[1,32], index: 6, kind: input, shape index: {}, may-alias: {2,6}]
  %s7 = inlined_call_operand.vmem [shape: bf16[16,32], index: 7, kind: output, shape index: {}]
  %s8 = sld [smem:[#allocation0]]
  $region38: #{raven_forward.32} parent=0
    _
  %s10 = ssub.s32 1, %s8
  %s11 = scalar_select 0, %s10, %s8
  // Predicated region
  $region2: #{raven_forward.32} parent=0 // pred_check
    _
  $region3: #{raven_forward.32} parent=0 // pred_check_branch
    %13 = sbr.rel (0) target = $region5
  $region4: #{raven_forward.32} parent=0 // pred_region
    _
  $region5: #{raven_forward.32} parent=0 // pred_fallthru
    _
  // Predicated region
  $region6: #{raven_forward.32} parent=0 // pred_check
    _
  $region7: #{raven_forward.32} parent=0 // pred_check_branch
    %15 = sbr.rel (0) target = $region9
  $region8: #{raven_forward.32} parent=0 // pred_region
    _
  $region9: #{raven_forward.32} parent=0 // pred_fallthru
    _
  // Predicated region
  $region10: #{raven_forward.32} parent=0 // pred_check
    _
  $region11: #{raven_forward.32} parent=0 // pred_check_branch
    %17 = sbr.rel (0) target = $region13
  $region12: #{raven_forward.32} parent=0 // pred_region
    _
  $region13: #{raven_forward.32} parent=0 // pred_fallthru
    _
  // Predicated region
  $region14: #{raven_forward.32} parent=0 // pred_check
    _
  $region15: #{raven_forward.32} parent=0 // pred_check_branch
    %19 = sbr.rel (0) target = $region17
  $region16: #{raven_forward.32} parent=0 // pred_region
    _
  $region17: #{raven_forward.32} parent=0 // pred_fallthru
    _
  // Predicated region
  $region18: #{raven_forward.32} parent=0 // pred_check
    _
  $region19: #{raven_forward.32} parent=0 // pred_check_branch
    %21 = sbr.rel (0) target = $region21
  $region20: #{raven_forward.32} parent=0 // pred_region
    _
  $region21: #{raven_forward.32} parent=0 // pred_fallthru
    _
  // Predicated region
  $region22: #{raven_forward.32} parent=0 // pred_check
    _
  $region23: #{raven_forward.32} parent=0 // pred_check_branch
    %23 = sbr.rel (0) target = $region25
  $region24: #{raven_forward.32} parent=0 // pred_region
    _
  $region25: #{raven_forward.32} parent=0 // pred_fallthru
    _
  // Predicated region
  $region26: #{raven_forward.32} parent=0 // pred_check
    _
  $region27: #{raven_forward.32} parent=0 // pred_check_branch
    %25 = sbr.rel (0) target = $region29
  $region28: #{raven_forward.32} parent=0 // pred_region
    _
  $region29: #{raven_forward.32} parent=0 // pred_fallthru
    _
  %v27 = vld [vmem:[%s0] sm:$0xf]
  %v28 = vld [vmem:[%s0 + $0x4] sm:$0xf]
  %v29 = vunpack.c.l.bf16 %v27
  %v30 = vunpack.c.l.bf16 %v28
  %vm31 = vcmask 261120
  %v32 = vsel %vm31, %v29, 0.0
  %33 = vadd.xlane.f32.xlu0 %v32
  %v34 = vpop.xlane.xlu0 %33
  %v35 = vsel %vm31, %v30, 0.0
  %36 = vadd.xlane.f32.xlu0 %v35
  %v37 = vpop.xlane.xlu0 %36
  %v38 = vrcp.pop 32.0
  %v39 = vmul.f32 %v34, %v38
  %v40 = vmul.f32 %v37, %v38
  %v41 = vsub.f32 %v29, %v39
  %v42 = vsub.f32 %v30, %v40
  %v43 = vmul.f32 %v41, %v41
  %v44 = vmul.f32 %v42, %v42
  %v45 = vsel %vm31, %v43, 0.0
  %46 = vadd.xlane.f32.xlu0 %v45
  %v47 = vpop.xlane.xlu0 %46
  %v48 = vsel %vm31, %v44, 0.0
  %49 = vadd.xlane.f32.xlu0 %v48
  %v50 = vpop.xlane.xlu0 %49
  %v51 = vmul.f32 %v47, %v38
  %v52 = vmul.f32 %v50, %v38
  %v53 = vadd.f32 %v51, 1e-12
  %v54 = vadd.f32 %v52, 1e-12
  %v55 = vrsqrt.pop %v53
  %v56 = vrsqrt.pop %v54
  %v57 = vmul.f32 %v41, %v55
  %v58 = vmul.f32 %v42, %v56
  %v59 = vld [vmem:[%s1] sm:$0x1]
  %v61 = vlaneseq
  %v62 = vshrl.u32 %v61, 7
  %v63 = vsub.s32 0, %v62
  %v64 = vrot.slane %v59, %v63
  %v66 = vmul.f32 %v57, %v64
  %v67 = vmul.f32 %v58, %v64
  %v68 = vld [vmem:[%s2] sm:$0x1]
  %v70 = vlaneseq
  %v71 = vshrl.u32 %v70, 7
  %v72 = vsub.s32 0, %v71
  %v73 = vrot.slane %v68, %v72
  %v75 = vadd.f32 %v66, %v73
  %v76 = vadd.f32 %v67, %v73
  %v77 = vpack.c.bf16 %v76, %v75
  %v78 = vld [vmem:[%s3] sm:$0xf]
  %v79 = vld [vmem:[%s3 + $0x4] sm:$0xf]
  %v80 = vld [vmem:[%s3 + $0x8] sm:$0xf]
  %v81 = vld [vmem:[%s3 + $0xc] sm:$0xf]
  %v82 = vld [vmem:[%s4] sm:$0x1]
  %v84 = vlaneseq
  %v85 = vshrl.u32 %v84, 7
  %v86 = vsub.s32 0, %v85
  %v87 = vrot.slane %v82, %v86
  %v93 = vunpack.c.l.b16 %v78
  %v94 = vunpack.c.l.b16 %v79
  %v95 = vunpack.c.l.b16 %v80
  %v96 = vunpack.c.l.b16 %v81
  %v97 = vpack.c.b16 %v94, %v93
  %v98 = vpack.c.b16 %v96, %v95
  %v102 = vsel %vm31, %v77, 0
  %104 = vmatprep.subr.bf16.mxu0 0
  %105 = vmatpush1.bf16.msra.mxu0 0
  %106 = vmatprep.subr.bf16.mxu0 0
  %107 = vmatpush1.bf16.msra.mxu0 0
  %108 = vmatprep.subr.bf16.mxu0 0
  %109 = vmatpush1.bf16.msra.mxu0 0
  %110 = vmatprep.subr.bf16.mxu0 0
  %111 = vmatpush1.bf16.msra.mxu0 0
  %112 = vmatprep.subr.bf16.mxu0 0
  %113 = vmatpush1.bf16.msra.mxu0 0
  %114 = vmatprep.subr.bf16.mxu0 0
  %115 = vmatpush1.bf16.msra.mxu0 0
  %116 = vmatprep.subr.bf16.mxu0 0
  %117 = vmatpush1.bf16.msra.mxu0 %v98
  %118 = vmatprep.subr.bf16.mxu0 0
  %119 = vmatpush1.bf16.msra.mxu0 %v97
  %120 = vmatprep.subr.bf16.mxu0 0
  %121 = vmatpush2.bf16.msra.mxu0 0
  %122 = vmatprep.subr.bf16.mxu0 0
  %123 = vmatpush2.bf16.msra.mxu0 0
  %124 = vmatprep.subr.bf16.mxu0 0
  %125 = vmatpush2.bf16.msra.mxu0 0
  %126 = vmatprep.subr.bf16.mxu0 0
  %127 = vmatpush2.bf16.msra.mxu0 0
  %128 = vmatprep.subr.bf16.mxu0 0
  %129 = vmatpush2.bf16.msra.mxu0 0
  %130 = vmatprep.subr.bf16.mxu0 0
  %131 = vmatpush2.bf16.msra.mxu0 0
  %132 = vmatprep.subr.bf16.mxu0 0
  %133 = vmatpush2.bf16.msra.mxu0 0
  %134 = vmatprep.subr.bf16.mxu0 0
  %135 = vmatpush2.bf16.msra.mxu0 0
  %136 = vmatprep.mubr.bf16.mxu0 0
  %137 = vmatmul.mubr.bf16.gmra.mxu0 %v102
  %v138 = vpop.f32.mrf.mxu0
  %v139 = vadd.f32 %v87, %v138
  %v140 = vpop.f32.mrf.mxu0
  %v141 = vpop.f32.mrf.mxu0
  %v142 = vadd.f32 %v87, %v141
  %v143 = vpop.f32.mrf.mxu0
  %144 = vdwg.mxu0
  %v145 = vmax.f32 %v139, 0.0
  %v146 = vmax.f32 %v142, 0.0
  %v147 = vpack.c.bf16 %v146, %v145
  %v148 = vld [vmem:[%s5] sm:$0xf]
  %v149 = vld [vmem:[%s5 + $0x4] sm:$0xf]
  %v150 = vld [vmem:[%s5 + $0x8] sm:$0xf]
  %v151 = vld [vmem:[%s5 + $0xc] sm:$0xf]
  %v152 = vld [vmem:[%s5 + $0x10] sm:$0xf]
  %v153 = vld [vmem:[%s5 + $0x14] sm:$0xf]
  %v154 = vld [vmem:[%s5 + $0x18] sm:$0xf]
  %v155 = vld [vmem:[%s5 + $0x1c] sm:$0xf]
  %v156 = vld [vmem:[%s6] sm:$0x1]
  %v158 = vlaneseq
  %v159 = vshrl.u32 %v158, 7
  %v160 = vsub.s32 0, %v159
  %v161 = vrot.slane %v156, %v160
  %v171 = vunpack.c.l.b16 %v148
  %v172 = vunpack.c.l.b16 %v149
  %v173 = vunpack.c.l.b16 %v150
  %v174 = vunpack.c.l.b16 %v151
  %v175 = vunpack.c.l.b16 %v152
  %v176 = vunpack.c.l.b16 %v153
  %v177 = vunpack.c.l.b16 %v154
  %v178 = vunpack.c.l.b16 %v155
  %v179 = vpack.c.b16 %v172, %v171
  %v180 = vpack.c.b16 %v174, %v173
  %v181 = vpack.c.b16 %v176, %v175
  %v182 = vpack.c.b16 %v178, %v177
  %vm187 = vcmask 523264
  %v189 = vsel %vm187, %v147, 0
  %191 = vmatprep.subr.bf16.mxu0 0
  %192 = vmatpush1.bf16.msra.mxu0 0
  %193 = vmatprep.subr.bf16.mxu0 0
  %194 = vmatpush1.bf16.msra.mxu0 0
  %195 = vmatprep.subr.bf16.mxu0 0
  %196 = vmatpush1.bf16.msra.mxu0 0
  %197 = vmatprep.subr.bf16.mxu0 0
  %198 = vmatpush1.bf16.msra.mxu0 0
  %199 = vmatprep.subr.bf16.mxu0 0
  %200 = vmatpush1.bf16.msra.mxu0 %v182
  %201 = vmatprep.subr.bf16.mxu0 0
  %202 = vmatpush1.bf16.msra.mxu0 %v181
  %203 = vmatprep.subr.bf16.mxu0 0
  %204 = vmatpush1.bf16.msra.mxu0 %v180
  %205 = vmatprep.subr.bf16.mxu0 0
  %206 = vmatpush1.bf16.msra.mxu0 %v179
  %207 = vmatprep.subr.bf16.mxu0 0
  %208 = vmatpush2.bf16.msra.mxu0 0
  %209 = vmatprep.subr.bf16.mxu0 0
  %210 = vmatpush2.bf16.msra.mxu0 0
  %211 = vmatprep.subr.bf16.mxu0 0
  %212 = vmatpush2.bf16.msra.mxu0 0
  %213 = vmatprep.subr.bf16.mxu0 0
  %214 = vmatpush2.bf16.msra.mxu0 0
  %215 = vmatprep.subr.bf16.mxu0 0
  %216 = vmatpush2.bf16.msra.mxu0 0
  %217 = vmatprep.subr.bf16.mxu0 0
  %218 = vmatpush2.bf16.msra.mxu0 0
  %219 = vmatprep.subr.bf16.mxu0 0
  %220 = vmatpush2.bf16.msra.mxu0 0
  %221 = vmatprep.subr.bf16.mxu0 0
  %222 = vmatpush2.bf16.msra.mxu0 0
  %223 = vmatprep.mubr.bf16.mxu0 0
  %224 = vmatmul.mubr.bf16.gmra.mxu0 %v189
  %v225 = vpop.f32.mrf.mxu0
  %v226 = vadd.f32 %v161, %v225
  %v227 = vpop.f32.mrf.mxu0
  %v228 = vpop.f32.mrf.mxu0
  %v229 = vadd.f32 %v161, %v228
  %v230 = vpop.f32.mrf.mxu0
  %231 = vdwg.mxu0
  %v232 = vadd.f32 %v29, %v226
  %v233 = vadd.f32 %v30, %v229
  %v234 = vpack.c.bf16 %v233, %v232
  %v236 = vunpack.c.l.b16 %v234
  %v237 = vunpack.c.h.b16 %v234
  %v238 = vpack.c.b16 %v236, %v236
  %v239 = vpack.c.b16 %v237, %v237
  %vm242 = vcmask 257024
  %243 = vst.msk [vmem:[%s7] sm:$0xf] %vm242, %v238
  %244 = vst.msk [vmem:[%s7 + $0x4] sm:$0xf] %vm242, %v239
  // Predicated region
  $region30: #{raven_forward.32} parent=0 // pred_check
    _
  $region31: #{raven_forward.32} parent=0 // pred_check_branch
    %246 = sbr.rel (0) target = $region33
  $region32: #{raven_forward.32} parent=0 // pred_region
    _
  $region33: #{raven_forward.32} parent=0 // pred_fallthru
    _
  // Predicated region
  $region34: #{raven_forward.32} parent=0 // pred_check
    _
  $region35: #{raven_forward.32} parent=0 // pred_check_branch
    %248 = sbr.rel (0) target = $region37
  $region36: #{raven_forward.32} parent=0 // pred_region
    _
  $region37: #{raven_forward.32} parent=0 // pred_fallthru
    _

// kernel: raven_forward.30
$region0: #{raven_forward.30}
  #allocation0 [shape = 'u32[]', space=smem, size = 0x4, offset = 0x4, fixed_abs, tag = 'smem constant byte address 0x4 - core index']
  #allocation1 [shape = 'u32[144,128]{1,0:T(1,128)}', space=vmem, size = 0x12000, scoped, tag = 'internal scratch']
  %s0 = inlined_call_operand.vmem [shape: bf16[2,8,96], index: 0, kind: input, shape index: {}]
  %s1 = inlined_call_operand.vmem [shape: bf16[2,1,8], index: 1, kind: input, shape index: {}]
  %s2 = inlined_call_operand.vmem [shape: bf16[2,8,32], index: 2, kind: output, shape index: {}]
  %s3 = sld [smem:[#allocation0]]
  $region41: #{raven_forward.30} parent=0
    _
  %s5 = ssub.s32 1, %s3
  %s6 = scalar_select 0, %s5, %s3
  loop: start=0, step=1, limit=4
  $region2: #{raven_forward.30} parent=0 // loop_pre_header
    _
  $region3: #{raven_forward.30} parent=0 // loop_header
    %s8 = sphi 0, %s12
    %p9 = scmp.ge.s32.totalorder %s8, 4
    %s18 = sphi 0, %s20
    %s21 = sphi 0, %s18
    %s22 = sphi 0, %s21
    %s38 = sphi 0, %s22
    %s44 = sphi 0, %s46
    %s47 = sphi 0, %s44
    %s48 = sphi 0, %s47
    %s64 = sphi 0, %s48
    %s70 = sphi 0, %s72
    %s73 = sphi 0, %s70
    %s74 = sphi 0, %s73
    %s90 = sphi 0, %s74
  $region4: #{raven_forward.30} parent=0 // loop_header_branch
    %11 = sbr.rel (%p9) target = $region8
  $region5: #{raven_forward.30} parent=0 // loop_body
    %s13 = ssub.s32 %s8, 1
    %s14 = ssub.s32 %s8, 2
    %s15 = sadd.s32 %s8, 1
    %s16 = ssub.s32 %s8, %s15
    %p17 = scmp.eq.s32.totalorder %s16, 0
    %s19 = sadd.s32 %s18, 1
    %s20 = scalar_select %p17, %s18, %s19
    %p23 = pneg %p17
    %p24 = scmp.eq.s32.totalorder %s8, 1
    %p25 = por %p23, %p24
    %p26 = scmp.ne.s32.totalorder %s18, %s21
    %p27 = scmp.eq.s32.totalorder %s8, 0
    %p28 = por %p26, %p27
    %p29 = scmp.ne.s32.totalorder %s18, %s21
    %p30 = scmp.eq.s32.totalorder %s13, 1
    %p31 = por %p29, %p30
    %p32 = scmp.ne.s32.totalorder %s21, %s22
    %p33 = scmp.eq.s32.totalorder %s13, 0
    %p34 = por %p32, %p33
    %p35 = scmp.ne.s32.totalorder %s21, %s22
    %p36 = scmp.eq.s32.totalorder %s14, 1
    %p37 = por %p35, %p36
    %p39 = scmp.ne.s32.totalorder %s22, %s38
    %p40 = scmp.eq.s32.totalorder %s14, 0
    %p41 = por %p39, %p40
    %s42 = ssub.s32 %s8, %s15
    %p43 = scmp.eq.s32.totalorder %s42, 0
    %s45 = sadd.s32 %s44, 1
    %s46 = scalar_select %p43, %s44, %s45
    %p49 = pneg %p43
    %p50 = scmp.eq.s32.totalorder %s8, 1
    %p51 = por %p49, %p50
    %p52 = scmp.ne.s32.totalorder %s44, %s47
    %p53 = scmp.eq.s32.totalorder %s8, 0
    %p54 = por %p52, %p53
    %p55 = scmp.ne.s32.totalorder %s44, %s47
    %p56 = scmp.eq.s32.totalorder %s13, 1
    %p57 = por %p55, %p56
    %p58 = scmp.ne.s32.totalorder %s47, %s48
    %p59 = scmp.eq.s32.totalorder %s13, 0
    %p60 = por %p58, %p59
    %p61 = scmp.ne.s32.totalorder %s47, %s48
    %p62 = scmp.eq.s32.totalorder %s14, 1
    %p63 = por %p61, %p62
    %p65 = scmp.ne.s32.totalorder %s48, %s64
    %p66 = scmp.eq.s32.totalorder %s14, 0
    %p67 = por %p65, %p66
    %s68 = ssub.s32 %s8, %s15
    %p69 = scmp.eq.s32.totalorder %s68, 0
    %s71 = sadd.s32 %s70, 1
    %s72 = scalar_select %p69, %s70, %s71
    %p75 = pneg %p69
    %p76 = scmp.eq.s32.totalorder %s8, 1
    %p77 = por %p75, %p76
    %p78 = scmp.ne.s32.totalorder %s70, %s73
    %p79 = scmp.eq.s32.totalorder %s8, 0
    %p80 = por %p78, %p79
    %p81 = scmp.ne.s32.totalorder %s70, %s73
    %p82 = scmp.eq.s32.totalorder %s13, 1
    %p83 = por %p81, %p82
    %p84 = scmp.ne.s32.totalorder %s73, %s74
    %p85 = scmp.eq.s32.totalorder %s13, 0
    %p86 = por %p84, %p85
    %p87 = scmp.ne.s32.totalorder %s73, %s74
    %p88 = scmp.eq.s32.totalorder %s14, 1
    %p89 = por %p87, %p88
    %p91 = scmp.ne.s32.totalorder %s74, %s90
    %p92 = scmp.eq.s32.totalorder %s14, 0
    %p93 = por %p91, %p92
    %p94 = scmp.le.s32.totalorder 1, %s8
    %p95 = scmp.lt.s32.totalorder %s8, 3
    %p96 = pnand %p94, %p95
    %p97 = pneg %p96
    // Predicated region
    $region9: #{raven_forward.30} parent=5 // pred_check
      _
    $region10: #{raven_forward.30} parent=5 // pred_check_branch
      %99 = sbr.rel (%p96) target = $region12
    $region11: #{raven_forward.30} parent=5 // pred_region
      %s100 = ssub.s32 %s8, 1
    $region12: #{raven_forward.30} parent=5 // pred_fallthru
      _
    %p101 = scmp.lt.s32.totalorder %s8, 2
    // Predicated region
    $region13: #{raven_forward.30} parent=5 // pred_check
      %p102 = pneg %p101
    $region14: #{raven_forward.30} parent=5 // pred_check_branch
      %104 = sbr.rel (%p102) target = $region16
    $region15: #{raven_forward.30} parent=5 // pred_region
      // Predicated region
      $region17: #{raven_forward.30} parent=15 // pred_check
        %p105 = pneg %p28
      $region18: #{raven_forward.30} parent=15 // pred_check_branch
        %107 = sbr.rel (%p105) target = $region20
      $region19: #{raven_forward.30} parent=15 // pred_region
        %p108 = scmp.lt.s32.totalorder %s8, 1
        %s109 = scalar_select %p108, %s8, 1
        %s110 = smul.addr %s109, 4
        %s111 = scalar_lea.vmem %s0, %s110
      $region20: #{raven_forward.30} parent=15 // pred_fallthru
        _
      // Predicated region
      $region21: #{raven_forward.30} parent=15 // pred_check
        %p112 = pneg %p54
      $region22: #{raven_forward.30} parent=15 // pred_check_branch
        %114 = sbr.rel (%p112) target = $region24
      $region23: #{raven_forward.30} parent=15 // pred_region
        %p115 = scmp.lt.s32.totalorder %s8, 1
        %s116 = scalar_select %p115, %s8, 1
        %s117 = scalar_lea.vmem %s1, %s116
      $region24: #{raven_forward.30} parent=15 // pred_fallthru
        _
    $region16: #{raven_forward.30} parent=5 // pred_fallthru
      _
    %p118 = scmp.le.s32.totalorder 1, %s8
    %p119 = scmp.lt.s32.totalorder %s8, 3
    %p120 = pnand %p118, %p119
    %p121 = pneg %p120
    // Predicated region
    $region25: #{raven_forward.30} parent=5 // pred_check
      _
    $region26: #{raven_forward.30} parent=5 // pred_check_branch
      %123 = sbr.rel (%p120) target = $region28
    $region27: #{raven_forward.30} parent=5 // pred_region
      %s124 = ssub.s32 %s8, 1
      %p125 = scmp.lt.s32.totalorder %s13, 1
      %s126 = scalar_select %p125, %s13, 1
      %s127 = smul.addr %s126, 4
      %s128 = scalar_lea.vmem %s0, %s127
      %p129 = pneg %p34
      %p130 = pneg %p31
      %p131 = scmp.lt.s32.totalorder %s13, 1
      %s132 = scalar_select %p131, %s13, 1
      %s133 = scalar_lea.vmem %s1, %s132
      %p134 = pneg %p60
      %p135 = pneg %p57
      %p136 = pneg %p86
      %p137 = pneg %p83
      %p138 = scmp.lt.s32.totalorder %s13, 1
      %s139 = scalar_select %p138, %s13, 1
      %s140 = smul.addr %s139, 4
      %s141 = scalar_lea.vmem %s2, %s140
      %p142 = scmp.lt.s32.totalorder %s13, 1
      %s143 = scalar_select %p142, %s13, 1
      %s144 = smul.addr %s143, 4
      %s145 = scalar_lea.vmem %s0, %s144
      %p146 = scmp.lt.s32.totalorder %s13, 1
      %s147 = scalar_select %p146, %s13, 1
      %s148 = scalar_lea.vmem %s1, %s147
      %p149 = scmp.lt.s32.totalorder %s13, 1
      %s150 = scalar_select %p149, %s13, 1
      %s151 = smul.addr %s150, 4
      %s152 = scalar_lea.vmem %s2, %s151
      %v154 = vld [vmem:[%s148] sm:$0x1]
      %v155 = vunpack.c.l.bf16 %v154
      %v156 = vld [vmem:[%s145] sm:$0xf]
      %v157 = vlaneseq
      %v158 = vshrl.u32 %v157, 7
      %v159 = vsub.s32 0, %v158
      %v160 = vrot.slane %v155, %v159
      %v162 = vunpack.c.l.b16 %v156
      %v163 = vpack.c.b16 %v162, %v162
      %164 = vrot.lane.b32.xlu0 %v163, 96
      %v165 = vpop.permute.xlu0 %164
      %vm166 = vcmask 64512
      %v168 = vsel %vm166, %v156, 0
      %v171 = vsel %vm166, %v165, 0
      %173 = vmatprep.subr.bf16.mxu0 0
      %174 = vmatpush1.bf16.xpose.msra.mxu0 0
      %175 = vmatprep.subr.bf16.mxu0 0
      %176 = vmatpush1.bf16.xpose.msra.mxu0 0
      %177 = vmatprep.subr.bf16.mxu0 0
      %178 = vmatpush1.bf16.xpose.msra.mxu0 0
      %179 = vmatprep.subr.bf16.mxu0 0
      %180 = vmatpush1.bf16.xpose.msra.mxu0 0
      %181 = vmatprep.subr.bf16.mxu0 0
      %182 = vmatpush1.bf16.xpose.msra.mxu0 0
      %183 = vmatprep.subr.bf16.mxu0 0
      %184 = vmatpush1.bf16.xpose.msra.mxu0 0
      %185 = vmatprep.subr.bf16.mxu0 0
      %186 = vmatpush1.bf16.xpose.msra.mxu0 0
      %187 = vmatprep.subr.bf16.mxu0 0
      %188 = vmatpush1.bf16.xpose.msra.mxu0 %v171
      %189 = vmatprep.subr.bf16.mxu0 0
      %190 = vmatpush2.bf16.xpose.msra.mxu0 0
      %191 = vmatprep.subr.bf16.mxu0 0
      %192 = vmatpush2.bf16.xpose.msra.mxu0 0
      %193 = vmatprep.subr.bf16.mxu0 0
      %194 = vmatpush2.bf16.xpose.msra.mxu0 0
      %195 = vmatprep.subr.bf16.mxu0 0
      %196 = vmatpush2.bf16.xpose.msra.mxu0 0
      %197 = vmatprep.subr.bf16.mxu0 0
      %198 = vmatpush2.bf16.xpose.msra.mxu0 0
      %199 = vmatprep.subr.bf16.mxu0 0
      %200 = vmatpush2.bf16.xpose.msra.mxu0 0
      %201 = vmatprep.subr.bf16.mxu0 0
      %202 = vmatpush2.bf16.xpose.msra.mxu0 0
      %203 = vmatprep.subr.bf16.mxu0 0
      %204 = vmatpush2.bf16.xpose.msra.mxu0 0
      %205 = vmatprep.mubr.bf16.mxu0 0
      %206 = vmatmul.mubr.bf16.gmra.mxu0 %v168
      %v207 = vpop.f32.mrf.mxu0
      %v208 = vadd.f32 %v160, %v207
      %v209 = vpop.f32.mrf.mxu0
      %v210 = vpop.f32.mrf.mxu0
      %v211 = vpop.f32.mrf.mxu0
      %212 = vdwg.mxu0
      %v213 = vsel %vm166, %v208, -inf
      %214 = vmax.xlane.f32.xlu0 %v213
      %v215 = vpop.xlane.xlu0 %214
      %vm216 = vcmp.gt.f32.partialorder %v215, -5e+29
      %v217 = vsel %vm216, 1, 0
      %v218 = vcvt.s32.f32 %v217
      %v219 = vsub.f32 %v208, %v215
      %v220 = vmul.f32 %v219, 1.442695
      %v221 = vpow.pop %v220
      %v222 = vsel %vm166, %v221, 0.0
      %223 = vadd.xlane.f32.xlu0 %v222
      %v224 = vpop.xlane.xlu0 %223
      %v225 = vpack.c.bf16 %v221, %v221
      %v226 = vadd.f32 %v224, 1e-30
      %v227 = vrcp.pop %v226
      %v228 = vmul.f32 %v227, %v218
      %229 = vrot.lane.b32.xlu0 %v163, 64
      %v230 = vpop.permute.xlu0 %229
      %v232 = vsel %vm166, %v225, 0
      %vm234 = vcmask 1043456
      %v236 = vsel %vm234, %v230, 0
      %238 = vmatprep.subr.bf16.mxu0 0
      %239 = vmatpush1.bf16.msra.mxu0 0
      %240 = vmatprep.subr.bf16.mxu0 0
      %241 = vmatpush1.bf16.msra.mxu0 0
      %242 = vmatprep.subr.bf16.mxu0 0
      %243 = vmatpush1.bf16.msra.mxu0 0
      %244 = vmatprep.subr.bf16.mxu0 0
      %245 = vmatpush1.bf16.msra.mxu0 0
      %246 = vmatprep.subr.bf16.mxu0 0
      %247 = vmatpush1.bf16.msra.mxu0 0
      %248 = vmatprep.subr.bf16.mxu0 0
      %249 = vmatpush1.bf16.msra.mxu0 0
      %250 = vmatprep.subr.bf16.mxu0 0
      %251 = vmatpush1.bf16.msra.mxu0 0
      %252 = vmatprep.subr.bf16.mxu0 0
      %253 = vmatpush1.bf16.msra.mxu0 %v236
      %254 = vmatprep.subr.bf16.mxu0 0
      %255 = vmatpush2.bf16.msra.mxu0 0
      %256 = vmatprep.subr.bf16.mxu0 0
      %257 = vmatpush2.bf16.msra.mxu0 0
      %258 = vmatprep.subr.bf16.mxu0 0
      %259 = vmatpush2.bf16.msra.mxu0 0
      %260 = vmatprep.subr.bf16.mxu0 0
      %261 = vmatpush2.bf16.msra.mxu0 0
      %262 = vmatprep.subr.bf16.mxu0 0
      %263 = vmatpush2.bf16.msra.mxu0 0
      %264 = vmatprep.subr.bf16.mxu0 0
      %265 = vmatpush2.bf16.msra.mxu0 0
      %266 = vmatprep.subr.bf16.mxu0 0
      %267 = vmatpush2.bf16.msra.mxu0 0
      %268 = vmatprep.subr.bf16.mxu0 0
      %269 = vmatpush2.bf16.msra.mxu0 0
      %270 = vmatprep.mubr.bf16.mxu0 0
      %271 = vmatmul.mubr.bf16.gmra.mxu0 %v232
      %v272 = vpop.f32.mrf.mxu0
      %v273 = vadd.f32 0.0, %v272
      %v274 = vpop.f32.mrf.mxu0
      %v275 = vpop.f32.mrf.mxu0
      %v276 = vpop.f32.mrf.mxu0
      %277 = vdwg.mxu0
      %v278 = vmul.f32 %v273, %v228
      %v279 = vpack.c.bf16 %v278, %v278
      %vm280 = vcmask 60416
      %281 = vst.msk [vmem:[%s152] sm:$0xf] %vm280, %v279
      %v282 = vld [vmem:[%s145] sm:$0xf]
      %v284 = vunpack.c.l.b16 %v282
      %v285 = vpack.c.b16 %v284, %v284
      %286 = vrot.lane.b32.xlu0 %v285, 120
      %v287 = vpop.permute.xlu0 %286
      %288 = vrot.lane.b32.xlu0 %v285, 88
      %v289 = vpop.permute.xlu0 %288
      %v291 = vsel %vm166, %v287, 0
      %v294 = vsel %vm166, %v289, 0
      %296 = vmatprep.subr.bf16.mxu0 0
      %297 = vmatpush1.bf16.xpose.msra.mxu0 0
      %298 = vmatprep.subr.bf16.mxu0 0
      %299 = vmatpush1.bf16.xpose.msra.mxu0 0
      %300 = vmatprep.subr.bf16.mxu0 0
      %301 = vmatpush1.bf16.xpose.msra.mxu0 0
      %302 = vmatprep.subr.bf16.mxu0 0
      %303 = vmatpush1.bf16.xpose.msra.mxu0 0
      %304 = vmatprep.subr.bf16.mxu0 0
      %305 = vmatpush1.bf16.xpose.msra.mxu0 0
      %306 = vmatprep.subr.bf16.mxu0 0
      %307 = vmatpush1.bf16.xpose.msra.mxu0 0
      %308 = vmatprep.subr.bf16.mxu0 0
      %309 = vmatpush1.bf16.xpose.msra.mxu0 0
      %310 = vmatprep.subr.bf16.mxu0 0
      %311 = vmatpush1.bf16.xpose.msra.mxu0 %v294
      %312 = vmatprep.subr.bf16.mxu0 0
      %313 = vmatpush2.bf16.xpose.msra.mxu0 0
      %314 = vmatprep.subr.bf16.mxu0 0
      %315 = vmatpush2.bf16.xpose.msra.mxu0 0
      %316 = vmatprep.subr.bf16.mxu0 0
      %317 = vmatpush2.bf16.xpose.msra.mxu0 0
      %318 = vmatprep.subr.bf16.mxu0 0
      %319 = vmatpush2.bf16.xpose.msra.mxu0 0
      %320 = vmatprep.subr.bf16.mxu0 0
      %321 = vmatpush2.bf16.xpose.msra.mxu0 0
      %322 = vmatprep.subr.bf16.mxu0 0
      %323 = vmatpush2.bf16.xpose.msra.mxu0 0
      %324 = vmatprep.subr.bf16.mxu0 0
      %325 = vmatpush2.bf16.xpose.msra.mxu0 0
      %326 = vmatprep.subr.bf16.mxu0 0
      %327 = vmatpush2.bf16.xpose.msra.mxu0 0
      %328 = vmatprep.mubr.bf16.mxu0 0
      %329 = vmatmul.mubr.bf16.gmra.mxu0 %v291
      %v330 = vpop.f32.mrf.mxu0
      %v331 = vadd.f32 %v160, %v330
      %v332 = vpop.f32.mrf.mxu0
      %v333 = vpop.f32.mrf.mxu0
      %v334 = vpop.f32.mrf.mxu0
      %335 = vdwg.mxu0
      %v336 = vsel %vm166, %v331, -inf
      %337 = vmax.xlane.f32.xlu0 %v336
      %v338 = vpop.xlane.xlu0 %337
      %vm339 = vcmp.gt.f32.partialorder %v338, -5e+29
      %v340 = vsel %vm339, 1, 0
      %v341 = vcvt.s32.f32 %v340
      %v342 = vsub.f32 %v331, %v338
      %v343 = vmul.f32 %v342, 1.442695
      %v344 = vpow.pop %v343
      %v345 = vsel %vm166, %v344, 0.0
      %346 = vadd.xlane.f32.xlu0 %v345
      %v347 = vpop.xlane.xlu0 %346
      %v348 = vpack.c.bf16 %v344, %v344
      %v349 = vadd.f32 %v347, 1e-30
      %v350 = vrcp.pop %v349
      %v351 = vmul.f32 %v350, %v341
      %352 = vrot.lane.b32.xlu0 %v285, 56
      %v353 = vpop.permute.xlu0 %352
      %v355 = vsel %vm166, %v348, 0
      %v358 = vsel %vm234, %v353, 0
      %360 = vmatprep.subr.bf16.mxu0 0
      %361 = vmatpush1.bf16.msra.mxu0 0
      %362 = vmatprep.subr.bf16.mxu0 0
      %363 = vmatpush1.bf16.msra.mxu0 0
      %364 = vmatprep.subr.bf16.mxu0 0
      %365 = vmatpush1.bf16.msra.mxu0 0
      %366 = vmatprep.subr.bf16.mxu0 0
      %367 = vmatpush1.bf16.msra.mxu0 0
      %368 = vmatprep.subr.bf16.mxu0 0
      %369 = vmatpush1.bf16.msra.mxu0 0
      %370 = vmatprep.subr.bf16.mxu0 0
      %371 = vmatpush1.bf16.msra.mxu0 0
      %372 = vmatprep.subr.bf16.mxu0 0
      %373 = vmatpush1.bf16.msra.mxu0 0
      %374 = vmatprep.subr.bf16.mxu0 0
      %375 = vmatpush1.bf16.msra.mxu0 %v358
      %376 = vmatprep.subr.bf16.mxu0 0
      %377 = vmatpush2.bf16.msra.mxu0 0
      %378 = vmatprep.subr.bf16.mxu0 0
      %379 = vmatpush2.bf16.msra.mxu0 0
      %380 = vmatprep.subr.bf16.mxu0 0
      %381 = vmatpush2.bf16.msra.mxu0 0
      %382 = vmatprep.subr.bf16.mxu0 0
      %383 = vmatpush2.bf16.msra.mxu0 0
      %384 = vmatprep.subr.bf16.mxu0 0
      %385 = vmatpush2.bf16.msra.mxu0 0
      %386 = vmatprep.subr.bf16.mxu0 0
      %387 = vmatpush2.bf16.msra.mxu0 0
      %388 = vmatprep.subr.bf16.mxu0 0
      %389 = vmatpush2.bf16.msra.mxu0 0
      %390 = vmatprep.subr.bf16.mxu0 0
      %391 = vmatpush2.bf16.msra.mxu0 0
      %392 = vmatprep.mubr.bf16.mxu0 0
      %393 = vmatmul.mubr.bf16.gmra.mxu0 %v355
      %v394 = vpop.f32.mrf.mxu0
      %v395 = vadd.f32 0.0, %v394
      %v396 = vpop.f32.mrf.mxu0
      %v397 = vpop.f32.mrf.mxu0
      %v398 = vpop.f32.mrf.mxu0
      %399 = vdwg.mxu0
      %v400 = vmul.f32 %v395, %v351
      %v401 = vpack.c.bf16 %v400, %v400
      %v403 = vunpack.c.l.b16 %v401
      %v404 = vpack.c.b16 %v403, %v403
      %405 = vrot.lane.b32.xlu0 %v404, 8
      %v406 = vpop.permute.xlu0 %405
      %vm408 = vcmask 126016
      %409 = vst.msk [vmem:[%s152] sm:$0xf] %vm408, %v406
      %v410 = vld [vmem:[%s145] sm:$0xf]
      %v412 = vunpack.c.l.b16 %v410
      %v413 = vpack.c.b16 %v412, %v412
      %414 = vrot.lane.b32.xlu0 %v413, 112
      %v415 = vpop.permute.xlu0 %414
      %416 = vrot.lane.b32.xlu0 %v413, 80
      %v417 = vpop.permute.xlu0 %416
      %v419 = vsel %vm166, %v415, 0
      %v422 = vsel %vm166, %v417, 0
      %424 = vmatprep.subr.bf16.mxu0 0
      %425 = vmatpush1.bf16.xpose.msra.mxu0 0
      %426 = vmatprep.subr.bf16.mxu0 0
      %427 = vmatpush1.bf16.xpose.msra.mxu0 0
      %428 = vmatprep.subr.bf16.mxu0 0
      %429 = vmatpush1.bf16.xpose.msra.mxu0 0
      %430 = vmatprep.subr.bf16.mxu0 0
      %431 = vmatpush1.bf16.xpose.msra.mxu0 0
      %432 = vmatprep.subr.bf16.mxu0 0
      %433 = vmatpush1.bf16.xpose.msra.mxu0 0
      %434 = vmatprep.subr.bf16.mxu0 0
      %435 = vmatpush1.bf16.xpose.msra.mxu0 0
      %436 = vmatprep.subr.bf16.mxu0 0
      %437 = vmatpush1.bf16.xpose.msra.mxu0 0
      %438 = vmatprep.subr.bf16.mxu0 0
      %439 = vmatpush1.bf16.xpose.msra.mxu0 %v422
      %440 = vmatprep.subr.bf16.mxu0 0
      %441 = vmatpush2.bf16.xpose.msra.mxu0 0
      %442 = vmatprep.subr.bf16.mxu0 0
      %443 = vmatpush2.bf16.xpose.msra.mxu0 0
      %444 = vmatprep.subr.bf16.mxu0 0
      %445 = vmatpush2.bf16.xpose.msra.mxu0 0
      %446 = vmatprep.subr.bf16.mxu0 0
      %447 = vmatpush2.bf16.xpose.msra.mxu0 0
      %448 = vmatprep.subr.bf16.mxu0 0
      %449 = vmatpush2.bf16.xpose.msra.mxu0 0
      %450 = vmatprep.subr.bf16.mxu0 0
      %451 = vmatpush2.bf16.xpose.msra.mxu0 0
      %452 = vmatprep.subr.bf16.mxu0 0
      %453 = vmatpush2.bf16.xpose.msra.mxu0 0
      %454 = vmatprep.subr.bf16.mxu0 0
      %455 = vmatpush2.bf16.xpose.msra.mxu0 0
      %456 = vmatprep.mubr.bf16.mxu0 0
      %457 = vmatmul.mubr.bf16.gmra.mxu0 %v419
      %v458 = vpop.f32.mrf.mxu0
      %v459 = vadd.f32 %v160, %v458
      %v460 = vpop.f32.mrf.mxu0
      %v461 = vpop.f32.mrf.mxu0
      %v462 = vpop.f32.mrf.mxu0
      %463 = vdwg.mxu0
      %v464 = vsel %vm166, %v459, -inf
      %465 = vmax.xlane.f32.xlu0 %v464
      %v466 = vpop.xlane.xlu0 %465
      %vm467 = vcmp.gt.f32.partialorder %v466, -5e+29
      %v468 = vsel %vm467, 1, 0
      %v469 = vcvt.s32.f32 %v468
      %v470 = vsub.f32 %v459, %v466
      %v471 = vmul.f32 %v470, 1.442695
      %v472 = vpow.pop %v471
      %v473 = vsel %vm166, %v472, 0.0
      %474 = vadd.xlane.f32.xlu0 %v473
      %v475 = vpop.xlane.xlu0 %474
      %v476 = vpack.c.bf16 %v472, %v472
      %v477 = vadd.f32 %v475, 1e-30
      %v478 = vrcp.pop %v477
      %v479 = vmul.f32 %v478, %v469
      %480 = vrot.lane.b32.xlu0 %v413, 48
      %v481 = vpop.permute.xlu0 %480
      %v483 = vsel %vm166, %v476, 0
      %v486 = vsel %vm234, %v481, 0
      %488 = vmatprep.subr.bf16.mxu0 0
      %489 = vmatpush1.bf16.msra.mxu0 0
      %490 = vmatprep.subr.bf16.mxu0 0
      %491 = vmatpush1.bf16.msra.mxu0 0
      %492 = vmatprep.subr.bf16.mxu0 0
      %493 = vmatpush1.bf16.msra.mxu0 0
      %494 = vmatprep.subr.bf16.mxu0 0
      %495 = vmatpush1.bf16.msra.mxu0 0
      %496 = vmatprep.subr.bf16.mxu0 0
      %497 = vmatpush1.bf16.msra.mxu0 0
      %498 = vmatprep.subr.bf16.mxu0 0
      %499 = vmatpush1.bf16.msra.mxu0 0
      %500 = vmatprep.subr.bf16.mxu0 0
      %501 = vmatpush1.bf16.msra.mxu0 0
      %502 = vmatprep.subr.bf16.mxu0 0
      %503 = vmatpush1.bf16.msra.mxu0 %v486
      %504 = vmatprep.subr.bf16.mxu0 0
      %505 = vmatpush2.bf16.msra.mxu0 0
      %506 = vmatprep.subr.bf16.mxu0 0
      %507 = vmatpush2.bf16.msra.mxu0 0
      %508 = vmatprep.subr.bf16.mxu0 0
      %509 = vmatpush2.bf16.msra.mxu0 0
      %510 = vmatprep.subr.bf16.mxu0 0
      %511 = vmatpush2.bf16.msra.mxu0 0
      %512 = vmatprep.subr.bf16.mxu0 0
      %513 = vmatpush2.bf16.msra.mxu0 0
      %514 = vmatprep.subr.bf16.mxu0 0
      %515 = vmatpush2.bf16.msra.mxu0 0
      %516 = vmatprep.subr.bf16.mxu0 0
      %517 = vmatpush2.bf16.msra.mxu0 0
      %518 = vmatprep.subr.bf16.mxu0 0
      %519 = vmatpush2.bf16.msra.mxu0 0
      %520 = vmatprep.mubr.bf16.mxu0 0
      %521 = vmatmul.mubr.bf16.gmra.mxu0 %v483
      %v522 = vpop.f32.mrf.mxu0
      %v523 = vadd.f32 0.0, %v522
      %v524 = vpop.f32.mrf.mxu0
      %v525 = vpop.f32.mrf.mxu0
      %v526 = vpop.f32.mrf.mxu0
      %527 = vdwg.mxu0
      %v528 = vmul.f32 %v523, %v479
      %v529 = vpack.c.bf16 %v528, %v528
      %v531 = vunpack.c.l.b16 %v529
      %v532 = vpack.c.b16 %v531, %v531
      %533 = vrot.lane.b32.xlu0 %v532, 16
      %v534 = vpop.permute.xlu0 %533
      %vm536 = vcmask 191616
      %537 = vst.msk [vmem:[%s152] sm:$0xf] %vm536, %v534
      %v538 = vld [vmem:[%s145] sm:$0xf]
      %v540 = vunpack.c.l.b16 %v538
      %v541 = vpack.c.b16 %v540, %v540
      %542 = vrot.lane.b32.xlu0 %v541, 104
      %v543 = vpop.permute.xlu0 %542
      %544 = vrot.lane.b32.xlu0 %v541, 72
      %v545 = vpop.permute.xlu0 %544
      %v547 = vsel %vm166, %v543, 0
      %v550 = vsel %vm166, %v545, 0
      %552 = vmatprep.subr.bf16.mxu0 0
      %553 = vmatpush1.bf16.xpose.msra.mxu0 0
      %554 = vmatprep.subr.bf16.mxu0 0
      %555 = vmatpush1.bf16.xpose.msra.mxu0 0
      %556 = vmatprep.subr.bf16.mxu0 0
      %557 = vmatpush1.bf16.xpose.msra.mxu0 0
      %558 = vmatprep.subr.bf16.mxu0 0
      %559 = vmatpush1.bf16.xpose.msra.mxu0 0
      %560 = vmatprep.subr.bf16.mxu0 0
      %561 = vmatpush1.bf16.xpose.msra.mxu0 0
      %562 = vmatprep.subr.bf16.mxu0 0
      %563 = vmatpush1.bf16.xpose.msra.mxu0 0
      %564 = vmatprep.subr.bf16.mxu0 0
      %565 = vmatpush1.bf16.xpose.msra.mxu0 0
      %566 = vmatprep.subr.bf16.mxu0 0
      %567 = vmatpush1.bf16.xpose.msra.mxu0 %v550
      %568 = vmatprep.subr.bf16.mxu0 0
      %569 = vmatpush2.bf16.xpose.msra.mxu0 0
      %570 = vmatprep.subr.bf16.mxu0 0
      %571 = vmatpush2.bf16.xpose.msra.mxu0 0
      %572 = vmatprep.subr.bf16.mxu0 0
      %573 = vmatpush2.bf16.xpose.msra.mxu0 0
      %574 = vmatprep.subr.bf16.mxu0 0
      %575 = vmatpush2.bf16.xpose.msra.mxu0 0
      %576 = vmatprep.subr.bf16.mxu0 0
      %577 = vmatpush2.bf16.xpose.msra.mxu0 0
      %578 = vmatprep.subr.bf16.mxu0 0
      %579 = vmatpush2.bf16.xpose.msra.mxu0 0
      %580 = vmatprep.subr.bf16.mxu0 0
      %581 = vmatpush2.bf16.xpose.msra.mxu0 0
      %582 = vmatprep.subr.bf16.mxu0 0
      %583 = vmatpush2.bf16.xpose.msra.mxu0 0
      %584 = vmatprep.mubr.bf16.mxu0 0
      %585 = vmatmul.mubr.bf16.gmra.mxu0 %v547
      %v586 = vpop.f32.mrf.mxu0
      %v587 = vadd.f32 %v160, %v586
      %v588 = vpop.f32.mrf.mxu0
      %v589 = vpop.f32.mrf.mxu0
      %v590 = vpop.f32.mrf.mxu0
      %591 = vdwg.mxu0
      %v592 = vsel %vm166, %v587, -inf
      %593 = vmax.xlane.f32.xlu0 %v592
      %v594 = vpop.xlane.xlu0 %593
      %vm595 = vcmp.gt.f32.partialorder %v594, -5e+29
      %v596 = vsel %vm595, 1, 0
      %v597 = vcvt.s32.f32 %v596
      %v598 = vsub.f32 %v587, %v594
      %v599 = vmul.f32 %v598, 1.442695
      %v600 = vpow.pop %v599
      %v601 = vsel %vm166, %v600, 0.0
      %602 = vadd.xlane.f32.xlu0 %v601
      %v603 = vpop.xlane.xlu0 %602
      %v604 = vpack.c.bf16 %v600, %v600
      %v605 = vadd.f32 %v603, 1e-30
      %v606 = vrcp.pop %v605
      %v607 = vmul.f32 %v606, %v597
      %608 = vrot.lane.b32.xlu0 %v541, 40
      %v609 = vpop.permute.xlu0 %608
      %v611 = vsel %vm166, %v604, 0
      %v614 = vsel %vm234, %v609, 0
      %616 = vmatprep.subr.bf16.mxu0 0
      %617 = vmatpush1.bf16.msra.mxu0 0
      %618 = vmatprep.subr.bf16.mxu0 0
      %619 = vmatpush1.bf16.msra.mxu0 0
      %620 = vmatprep.subr.bf16.mxu0 0
      %621 = vmatpush1.bf16.msra.mxu0 0
      %622 = vmatprep.subr.bf16.mxu0 0
      %623 = vmatpush1.bf16.msra.mxu0 0
      %624 = vmatprep.subr.bf16.mxu0 0
      %625 = vmatpush1.bf16.msra.mxu0 0
      %626 = vmatprep.subr.bf16.mxu0 0
      %627 = vmatpush1.bf16.msra.mxu0 0
      %628 = vmatprep.subr.bf16.mxu0 0
      %629 = vmatpush1.bf16.msra.mxu0 0
      %630 = vmatprep.subr.bf16.mxu0 0
      %631 = vmatpush1.bf16.msra.mxu0 %v614
      %632 = vmatprep.subr.bf16.mxu0 0
      %633 = vmatpush2.bf16.msra.mxu0 0
      %634 = vmatprep.subr.bf16.mxu0 0
      %635 = vmatpush2.bf16.msra.mxu0 0
      %636 = vmatprep.subr.bf16.mxu0 0
      %637 = vmatpush2.bf16.msra.mxu0 0
      %638 = vmatprep.subr.bf16.mxu0 0
      %639 = vmatpush2.bf16.msra.mxu0 0
      %640 = vmatprep.subr.bf16.mxu0 0
      %641 = vmatpush2.bf16.msra.mxu0 0
      %642 = vmatprep.subr.bf16.mxu0 0
      %643 = vmatpush2.bf16.msra.mxu0 0
      %644 = vmatprep.subr.bf16.mxu0 0
      %645 = vmatpush2.bf16.msra.mxu0 0
      %646 = vmatprep.subr.bf16.mxu0 0
      %647 = vmatpush2.bf16.msra.mxu0 0
      %648 = vmatprep.mubr.bf16.mxu0 0
      %649 = vmatmul.mubr.bf16.gmra.mxu0 %v611
      %v650 = vpop.f32.mrf.mxu0
      %v651 = vadd.f32 0.0, %v650
      %v652 = vpop.f32.mrf.mxu0
      %v653 = vpop.f32.mrf.mxu0
      %v654 = vpop.f32.mrf.mxu0
      %655 = vdwg.mxu0
      %v656 = vmul.f32 %v651, %v607
      %v657 = vpack.c.bf16 %v656, %v656
      %v659 = vunpack.c.l.b16 %v657
      %v660 = vpack.c.b16 %v659, %v659
      %661 = vrot.lane.b32.xlu0 %v660, 24
      %v662 = vpop.permute.xlu0 %661
      %vm664 = vcmask 257216
      %665 = vst.msk [vmem:[%s152] sm:$0xf] %vm664, %v662
      %p666 = scmp.lt.s32.totalorder %s13, 1
      %s667 = scalar_select %p666, %s13, 1
      %s668 = smul.addr %s667, 4
      %s669 = scalar_lea.vmem %s2, %s668
      // Predicated region
      $region29: #{raven_forward.30} parent=27 // pred_check
        %p670 = pneg %p83
      $region30: #{raven_forward.30} parent=27 // pred_check_branch
        %672 = sbr.rel (%p670) target = $region32
      $region31: #{raven_forward.30} parent=27 // pred_region
        _
      $region32: #{raven_forward.30} parent=27 // pred_fallthru
        _
    $region28: #{raven_forward.30} parent=5 // pred_fallthru
      _
    %p673 = scmp.le.s32.totalorder 2, %s8
    // Predicated region
    $region33: #{raven_forward.30} parent=5 // pred_check
      %p674 = pneg %p673
    $region34: #{raven_forward.30} parent=5 // pred_check_branch
      %676 = sbr.rel (%p674) target = $region36
    $region35: #{raven_forward.30} parent=5 // pred_region
      %s677 = ssub.s32 %s8, 2
      // Predicated region
      $region37: #{raven_forward.30} parent=35 // pred_check
        %p678 = pneg %p89
      $region38: #{raven_forward.30} parent=35 // pred_check_branch
        %680 = sbr.rel (%p678) target = $region40
      $region39: #{raven_forward.30} parent=35 // pred_region
        %p681 = scmp.lt.s32.totalorder %s14, 1
        %s682 = scalar_select %p681, %s14, 1
        %s683 = smul.addr %s682, 4
        %s684 = scalar_lea.vmem %s2, %s683
      $region40: #{raven_forward.30} parent=35 // pred_fallthru
        _
    $region36: #{raven_forward.30} parent=5 // pred_fallthru
      _
  $region6: #{raven_forward.30} parent=0 // loop_footer
    %s12 = sadd.s32 1, %s8
  $region7: #{raven_forward.30} parent=0 // loop_footer_branch
    %7 = sbr.rel target = $region3
  $region8: #{raven_forward.30} parent=0 // loop_exit
    _

// kernel: raven_forward.37
$region0: #{raven_forward.37}
  #allocation0 [shape = 'u32[]', space=smem, size = 0x4, offset = 0x4, fixed_abs, tag = 'smem constant byte address 0x4 - core index']
  #allocation1 [shape = 'u32[144,128]{1,0:T(1,128)}', space=vmem, size = 0x12000, scoped, tag = 'internal scratch']
  %s0 = inlined_call_operand.vmem [shape: bf16[16,32], index: 0, kind: input, shape index: {}]
  %s1 = inlined_call_operand.vmem [shape: f32[1,32], index: 1, kind: input, shape index: {}]
  %s2 = inlined_call_operand.vmem [shape: f32[1,32], index: 2, kind: input, shape index: {}]
  %s3 = inlined_call_operand.vmem [shape: bf16[16,32], index: 3, kind: output, shape index: {}]
  %s4 = sld [smem:[#allocation0]]
  $region22: #{raven_forward.37} parent=0
    _
  %s6 = ssub.s32 1, %s4
  %s7 = scalar_select 0, %s6, %s4
  // Predicated region
  $region2: #{raven_forward.37} parent=0 // pred_check
    _
  $region3: #{raven_forward.37} parent=0 // pred_check_branch
    %9 = sbr.rel (0) target = $region5
  $region4: #{raven_forward.37} parent=0 // pred_region
    _
  $region5: #{raven_forward.37} parent=0 // pred_fallthru
    _
  // Predicated region
  $region6: #{raven_forward.37} parent=0 // pred_check
    _
  $region7: #{raven_forward.37} parent=0 // pred_check_branch
    %11 = sbr.rel (0) target = $region9
  $region8: #{raven_forward.37} parent=0 // pred_region
    _
  $region9: #{raven_forward.37} parent=0 // pred_fallthru
    _
  // Predicated region
  $region10: #{raven_forward.37} parent=0 // pred_check
    _
  $region11: #{raven_forward.37} parent=0 // pred_check_branch
    %13 = sbr.rel (0) target = $region13
  $region12: #{raven_forward.37} parent=0 // pred_region
    _
  $region13: #{raven_forward.37} parent=0 // pred_fallthru
    _
  %v14 = vld [vmem:[%s0] sm:$0xf]
  %v15 = vld [vmem:[%s0 + $0x4] sm:$0xf]
  %v16 = vunpack.c.l.bf16 %v14
  %v17 = vunpack.c.l.bf16 %v15
  %vm18 = vcmask 261120
  %v19 = vsel %vm18, %v16, 0.0
  %20 = vadd.xlane.f32.xlu0 %v19
  %v21 = vpop.xlane.xlu0 %20
  %v22 = vsel %vm18, %v17, 0.0
  %23 = vadd.xlane.f32.xlu0 %v22
  %v24 = vpop.xlane.xlu0 %23
  %v25 = vrcp.pop 32.0
  %v26 = vmul.f32 %v21, %v25
  %v27 = vmul.f32 %v24, %v25
  %v28 = vsub.f32 %v16, %v26
  %v29 = vsub.f32 %v17, %v27
  %v30 = vmul.f32 %v28, %v28
  %v31 = vmul.f32 %v29, %v29
  %v32 = vsel %vm18, %v30, 0.0
  %33 = vadd.xlane.f32.xlu0 %v32
  %v34 = vpop.xlane.xlu0 %33
  %v35 = vsel %vm18, %v31, 0.0
  %36 = vadd.xlane.f32.xlu0 %v35
  %v37 = vpop.xlane.xlu0 %36
  %v38 = vmul.f32 %v34, %v25
  %v39 = vmul.f32 %v37, %v25
  %v40 = vadd.f32 %v38, 1e-12
  %v41 = vadd.f32 %v39, 1e-12
  %v42 = vrsqrt.pop %v40
  %v43 = vrsqrt.pop %v41
  %v44 = vmul.f32 %v28, %v42
  %v45 = vmul.f32 %v29, %v43
  %v46 = vld [vmem:[%s1] sm:$0x1]
  %v48 = vlaneseq
  %v49 = vshrl.u32 %v48, 7
  %v50 = vsub.s32 0, %v49
  %v51 = vrot.slane %v46, %v50
  %v53 = vmul.f32 %v44, %v51
  %v54 = vmul.f32 %v45, %v51
  %v55 = vld [vmem:[%s2] sm:$0x1]
  %v57 = vlaneseq
  %v58 = vshrl.u32 %v57, 7
  %v59 = vsub.s32 0, %v58
  %v60 = vrot.slane %v55, %v59
  %v62 = vadd.f32 %v53, %v60
  %v63 = vadd.f32 %v54, %v60
  %v64 = vpack.c.bf16 %v63, %v62
  %v66 = vunpack.c.l.b16 %v64
  %v67 = vunpack.c.h.b16 %v64
  %v68 = vpack.c.b16 %v66, %v66
  %v69 = vpack.c.b16 %v67, %v67
  %vm72 = vcmask 257024
  %73 = vst.msk [vmem:[%s3] sm:$0xf] %vm72, %v68
  %74 = vst.msk [vmem:[%s3 + $0x4] sm:$0xf] %vm72, %v69
  // Predicated region
  $region14: #{raven_forward.37} parent=0 // pred_check
    _
  $region15: #{raven_forward.37} parent=0 // pred_check_branch
    %76 = sbr.rel (0) target = $region17
  $region16: #{raven_forward.37} parent=0 // pred_region
    _
  $region17: #{raven_forward.37} parent=0 // pred_fallthru
    _
  // Predicated region
  $region18: #{raven_forward.37} parent=0 // pred_check
    _
  $region19: #{raven_forward.37} parent=0 // pred_check_branch
    %78 = sbr.rel (0) target = $region21
  $region20: #{raven_forward.37} parent=0 // pred_region
    _
  $region21: #{raven_forward.37} parent=0 // pred_fallthru
    _

// kernel: raven_forward.43
$region0: #{raven_forward.43}
  #allocation0 [shape = 'u32[]', space=smem, size = 0x4, offset = 0x4, fixed_abs, tag = 'smem constant byte address 0x4 - core index']
  #allocation1 [shape = 'u32[144,128]{1,0:T(1,128)}', space=vmem, size = 0x12000, scoped, tag = 'internal scratch']
  #allocation2 [shape = 'f32[16,64]{1,0:T(8,128)}', space=vmem, size = 0x2000, scoped, tag = 'scratch operand']
  %s0 = inlined_call_operand.vmem [shape: bf16[16,32], index: 0, kind: input, shape index: {}]
  %s1 = inlined_call_operand.vmem [shape: bf16[32,64], index: 1, kind: input, shape index: {}]
  %s2 = inlined_call_operand.vmem [shape: f32[1,64], index: 2, kind: input, shape index: {}]
  %s3 = inlined_call_operand.vmem [shape: bf16[16,64], index: 3, kind: output, shape index: {}]
  %s4 = sld [smem:[#allocation0]]
  $region30: #{raven_forward.43} parent=0
    _
  %s6 = ssub.s32 1, %s4
  %s7 = scalar_select 0, %s6, %s4
  // Predicated region
  $region2: #{raven_forward.43} parent=0 // pred_check
    _
  $region3: #{raven_forward.43} parent=0 // pred_check_branch
    %9 = sbr.rel (0) target = $region5
  $region4: #{raven_forward.43} parent=0 // pred_region
    _
  $region5: #{raven_forward.43} parent=0 // pred_fallthru
    _
  // Predicated region
  $region6: #{raven_forward.43} parent=0 // pred_check
    _
  $region7: #{raven_forward.43} parent=0 // pred_check_branch
    %11 = sbr.rel (0) target = $region9
  $region8: #{raven_forward.43} parent=0 // pred_region
    _
  $region9: #{raven_forward.43} parent=0 // pred_fallthru
    _
  // Predicated region
  $region10: #{raven_forward.43} parent=0 // pred_check
    _
  $region11: #{raven_forward.43} parent=0 // pred_check_branch
    %13 = sbr.rel (0) target = $region13
  $region12: #{raven_forward.43} parent=0 // pred_region
    _
  $region13: #{raven_forward.43} parent=0 // pred_fallthru
    _
  %p15 = scmp.eq.s32.totalorder 0, 0
  // Predicated region
  $region14: #{raven_forward.43} parent=0 // pred_check
    %p16 = pneg %p15
  $region15: #{raven_forward.43} parent=0 // pred_check_branch
    %18 = sbr.rel (%p16) target = $region17
  $region16: #{raven_forward.43} parent=0 // pred_region
    %vm19 = vcmask 523264
    %20 = vst.msk [vmem:[#allocation2] sm:$0xff] %vm19, 0.0
    %21 = vst.msk [vmem:[#allocation2 + $0x8] sm:$0xff] %vm19, 0.0
  $region17: #{raven_forward.43} parent=0 // pred_fallthru
    _
  %v22 = vld [vmem:[%s0] sm:$0xf]
  %v23 = vld [vmem:[%s0 + $0x4] sm:$0xf]
  %v24 = vld [vmem:[#allocation2] sm:$0xff]
  %v25 = vld [vmem:[#allocation2 + $0x8] sm:$0xff]
  %v26 = vld [vmem:[%s1] sm:$0xf]
  %v27 = vld [vmem:[%s1 + $0x4] sm:$0xf]
  %v28 = vld [vmem:[%s1 + $0x8] sm:$0xf]
  %v29 = vld [vmem:[%s1 + $0xc] sm:$0xf]
  %v32 = vunpack.c.l.b16 %v22
  %v33 = vunpack.c.l.b16 %v23
  %v34 = vpack.c.b16 %v33, %v32
  %v39 = vunpack.c.l.b16 %v26
  %v40 = vunpack.c.l.b16 %v27
  %v41 = vunpack.c.l.b16 %v28
  %v42 = vunpack.c.l.b16 %v29
  %v43 = vpack.c.b16 %v40, %v39
  %v44 = vpack.c.b16 %v42, %v41
  %vm47 = vcmask 261120
  %v49 = vsel %vm47, %v34, 0
  %51 = vmatprep.subr.bf16.mxu0 0
  %52 = vmatpush1.bf16.msra.mxu0 0
  %53 = vmatprep.subr.bf16.mxu0 0
  %54 = vmatpush1.bf16.msra.mxu0 0
  %55 = vmatprep.subr.bf16.mxu0 0
  %56 = vmatpush1.bf16.msra.mxu0 0
  %57 = vmatprep.subr.bf16.mxu0 0
  %58 = vmatpush1.bf16.msra.mxu0 0
  %59 = vmatprep.subr.bf16.mxu0 0
  %60 = vmatpush1.bf16.msra.mxu0 0
  %61 = vmatprep.subr.bf16.mxu0 0
  %62 = vmatpush1.bf16.msra.mxu0 0
  %63 = vmatprep.subr.bf16.mxu0 0
  %64 = vmatpush1.bf16.msra.mxu0 %v44
  %65 = vmatprep.subr.bf16.mxu0 0
  %66 = vmatpush1.bf16.msra.mxu0 %v43
  %67 = vmatprep.subr.bf16.mxu0 0
  %68 = vmatpush2.bf16.msra.mxu0 0
  %69 = vmatprep.subr.bf16.mxu0 0
  %70 = vmatpush2.bf16.msra.mxu0 0
  %71 = vmatprep.subr.bf16.mxu0 0
  %72 = vmatpush2.bf16.msra.mxu0 0
  %73 = vmatprep.subr.bf16.mxu0 0
  %74 = vmatpush2.bf16.msra.mxu0 0
  %75 = vmatprep.subr.bf16.mxu0 0
  %76 = vmatpush2.bf16.msra.mxu0 0
  %77 = vmatprep.subr.bf16.mxu0 0
  %78 = vmatpush2.bf16.msra.mxu0 0
  %79 = vmatprep.subr.bf16.mxu0 0
  %80 = vmatpush2.bf16.msra.mxu0 0
  %81 = vmatprep.subr.bf16.mxu0 0
  %82 = vmatpush2.bf16.msra.mxu0 0
  %83 = vmatprep.mubr.bf16.mxu0 0
  %84 = vmatmul.mubr.bf16.gmra.mxu0 %v49
  %v85 = vpop.f32.mrf.mxu0
  %v86 = vadd.f32 0.0, %v85
  %v87 = vpop.f32.mrf.mxu0
  %v88 = vpop.f32.mrf.mxu0
  %v89 = vadd.f32 0.0, %v88
  %v90 = vpop.f32.mrf.mxu0
  %91 = vdwg.mxu0
  %v92 = vadd.f32 %v24, %v86
  %v93 = vadd.f32 %v25, %v89
  %vm94 = vcmask 523264
  %95 = vst.msk [vmem:[#allocation2] sm:$0xff] %vm94, %v92
  %96 = vst.msk [vmem:[#allocation2 + $0x8] sm:$0xff] %vm94, %v93
  // Predicated region
  $region18: #{raven_forward.43} parent=0 // pred_check
    %p97 = pneg %p15
  $region19: #{raven_forward.43} parent=0 // pred_check_branch
    %99 = sbr.rel (%p97) target = $region21
  $region20: #{raven_forward.43} parent=0 // pred_region
    %v100 = vld [vmem:[#allocation2] sm:$0xff]
    %v101 = vld [vmem:[#allocation2 + $0x8] sm:$0xff]
    %v102 = vld [vmem:[%s2] sm:$0x1]
    %v104 = vlaneseq
    %v105 = vshrl.u32 %v104, 7
    %v106 = vsub.s32 0, %v105
    %v107 = vrot.slane %v102, %v106
    %v109 = vadd.f32 %v100, %v107
    %v110 = vadd.f32 %v101, %v107
    %v111 = vpack.c.bf16 %v110, %v109
    %v113 = vunpack.c.l.b16 %v111
    %v114 = vunpack.c.h.b16 %v111
    %v115 = vpack.c.b16 %v113, %v113
    %v116 = vpack.c.b16 %v114, %v114
    %vm119 = vcmask 519168
    %120 = vst.msk [vmem:[%s3] sm:$0xf] %vm119, %v115
    %121 = vst.msk [vmem:[%s3 + $0x4] sm:$0xf] %vm119, %v116
  $region21: #{raven_forward.43} parent=0 // pred_fallthru
    _
  // Predicated region
  $region22: #{raven_forward.43} parent=0 // pred_check
    _
  $region23: #{raven_forward.43} parent=0 // pred_check_branch
    %123 = sbr.rel (0) target = $region25
  $region24: #{raven_forward.43} parent=0 // pred_region
    _
  $region25: #{raven_forward.43} parent=0 // pred_fallthru
    _
  // Predicated region
  $region26: #{raven_forward.43} parent=0 // pred_check
    _
  $region27: #{raven_forward.43} parent=0 // pred_check_branch
    %125 = sbr.rel (0) target = $region29
  $region28: #{raven_forward.43} parent=0 // pred_region
    _
  $region29: #{raven_forward.43} parent=0 // pred_fallthru
    _

// kernel: raven_forward.39
$region0: #{raven_forward.39}
  #allocation0 [shape = 'u32[]', space=smem, size = 0x4, offset = 0x4, fixed_abs, tag = 'smem constant byte address 0x4 - core index']
  #allocation1 [shape = 'u32[144,128]{1,0:T(1,128)}', space=vmem, size = 0x12000, scoped, tag = 'internal scratch']
  #allocation2 [shape = 'f32[10,96]{1,0:T(8,128)}', space=vmem, size = 0x2000, scoped, tag = 'scratch operand']
  %s0 = inlined_call_operand.vmem [shape: bf16[10,32], index: 0, kind: input, shape index: {}]
  %s1 = inlined_call_operand.vmem [shape: f32[1,32], index: 1, kind: input, shape index: {}]
  %s2 = inlined_call_operand.vmem [shape: f32[1,32], index: 2, kind: input, shape index: {}]
  %s3 = inlined_call_operand.vmem [shape: bf16[32,96], index: 3, kind: input, shape index: {}]
  %s4 = inlined_call_operand.vmem [shape: f32[1,96], index: 4, kind: input, shape index: {}]
  %s5 = inlined_call_operand.vmem [shape: bf16[10,96], index: 5, kind: output, shape index: {}]
  %s6 = sld [smem:[#allocation0]]
  $region38: #{raven_forward.39} parent=0
    _
  %s8 = ssub.s32 1, %s6
  %s9 = scalar_select 0, %s8, %s6
  // Predicated region
  $region2: #{raven_forward.39} parent=0 // pred_check
    _
  $region3: #{raven_forward.39} parent=0 // pred_check_branch
    %11 = sbr.rel (0) target = $region5
  $region4: #{raven_forward.39} parent=0 // pred_region
    _
  $region5: #{raven_forward.39} parent=0 // pred_fallthru
    _
  // Predicated region
  $region6: #{raven_forward.39} parent=0 // pred_check
    _
  $region7: #{raven_forward.39} parent=0 // pred_check_branch
    %13 = sbr.rel (0) target = $region9
  $region8: #{raven_forward.39} parent=0 // pred_region
    _
  $region9: #{raven_forward.39} parent=0 // pred_fallthru
    _
  // Predicated region
  $region10: #{raven_forward.39} parent=0 // pred_check
    _
  $region11: #{raven_forward.39} parent=0 // pred_check_branch
    %15 = sbr.rel (0) target = $region13
  $region12: #{raven_forward.39} parent=0 // pred_region
    _
  $region13: #{raven_forward.39} parent=0 // pred_fallthru
    _
  // Predicated region
  $region14: #{raven_forward.39} parent=0 // pred_check
    _
  $region15: #{raven_forward.39} parent=0 // pred_check_branch
    %17 = sbr.rel (0) target = $region17
  $region16: #{raven_forward.39} parent=0 // pred_region
    _
  $region17: #{raven_forward.39} parent=0 // pred_fallthru
    _
  // Predicated region
  $region18: #{raven_forward.39} parent=0 // pred_check
    _
  $region19: #{raven_forward.39} parent=0 // pred_check_branch
    %19 = sbr.rel (0) target = $region21
  $region20: #{raven_forward.39} parent=0 // pred_region
    _
  $region21: #{raven_forward.39} parent=0 // pred_fallthru
    _
  %p21 = scmp.eq.s32.totalorder 0, 0
  // Predicated region
  $region22: #{raven_forward.39} parent=0 // pred_check
    %p22 = pneg %p21
  $region23: #{raven_forward.39} parent=0 // pred_check_branch
    %24 = sbr.rel (%p22) target = $region25
  $region24: #{raven_forward.39} parent=0 // pred_region
    %vm25 = vcmask 785408
    %26 = vst.msk [vmem:[#allocation2] sm:$0xff] %vm25, 0.0
    %vm27 = vcmask 779264
    %28 = vst.msk [vmem:[#allocation2 + $0x8] sm:$0x3] %vm27, 0.0
  $region25: #{raven_forward.39} parent=0 // pred_fallthru
    _
  %v29 = vld [vmem:[%s0] sm:$0xf]
  %v30 = vld [vmem:[%s0 + $0x4] sm:$0x1]
  %v31 = vunpack.c.l.bf16 %v29
  %v32 = vunpack.c.l.bf16 %v30
  %vm33 = vcmask 261120
  %v34 = vsel %vm33, %v31, 0.0
  %35 = vadd.xlane.f32.xlu0 %v34
  %v36 = vpop.xlane.xlu0 %35
  %vm37 = vcmask 254976
  %v38 = vsel %vm37, %v32, 0.0
  %39 = vadd.xlane.f32.xlu0 %v38
  %v40 = vpop.xlane.xlu0 %39
  %v41 = vrcp.pop 32.0
  %v42 = vmul.f32 %v36, %v41
  %v43 = vmul.f32 %v40, %v41
  %v44 = vsub.f32 %v31, %v42
  %v45 = vsub.f32 %v32, %v43
  %v46 = vmul.f32 %v44, %v44
  %v47 = vmul.f32 %v45, %v45
  %v48 = vsel %vm33, %v46, 0.0
  %49 = vadd.xlane.f32.xlu0 %v48
  %v50 = vpop.xlane.xlu0 %49
  %v51 = vsel %vm37, %v47, 0.0
  %52 = vadd.xlane.f32.xlu0 %v51
  %v53 = vpop.xlane.xlu0 %52
  %v54 = vmul.f32 %v50, %v41
  %v55 = vmul.f32 %v53, %v41
  %v56 = vadd.f32 %v54, 1e-12
  %v57 = vadd.f32 %v55, 1e-12
  %v58 = vrsqrt.pop %v56
  %v59 = vrsqrt.pop %v57
  %v60 = vmul.f32 %v44, %v58
  %v61 = vmul.f32 %v45, %v59
  %v62 = vld [vmem:[%s1] sm:$0x1]
  %v64 = vlaneseq
  %v65 = vshrl.u32 %v64, 7
  %v66 = vsub.s32 0, %v65
  %v67 = vrot.slane %v62, %v66
  %v69 = vmul.f32 %v60, %v67
  %v70 = vmul.f32 %v61, %v67
  %v71 = vld [vmem:[%s2] sm:$0x1]
  %v73 = vlaneseq
  %v74 = vshrl.u32 %v73, 7
  %v75 = vsub.s32 0, %v74
  %v76 = vrot.slane %v71, %v75
  %v78 = vadd.f32 %v69, %v76
  %v79 = vadd.f32 %v70, %v76
  %v80 = vpack.c.bf16 %v79, %v78
  %v81 = vld [vmem:[#allocation2] sm:$0xff]
  %v82 = vld [vmem:[#allocation2 + $0x8] sm:$0x3]
  %v83 = vld [vmem:[%s3] sm:$0xf]
  %v84 = vld [vmem:[%s3 + $0x4] sm:$0xf]
  %v85 = vld [vmem:[%s3 + $0x8] sm:$0xf]
  %v86 = vld [vmem:[%s3 + $0xc] sm:$0xf]
  %v91 = vunpack.c.l.b16 %v83
  %v92 = vunpack.c.l.b16 %v84
  %v93 = vunpack.c.l.b16 %v85
  %v94 = vunpack.c.l.b16 %v86
  %v95 = vpack.c.b16 %v92, %v91
  %v96 = vpack.c.b16 %v94, %v93
  %v100 = vsel %vm33, %v80, 0
  %102 = vmatprep.subr.bf16.mxu0 0
  %103 = vmatpush1.bf16.msra.mxu0 0
  %104 = vmatprep.subr.bf16.mxu0 0
  %105 = vmatpush1.bf16.msra.mxu0 0
  %106 = vmatprep.subr.bf16.mxu0 0
  %107 = vmatpush1.bf16.msra.mxu0 0
  %108 = vmatprep.subr.bf16.mxu0 0
  %109 = vmatpush1.bf16.msra.mxu0 0
  %110 = vmatprep.subr.bf16.mxu0 0
  %111 = vmatpush1.bf16.msra.mxu0 0
  %112 = vmatprep.subr.bf16.mxu0 0
  %113 = vmatpush1.bf16.msra.mxu0 0
  %114 = vmatprep.subr.bf16.mxu0 0
  %115 = vmatpush1.bf16.msra.mxu0 %v96
  %116 = vmatprep.subr.bf16.mxu0 0
  %117 = vmatpush1.bf16.msra.mxu0 %v95
  %118 = vmatprep.subr.bf16.mxu0 0
  %119 = vmatpush2.bf16.msra.mxu0 0
  %120 = vmatprep.subr.bf16.mxu0 0
  %121 = vmatpush2.bf16.msra.mxu0 0
  %122 = vmatprep.subr.bf16.mxu0 0
  %123 = vmatpush2.bf16.msra.mxu0 0
  %124 = vmatprep.subr.bf16.mxu0 0
  %125 = vmatpush2.bf16.msra.mxu0 0
  %126 = vmatprep.subr.bf16.mxu0 0
  %127 = vmatpush2.bf16.msra.mxu0 0
  %128 = vmatprep.subr.bf16.mxu0 0
  %129 = vmatpush2.bf16.msra.mxu0 0
  %130 = vmatprep.subr.bf16.mxu0 0
  %131 = vmatpush2.bf16.msra.mxu0 0
  %132 = vmatprep.subr.bf16.mxu0 0
  %133 = vmatpush2.bf16.msra.mxu0 0
  %134 = vmatprep.mubr.bf16.mxu0 0
  %135 = vmatmul.mubr.bf16.gmra.mxu0 %v100
  %v136 = vpop.f32.mrf.mxu0
  %v137 = vadd.f32 0.0, %v136
  %v138 = vpop.f32.mrf.mxu0
  %v139 = vpop.f32.mrf.mxu0
  %v140 = vadd.f32 0.0, %v139
  %v141 = vpop.f32.mrf.mxu0
  %142 = vdwg.mxu0
  %v143 = vadd.f32 %v81, %v137
  %v144 = vadd.f32 %v82, %v140
  %vm145 = vcmask 785408
  %146 = vst.msk [vmem:[#allocation2] sm:$0xff] %vm145, %v143
  %vm147 = vcmask 779264
  %148 = vst.msk [vmem:[#allocation2 + $0x8] sm:$0x3] %vm147, %v144
  // Predicated region
  $region26: #{raven_forward.39} parent=0 // pred_check
    %p149 = pneg %p21
  $region27: #{raven_forward.39} parent=0 // pred_check_branch
    %151 = sbr.rel (%p149) target = $region29
  $region28: #{raven_forward.39} parent=0 // pred_region
    %v152 = vld [vmem:[#allocation2] sm:$0xff]
    %v153 = vld [vmem:[#allocation2 + $0x8] sm:$0x3]
    %v154 = vld [vmem:[%s4] sm:$0x1]
    %v156 = vlaneseq
    %v157 = vshrl.u32 %v156, 7
    %v158 = vsub.s32 0, %v157
    %v159 = vrot.slane %v154, %v158
    %v161 = vadd.f32 %v152, %v159
    %v162 = vadd.f32 %v153, %v159
    %v163 = vpack.c.bf16 %v162, %v161
    %v165 = vunpack.c.l.b16 %v163
    %v166 = vunpack.c.h.b16 %v163
    %v167 = vpack.c.b16 %v165, %v165
    %v168 = vpack.c.b16 %v166, %v166
    %vm171 = vcmask 781312
    %172 = vst.msk [vmem:[%s5] sm:$0xf] %vm171, %v167
    %vm173 = vcmask 778240
    %174 = vst.msk [vmem:[%s5 + $0x4] sm:$0x1] %vm173, %v168
  $region29: #{raven_forward.39} parent=0 // pred_fallthru
    _
  // Predicated region
  $region30: #{raven_forward.39} parent=0 // pred_check
    _
  $region31: #{raven_forward.39} parent=0 // pred_check_branch
    %176 = sbr.rel (0) target = $region33
  $region32: #{raven_forward.39} parent=0 // pred_region
    _
  $region33: #{raven_forward.39} parent=0 // pred_fallthru
    _
  // Predicated region
  $region34: #{raven_forward.39} parent=0 // pred_check
    _
  $region35: #{raven_forward.39} parent=0 // pred_check_branch
    %178 = sbr.rel (0) target = $region37
  $region36: #{raven_forward.39} parent=0 // pred_region
    _
  $region37: #{raven_forward.39} parent=0 // pred_fallthru
    _

// kernel: raven_forward.41
$region0: #{raven_forward.41}
  #allocation0 [shape = 'u32[]', space=smem, size = 0x4, offset = 0x4, fixed_abs, tag = 'smem constant byte address 0x4 - core index']
  #allocation1 [shape = 'u32[144,128]{1,0:T(1,128)}', space=vmem, size = 0x12000, scoped, tag = 'internal scratch']
  #allocation2 [shape = 'f32[10,32]{1,0:T(8,128)}', space=vmem, size = 0x2000, scoped, tag = 'scratch operand']
  %s0 = inlined_call_operand.vmem [shape: bf16[10,32], index: 0, kind: input, shape index: {}]
  %s1 = inlined_call_operand.vmem [shape: bf16[32,32], index: 1, kind: input, shape index: {}]
  %s2 = inlined_call_operand.vmem [shape: f32[1,32], index: 2, kind: input, shape index: {}]
  %s3 = inlined_call_operand.vmem [shape: bf16[10,32], index: 3, kind: input, shape index: {}]
  %s4 = inlined_call_operand.vmem [shape: bf16[10,32], index: 4, kind: output, shape index: {}]
  %s5 = sld [smem:[#allocation0]]
  $region34: #{raven_forward.41} parent=0
    _
  %s7 = ssub.s32 1, %s5
  %s8 = scalar_select 0, %s7, %s5
  // Predicated region
  $region2: #{raven_forward.41} parent=0 // pred_check
    _
  $region3: #{raven_forward.41} parent=0 // pred_check_branch
    %10 = sbr.rel (0) target = $region5
  $region4: #{raven_forward.41} parent=0 // pred_region
    _
  $region5: #{raven_forward.41} parent=0 // pred_fallthru
    _
  // Predicated region
  $region6: #{raven_forward.41} parent=0 // pred_check
    _
  $region7: #{raven_forward.41} parent=0 // pred_check_branch
    %12 = sbr.rel (0) target = $region9
  $region8: #{raven_forward.41} parent=0 // pred_region
    _
  $region9: #{raven_forward.41} parent=0 // pred_fallthru
    _
  // Predicated region
  $region10: #{raven_forward.41} parent=0 // pred_check
    _
  $region11: #{raven_forward.41} parent=0 // pred_check_branch
    %14 = sbr.rel (0) target = $region13
  $region12: #{raven_forward.41} parent=0 // pred_region
    _
  $region13: #{raven_forward.41} parent=0 // pred_fallthru
    _
  // Predicated region
  $region14: #{raven_forward.41} parent=0 // pred_check
    _
  $region15: #{raven_forward.41} parent=0 // pred_check_branch
    %16 = sbr.rel (0) target = $region17
  $region16: #{raven_forward.41} parent=0 // pred_region
    _
  $region17: #{raven_forward.41} parent=0 // pred_fallthru
    _
  %p18 = scmp.eq.s32.totalorder 0, 0
  // Predicated region
  $region18: #{raven_forward.41} parent=0 // pred_check
    %p19 = pneg %p18
  $region19: #{raven_forward.41} parent=0 // pred_check_branch
    %21 = sbr.rel (%p19) target = $region21
  $region20: #{raven_forward.41} parent=0 // pred_region
    %vm22 = vcmask 261120
    %23 = vst.msk [vmem:[#allocation2] sm:$0xff] %vm22, 0.0
    %vm24 = vcmask 254976
    %25 = vst.msk [vmem:[#allocation2 + $0x8] sm:$0x3] %vm24, 0.0
  $region21: #{raven_forward.41} parent=0 // pred_fallthru
    _
  %v26 = vld [vmem:[%s0] sm:$0xf]
  %v27 = vld [vmem:[%s0 + $0x4] sm:$0x1]
  %v28 = vld [vmem:[#allocation2] sm:$0xff]
  %v29 = vld [vmem:[#allocation2 + $0x8] sm:$0x3]
  %v30 = vld [vmem:[%s1] sm:$0xf]
  %v31 = vld [vmem:[%s1 + $0x4] sm:$0xf]
  %v32 = vld [vmem:[%s1 + $0x8] sm:$0xf]
  %v33 = vld [vmem:[%s1 + $0xc] sm:$0xf]
  %v36 = vunpack.c.l.b16 %v26
  %v37 = vunpack.c.l.b16 %v27
  %v38 = vpack.c.b16 %v37, %v36
  %v43 = vunpack.c.l.b16 %v30
  %v44 = vunpack.c.l.b16 %v31
  %v45 = vunpack.c.l.b16 %v32
  %v46 = vunpack.c.l.b16 %v33
  %v47 = vpack.c.b16 %v44, %v43
  %v48 = vpack.c.b16 %v46, %v45
  %vm51 = vcmask 261120
  %v53 = vsel %vm51, %v38, 0
  %55 = vmatprep.subr.bf16.mxu0 0
  %56 = vmatpush1.bf16.msra.mxu0 0
  %57 = vmatprep.subr.bf16.mxu0 0
  %58 = vmatpush1.bf16.msra.mxu0 0
  %59 = vmatprep.subr.bf16.mxu0 0
  %60 = vmatpush1.bf16.msra.mxu0 0
  %61 = vmatprep.subr.bf16.mxu0 0
  %62 = vmatpush1.bf16.msra.mxu0 0
  %63 = vmatprep.subr.bf16.mxu0 0
  %64 = vmatpush1.bf16.msra.mxu0 0
  %65 = vmatprep.subr.bf16.mxu0 0
  %66 = vmatpush1.bf16.msra.mxu0 0
  %67 = vmatprep.subr.bf16.mxu0 0
  %68 = vmatpush1.bf16.msra.mxu0 %v48
  %69 = vmatprep.subr.bf16.mxu0 0
  %70 = vmatpush1.bf16.msra.mxu0 %v47
  %71 = vmatprep.subr.bf16.mxu0 0
  %72 = vmatpush2.bf16.msra.mxu0 0
  %73 = vmatprep.subr.bf16.mxu0 0
  %74 = vmatpush2.bf16.msra.mxu0 0
  %75 = vmatprep.subr.bf16.mxu0 0
  %76 = vmatpush2.bf16.msra.mxu0 0
  %77 = vmatprep.subr.bf16.mxu0 0
  %78 = vmatpush2.bf16.msra.mxu0 0
  %79 = vmatprep.subr.bf16.mxu0 0
  %80 = vmatpush2.bf16.msra.mxu0 0
  %81 = vmatprep.subr.bf16.mxu0 0
  %82 = vmatpush2.bf16.msra.mxu0 0
  %83 = vmatprep.subr.bf16.mxu0 0
  %84 = vmatpush2.bf16.msra.mxu0 0
  %85 = vmatprep.subr.bf16.mxu0 0
  %86 = vmatpush2.bf16.msra.mxu0 0
  %87 = vmatprep.mubr.bf16.mxu0 0
  %88 = vmatmul.mubr.bf16.gmra.mxu0 %v53
  %v89 = vpop.f32.mrf.mxu0
  %v90 = vadd.f32 0.0, %v89
  %v91 = vpop.f32.mrf.mxu0
  %v92 = vpop.f32.mrf.mxu0
  %v93 = vadd.f32 0.0, %v92
  %v94 = vpop.f32.mrf.mxu0
  %95 = vdwg.mxu0
  %v96 = vadd.f32 %v28, %v90
  %v97 = vadd.f32 %v29, %v93
  %98 = vst.msk [vmem:[#allocation2] sm:$0xff] %vm51, %v96
  %vm99 = vcmask 254976
  %100 = vst.msk [vmem:[#allocation2 + $0x8] sm:$0x3] %vm99, %v97
  // Predicated region
  $region22: #{raven_forward.41} parent=0 // pred_check
    %p101 = pneg %p18
  $region23: #{raven_forward.41} parent=0 // pred_check_branch
    %103 = sbr.rel (%p101) target = $region25
  $region24: #{raven_forward.41} parent=0 // pred_region
    %v104 = vld [vmem:[#allocation2] sm:$0xff]
    %v105 = vld [vmem:[#allocation2 + $0x8] sm:$0x3]
    %v106 = vld [vmem:[%s2] sm:$0x1]
    %v108 = vlaneseq
    %v109 = vshrl.u32 %v108, 7
    %v110 = vsub.s32 0, %v109
    %v111 = vrot.slane %v106, %v110
    %v113 = vadd.f32 %v104, %v111
    %v114 = vadd.f32 %v105, %v111
    %v115 = vld [vmem:[%s3] sm:$0xf]
    %v116 = vld [vmem:[%s3 + $0x4] sm:$0x1]
    %v117 = vunpack.c.l.bf16 %v115
    %v118 = vunpack.c.l.bf16 %v116
    %v119 = vadd.f32 %v113, %v117
    %v120 = vadd.f32 %v114, %v118
    %v121 = vpack.c.bf16 %v120, %v119
    %v123 = vunpack.c.l.b16 %v121
    %v124 = vunpack.c.h.b16 %v121
    %v125 = vpack.c.b16 %v123, %v123
    %v126 = vpack.c.b16 %v124, %v124
    %vm129 = vcmask 257024
    %130 = vst.msk [vmem:[%s4] sm:$0xf] %vm129, %v125
    %vm131 = vcmask 253952
    %132 = vst.msk [vmem:[%s4 + $0x4] sm:$0x1] %vm131, %v126
  $region25: #{raven_forward.41} parent=0 // pred_fallthru
    _
  // Predicated region
  $region26: #{raven_forward.41} parent=0 // pred_check
    _
  $region27: #{raven_forward.41} parent=0 // pred_check_branch
    %134 = sbr.rel (0) target = $region29
  $region28: #{raven_forward.41} parent=0 // pred_region
    _
  $region29: #{raven_forward.41} parent=0 // pred_fallthru
    _
  // Predicated region
  $region30: #{raven_forward.41} parent=0 // pred_check
    _
  $region31: #{raven_forward.41} parent=0 // pred_check_branch
    %136 = sbr.rel (0) target = $region33
  $region32: #{raven_forward.41} parent=0 // pred_region
    _
  $region33: #{raven_forward.41} parent=0 // pred_fallthru
    _

// kernel: raven_forward.42
$region0: #{raven_forward.42}
  #allocation0 [shape = 'u32[]', space=smem, size = 0x4, offset = 0x4, fixed_abs, tag = 'smem constant byte address 0x4 - core index']
  #allocation1 [shape = 'u32[144,128]{1,0:T(1,128)}', space=vmem, size = 0x12000, scoped, tag = 'internal scratch']
  #allocation2 [shape = 'f32[10,32]{1,0:T(8,128)}', space=vmem, size = 0x2000, scoped, tag = 'scratch operand']
  %s0 = inlined_call_operand.vmem [shape: bf16[10,32], index: 0, kind: input, shape index: {}]
  %s1 = inlined_call_operand.vmem [shape: f32[1,32], index: 1, kind: input, shape index: {}]
  %s2 = inlined_call_operand.vmem [shape: f32[1,32], index: 2, kind: input, shape index: {}, may-alias: {2,4}]
  %s3 = inlined_call_operand.vmem [shape: bf16[32,32], index: 3, kind: input, shape index: {}]
  %s4 = inlined_call_operand.vmem [shape: f32[1,32], index: 4, kind: input, shape index: {}, may-alias: {2,4}]
  %s5 = inlined_call_operand.vmem [shape: bf16[10,32], index: 5, kind: output, shape index: {}]
  %s6 = sld [smem:[#allocation0]]
  $region38: #{raven_forward.42} parent=0
    _
  %s8 = ssub.s32 1, %s6
  %s9 = scalar_select 0, %s8, %s6
  // Predicated region
  $region2: #{raven_forward.42} parent=0 // pred_check
    _
  $region3: #{raven_forward.42} parent=0 // pred_check_branch
    %11 = sbr.rel (0) target = $region5
  $region4: #{raven_forward.42} parent=0 // pred_region
    _
  $region5: #{raven_forward.42} parent=0 // pred_fallthru
    _
  // Predicated region
  $region6: #{raven_forward.42} parent=0 // pred_check
    _
  $region7: #{raven_forward.42} parent=0 // pred_check_branch
    %13 = sbr.rel (0) target = $region9
  $region8: #{raven_forward.42} parent=0 // pred_region
    _
  $region9: #{raven_forward.42} parent=0 // pred_fallthru
    _
  // Predicated region
  $region10: #{raven_forward.42} parent=0 // pred_check
    _
  $region11: #{raven_forward.42} parent=0 // pred_check_branch
    %15 = sbr.rel (0) target = $region13
  $region12: #{raven_forward.42} parent=0 // pred_region
    _
  $region13: #{raven_forward.42} parent=0 // pred_fallthru
    _
  // Predicated region
  $region14: #{raven_forward.42} parent=0 // pred_check
    _
  $region15: #{raven_forward.42} parent=0 // pred_check_branch
    %17 = sbr.rel (0) target = $region17
  $region16: #{raven_forward.42} parent=0 // pred_region
    _
  $region17: #{raven_forward.42} parent=0 // pred_fallthru
    _
  // Predicated region
  $region18: #{raven_forward.42} parent=0 // pred_check
    _
  $region19: #{raven_forward.42} parent=0 // pred_check_branch
    %19 = sbr.rel (0) target = $region21
  $region20: #{raven_forward.42} parent=0 // pred_region
    _
  $region21: #{raven_forward.42} parent=0 // pred_fallthru
    _
  %p21 = scmp.eq.s32.totalorder 0, 0
  // Predicated region
  $region22: #{raven_forward.42} parent=0 // pred_check
    %p22 = pneg %p21
  $region23: #{raven_forward.42} parent=0 // pred_check_branch
    %24 = sbr.rel (%p22) target = $region25
  $region24: #{raven_forward.42} parent=0 // pred_region
    %vm25 = vcmask 261120
    %26 = vst.msk [vmem:[#allocation2] sm:$0xff] %vm25, 0.0
    %vm27 = vcmask 254976
    %28 = vst.msk [vmem:[#allocation2 + $0x8] sm:$0x3] %vm27, 0.0
  $region25: #{raven_forward.42} parent=0 // pred_fallthru
    _
  %v29 = vld [vmem:[%s0] sm:$0xf]
  %v30 = vld [vmem:[%s0 + $0x4] sm:$0x1]
  %v31 = vunpack.c.l.bf16 %v29
  %v32 = vunpack.c.l.bf16 %v30
  %vm33 = vcmask 261120
  %v34 = vsel %vm33, %v31, 0.0
  %35 = vadd.xlane.f32.xlu0 %v34
  %v36 = vpop.xlane.xlu0 %35
  %vm37 = vcmask 254976
  %v38 = vsel %vm37, %v32, 0.0
  %39 = vadd.xlane.f32.xlu0 %v38
  %v40 = vpop.xlane.xlu0 %39
  %v41 = vrcp.pop 32.0
  %v42 = vmul.f32 %v36, %v41
  %v43 = vmul.f32 %v40, %v41
  %v44 = vsub.f32 %v31, %v42
  %v45 = vsub.f32 %v32, %v43
  %v46 = vmul.f32 %v44, %v44
  %v47 = vmul.f32 %v45, %v45
  %v48 = vsel %vm33, %v46, 0.0
  %49 = vadd.xlane.f32.xlu0 %v48
  %v50 = vpop.xlane.xlu0 %49
  %v51 = vsel %vm37, %v47, 0.0
  %52 = vadd.xlane.f32.xlu0 %v51
  %v53 = vpop.xlane.xlu0 %52
  %v54 = vmul.f32 %v50, %v41
  %v55 = vmul.f32 %v53, %v41
  %v56 = vadd.f32 %v54, 1e-12
  %v57 = vadd.f32 %v55, 1e-12
  %v58 = vrsqrt.pop %v56
  %v59 = vrsqrt.pop %v57
  %v60 = vmul.f32 %v44, %v58
  %v61 = vmul.f32 %v45, %v59
  %v62 = vld [vmem:[%s1] sm:$0x1]
  %v64 = vlaneseq
  %v65 = vshrl.u32 %v64, 7
  %v66 = vsub.s32 0, %v65
  %v67 = vrot.slane %v62, %v66
  %v69 = vmul.f32 %v60, %v67
  %v70 = vmul.f32 %v61, %v67
  %v71 = vld [vmem:[%s2] sm:$0x1]
  %v73 = vlaneseq
  %v74 = vshrl.u32 %v73, 7
  %v75 = vsub.s32 0, %v74
  %v76 = vrot.slane %v71, %v75
  %v78 = vadd.f32 %v69, %v76
  %v79 = vadd.f32 %v70, %v76
  %v80 = vpack.c.bf16 %v79, %v78
  %v81 = vld [vmem:[#allocation2] sm:$0xff]
  %v82 = vld [vmem:[#allocation2 + $0x8] sm:$0x3]
  %v83 = vld [vmem:[%s3] sm:$0xf]
  %v84 = vld [vmem:[%s3 + $0x4] sm:$0xf]
  %v85 = vld [vmem:[%s3 + $0x8] sm:$0xf]
  %v86 = vld [vmem:[%s3 + $0xc] sm:$0xf]
  %v91 = vunpack.c.l.b16 %v83
  %v92 = vunpack.c.l.b16 %v84
  %v93 = vunpack.c.l.b16 %v85
  %v94 = vunpack.c.l.b16 %v86
  %v95 = vpack.c.b16 %v92, %v91
  %v96 = vpack.c.b16 %v94, %v93
  %v100 = vsel %vm33, %v80, 0
  %102 = vmatprep.subr.bf16.mxu0 0
  %103 = vmatpush1.bf16.msra.mxu0 0
  %104 = vmatprep.subr.bf16.mxu0 0
  %105 = vmatpush1.bf16.msra.mxu0 0
  %106 = vmatprep.subr.bf16.mxu0 0
  %107 = vmatpush1.bf16.msra.mxu0 0
  %108 = vmatprep.subr.bf16.mxu0 0
  %109 = vmatpush1.bf16.msra.mxu0 0
  %110 = vmatprep.subr.bf16.mxu0 0
  %111 = vmatpush1.bf16.msra.mxu0 0
  %112 = vmatprep.subr.bf16.mxu0 0
  %113 = vmatpush1.bf16.msra.mxu0 0
  %114 = vmatprep.subr.bf16.mxu0 0
  %115 = vmatpush1.bf16.msra.mxu0 %v96
  %116 = vmatprep.subr.bf16.mxu0 0
  %117 = vmatpush1.bf16.msra.mxu0 %v95
  %118 = vmatprep.subr.bf16.mxu0 0
  %119 = vmatpush2.bf16.msra.mxu0 0
  %120 = vmatprep.subr.bf16.mxu0 0
  %121 = vmatpush2.bf16.msra.mxu0 0
  %122 = vmatprep.subr.bf16.mxu0 0
  %123 = vmatpush2.bf16.msra.mxu0 0
  %124 = vmatprep.subr.bf16.mxu0 0
  %125 = vmatpush2.bf16.msra.mxu0 0
  %126 = vmatprep.subr.bf16.mxu0 0
  %127 = vmatpush2.bf16.msra.mxu0 0
  %128 = vmatprep.subr.bf16.mxu0 0
  %129 = vmatpush2.bf16.msra.mxu0 0
  %130 = vmatprep.subr.bf16.mxu0 0
  %131 = vmatpush2.bf16.msra.mxu0 0
  %132 = vmatprep.subr.bf16.mxu0 0
  %133 = vmatpush2.bf16.msra.mxu0 0
  %134 = vmatprep.mubr.bf16.mxu0 0
  %135 = vmatmul.mubr.bf16.gmra.mxu0 %v100
  %v136 = vpop.f32.mrf.mxu0
  %v137 = vadd.f32 0.0, %v136
  %v138 = vpop.f32.mrf.mxu0
  %v139 = vpop.f32.mrf.mxu0
  %v140 = vadd.f32 0.0, %v139
  %v141 = vpop.f32.mrf.mxu0
  %142 = vdwg.mxu0
  %v143 = vadd.f32 %v81, %v137
  %v144 = vadd.f32 %v82, %v140
  %145 = vst.msk [vmem:[#allocation2] sm:$0xff] %vm33, %v143
  %146 = vst.msk [vmem:[#allocation2 + $0x8] sm:$0x3] %vm37, %v144
  // Predicated region
  $region26: #{raven_forward.42} parent=0 // pred_check
    %p147 = pneg %p21
  $region27: #{raven_forward.42} parent=0 // pred_check_branch
    %149 = sbr.rel (%p147) target = $region29
  $region28: #{raven_forward.42} parent=0 // pred_region
    %v150 = vld [vmem:[#allocation2] sm:$0xff]
    %v151 = vld [vmem:[#allocation2 + $0x8] sm:$0x3]
    %v152 = vld [vmem:[%s4] sm:$0x1]
    %v154 = vlaneseq
    %v155 = vshrl.u32 %v154, 7
    %v156 = vsub.s32 0, %v155
    %v157 = vrot.slane %v152, %v156
    %v159 = vadd.f32 %v150, %v157
    %v160 = vadd.f32 %v151, %v157
    %v161 = vpack.c.bf16 %v160, %v159
    %v163 = vunpack.c.l.b16 %v161
    %v164 = vunpack.c.h.b16 %v161
    %v165 = vpack.c.b16 %v163, %v163
    %v166 = vpack.c.b16 %v164, %v164
    %vm169 = vcmask 257024
    %170 = vst.msk [vmem:[%s5] sm:$0xf] %vm169, %v165
    %vm171 = vcmask 253952
    %172 = vst.msk [vmem:[%s5 + $0x4] sm:$0x1] %vm171, %v166
  $region29: #{raven_forward.42} parent=0 // pred_fallthru
    _
  // Predicated region
  $region30: #{raven_forward.42} parent=0 // pred_check
    _
  $region31: #{raven_forward.42} parent=0 // pred_check_branch
    %174 = sbr.rel (0) target = $region33
  $region32: #{raven_forward.42} parent=0 // pred_region
    _
  $region33: #{raven_forward.42} parent=0 // pred_fallthru
    _
  // Predicated region
  $region34: #{raven_forward.42} parent=0 // pred_check
    _
  $region35: #{raven_forward.42} parent=0 // pred_check_branch
    %176 = sbr.rel (0) target = $region37
  $region36: #{raven_forward.42} parent=0 // pred_region
    _
  $region37: #{raven_forward.42} parent=0 // pred_fallthru
    _

// kernel: raven_forward.40
$region0: #{raven_forward.40}
  #allocation0 [shape = 'u32[]', space=smem, size = 0x4, offset = 0x4, fixed_abs, tag = 'smem constant byte address 0x4 - core index']
  #allocation1 [shape = 'u32[144,128]{1,0:T(1,128)}', space=vmem, size = 0x12000, scoped, tag = 'internal scratch']
  %s0 = inlined_call_operand.vmem [shape: bf16[2,5,96], index: 0, kind: input, shape index: {}]
  %s1 = inlined_call_operand.vmem [shape: bf16[2,5,5], index: 1, kind: input, shape index: {}]
  %s2 = inlined_call_operand.vmem [shape: bf16[2,5,32], index: 2, kind: output, shape index: {}]
  %s3 = sld [smem:[#allocation0]]
  $region41: #{raven_forward.40} parent=0
    _
  %s5 = ssub.s32 1, %s3
  %s6 = scalar_select 0, %s5, %s3
  loop: start=0, step=1, limit=4
  $region2: #{raven_forward.40} parent=0 // loop_pre_header
    _
  $region3: #{raven_forward.40} parent=0 // loop_header
    %s8 = sphi 0, %s12
    %p9 = scmp.ge.s32.totalorder %s8, 4
    %s18 = sphi 0, %s20
    %s21 = sphi 0, %s18
    %s22 = sphi 0, %s21
    %s38 = sphi 0, %s22
    %s44 = sphi 0, %s46
    %s47 = sphi 0, %s44
    %s48 = sphi 0, %s47
    %s64 = sphi 0, %s48
    %s70 = sphi 0, %s72
    %s73 = sphi 0, %s70
    %s74 = sphi 0, %s73
    %s90 = sphi 0, %s74
  $region4: #{raven_forward.40} parent=0 // loop_header_branch
    %11 = sbr.rel (%p9) target = $region8
  $region5: #{raven_forward.40} parent=0 // loop_body
    %s13 = ssub.s32 %s8, 1
    %s14 = ssub.s32 %s8, 2
    %s15 = sadd.s32 %s8, 1
    %s16 = ssub.s32 %s8, %s15
    %p17 = scmp.eq.s32.totalorder %s16, 0
    %s19 = sadd.s32 %s18, 1
    %s20 = scalar_select %p17, %s18, %s19
    %p23 = pneg %p17
    %p24 = scmp.eq.s32.totalorder %s8, 1
    %p25 = por %p23, %p24
    %p26 = scmp.ne.s32.totalorder %s18, %s21
    %p27 = scmp.eq.s32.totalorder %s8, 0
    %p28 = por %p26, %p27
    %p29 = scmp.ne.s32.totalorder %s18, %s21
    %p30 = scmp.eq.s32.totalorder %s13, 1
    %p31 = por %p29, %p30
    %p32 = scmp.ne.s32.totalorder %s21, %s22
    %p33 = scmp.eq.s32.totalorder %s13, 0
    %p34 = por %p32, %p33
    %p35 = scmp.ne.s32.totalorder %s21, %s22
    %p36 = scmp.eq.s32.totalorder %s14, 1
    %p37 = por %p35, %p36
    %p39 = scmp.ne.s32.totalorder %s22, %s38
    %p40 = scmp.eq.s32.totalorder %s14, 0
    %p41 = por %p39, %p40
    %s42 = ssub.s32 %s8, %s15
    %p43 = scmp.eq.s32.totalorder %s42, 0
    %s45 = sadd.s32 %s44, 1
    %s46 = scalar_select %p43, %s44, %s45
    %p49 = pneg %p43
    %p50 = scmp.eq.s32.totalorder %s8, 1
    %p51 = por %p49, %p50
    %p52 = scmp.ne.s32.totalorder %s44, %s47
    %p53 = scmp.eq.s32.totalorder %s8, 0
    %p54 = por %p52, %p53
    %p55 = scmp.ne.s32.totalorder %s44, %s47
    %p56 = scmp.eq.s32.totalorder %s13, 1
    %p57 = por %p55, %p56
    %p58 = scmp.ne.s32.totalorder %s47, %s48
    %p59 = scmp.eq.s32.totalorder %s13, 0
    %p60 = por %p58, %p59
    %p61 = scmp.ne.s32.totalorder %s47, %s48
    %p62 = scmp.eq.s32.totalorder %s14, 1
    %p63 = por %p61, %p62
    %p65 = scmp.ne.s32.totalorder %s48, %s64
    %p66 = scmp.eq.s32.totalorder %s14, 0
    %p67 = por %p65, %p66
    %s68 = ssub.s32 %s8, %s15
    %p69 = scmp.eq.s32.totalorder %s68, 0
    %s71 = sadd.s32 %s70, 1
    %s72 = scalar_select %p69, %s70, %s71
    %p75 = pneg %p69
    %p76 = scmp.eq.s32.totalorder %s8, 1
    %p77 = por %p75, %p76
    %p78 = scmp.ne.s32.totalorder %s70, %s73
    %p79 = scmp.eq.s32.totalorder %s8, 0
    %p80 = por %p78, %p79
    %p81 = scmp.ne.s32.totalorder %s70, %s73
    %p82 = scmp.eq.s32.totalorder %s13, 1
    %p83 = por %p81, %p82
    %p84 = scmp.ne.s32.totalorder %s73, %s74
    %p85 = scmp.eq.s32.totalorder %s13, 0
    %p86 = por %p84, %p85
    %p87 = scmp.ne.s32.totalorder %s73, %s74
    %p88 = scmp.eq.s32.totalorder %s14, 1
    %p89 = por %p87, %p88
    %p91 = scmp.ne.s32.totalorder %s74, %s90
    %p92 = scmp.eq.s32.totalorder %s14, 0
    %p93 = por %p91, %p92
    %p94 = scmp.le.s32.totalorder 1, %s8
    %p95 = scmp.lt.s32.totalorder %s8, 3
    %p96 = pnand %p94, %p95
    %p97 = pneg %p96
    // Predicated region
    $region9: #{raven_forward.40} parent=5 // pred_check
      _
    $region10: #{raven_forward.40} parent=5 // pred_check_branch
      %99 = sbr.rel (%p96) target = $region12
    $region11: #{raven_forward.40} parent=5 // pred_region
      %s100 = ssub.s32 %s8, 1
    $region12: #{raven_forward.40} parent=5 // pred_fallthru
      _
    %p101 = scmp.lt.s32.totalorder %s8, 2
    // Predicated region
    $region13: #{raven_forward.40} parent=5 // pred_check
      %p102 = pneg %p101
    $region14: #{raven_forward.40} parent=5 // pred_check_branch
      %104 = sbr.rel (%p102) target = $region16
    $region15: #{raven_forward.40} parent=5 // pred_region
      // Predicated region
      $region17: #{raven_forward.40} parent=15 // pred_check
        %p105 = pneg %p28
      $region18: #{raven_forward.40} parent=15 // pred_check_branch
        %107 = sbr.rel (%p105) target = $region20
      $region19: #{raven_forward.40} parent=15 // pred_region
        %p108 = scmp.lt.s32.totalorder %s8, 1
        %s109 = scalar_select %p108, %s8, 1
        %s110 = smul.addr %s109, 4
        %s111 = scalar_lea.vmem %s0, %s110
      $region20: #{raven_forward.40} parent=15 // pred_fallthru
        _
      // Predicated region
      $region21: #{raven_forward.40} parent=15 // pred_check
        %p112 = pneg %p54
      $region22: #{raven_forward.40} parent=15 // pred_check_branch
        %114 = sbr.rel (%p112) target = $region24
      $region23: #{raven_forward.40} parent=15 // pred_region
        %p115 = scmp.lt.s32.totalorder %s8, 1
        %s116 = scalar_select %p115, %s8, 1
        %s117 = smul.addr %s116, 4
        %s118 = scalar_lea.vmem %s1, %s117
      $region24: #{raven_forward.40} parent=15 // pred_fallthru
        _
    $region16: #{raven_forward.40} parent=5 // pred_fallthru
      _
    %p119 = scmp.le.s32.totalorder 1, %s8
    %p120 = scmp.lt.s32.totalorder %s8, 3
    %p121 = pnand %p119, %p120
    %p122 = pneg %p121
    // Predicated region
    $region25: #{raven_forward.40} parent=5 // pred_check
      _
    $region26: #{raven_forward.40} parent=5 // pred_check_branch
      %124 = sbr.rel (%p121) target = $region28
    $region27: #{raven_forward.40} parent=5 // pred_region
      %s125 = ssub.s32 %s8, 1
      %p126 = scmp.lt.s32.totalorder %s13, 1
      %s127 = scalar_select %p126, %s13, 1
      %s128 = smul.addr %s127, 4
      %s129 = scalar_lea.vmem %s0, %s128
      %p130 = pneg %p34
      %p131 = pneg %p31
      %p132 = scmp.lt.s32.totalorder %s13, 1
      %s133 = scalar_select %p132, %s13, 1
      %s134 = smul.addr %s133, 4
      %s135 = scalar_lea.vmem %s1, %s134
      %p136 = pneg %p60
      %p137 = pneg %p57
      %p138 = pneg %p86
      %p139 = pneg %p83
      %p140 = scmp.lt.s32.totalorder %s13, 1
      %s141 = scalar_select %p140, %s13, 1
      %s142 = smul.addr %s141, 4
      %s143 = scalar_lea.vmem %s2, %s142
      %p144 = scmp.lt.s32.totalorder %s13, 1
      %s145 = scalar_select %p144, %s13, 1
      %s146 = smul.addr %s145, 4
      %s147 = scalar_lea.vmem %s0, %s146
      %p148 = scmp.lt.s32.totalorder %s13, 1
      %s149 = scalar_select %p148, %s13, 1
      %s150 = smul.addr %s149, 4
      %s151 = scalar_lea.vmem %s1, %s150
      %p152 = scmp.lt.s32.totalorder %s13, 1
      %s153 = scalar_select %p152, %s13, 1
      %s154 = smul.addr %s153, 4
      %s155 = scalar_lea.vmem %s2, %s154
      %v157 = vld [vmem:[%s151] sm:$0x7]
      %v158 = vunpack.c.l.bf16 %v157
      %v159 = vld [vmem:[%s147] sm:$0x7]
      %v161 = vunpack.c.l.b16 %v159
      %v162 = vpack.c.b16 %v161, %v161
      %163 = vrot.lane.b32.xlu0 %v162, 96
      %v164 = vpop.permute.xlu0 %163
      %vm165 = vcmask 64512
      %v167 = vsel %vm165, %v159, 0
      %v170 = vsel %vm165, %v164, 0
      %172 = vmatprep.subr.bf16.mxu0 0
      %173 = vmatpush1.bf16.xpose.msra.mxu0 0
      %174 = vmatprep.subr.bf16.mxu0 0
      %175 = vmatpush1.bf16.xpose.msra.mxu0 0
      %176 = vmatprep.subr.bf16.mxu0 0
      %177 = vmatpush1.bf16.xpose.msra.mxu0 0
      %178 = vmatprep.subr.bf16.mxu0 0
      %179 = vmatpush1.bf16.xpose.msra.mxu0 0
      %180 = vmatprep.subr.bf16.mxu0 0
      %181 = vmatpush1.bf16.xpose.msra.mxu0 0
      %182 = vmatprep.subr.bf16.mxu0 0
      %183 = vmatpush1.bf16.xpose.msra.mxu0 0
      %184 = vmatprep.subr.bf16.mxu0 0
      %185 = vmatpush1.bf16.xpose.msra.mxu0 0
      %186 = vmatprep.subr.bf16.mxu0 0
      %187 = vmatpush1.bf16.xpose.msra.mxu0 %v170
      %188 = vmatprep.subr.bf16.mxu0 0
      %189 = vmatpush2.bf16.xpose.msra.mxu0 0
      %190 = vmatprep.subr.bf16.mxu0 0
      %191 = vmatpush2.bf16.xpose.msra.mxu0 0
      %192 = vmatprep.subr.bf16.mxu0 0
      %193 = vmatpush2.bf16.xpose.msra.mxu0 0
      %194 = vmatprep.subr.bf16.mxu0 0
      %195 = vmatpush2.bf16.xpose.msra.mxu0 0
      %196 = vmatprep.subr.bf16.mxu0 0
      %197 = vmatpush2.bf16.xpose.msra.mxu0 0
      %198 = vmatprep.subr.bf16.mxu0 0
      %199 = vmatpush2.bf16.xpose.msra.mxu0 0
      %200 = vmatprep.subr.bf16.mxu0 0
      %201 = vmatpush2.bf16.xpose.msra.mxu0 0
      %202 = vmatprep.subr.bf16.mxu0 0
      %203 = vmatpush2.bf16.xpose.msra.mxu0 0
      %204 = vmatprep.mubr.bf16.mxu0 0
      %205 = vmatmul.mubr.bf16.gmra.mxu0 %v167
      %v206 = vpop.f32.mrf.mxu0
      %v207 = vadd.f32 %v158, %v206
      %v208 = vpop.f32.mrf.mxu0
      %v209 = vpop.f32.mrf.mxu0
      %v210 = vpop.f32.mrf.mxu0
      %211 = vdwg.mxu0
      %vm212 = vcmask 36864
      %v213 = vsel %vm212, %v207, -inf
      %214 = vmax.xlane.f32.xlu0 %v213
      %v215 = vpop.xlane.xlu0 %214
      %vm216 = vcmp.gt.f32.partialorder %v215, -5e+29
      %v217 = vsel %vm216, 1, 0
      %v218 = vcvt.s32.f32 %v217
      %v219 = vsub.f32 %v207, %v215
      %v220 = vmul.f32 %v219, 1.442695
      %v221 = vpow.pop %v220
      %v222 = vsel %vm212, %v221, 0.0
      %223 = vadd.xlane.f32.xlu0 %v222
      %v224 = vpop.xlane.xlu0 %223
      %v225 = vpack.c.bf16 %v221, %v221
      %v226 = vadd.f32 %v224, 1e-30
      %v227 = vrcp.pop %v226
      %v228 = vmul.f32 %v227, %v218
      %229 = vrot.lane.b32.xlu0 %v162, 64
      %v230 = vpop.permute.xlu0 %229
      %vm231 = vcmask 39936
      %v233 = vsel %vm231, %v225, 0
      %vm235 = vcmask 1041408
      %vm236 = vcmask 1042432
      %v237 = vsel %vm235, 4294967295, 65535
      %v238 = vsel %vm236, %v237, 0
      %v240 = vand.u32 %v230, %v238
      %242 = vmatprep.subr.bf16.mxu0 0
      %243 = vmatpush1.bf16.msra.mxu0 0
      %244 = vmatprep.subr.bf16.mxu0 0
      %245 = vmatpush1.bf16.msra.mxu0 0
      %246 = vmatprep.subr.bf16.mxu0 0
      %247 = vmatpush1.bf16.msra.mxu0 0
      %248 = vmatprep.subr.bf16.mxu0 0
      %249 = vmatpush1.bf16.msra.mxu0 0
      %250 = vmatprep.subr.bf16.mxu0 0
      %251 = vmatpush1.bf16.msra.mxu0 0
      %252 = vmatprep.subr.bf16.mxu0 0
      %253 = vmatpush1.bf16.msra.mxu0 0
      %254 = vmatprep.subr.bf16.mxu0 0
      %255 = vmatpush1.bf16.msra.mxu0 0
      %256 = vmatprep.subr.bf16.mxu0 0
      %257 = vmatpush1.bf16.msra.mxu0 %v240
      %258 = vmatprep.subr.bf16.mxu0 0
      %259 = vmatpush2.bf16.msra.mxu0 0
      %260 = vmatprep.subr.bf16.mxu0 0
      %261 = vmatpush2.bf16.msra.mxu0 0
      %262 = vmatprep.subr.bf16.mxu0 0
      %263 = vmatpush2.bf16.msra.mxu0 0
      %264 = vmatprep.subr.bf16.mxu0 0
      %265 = vmatpush2.bf16.msra.mxu0 0
      %266 = vmatprep.subr.bf16.mxu0 0
      %267 = vmatpush2.bf16.msra.mxu0 0
      %268 = vmatprep.subr.bf16.mxu0 0
      %269 = vmatpush2.bf16.msra.mxu0 0
      %270 = vmatprep.subr.bf16.mxu0 0
      %271 = vmatpush2.bf16.msra.mxu0 0
      %272 = vmatprep.subr.bf16.mxu0 0
      %273 = vmatpush2.bf16.msra.mxu0 0
      %274 = vmatprep.mubr.bf16.mxu0 0
      %275 = vmatmul.mubr.bf16.gmra.mxu0 %v233
      %v276 = vpop.f32.mrf.mxu0
      %v277 = vadd.f32 0.0, %v276
      %v278 = vpop.f32.mrf.mxu0
      %v279 = vpop.f32.mrf.mxu0
      %v280 = vpop.f32.mrf.mxu0
      %281 = vdwg.mxu0
      %v282 = vmul.f32 %v277, %v228
      %v283 = vpack.c.bf16 %v282, %v282
      %vm284 = vcmask 59392
      %vm285 = vsmask.f32 2304
      %vm286 = vmand %vm284, %vm285
      %v287 = vld [vmem:[%s155] sm:$0x7]
      %v288 = vsel %vm286, %v283, %v287
      %289 = vst [vmem:[%s155] sm:$0x7] %v288
      %v290 = vld [vmem:[%s147] sm:$0x7]
      %v292 = vunpack.c.l.b16 %v290
      %v293 = vpack.c.b16 %v292, %v292
      %294 = vrot.lane.b32.xlu0 %v293, 120
      %v295 = vpop.permute.xlu0 %294
      %296 = vrot.lane.b32.xlu0 %v293, 88
      %v297 = vpop.permute.xlu0 %296
      %v299 = vsel %vm165, %v295, 0
      %v302 = vsel %vm165, %v297, 0
      %304 = vmatprep.subr.bf16.mxu0 0
      %305 = vmatpush1.bf16.xpose.msra.mxu0 0
      %306 = vmatprep.subr.bf16.mxu0 0
      %307 = vmatpush1.bf16.xpose.msra.mxu0 0
      %308 = vmatprep.subr.bf16.mxu0 0
      %309 = vmatpush1.bf16.xpose.msra.mxu0 0
      %310 = vmatprep.subr.bf16.mxu0 0
      %311 = vmatpush1.bf16.xpose.msra.mxu0 0
      %312 = vmatprep.subr.bf16.mxu0 0
      %313 = vmatpush1.bf16.xpose.msra.mxu0 0
      %314 = vmatprep.subr.bf16.mxu0 0
      %315 = vmatpush1.bf16.xpose.msra.mxu0 0
      %316 = vmatprep.subr.bf16.mxu0 0
      %317 = vmatpush1.bf16.xpose.msra.mxu0 0
      %318 = vmatprep.subr.bf16.mxu0 0
      %319 = vmatpush1.bf16.xpose.msra.mxu0 %v302
      %320 = vmatprep.subr.bf16.mxu0 0
      %321 = vmatpush2.bf16.xpose.msra.mxu0 0
      %322 = vmatprep.subr.bf16.mxu0 0
      %323 = vmatpush2.bf16.xpose.msra.mxu0 0
      %324 = vmatprep.subr.bf16.mxu0 0
      %325 = vmatpush2.bf16.xpose.msra.mxu0 0
      %326 = vmatprep.subr.bf16.mxu0 0
      %327 = vmatpush2.bf16.xpose.msra.mxu0 0
      %328 = vmatprep.subr.bf16.mxu0 0
      %329 = vmatpush2.bf16.xpose.msra.mxu0 0
      %330 = vmatprep.subr.bf16.mxu0 0
      %331 = vmatpush2.bf16.xpose.msra.mxu0 0
      %332 = vmatprep.subr.bf16.mxu0 0
      %333 = vmatpush2.bf16.xpose.msra.mxu0 0
      %334 = vmatprep.subr.bf16.mxu0 0
      %335 = vmatpush2.bf16.xpose.msra.mxu0 0
      %336 = vmatprep.mubr.bf16.mxu0 0
      %337 = vmatmul.mubr.bf16.gmra.mxu0 %v299
      %v338 = vpop.f32.mrf.mxu0
      %v339 = vadd.f32 %v158, %v338
      %v340 = vpop.f32.mrf.mxu0
      %v341 = vpop.f32.mrf.mxu0
      %v342 = vpop.f32.mrf.mxu0
      %343 = vdwg.mxu0
      %v344 = vsel %vm212, %v339, -inf
      %345 = vmax.xlane.f32.xlu0 %v344
      %v346 = vpop.xlane.xlu0 %345
      %vm347 = vcmp.gt.f32.partialorder %v346, -5e+29
      %v348 = vsel %vm347, 1, 0
      %v349 = vcvt.s32.f32 %v348
      %v350 = vsub.f32 %v339, %v346
      %v351 = vmul.f32 %v350, 1.442695
      %v352 = vpow.pop %v351
      %v353 = vsel %vm212, %v352, 0.0
      %354 = vadd.xlane.f32.xlu0 %v353
      %v355 = vpop.xlane.xlu0 %354
      %v356 = vpack.c.bf16 %v352, %v352
      %v357 = vadd.f32 %v355, 1e-30
      %v358 = vrcp.pop %v357
      %v359 = vmul.f32 %v358, %v349
      %360 = vrot.lane.b32.xlu0 %v293, 56
      %v361 = vpop.permute.xlu0 %360
      %v363 = vsel %vm231, %v356, 0
      %v366 = vand.u32 %v361, %v238
      %368 = vmatprep.subr.bf16.mxu0 0
      %369 = vmatpush1.bf16.msra.mxu0 0
      %370 = vmatprep.subr.bf16.mxu0 0
      %371 = vmatpush1.bf16.msra.mxu0 0
      %372 = vmatprep.subr.bf16.mxu0 0
      %373 = vmatpush1.bf16.msra.mxu0 0
      %374 = vmatprep.subr.bf16.mxu0 0
      %375 = vmatpush1.bf16.msra.mxu0 0
      %376 = vmatprep.subr.bf16.mxu0 0
      %377 = vmatpush1.bf16.msra.mxu0 0
      %378 = vmatprep.subr.bf16.mxu0 0
      %379 = vmatpush1.bf16.msra.mxu0 0
      %380 = vmatprep.subr.bf16.mxu0 0
      %381 = vmatpush1.bf16.msra.mxu0 0
      %382 = vmatprep.subr.bf16.mxu0 0
      %383 = vmatpush1.bf16.msra.mxu0 %v366
      %384 = vmatprep.subr.bf16.mxu0 0
      %385 = vmatpush2.bf16.msra.mxu0 0
      %386 = vmatprep.subr.bf16.mxu0 0
      %387 = vmatpush2.bf16.msra.mxu0 0
      %388 = vmatprep.subr.bf16.mxu0 0
      %389 = vmatpush2.bf16.msra.mxu0 0
      %390 = vmatprep.subr.bf16.mxu0 0
      %391 = vmatpush2.bf16.msra.mxu0 0
      %392 = vmatprep.subr.bf16.mxu0 0
      %393 = vmatpush2.bf16.msra.mxu0 0
      %394 = vmatprep.subr.bf16.mxu0 0
      %395 = vmatpush2.bf16.msra.mxu0 0
      %396 = vmatprep.subr.bf16.mxu0 0
      %397 = vmatpush2.bf16.msra.mxu0 0
      %398 = vmatprep.subr.bf16.mxu0 0
      %399 = vmatpush2.bf16.msra.mxu0 0
      %400 = vmatprep.mubr.bf16.mxu0 0
      %401 = vmatmul.mubr.bf16.gmra.mxu0 %v363
      %v402 = vpop.f32.mrf.mxu0
      %v403 = vadd.f32 0.0, %v402
      %v404 = vpop.f32.mrf.mxu0
      %v405 = vpop.f32.mrf.mxu0
      %v406 = vpop.f32.mrf.mxu0
      %407 = vdwg.mxu0
      %v408 = vmul.f32 %v403, %v359
      %v409 = vpack.c.bf16 %v408, %v408
      %v411 = vunpack.c.l.b16 %v409
      %v412 = vpack.c.b16 %v411, %v411
      %413 = vrot.lane.b32.xlu0 %v412, 8
      %v414 = vpop.permute.xlu0 %413
      %vm416 = vcmask 124992
      %vm417 = vmand %vm416, %vm285
      %v418 = vld [vmem:[%s155] sm:$0x7]
      %v419 = vsel %vm417, %v414, %v418
      %420 = vst [vmem:[%s155] sm:$0x7] %v419
      %v421 = vld [vmem:[%s147] sm:$0x7]
      %v423 = vunpack.c.l.b16 %v421
      %v424 = vpack.c.b16 %v423, %v423
      %425 = vrot.lane.b32.xlu0 %v424, 112
      %v426 = vpop.permute.xlu0 %425
      %427 = vrot.lane.b32.xlu0 %v424, 80
      %v428 = vpop.permute.xlu0 %427
      %v430 = vsel %vm165, %v426, 0
      %v433 = vsel %vm165, %v428, 0
      %435 = vmatprep.subr.bf16.mxu0 0
      %436 = vmatpush1.bf16.xpose.msra.mxu0 0
      %437 = vmatprep.subr.bf16.mxu0 0
      %438 = vmatpush1.bf16.xpose.msra.mxu0 0
      %439 = vmatprep.subr.bf16.mxu0 0
      %440 = vmatpush1.bf16.xpose.msra.mxu0 0
      %441 = vmatprep.subr.bf16.mxu0 0
      %442 = vmatpush1.bf16.xpose.msra.mxu0 0
      %443 = vmatprep.subr.bf16.mxu0 0
      %444 = vmatpush1.bf16.xpose.msra.mxu0 0
      %445 = vmatprep.subr.bf16.mxu0 0
      %446 = vmatpush1.bf16.xpose.msra.mxu0 0
      %447 = vmatprep.subr.bf16.mxu0 0
      %448 = vmatpush1.bf16.xpose.msra.mxu0 0
      %449 = vmatprep.subr.bf16.mxu0 0
      %450 = vmatpush1.bf16.xpose.msra.mxu0 %v433
      %451 = vmatprep.subr.bf16.mxu0 0
      %452 = vmatpush2.bf16.xpose.msra.mxu0 0
      %453 = vmatprep.subr.bf16.mxu0 0
      %454 = vmatpush2.bf16.xpose.msra.mxu0 0
      %455 = vmatprep.subr.bf16.mxu0 0
      %456 = vmatpush2.bf16.xpose.msra.mxu0 0
      %457 = vmatprep.subr.bf16.mxu0 0
      %458 = vmatpush2.bf16.xpose.msra.mxu0 0
      %459 = vmatprep.subr.bf16.mxu0 0
      %460 = vmatpush2.bf16.xpose.msra.mxu0 0
      %461 = vmatprep.subr.bf16.mxu0 0
      %462 = vmatpush2.bf16.xpose.msra.mxu0 0
      %463 = vmatprep.subr.bf16.mxu0 0
      %464 = vmatpush2.bf16.xpose.msra.mxu0 0
      %465 = vmatprep.subr.bf16.mxu0 0
      %466 = vmatpush2.bf16.xpose.msra.mxu0 0
      %467 = vmatprep.mubr.bf16.mxu0 0
      %468 = vmatmul.mubr.bf16.gmra.mxu0 %v430
      %v469 = vpop.f32.mrf.mxu0
      %v470 = vadd.f32 %v158, %v469
      %v471 = vpop.f32.mrf.mxu0
      %v472 = vpop.f32.mrf.mxu0
      %v473 = vpop.f32.mrf.mxu0
      %474 = vdwg.mxu0
      %v475 = vsel %vm212, %v470, -inf
      %476 = vmax.xlane.f32.xlu0 %v475
      %v477 = vpop.xlane.xlu0 %476
      %vm478 = vcmp.gt.f32.partialorder %v477, -5e+29
      %v479 = vsel %vm478, 1, 0
      %v480 = vcvt.s32.f32 %v479
      %v481 = vsub.f32 %v470, %v477
      %v482 = vmul.f32 %v481, 1.442695
      %v483 = vpow.pop %v482
      %v484 = vsel %vm212, %v483, 0.0
      %485 = vadd.xlane.f32.xlu0 %v484
      %v486 = vpop.xlane.xlu0 %485
      %v487 = vpack.c.bf16 %v483, %v483
      %v488 = vadd.f32 %v486, 1e-30
      %v489 = vrcp.pop %v488
      %v490 = vmul.f32 %v489, %v480
      %491 = vrot.lane.b32.xlu0 %v424, 48
      %v492 = vpop.permute.xlu0 %491
      %v494 = vsel %vm231, %v487, 0
      %v497 = vand.u32 %v492, %v238
      %499 = vmatprep.subr.bf16.mxu0 0
      %500 = vmatpush1.bf16.msra.mxu0 0
      %501 = vmatprep.subr.bf16.mxu0 0
      %502 = vmatpush1.bf16.msra.mxu0 0
      %503 = vmatprep.subr.bf16.mxu0 0
      %504 = vmatpush1.bf16.msra.mxu0 0
      %505 = vmatprep.subr.bf16.mxu0 0
      %506 = vmatpush1.bf16.msra.mxu0 0
      %507 = vmatprep.subr.bf16.mxu0 0
      %508 = vmatpush1.bf16.msra.mxu0 0
      %509 = vmatprep.subr.bf16.mxu0 0
      %510 = vmatpush1.bf16.msra.mxu0 0
      %511 = vmatprep.subr.bf16.mxu0 0
      %512 = vmatpush1.bf16.msra.mxu0 0
      %513 = vmatprep.subr.bf16.mxu0 0
      %514 = vmatpush1.bf16.msra.mxu0 %v497
      %515 = vmatprep.subr.bf16.mxu0 0
      %516 = vmatpush2.bf16.msra.mxu0 0
      %517 = vmatprep.subr.bf16.mxu0 0
      %518 = vmatpush2.bf16.msra.mxu0 0
      %519 = vmatprep.subr.bf16.mxu0 0
      %520 = vmatpush2.bf16.msra.mxu0 0
      %521 = vmatprep.subr.bf16.mxu0 0
      %522 = vmatpush2.bf16.msra.mxu0 0
      %523 = vmatprep.subr.bf16.mxu0 0
      %524 = vmatpush2.bf16.msra.mxu0 0
      %525 = vmatprep.subr.bf16.mxu0 0
      %526 = vmatpush2.bf16.msra.mxu0 0
      %527 = vmatprep.subr.bf16.mxu0 0
      %528 = vmatpush2.bf16.msra.mxu0 0
      %529 = vmatprep.subr.bf16.mxu0 0
      %530 = vmatpush2.bf16.msra.mxu0 0
      %531 = vmatprep.mubr.bf16.mxu0 0
      %532 = vmatmul.mubr.bf16.gmra.mxu0 %v494
      %v533 = vpop.f32.mrf.mxu0
      %v534 = vadd.f32 0.0, %v533
      %v535 = vpop.f32.mrf.mxu0
      %v536 = vpop.f32.mrf.mxu0
      %v537 = vpop.f32.mrf.mxu0
      %538 = vdwg.mxu0
      %v539 = vmul.f32 %v534, %v490
      %v540 = vpack.c.bf16 %v539, %v539
      %v542 = vunpack.c.l.b16 %v540
      %v543 = vpack.c.b16 %v542, %v542
      %544 = vrot.lane.b32.xlu0 %v543, 16
      %v545 = vpop.permute.xlu0 %544
      %vm547 = vcmask 190592
      %vm548 = vmand %vm547, %vm285
      %v549 = vld [vmem:[%s155] sm:$0x7]
      %v550 = vsel %vm548, %v545, %v549
      %551 = vst [vmem:[%s155] sm:$0x7] %v550
      %v552 = vld [vmem:[%s147] sm:$0x7]
      %v554 = vunpack.c.l.b16 %v552
      %v555 = vpack.c.b16 %v554, %v554
      %556 = vrot.lane.b32.xlu0 %v555, 104
      %v557 = vpop.permute.xlu0 %556
      %558 = vrot.lane.b32.xlu0 %v555, 72
      %v559 = vpop.permute.xlu0 %558
      %v561 = vsel %vm165, %v557, 0
      %v564 = vsel %vm165, %v559, 0
      %566 = vmatprep.subr.bf16.mxu0 0
      %567 = vmatpush1.bf16.xpose.msra.mxu0 0
      %568 = vmatprep.subr.bf16.mxu0 0
      %569 = vmatpush1.bf16.xpose.msra.mxu0 0
      %570 = vmatprep.subr.bf16.mxu0 0
      %571 = vmatpush1.bf16.xpose.msra.mxu0 0
      %572 = vmatprep.subr.bf16.mxu0 0
      %573 = vmatpush1.bf16.xpose.msra.mxu0 0
      %574 = vmatprep.subr.bf16.mxu0 0
      %575 = vmatpush1.bf16.xpose.msra.mxu0 0
      %576 = vmatprep.subr.bf16.mxu0 0
      %577 = vmatpush1.bf16.xpose.msra.mxu0 0
      %578 = vmatprep.subr.bf16.mxu0 0
      %579 = vmatpush1.bf16.xpose.msra.mxu0 0
      %580 = vmatprep.subr.bf16.mxu0 0
      %581 = vmatpush1.bf16.xpose.msra.mxu0 %v564
      %582 = vmatprep.subr.bf16.mxu0 0
      %583 = vmatpush2.bf16.xpose.msra.mxu0 0
      %584 = vmatprep.subr.bf16.mxu0 0
      %585 = vmatpush2.bf16.xpose.msra.mxu0 0
      %586 = vmatprep.subr.bf16.mxu0 0
      %587 = vmatpush2.bf16.xpose.msra.mxu0 0
      %588 = vmatprep.subr.bf16.mxu0 0
      %589 = vmatpush2.bf16.xpose.msra.mxu0 0
      %590 = vmatprep.subr.bf16.mxu0 0
      %591 = vmatpush2.bf16.xpose.msra.mxu0 0
      %592 = vmatprep.subr.bf16.mxu0 0
      %593 = vmatpush2.bf16.xpose.msra.mxu0 0
      %594 = vmatprep.subr.bf16.mxu0 0
      %595 = vmatpush2.bf16.xpose.msra.mxu0 0
      %596 = vmatprep.subr.bf16.mxu0 0
      %597 = vmatpush2.bf16.xpose.msra.mxu0 0
      %598 = vmatprep.mubr.bf16.mxu0 0
      %599 = vmatmul.mubr.bf16.gmra.mxu0 %v561
      %v600 = vpop.f32.mrf.mxu0
      %v601 = vadd.f32 %v158, %v600
      %v602 = vpop.f32.mrf.mxu0
      %v603 = vpop.f32.mrf.mxu0
      %v604 = vpop.f32.mrf.mxu0
      %605 = vdwg.mxu0
      %v606 = vsel %vm212, %v601, -inf
      %607 = vmax.xlane.f32.xlu0 %v606
      %v608 = vpop.xlane.xlu0 %607
      %vm609 = vcmp.gt.f32.partialorder %v608, -5e+29
      %v610 = vsel %vm609, 1, 0
      %v611 = vcvt.s32.f32 %v610
      %v612 = vsub.f32 %v601, %v608
      %v613 = vmul.f32 %v612, 1.442695
      %v614 = vpow.pop %v613
      %v615 = vsel %vm212, %v614, 0.0
      %616 = vadd.xlane.f32.xlu0 %v615
      %v617 = vpop.xlane.xlu0 %616
      %v618 = vpack.c.bf16 %v614, %v614
      %v619 = vadd.f32 %v617, 1e-30
      %v620 = vrcp.pop %v619
      %v621 = vmul.f32 %v620, %v611
      %622 = vrot.lane.b32.xlu0 %v555, 40
      %v623 = vpop.permute.xlu0 %622
      %v625 = vsel %vm231, %v618, 0
      %v628 = vand.u32 %v623, %v238
      %630 = vmatprep.subr.bf16.mxu0 0
      %631 = vmatpush1.bf16.msra.mxu0 0
      %632 = vmatprep.subr.bf16.mxu0 0
      %633 = vmatpush1.bf16.msra.mxu0 0
      %634 = vmatprep.subr.bf16.mxu0 0
      %635 = vmatpush1.bf16.msra.mxu0 0
      %636 = vmatprep.subr.bf16.mxu0 0
      %637 = vmatpush1.bf16.msra.mxu0 0
      %638 = vmatprep.subr.bf16.mxu0 0
      %639 = vmatpush1.bf16.msra.mxu0 0
      %640 = vmatprep.subr.bf16.mxu0 0
      %641 = vmatpush1.bf16.msra.mxu0 0
      %642 = vmatprep.subr.bf16.mxu0 0
      %643 = vmatpush1.bf16.msra.mxu0 0
      %644 = vmatprep.subr.bf16.mxu0 0
      %645 = vmatpush1.bf16.msra.mxu0 %v628
      %646 = vmatprep.subr.bf16.mxu0 0
      %647 = vmatpush2.bf16.msra.mxu0 0
      %648 = vmatprep.subr.bf16.mxu0 0
      %649 = vmatpush2.bf16.msra.mxu0 0
      %650 = vmatprep.subr.bf16.mxu0 0
      %651 = vmatpush2.bf16.msra.mxu0 0
      %652 = vmatprep.subr.bf16.mxu0 0
      %653 = vmatpush2.bf16.msra.mxu0 0
      %654 = vmatprep.subr.bf16.mxu0 0
      %655 = vmatpush2.bf16.msra.mxu0 0
      %656 = vmatprep.subr.bf16.mxu0 0
      %657 = vmatpush2.bf16.msra.mxu0 0
      %658 = vmatprep.subr.bf16.mxu0 0
      %659 = vmatpush2.bf16.msra.mxu0 0
      %660 = vmatprep.subr.bf16.mxu0 0
      %661 = vmatpush2.bf16.msra.mxu0 0
      %662 = vmatprep.mubr.bf16.mxu0 0
      %663 = vmatmul.mubr.bf16.gmra.mxu0 %v625
      %v664 = vpop.f32.mrf.mxu0
      %v665 = vadd.f32 0.0, %v664
      %v666 = vpop.f32.mrf.mxu0
      %v667 = vpop.f32.mrf.mxu0
      %v668 = vpop.f32.mrf.mxu0
      %669 = vdwg.mxu0
      %v670 = vmul.f32 %v665, %v621
      %v671 = vpack.c.bf16 %v670, %v670
      %v673 = vunpack.c.l.b16 %v671
      %v674 = vpack.c.b16 %v673, %v673
      %675 = vrot.lane.b32.xlu0 %v674, 24
      %v676 = vpop.permute.xlu0 %675
      %vm678 = vcmask 256192
      %vm679 = vmand %vm678, %vm285
      %v680 = vld [vmem:[%s155] sm:$0x7]
      %v681 = vsel %vm679, %v676, %v680
      %682 = vst [vmem:[%s155] sm:$0x7] %v681
      %p683 = scmp.lt.s32.totalorder %s13, 1
      %s684 = scalar_select %p683, %s13, 1
      %s685 = smul.addr %s684, 4
      %s686 = scalar_lea.vmem %s2, %s685
      // Predicated region
      $region29: #{raven_forward.40} parent=27 // pred_check
        %p687 = pneg %p83
      $region30: #{raven_forward.40} parent=27 // pred_check_branch
        %689 = sbr.rel (%p687) target = $region32
      $region31: #{raven_forward.40} parent=27 // pred_region
        _
      $region32: #{raven_forward.40} parent=27 // pred_fallthru
        _
    $region28: #{raven_forward.40} parent=5 // pred_fallthru
      _
    %p690 = scmp.le.s32.totalorder 2, %s8
    // Predicated region
    $region33: #{raven_forward.40} parent=5 // pred_check
      %p691 = pneg %p690
    $region34: #{raven_forward.40} parent=5 // pred_check_branch
      %693 = sbr.rel (%p691) target = $region36
    $region35: #{raven_forward.40} parent=5 // pred_region
      %s694 = ssub.s32 %s8, 2
      // Predicated region
      $region37: #{raven_forward.40} parent=35 // pred_check
        %p695 = pneg %p89
      $region38: #{raven_forward.40} parent=35 // pred_check_branch
        %697 = sbr.rel (%p695) target = $region40
      $region39: #{raven_forward.40} parent=35 // pred_region
        %p698 = scmp.lt.s32.totalorder %s14, 1
        %s699 = scalar_select %p698, %s14, 1
        %s700 = smul.addr %s699, 4
        %s701 = scalar_lea.vmem %s2, %s700
      $region40: #{raven_forward.40} parent=35 // pred_fallthru
        _
    $region36: #{raven_forward.40} parent=5 // pred_fallthru
      _
  $region6: #{raven_forward.40} parent=0 // loop_footer
    %s12 = sadd.s32 1, %s8
  $region7: #{raven_forward.40} parent=0 // loop_footer_branch
    %7 = sbr.rel target = $region3
  $region8: #{raven_forward.40} parent=0 // loop_exit
    _

// kernel: raven_forward.46
$region0: #{raven_forward.46}
  #allocation0 [shape = 'u32[]', space=smem, size = 0x4, offset = 0x4, fixed_abs, tag = 'smem constant byte address 0x4 - core index']
  #allocation1 [shape = 'u32[144,128]{1,0:T(1,128)}', space=vmem, size = 0x12000, scoped, tag = 'internal scratch']
  %s0 = inlined_call_operand.vmem [shape: bf16[10,32], index: 0, kind: input, shape index: {}]
  %s1 = inlined_call_operand.vmem [shape: f32[1,32], index: 1, kind: input, shape index: {}]
  %s2 = inlined_call_operand.vmem [shape: f32[1,32], index: 2, kind: input, shape index: {}, may-alias: {2,6}]
  %s3 = inlined_call_operand.vmem [shape: bf16[32,64], index: 3, kind: input, shape index: {}]
  %s4 = inlined_call_operand.vmem [shape: f32[1,64], index: 4, kind: input, shape index: {}]
  %s5 = inlined_call_operand.vmem [shape: bf16[64,32], index: 5, kind: input, shape index: {}]
  %s6 = inlined_call_operand.vmem [shape: f32[1,32], index: 6, kind: input, shape index: {}, may-alias: {2,6}]
  %s7 = inlined_call_operand.vmem [shape: bf16[10,32], index: 7, kind: output, shape index: {}]
  %s8 = sld [smem:[#allocation0]]
  $region38: #{raven_forward.46} parent=0
    _
  %s10 = ssub.s32 1, %s8
  %s11 = scalar_select 0, %s10, %s8
  // Predicated region
  $region2: #{raven_forward.46} parent=0 // pred_check
    _
  $region3: #{raven_forward.46} parent=0 // pred_check_branch
    %13 = sbr.rel (0) target = $region5
  $region4: #{raven_forward.46} parent=0 // pred_region
    _
  $region5: #{raven_forward.46} parent=0 // pred_fallthru
    _
  // Predicated region
  $region6: #{raven_forward.46} parent=0 // pred_check
    _
  $region7: #{raven_forward.46} parent=0 // pred_check_branch
    %15 = sbr.rel (0) target = $region9
  $region8: #{raven_forward.46} parent=0 // pred_region
    _
  $region9: #{raven_forward.46} parent=0 // pred_fallthru
    _
  // Predicated region
  $region10: #{raven_forward.46} parent=0 // pred_check
    _
  $region11: #{raven_forward.46} parent=0 // pred_check_branch
    %17 = sbr.rel (0) target = $region13
  $region12: #{raven_forward.46} parent=0 // pred_region
    _
  $region13: #{raven_forward.46} parent=0 // pred_fallthru
    _
  // Predicated region
  $region14: #{raven_forward.46} parent=0 // pred_check
    _
  $region15: #{raven_forward.46} parent=0 // pred_check_branch
    %19 = sbr.rel (0) target = $region17
  $region16: #{raven_forward.46} parent=0 // pred_region
    _
  $region17: #{raven_forward.46} parent=0 // pred_fallthru
    _
  // Predicated region
  $region18: #{raven_forward.46} parent=0 // pred_check
    _
  $region19: #{raven_forward.46} parent=0 // pred_check_branch
    %21 = sbr.rel (0) target = $region21
  $region20: #{raven_forward.46} parent=0 // pred_region
    _
  $region21: #{raven_forward.46} parent=0 // pred_fallthru
    _
  // Predicated region
  $region22: #{raven_forward.46} parent=0 // pred_check
    _
  $region23: #{raven_forward.46} parent=0 // pred_check_branch
    %23 = sbr.rel (0) target = $region25
  $region24: #{raven_forward.46} parent=0 // pred_region
    _
  $region25: #{raven_forward.46} parent=0 // pred_fallthru
    _
  // Predicated region
  $region26: #{raven_forward.46} parent=0 // pred_check
    _
  $region27: #{raven_forward.46} parent=0 // pred_check_branch
    %25 = sbr.rel (0) target = $region29
  $region28: #{raven_forward.46} parent=0 // pred_region
    _
  $region29: #{raven_forward.46} parent=0 // pred_fallthru
    _
  %v27 = vld [vmem:[%s0] sm:$0xf]
  %v28 = vld [vmem:[%s0 + $0x4] sm:$0x1]
  %v29 = vunpack.c.l.bf16 %v27
  %v30 = vunpack.c.l.bf16 %v28
  %vm31 = vcmask 261120
  %v32 = vsel %vm31, %v29, 0.0
  %33 = vadd.xlane.f32.xlu0 %v32
  %v34 = vpop.xlane.xlu0 %33
  %vm35 = vcmask 254976
  %v36 = vsel %vm35, %v30, 0.0
  %37 = vadd.xlane.f32.xlu0 %v36
  %v38 = vpop.xlane.xlu0 %37
  %v39 = vrcp.pop 32.0
  %v40 = vmul.f32 %v34, %v39
  %v41 = vmul.f32 %v38, %v39
  %v42 = vsub.f32 %v29, %v40
  %v43 = vsub.f32 %v30, %v41
  %v44 = vmul.f32 %v42, %v42
  %v45 = vmul.f32 %v43, %v43
  %v46 = vsel %vm31, %v44, 0.0
  %47 = vadd.xlane.f32.xlu0 %v46
  %v48 = vpop.xlane.xlu0 %47
  %v49 = vsel %vm35, %v45, 0.0
  %50 = vadd.xlane.f32.xlu0 %v49
  %v51 = vpop.xlane.xlu0 %50
  %v52 = vmul.f32 %v48, %v39
  %v53 = vmul.f32 %v51, %v39
  %v54 = vadd.f32 %v52, 1e-12
  %v55 = vadd.f32 %v53, 1e-12
  %v56 = vrsqrt.pop %v54
  %v57 = vrsqrt.pop %v55
  %v58 = vmul.f32 %v42, %v56
  %v59 = vmul.f32 %v43, %v57
  %v60 = vld [vmem:[%s1] sm:$0x1]
  %v62 = vlaneseq
  %v63 = vshrl.u32 %v62, 7
  %v64 = vsub.s32 0, %v63
  %v65 = vrot.slane %v60, %v64
  %v67 = vmul.f32 %v58, %v65
  %v68 = vmul.f32 %v59, %v65
  %v69 = vld [vmem:[%s2] sm:$0x1]
  %v71 = vlaneseq
  %v72 = vshrl.u32 %v71, 7
  %v73 = vsub.s32 0, %v72
  %v74 = vrot.slane %v69, %v73
  %v76 = vadd.f32 %v67, %v74
  %v77 = vadd.f32 %v68, %v74
  %v78 = vpack.c.bf16 %v77, %v76
  %v79 = vld [vmem:[%s3] sm:$0xf]
  %v80 = vld [vmem:[%s3 + $0x4] sm:$0xf]
  %v81 = vld [vmem:[%s3 + $0x8] sm:$0xf]
  %v82 = vld [vmem:[%s3 + $0xc] sm:$0xf]
  %v83 = vld [vmem:[%s4] sm:$0x1]
  %v85 = vlaneseq
  %v86 = vshrl.u32 %v85, 7
  %v87 = vsub.s32 0, %v86
  %v88 = vrot.slane %v83, %v87
  %v94 = vunpack.c.l.b16 %v79
  %v95 = vunpack.c.l.b16 %v80
  %v96 = vunpack.c.l.b16 %v81
  %v97 = vunpack.c.l.b16 %v82
  %v98 = vpack.c.b16 %v95, %v94
  %v99 = vpack.c.b16 %v97, %v96
  %v103 = vsel %vm31, %v78, 0
  %105 = vmatprep.subr.bf16.mxu0 0
  %106 = vmatpush1.bf16.msra.mxu0 0
  %107 = vmatprep.subr.bf16.mxu0 0
  %108 = vmatpush1.bf16.msra.mxu0 0
  %109 = vmatprep.subr.bf16.mxu0 0
  %110 = vmatpush1.bf16.msra.mxu0 0
  %111 = vmatprep.subr.bf16.mxu0 0
  %112 = vmatpush1.bf16.msra.mxu0 0
  %113 = vmatprep.subr.bf16.mxu0 0
  %114 = vmatpush1.bf16.msra.mxu0 0
  %115 = vmatprep.subr.bf16.mxu0 0
  %116 = vmatpush1.bf16.msra.mxu0 0
  %117 = vmatprep.subr.bf16.mxu0 0
  %118 = vmatpush1.bf16.msra.mxu0 %v99
  %119 = vmatprep.subr.bf16.mxu0 0
  %120 = vmatpush1.bf16.msra.mxu0 %v98
  %121 = vmatprep.subr.bf16.mxu0 0
  %122 = vmatpush2.bf16.msra.mxu0 0
  %123 = vmatprep.subr.bf16.mxu0 0
  %124 = vmatpush2.bf16.msra.mxu0 0
  %125 = vmatprep.subr.bf16.mxu0 0
  %126 = vmatpush2.bf16.msra.mxu0 0
  %127 = vmatprep.subr.bf16.mxu0 0
  %128 = vmatpush2.bf16.msra.mxu0 0
  %129 = vmatprep.subr.bf16.mxu0 0
  %130 = vmatpush2.bf16.msra.mxu0 0
  %131 = vmatprep.subr.bf16.mxu0 0
  %132 = vmatpush2.bf16.msra.mxu0 0
  %133 = vmatprep.subr.bf16.mxu0 0
  %134 = vmatpush2.bf16.msra.mxu0 0
  %135 = vmatprep.subr.bf16.mxu0 0
  %136 = vmatpush2.bf16.msra.mxu0 0
  %137 = vmatprep.mubr.bf16.mxu0 0
  %138 = vmatmul.mubr.bf16.gmra.mxu0 %v103
  %v139 = vpop.f32.mrf.mxu0
  %v140 = vadd.f32 %v88, %v139
  %v141 = vpop.f32.mrf.mxu0
  %v142 = vpop.f32.mrf.mxu0
  %v143 = vadd.f32 %v88, %v142
  %v144 = vpop.f32.mrf.mxu0
  %145 = vdwg.mxu0
  %v146 = vmax.f32 %v140, 0.0
  %v147 = vmax.f32 %v143, 0.0
  %v148 = vpack.c.bf16 %v147, %v146
  %v149 = vld [vmem:[%s5] sm:$0xf]
  %v150 = vld [vmem:[%s5 + $0x4] sm:$0xf]
  %v151 = vld [vmem:[%s5 + $0x8] sm:$0xf]
  %v152 = vld [vmem:[%s5 + $0xc] sm:$0xf]
  %v153 = vld [vmem:[%s5 + $0x10] sm:$0xf]
  %v154 = vld [vmem:[%s5 + $0x14] sm:$0xf]
  %v155 = vld [vmem:[%s5 + $0x18] sm:$0xf]
  %v156 = vld [vmem:[%s5 + $0x1c] sm:$0xf]
  %v157 = vld [vmem:[%s6] sm:$0x1]
  %v159 = vlaneseq
  %v160 = vshrl.u32 %v159, 7
  %v161 = vsub.s32 0, %v160
  %v162 = vrot.slane %v157, %v161
  %v172 = vunpack.c.l.b16 %v149
  %v173 = vunpack.c.l.b16 %v150
  %v174 = vunpack.c.l.b16 %v151
  %v175 = vunpack.c.l.b16 %v152
  %v176 = vunpack.c.l.b16 %v153
  %v177 = vunpack.c.l.b16 %v154
  %v178 = vunpack.c.l.b16 %v155
  %v179 = vunpack.c.l.b16 %v156
  %v180 = vpack.c.b16 %v173, %v172
  %v181 = vpack.c.b16 %v175, %v174
  %v182 = vpack.c.b16 %v177, %v176
  %v183 = vpack.c.b16 %v179, %v178
  %vm188 = vcmask 523264
  %v190 = vsel %vm188, %v148, 0
  %192 = vmatprep.subr.bf16.mxu0 0
  %193 = vmatpush1.bf16.msra.mxu0 0
  %194 = vmatprep.subr.bf16.mxu0 0
  %195 = vmatpush1.bf16.msra.mxu0 0
  %196 = vmatprep.subr.bf16.mxu0 0
  %197 = vmatpush1.bf16.msra.mxu0 0
  %198 = vmatprep.subr.bf16.mxu0 0
  %199 = vmatpush1.bf16.msra.mxu0 0
  %200 = vmatprep.subr.bf16.mxu0 0
  %201 = vmatpush1.bf16.msra.mxu0 %v183
  %202 = vmatprep.subr.bf16.mxu0 0
  %203 = vmatpush1.bf16.msra.mxu0 %v182
  %204 = vmatprep.subr.bf16.mxu0 0
  %205 = vmatpush1.bf16.msra.mxu0 %v181
  %206 = vmatprep.subr.bf16.mxu0 0
  %207 = vmatpush1.bf16.msra.mxu0 %v180
  %208 = vmatprep.subr.bf16.mxu0 0
  %209 = vmatpush2.bf16.msra.mxu0 0
  %210 = vmatprep.subr.bf16.mxu0 0
  %211 = vmatpush2.bf16.msra.mxu0 0
  %212 = vmatprep.subr.bf16.mxu0 0
  %213 = vmatpush2.bf16.msra.mxu0 0
  %214 = vmatprep.subr.bf16.mxu0 0
  %215 = vmatpush2.bf16.msra.mxu0 0
  %216 = vmatprep.subr.bf16.mxu0 0
  %217 = vmatpush2.bf16.msra.mxu0 0
  %218 = vmatprep.subr.bf16.mxu0 0
  %219 = vmatpush2.bf16.msra.mxu0 0
  %220 = vmatprep.subr.bf16.mxu0 0
  %221 = vmatpush2.bf16.msra.mxu0 0
  %222 = vmatprep.subr.bf16.mxu0 0
  %223 = vmatpush2.bf16.msra.mxu0 0
  %224 = vmatprep.mubr.bf16.mxu0 0
  %225 = vmatmul.mubr.bf16.gmra.mxu0 %v190
  %v226 = vpop.f32.mrf.mxu0
  %v227 = vadd.f32 %v162, %v226
  %v228 = vpop.f32.mrf.mxu0
  %v229 = vpop.f32.mrf.mxu0
  %v230 = vadd.f32 %v162, %v229
  %v231 = vpop.f32.mrf.mxu0
  %232 = vdwg.mxu0
  %v233 = vadd.f32 %v29, %v227
  %v234 = vadd.f32 %v30, %v230
  %v235 = vpack.c.bf16 %v234, %v233
  %v237 = vunpack.c.l.b16 %v235
  %v238 = vunpack.c.h.b16 %v235
  %v239 = vpack.c.b16 %v237, %v237
  %v240 = vpack.c.b16 %v238, %v238
  %vm243 = vcmask 257024
  %244 = vst.msk [vmem:[%s7] sm:$0xf] %vm243, %v239
  %vm245 = vcmask 253952
  %246 = vst.msk [vmem:[%s7 + $0x4] sm:$0x1] %vm245, %v240
  // Predicated region
  $region30: #{raven_forward.46} parent=0 // pred_check
    _
  $region31: #{raven_forward.46} parent=0 // pred_check_branch
    %248 = sbr.rel (0) target = $region33
  $region32: #{raven_forward.46} parent=0 // pred_region
    _
  $region33: #{raven_forward.46} parent=0 // pred_fallthru
    _
  // Predicated region
  $region34: #{raven_forward.46} parent=0 // pred_check
    _
  $region35: #{raven_forward.46} parent=0 // pred_check_branch
    %250 = sbr.rel (0) target = $region37
  $region36: #{raven_forward.46} parent=0 // pred_region
    _
  $region37: #{raven_forward.46} parent=0 // pred_fallthru
    _

// kernel: raven_forward.44
$region0: #{raven_forward.44}
  #allocation0 [shape = 'u32[]', space=smem, size = 0x4, offset = 0x4, fixed_abs, tag = 'smem constant byte address 0x4 - core index']
  #allocation1 [shape = 'u32[144,128]{1,0:T(1,128)}', space=vmem, size = 0x12000, scoped, tag = 'internal scratch']
  %s0 = inlined_call_operand.vmem [shape: bf16[2,5,32], index: 0, kind: input, shape index: {}]
  %s1 = inlined_call_operand.vmem [shape: bf16[2,8,64], index: 1, kind: input, shape index: {}]
  %s2 = inlined_call_operand.vmem [shape: bf16[2,1,8], index: 2, kind: input, shape index: {}]
  %s3 = inlined_call_operand.vmem [shape: bf16[2,5,32], index: 3, kind: output, shape index: {}]
  %s4 = sld [smem:[#allocation0]]
  $region45: #{raven_forward.44} parent=0
    _
  %s6 = ssub.s32 1, %s4
  %s7 = scalar_select 0, %s6, %s4
  loop: start=0, step=1, limit=4
  $region2: #{raven_forward.44} parent=0 // loop_pre_header
    _
  $region3: #{raven_forward.44} parent=0 // loop_header
    %s9 = sphi 0, %s13
    %p10 = scmp.ge.s32.totalorder %s9, 4
    %s19 = sphi 0, %s21
    %s22 = sphi 0, %s19
    %s23 = sphi 0, %s22
    %s39 = sphi 0, %s23
    %s45 = sphi 0, %s47
    %s48 = sphi 0, %s45
    %s49 = sphi 0, %s48
    %s65 = sphi 0, %s49
    %s71 = sphi 0, %s73
    %s74 = sphi 0, %s71
    %s75 = sphi 0, %s74
    %s91 = sphi 0, %s75
    %s97 = sphi 0, %s99
    %s100 = sphi 0, %s97
    %s101 = sphi 0, %s100
    %s117 = sphi 0, %s101
  $region4: #{raven_forward.44} parent=0 // loop_header_branch
    %12 = sbr.rel (%p10) target = $region8
  $region5: #{raven_forward.44} parent=0 // loop_body
    %s14 = ssub.s32 %s9, 1
    %s15 = ssub.s32 %s9, 2
    %s16 = sadd.s32 %s9, 1
    %s17 = ssub.s32 %s9, %s16
    %p18 = scmp.eq.s32.totalorder %s17, 0
    %s20 = sadd.s32 %s19, 1
    %s21 = scalar_select %p18, %s19, %s20
    %p24 = pneg %p18
    %p25 = scmp.eq.s32.totalorder %s9, 1
    %p26 = por %p24, %p25
    %p27 = scmp.ne.s32.totalorder %s19, %s22
    %p28 = scmp.eq.s32.totalorder %s9, 0
    %p29 = por %p27, %p28
    %p30 = scmp.ne.s32.totalorder %s19, %s22
    %p31 = scmp.eq.s32.totalorder %s14, 1
    %p32 = por %p30, %p31
    %p33 = scmp.ne.s32.totalorder %s22, %s23
    %p34 = scmp.eq.s32.totalorder %s14, 0
    %p35 = por %p33, %p34
    %p36 = scmp.ne.s32.totalorder %s22, %s23
    %p37 = scmp.eq.s32.totalorder %s15, 1
    %p38 = por %p36, %p37
    %p40 = scmp.ne.s32.totalorder %s23, %s39
    %p41 = scmp.eq.s32.totalorder %s15, 0
    %p42 = por %p40, %p41
    %s43 = ssub.s32 %s9, %s16
    %p44 = scmp.eq.s32.totalorder %s43, 0
    %s46 = sadd.s32 %s45, 1
    %s47 = scalar_select %p44, %s45, %s46
    %p50 = pneg %p44
    %p51 = scmp.eq.s32.totalorder %s9, 1
    %p52 = por %p50, %p51
    %p53 = scmp.ne.s32.totalorder %s45, %s48
    %p54 = scmp.eq.s32.totalorder %s9, 0
    %p55 = por %p53, %p54
    %p56 = scmp.ne.s32.totalorder %s45, %s48
    %p57 = scmp.eq.s32.totalorder %s14, 1
    %p58 = por %p56, %p57
    %p59 = scmp.ne.s32.totalorder %s48, %s49
    %p60 = scmp.eq.s32.totalorder %s14, 0
    %p61 = por %p59, %p60
    %p62 = scmp.ne.s32.totalorder %s48, %s49
    %p63 = scmp.eq.s32.totalorder %s15, 1
    %p64 = por %p62, %p63
    %p66 = scmp.ne.s32.totalorder %s49, %s65
    %p67 = scmp.eq.s32.totalorder %s15, 0
    %p68 = por %p66, %p67
    %s69 = ssub.s32 %s9, %s16
    %p70 = scmp.eq.s32.totalorder %s69, 0
    %s72 = sadd.s32 %s71, 1
    %s73 = scalar_select %p70, %s71, %s72
    %p76 = pneg %p70
    %p77 = scmp.eq.s32.totalorder %s9, 1
    %p78 = por %p76, %p77
    %p79 = scmp.ne.s32.totalorder %s71, %s74
    %p80 = scmp.eq.s32.totalorder %s9, 0
    %p81 = por %p79, %p80
    %p82 = scmp.ne.s32.totalorder %s71, %s74
    %p83 = scmp.eq.s32.totalorder %s14, 1
    %p84 = por %p82, %p83
    %p85 = scmp.ne.s32.totalorder %s74, %s75
    %p86 = scmp.eq.s32.totalorder %s14, 0
    %p87 = por %p85, %p86
    %p88 = scmp.ne.s32.totalorder %s74, %s75
    %p89 = scmp.eq.s32.totalorder %s15, 1
    %p90 = por %p88, %p89
    %p92 = scmp.ne.s32.totalorder %s75, %s91
    %p93 = scmp.eq.s32.totalorder %s15, 0
    %p94 = por %p92, %p93
    %s95 = ssub.s32 %s9, %s16
    %p96 = scmp.eq.s32.totalorder %s95, 0
    %s98 = sadd.s32 %s97, 1
    %s99 = scalar_select %p96, %s97, %s98
    %p102 = pneg %p96
    %p103 = scmp.eq.s32.totalorder %s9, 1
    %p104 = por %p102, %p103
    %p105 = scmp.ne.s32.totalorder %s97, %s100
    %p106 = scmp.eq.s32.totalorder %s9, 0
    %p107 = por %p105, %p106
    %p108 = scmp.ne.s32.totalorder %s97, %s100
    %p109 = scmp.eq.s32.totalorder %s14, 1
    %p110 = por %p108, %p109
    %p111 = scmp.ne.s32.totalorder %s100, %s101
    %p112 = scmp.eq.s32.totalorder %s14, 0
    %p113 = por %p111, %p112
    %p114 = scmp.ne.s32.totalorder %s100, %s101
    %p115 = scmp.eq.s32.totalorder %s15, 1
    %p116 = por %p114, %p115
    %p118 = scmp.ne.s32.totalorder %s101, %s117
    %p119 = scmp.eq.s32.totalorder %s15, 0
    %p120 = por %p118, %p119
    %p121 = scmp.le.s32.totalorder 1, %s9
    %p122 = scmp.lt.s32.totalorder %s9, 3
    %p123 = pnand %p121, %p122
    %p124 = pneg %p123
    // Predicated region
    $region9: #{raven_forward.44} parent=5 // pred_check
      _
    $region10: #{raven_forward.44} parent=5 // pred_check_branch
      %126 = sbr.rel (%p123) target = $region12
    $region11: #{raven_forward.44} parent=5 // pred_region
      %s127 = ssub.s32 %s9, 1
    $region12: #{raven_forward.44} parent=5 // pred_fallthru
      _
    %p128 = scmp.lt.s32.totalorder %s9, 2
    // Predicated region
    $region13: #{raven_forward.44} parent=5 // pred_check
      %p129 = pneg %p128
    $region14: #{raven_forward.44} parent=5 // pred_check_branch
      %131 = sbr.rel (%p129) target = $region16
    $region15: #{raven_forward.44} parent=5 // pred_region
      // Predicated region
      $region17: #{raven_forward.44} parent=15 // pred_check
        %p132 = pneg %p29
      $region18: #{raven_forward.44} parent=15 // pred_check_branch
        %134 = sbr.rel (%p132) target = $region20
      $region19: #{raven_forward.44} parent=15 // pred_region
        %p135 = scmp.lt.s32.totalorder %s9, 1
        %s136 = scalar_select %p135, %s9, 1
        %s137 = smul.addr %s136, 4
        %s138 = scalar_lea.vmem %s0, %s137
      $region20: #{raven_forward.44} parent=15 // pred_fallthru
        _
      // Predicated region
      $region21: #{raven_forward.44} parent=15 // pred_check
        %p139 = pneg %p55
      $region22: #{raven_forward.44} parent=15 // pred_check_branch
        %141 = sbr.rel (%p139) target = $region24
      $region23: #{raven_forward.44} parent=15 // pred_region
        %p142 = scmp.lt.s32.totalorder %s9, 1
        %s143 = scalar_select %p142, %s9, 1
        %s144 = smul.addr %s143, 4
        %s145 = scalar_lea.vmem %s1, %s144
      $region24: #{raven_forward.44} parent=15 // pred_fallthru
        _
      // Predicated region
      $region25: #{raven_forward.44} parent=15 // pred_check
        %p146 = pneg %p81
      $region26: #{raven_forward.44} parent=15 // pred_check_branch
        %148 = sbr.rel (%p146) target = $region28
      $region27: #{raven_forward.44} parent=15 // pred_region
        %p149 = scmp.lt.s32.totalorder %s9, 1
        %s150 = scalar_select %p149, %s9, 1
        %s151 = scalar_lea.vmem %s2, %s150
      $region28: #{raven_forward.44} parent=15 // pred_fallthru
        _
    $region16: #{raven_forward.44} parent=5 // pred_fallthru
      _
    %p152 = scmp.le.s32.totalorder 1, %s9
    %p153 = scmp.lt.s32.totalorder %s9, 3
    %p154 = pnand %p152, %p153
    %p155 = pneg %p154
    // Predicated region
    $region29: #{raven_forward.44} parent=5 // pred_check
      _
    $region30: #{raven_forward.44} parent=5 // pred_check_branch
      %157 = sbr.rel (%p154) target = $region32
    $region31: #{raven_forward.44} parent=5 // pred_region
      %s158 = ssub.s32 %s9, 1
      %p159 = scmp.lt.s32.totalorder %s14, 1
      %s160 = scalar_select %p159, %s14, 1
      %s161 = smul.addr %s160, 4
      %s162 = scalar_lea.vmem %s0, %s161
      %p163 = pneg %p35
      %p164 = pneg %p32
      %p165 = scmp.lt.s32.totalorder %s14, 1
      %s166 = scalar_select %p165, %s14, 1
      %s167 = smul.addr %s166, 4
      %s168 = scalar_lea.vmem %s1, %s167
      %p169 = pneg %p61
      %p170 = pneg %p58
      %p171 = scmp.lt.s32.totalorder %s14, 1
      %s172 = scalar_select %p171, %s14, 1
      %s173 = scalar_lea.vmem %s2, %s172
      %p174 = pneg %p87
      %p175 = pneg %p84
      %p176 = pneg %p113
      %p177 = pneg %p110
      %p178 = scmp.lt.s32.totalorder %s14, 1
      %s179 = scalar_select %p178, %s14, 1
      %s180 = smul.addr %s179, 4
      %s181 = scalar_lea.vmem %s3, %s180
      %p182 = scmp.lt.s32.totalorder %s14, 1
      %s183 = scalar_select %p182, %s14, 1
      %s184 = smul.addr %s183, 4
      %s185 = scalar_lea.vmem %s0, %s184
      %p186 = scmp.lt.s32.totalorder %s14, 1
      %s187 = scalar_select %p186, %s14, 1
      %s188 = smul.addr %s187, 4
      %s189 = scalar_lea.vmem %s1, %s188
      %p190 = scmp.lt.s32.totalorder %s14, 1
      %s191 = scalar_select %p190, %s14, 1
      %s192 = scalar_lea.vmem %s2, %s191
      %p193 = scmp.lt.s32.totalorder %s14, 1
      %s194 = scalar_select %p193, %s14, 1
      %s195 = smul.addr %s194, 4
      %s196 = scalar_lea.vmem %s3, %s195
      %v198 = vld [vmem:[%s192] sm:$0x1]
      %v199 = vunpack.c.l.bf16 %v198
      %v200 = vld [vmem:[%s185] sm:$0x7]
      %v201 = vld [vmem:[%s189] sm:$0xf]
      %v202 = vlaneseq
      %v203 = vshrl.u32 %v202, 7
      %v204 = vsub.s32 0, %v203
      %v205 = vrot.slane %v199, %v204
      %vm206 = vcmask 64512
      %v208 = vsel %vm206, %v200, 0
      %v211 = vsel %vm206, %v201, 0
      %213 = vmatprep.subr.bf16.mxu0 0
      %214 = vmatpush1.bf16.xpose.msra.mxu0 0
      %215 = vmatprep.subr.bf16.mxu0 0
      %216 = vmatpush1.bf16.xpose.msra.mxu0 0
      %217 = vmatprep.subr.bf16.mxu0 0
      %218 = vmatpush1.bf16.xpose.msra.mxu0 0
      %219 = vmatprep.subr.bf16.mxu0 0
      %220 = vmatpush1.bf16.xpose.msra.mxu0 0
      %221 = vmatprep.subr.bf16.mxu0 0
      %222 = vmatpush1.bf16.xpose.msra.mxu0 0
      %223 = vmatprep.subr.bf16.mxu0 0
      %224 = vmatpush1.bf16.xpose.msra.mxu0 0
      %225 = vmatprep.subr.bf16.mxu0 0
      %226 = vmatpush1.bf16.xpose.msra.mxu0 0
      %227 = vmatprep.subr.bf16.mxu0 0
      %228 = vmatpush1.bf16.xpose.msra.mxu0 %v211
      %229 = vmatprep.subr.bf16.mxu0 0
      %230 = vmatpush2.bf16.xpose.msra.mxu0 0
      %231 = vmatprep.subr.bf16.mxu0 0
      %232 = vmatpush2.bf16.xpose.msra.mxu0 0
      %233 = vmatprep.subr.bf16.mxu0 0
      %234 = vmatpush2.bf16.xpose.msra.mxu0 0
      %235 = vmatprep.subr.bf16.mxu0 0
      %236 = vmatpush2.bf16.xpose.msra.mxu0 0
      %237 = vmatprep.subr.bf16.mxu0 0
      %238 = vmatpush2.bf16.xpose.msra.mxu0 0
      %239 = vmatprep.subr.bf16.mxu0 0
      %240 = vmatpush2.bf16.xpose.msra.mxu0 0
      %241 = vmatprep.subr.bf16.mxu0 0
      %242 = vmatpush2.bf16.xpose.msra.mxu0 0
      %243 = vmatprep.subr.bf16.mxu0 0
      %244 = vmatpush2.bf16.xpose.msra.mxu0 0
      %245 = vmatprep.mubr.bf16.mxu0 0
      %246 = vmatmul.mubr.bf16.gmra.mxu0 %v208
      %v247 = vpop.f32.mrf.mxu0
      %v248 = vadd.f32 %v205, %v247
      %v249 = vpop.f32.mrf.mxu0
      %v250 = vpop.f32.mrf.mxu0
      %v251 = vpop.f32.mrf.mxu0
      %252 = vdwg.mxu0
      %vm253 = vcmask 61440
      %v254 = vsel %vm253, %v248, -inf
      %255 = vmax.xlane.f32.xlu0 %v254
      %v256 = vpop.xlane.xlu0 %255
      %vm257 = vcmp.gt.f32.partialorder %v256, -5e+29
      %v258 = vsel %vm257, 1, 0
      %v259 = vcvt.s32.f32 %v258
      %v260 = vsub.f32 %v248, %v256
      %v261 = vmul.f32 %v260, 1.442695
      %v262 = vpow.pop %v261
      %v263 = vsel %vm253, %v262, 0.0
      %264 = vadd.xlane.f32.xlu0 %v263
      %v265 = vpop.xlane.xlu0 %264
      %v266 = vpack.c.bf16 %v262, %v262
      %v267 = vadd.f32 %v265, 1e-30
      %v268 = vrcp.pop %v267
      %v269 = vmul.f32 %v268, %v259
      %v271 = vunpack.c.l.b16 %v201
      %v272 = vpack.c.b16 %v271, %v271
      %273 = vrot.lane.b32.xlu0 %v272, 96
      %v274 = vpop.permute.xlu0 %273
      %v276 = vsel %vm206, %v266, 0
      %vm278 = vcmask 1043456
      %v280 = vsel %vm278, %v274, 0
      %282 = vmatprep.subr.bf16.mxu0 0
      %283 = vmatpush1.bf16.msra.mxu0 0
      %284 = vmatprep.subr.bf16.mxu0 0
      %285 = vmatpush1.bf16.msra.mxu0 0
      %286 = vmatprep.subr.bf16.mxu0 0
      %287 = vmatpush1.bf16.msra.mxu0 0
      %288 = vmatprep.subr.bf16.mxu0 0
      %289 = vmatpush1.bf16.msra.mxu0 0
      %290 = vmatprep.subr.bf16.mxu0 0
      %291 = vmatpush1.bf16.msra.mxu0 0
      %292 = vmatprep.subr.bf16.mxu0 0
      %293 = vmatpush1.bf16.msra.mxu0 0
      %294 = vmatprep.subr.bf16.mxu0 0
      %295 = vmatpush1.bf16.msra.mxu0 0
      %296 = vmatprep.subr.bf16.mxu0 0
      %297 = vmatpush1.bf16.msra.mxu0 %v280
      %298 = vmatprep.subr.bf16.mxu0 0
      %299 = vmatpush2.bf16.msra.mxu0 0
      %300 = vmatprep.subr.bf16.mxu0 0
      %301 = vmatpush2.bf16.msra.mxu0 0
      %302 = vmatprep.subr.bf16.mxu0 0
      %303 = vmatpush2.bf16.msra.mxu0 0
      %304 = vmatprep.subr.bf16.mxu0 0
      %305 = vmatpush2.bf16.msra.mxu0 0
      %306 = vmatprep.subr.bf16.mxu0 0
      %307 = vmatpush2.bf16.msra.mxu0 0
      %308 = vmatprep.subr.bf16.mxu0 0
      %309 = vmatpush2.bf16.msra.mxu0 0
      %310 = vmatprep.subr.bf16.mxu0 0
      %311 = vmatpush2.bf16.msra.mxu0 0
      %312 = vmatprep.subr.bf16.mxu0 0
      %313 = vmatpush2.bf16.msra.mxu0 0
      %314 = vmatprep.mubr.bf16.mxu0 0
      %315 = vmatmul.mubr.bf16.gmra.mxu0 %v276
      %v316 = vpop.f32.mrf.mxu0
      %v317 = vadd.f32 0.0, %v316
      %v318 = vpop.f32.mrf.mxu0
      %v319 = vpop.f32.mrf.mxu0
      %v320 = vpop.f32.mrf.mxu0
      %321 = vdwg.mxu0
      %v322 = vmul.f32 %v317, %v269
      %v323 = vpack.c.bf16 %v322, %v322
      %vm324 = vcmask 59392
      %vm325 = vsmask.f32 2304
      %vm326 = vmand %vm324, %vm325
      %v327 = vld [vmem:[%s196] sm:$0x7]
      %v328 = vsel %vm326, %v323, %v327
      %329 = vst [vmem:[%s196] sm:$0x7] %v328
      %v330 = vld [vmem:[%s185] sm:$0x7]
      %v331 = vld [vmem:[%s189] sm:$0xf]
      %v333 = vunpack.c.l.b16 %v330
      %v334 = vpack.c.b16 %v333, %v333
      %335 = vrot.lane.b32.xlu0 %v334, 120
      %v336 = vpop.permute.xlu0 %335
      %v338 = vunpack.c.l.b16 %v331
      %v339 = vpack.c.b16 %v338, %v338
      %340 = vrot.lane.b32.xlu0 %v339, 120
      %v341 = vpop.permute.xlu0 %340
      %v343 = vsel %vm206, %v336, 0
      %v346 = vsel %vm206, %v341, 0
      %348 = vmatprep.subr.bf16.mxu0 0
      %349 = vmatpush1.bf16.xpose.msra.mxu0 0
      %350 = vmatprep.subr.bf16.mxu0 0
      %351 = vmatpush1.bf16.xpose.msra.mxu0 0
      %352 = vmatprep.subr.bf16.mxu0 0
      %353 = vmatpush1.bf16.xpose.msra.mxu0 0
      %354 = vmatprep.subr.bf16.mxu0 0
      %355 = vmatpush1.bf16.xpose.msra.mxu0 0
      %356 = vmatprep.subr.bf16.mxu0 0
      %357 = vmatpush1.bf16.xpose.msra.mxu0 0
      %358 = vmatprep.subr.bf16.mxu0 0
      %359 = vmatpush1.bf16.xpose.msra.mxu0 0
      %360 = vmatprep.subr.bf16.mxu0 0
      %361 = vmatpush1.bf16.xpose.msra.mxu0 0
      %362 = vmatprep.subr.bf16.mxu0 0
      %363 = vmatpush1.bf16.xpose.msra.mxu0 %v346
      %364 = vmatprep.subr.bf16.mxu0 0
      %365 = vmatpush2.bf16.xpose.msra.mxu0 0
      %366 = vmatprep.subr.bf16.mxu0 0
      %367 = vmatpush2.bf16.xpose.msra.mxu0 0
      %368 = vmatprep.subr.bf16.mxu0 0
      %369 = vmatpush2.bf16.xpose.msra.mxu0 0
      %370 = vmatprep.subr.bf16.mxu0 0
      %371 = vmatpush2.bf16.xpose.msra.mxu0 0
      %372 = vmatprep.subr.bf16.mxu0 0
      %373 = vmatpush2.bf16.xpose.msra.mxu0 0
      %374 = vmatprep.subr.bf16.mxu0 0
      %375 = vmatpush2.bf16.xpose.msra.mxu0 0
      %376 = vmatprep.subr.bf16.mxu0 0
      %377 = vmatpush2.bf16.xpose.msra.mxu0 0
      %378 = vmatprep.subr.bf16.mxu0 0
      %379 = vmatpush2.bf16.xpose.msra.mxu0 0
      %380 = vmatprep.mubr.bf16.mxu0 0
      %381 = vmatmul.mubr.bf16.gmra.mxu0 %v343
      %v382 = vpop.f32.mrf.mxu0
      %v383 = vadd.f32 %v205, %v382
      %v384 = vpop.f32.mrf.mxu0
      %v385 = vpop.f32.mrf.mxu0
      %v386 = vpop.f32.mrf.mxu0
      %387 = vdwg.mxu0
      %v388 = vsel %vm253, %v383, -inf
      %389 = vmax.xlane.f32.xlu0 %v388
      %v390 = vpop.xlane.xlu0 %389
      %vm391 = vcmp.gt.f32.partialorder %v390, -5e+29
      %v392 = vsel %vm391, 1, 0
      %v393 = vcvt.s32.f32 %v392
      %v394 = vsub.f32 %v383, %v390
      %v395 = vmul.f32 %v394, 1.442695
      %v396 = vpow.pop %v395
      %v397 = vsel %vm253, %v396, 0.0
      %398 = vadd.xlane.f32.xlu0 %v397
      %v399 = vpop.xlane.xlu0 %398
      %v400 = vpack.c.bf16 %v396, %v396
      %v401 = vadd.f32 %v399, 1e-30
      %v402 = vrcp.pop %v401
      %v403 = vmul.f32 %v402, %v393
      %404 = vrot.lane.b32.xlu0 %v339, 88
      %v405 = vpop.permute.xlu0 %404
      %v407 = vsel %vm206, %v400, 0
      %v410 = vsel %vm278, %v405, 0
      %412 = vmatprep.subr.bf16.mxu0 0
      %413 = vmatpush1.bf16.msra.mxu0 0
      %414 = vmatprep.subr.bf16.mxu0 0
      %415 = vmatpush1.bf16.msra.mxu0 0
      %416 = vmatprep.subr.bf16.mxu0 0
      %417 = vmatpush1.bf16.msra.mxu0 0
      %418 = vmatprep.subr.bf16.mxu0 0
      %419 = vmatpush1.bf16.msra.mxu0 0
      %420 = vmatprep.subr.bf16.mxu0 0
      %421 = vmatpush1.bf16.msra.mxu0 0
      %422 = vmatprep.subr.bf16.mxu0 0
      %423 = vmatpush1.bf16.msra.mxu0 0
      %424 = vmatprep.subr.bf16.mxu0 0
      %425 = vmatpush1.bf16.msra.mxu0 0
      %426 = vmatprep.subr.bf16.mxu0 0
      %427 = vmatpush1.bf16.msra.mxu0 %v410
      %428 = vmatprep.subr.bf16.mxu0 0
      %429 = vmatpush2.bf16.msra.mxu0 0
      %430 = vmatprep.subr.bf16.mxu0 0
      %431 = vmatpush2.bf16.msra.mxu0 0
      %432 = vmatprep.subr.bf16.mxu0 0
      %433 = vmatpush2.bf16.msra.mxu0 0
      %434 = vmatprep.subr.bf16.mxu0 0
      %435 = vmatpush2.bf16.msra.mxu0 0
      %436 = vmatprep.subr.bf16.mxu0 0
      %437 = vmatpush2.bf16.msra.mxu0 0
      %438 = vmatprep.subr.bf16.mxu0 0
      %439 = vmatpush2.bf16.msra.mxu0 0
      %440 = vmatprep.subr.bf16.mxu0 0
      %441 = vmatpush2.bf16.msra.mxu0 0
      %442 = vmatprep.subr.bf16.mxu0 0
      %443 = vmatpush2.bf16.msra.mxu0 0
      %444 = vmatprep.mubr.bf16.mxu0 0
      %445 = vmatmul.mubr.bf16.gmra.mxu0 %v407
      %v446 = vpop.f32.mrf.mxu0
      %v447 = vadd.f32 0.0, %v446
      %v448 = vpop.f32.mrf.mxu0
      %v449 = vpop.f32.mrf.mxu0
      %v450 = vpop.f32.mrf.mxu0
      %451 = vdwg.mxu0
      %v452 = vmul.f32 %v447, %v403
      %v453 = vpack.c.bf16 %v452, %v452
      %v455 = vunpack.c.l.b16 %v453
      %v456 = vpack.c.b16 %v455, %v455
      %457 = vrot.lane.b32.xlu0 %v456, 8
      %v458 = vpop.permute.xlu0 %457
      %vm460 = vcmask 124992
      %vm461 = vmand %vm460, %vm325
      %v462 = vld [vmem:[%s196] sm:$0x7]
      %v463 = vsel %vm461, %v458, %v462
      %464 = vst [vmem:[%s196] sm:$0x7] %v463
      %v465 = vld [vmem:[%s185] sm:$0x7]
      %v466 = vld [vmem:[%s189] sm:$0xf]
      %v468 = vunpack.c.l.b16 %v465
      %v469 = vpack.c.b16 %v468, %v468
      %470 = vrot.lane.b32.xlu0 %v469, 112
      %v471 = vpop.permute.xlu0 %470
      %v473 = vunpack.c.l.b16 %v466
      %v474 = vpack.c.b16 %v473, %v473
      %475 = vrot.lane.b32.xlu0 %v474, 112
      %v476 = vpop.permute.xlu0 %475
      %v478 = vsel %vm206, %v471, 0
      %v481 = vsel %vm206, %v476, 0
      %483 = vmatprep.subr.bf16.mxu0 0
      %484 = vmatpush1.bf16.xpose.msra.mxu0 0
      %485 = vmatprep.subr.bf16.mxu0 0
      %486 = vmatpush1.bf16.xpose.msra.mxu0 0
      %487 = vmatprep.subr.bf16.mxu0 0
      %488 = vmatpush1.bf16.xpose.msra.mxu0 0
      %489 = vmatprep.subr.bf16.mxu0 0
      %490 = vmatpush1.bf16.xpose.msra.mxu0 0
      %491 = vmatprep.subr.bf16.mxu0 0
      %492 = vmatpush1.bf16.xpose.msra.mxu0 0
      %493 = vmatprep.subr.bf16.mxu0 0
      %494 = vmatpush1.bf16.xpose.msra.mxu0 0
      %495 = vmatprep.subr.bf16.mxu0 0
      %496 = vmatpush1.bf16.xpose.msra.mxu0 0
      %497 = vmatprep.subr.bf16.mxu0 0
      %498 = vmatpush1.bf16.xpose.msra.mxu0 %v481
      %499 = vmatprep.subr.bf16.mxu0 0
      %500 = vmatpush2.bf16.xpose.msra.mxu0 0
      %501 = vmatprep.subr.bf16.mxu0 0
      %502 = vmatpush2.bf16.xpose.msra.mxu0 0
      %503 = vmatprep.subr.bf16.mxu0 0
      %504 = vmatpush2.bf16.xpose.msra.mxu0 0
      %505 = vmatprep.subr.bf16.mxu0 0
      %506 = vmatpush2.bf16.xpose.msra.mxu0 0
      %507 = vmatprep.subr.bf16.mxu0 0
      %508 = vmatpush2.bf16.xpose.msra.mxu0 0
      %509 = vmatprep.subr.bf16.mxu0 0
      %510 = vmatpush2.bf16.xpose.msra.mxu0 0
      %511 = vmatprep.subr.bf16.mxu0 0
      %512 = vmatpush2.bf16.xpose.msra.mxu0 0
      %513 = vmatprep.subr.bf16.mxu0 0
      %514 = vmatpush2.bf16.xpose.msra.mxu0 0
      %515 = vmatprep.mubr.bf16.mxu0 0
      %516 = vmatmul.mubr.bf16.gmra.mxu0 %v478
      %v517 = vpop.f32.mrf.mxu0
      %v518 = vadd.f32 %v205, %v517
      %v519 = vpop.f32.mrf.mxu0
      %v520 = vpop.f32.mrf.mxu0
      %v521 = vpop.f32.mrf.mxu0
      %522 = vdwg.mxu0
      %v523 = vsel %vm253, %v518, -inf
      %524 = vmax.xlane.f32.xlu0 %v523
      %v525 = vpop.xlane.xlu0 %524
      %vm526 = vcmp.gt.f32.partialorder %v525, -5e+29
      %v527 = vsel %vm526, 1, 0
      %v528 = vcvt.s32.f32 %v527
      %v529 = vsub.f32 %v518, %v525
      %v530 = vmul.f32 %v529, 1.442695
      %v531 = vpow.pop %v530
      %v532 = vsel %vm253, %v531, 0.0
      %533 = vadd.xlane.f32.xlu0 %v532
      %v534 = vpop.xlane.xlu0 %533
      %v535 = vpack.c.bf16 %v531, %v531
      %v536 = vadd.f32 %v534, 1e-30
      %v537 = vrcp.pop %v536
      %v538 = vmul.f32 %v537, %v528
      %539 = vrot.lane.b32.xlu0 %v474, 80
      %v540 = vpop.permute.xlu0 %539
      %v542 = vsel %vm206, %v535, 0
      %v545 = vsel %vm278, %v540, 0
      %547 = vmatprep.subr.bf16.mxu0 0
      %548 = vmatpush1.bf16.msra.mxu0 0
      %549 = vmatprep.subr.bf16.mxu0 0
      %550 = vmatpush1.bf16.msra.mxu0 0
      %551 = vmatprep.subr.bf16.mxu0 0
      %552 = vmatpush1.bf16.msra.mxu0 0
      %553 = vmatprep.subr.bf16.mxu0 0
      %554 = vmatpush1.bf16.msra.mxu0 0
      %555 = vmatprep.subr.bf16.mxu0 0
      %556 = vmatpush1.bf16.msra.mxu0 0
      %557 = vmatprep.subr.bf16.mxu0 0
      %558 = vmatpush1.bf16.msra.mxu0 0
      %559 = vmatprep.subr.bf16.mxu0 0
      %560 = vmatpush1.bf16.msra.mxu0 0
      %561 = vmatprep.subr.bf16.mxu0 0
      %562 = vmatpush1.bf16.msra.mxu0 %v545
      %563 = vmatprep.subr.bf16.mxu0 0
      %564 = vmatpush2.bf16.msra.mxu0 0
      %565 = vmatprep.subr.bf16.mxu0 0
      %566 = vmatpush2.bf16.msra.mxu0 0
      %567 = vmatprep.subr.bf16.mxu0 0
      %568 = vmatpush2.bf16.msra.mxu0 0
      %569 = vmatprep.subr.bf16.mxu0 0
      %570 = vmatpush2.bf16.msra.mxu0 0
      %571 = vmatprep.subr.bf16.mxu0 0
      %572 = vmatpush2.bf16.msra.mxu0 0
      %573 = vmatprep.subr.bf16.mxu0 0
      %574 = vmatpush2.bf16.msra.mxu0 0
      %575 = vmatprep.subr.bf16.mxu0 0
      %576 = vmatpush2.bf16.msra.mxu0 0
      %577 = vmatprep.subr.bf16.mxu0 0
      %578 = vmatpush2.bf16.msra.mxu0 0
      %579 = vmatprep.mubr.bf16.mxu0 0
      %580 = vmatmul.mubr.bf16.gmra.mxu0 %v542
      %v581 = vpop.f32.mrf.mxu0
      %v582 = vadd.f32 0.0, %v581
      %v583 = vpop.f32.mrf.mxu0
      %v584 = vpop.f32.mrf.mxu0
      %v585 = vpop.f32.mrf.mxu0
      %586 = vdwg.mxu0
      %v587 = vmul.f32 %v582, %v538
      %v588 = vpack.c.bf16 %v587, %v587
      %v590 = vunpack.c.l.b16 %v588
      %v591 = vpack.c.b16 %v590, %v590
      %592 = vrot.lane.b32.xlu0 %v591, 16
      %v593 = vpop.permute.xlu0 %592
      %vm595 = vcmask 190592
      %vm596 = vmand %vm595, %vm325
      %v597 = vld [vmem:[%s196] sm:$0x7]
      %v598 = vsel %vm596, %v593, %v597
      %599 = vst [vmem:[%s196] sm:$0x7] %v598
      %v600 = vld [vmem:[%s185] sm:$0x7]
      %v601 = vld [vmem:[%s189] sm:$0xf]
      %v603 = vunpack.c.l.b16 %v600
      %v604 = vpack.c.b16 %v603, %v603
      %605 = vrot.lane.b32.xlu0 %v604, 104
      %v606 = vpop.permute.xlu0 %605
      %v608 = vunpack.c.l.b16 %v601
      %v609 = vpack.c.b16 %v608, %v608
      %610 = vrot.lane.b32.xlu0 %v609, 104
      %v611 = vpop.permute.xlu0 %610
      %v613 = vsel %vm206, %v606, 0
      %v616 = vsel %vm206, %v611, 0
      %618 = vmatprep.subr.bf16.mxu0 0
      %619 = vmatpush1.bf16.xpose.msra.mxu0 0
      %620 = vmatprep.subr.bf16.mxu0 0
      %621 = vmatpush1.bf16.xpose.msra.mxu0 0
      %622 = vmatprep.subr.bf16.mxu0 0
      %623 = vmatpush1.bf16.xpose.msra.mxu0 0
      %624 = vmatprep.subr.bf16.mxu0 0
      %625 = vmatpush1.bf16.xpose.msra.mxu0 0
      %626 = vmatprep.subr.bf16.mxu0 0
      %627 = vmatpush1.bf16.xpose.msra.mxu0 0
      %628 = vmatprep.subr.bf16.mxu0 0
      %629 = vmatpush1.bf16.xpose.msra.mxu0 0
      %630 = vmatprep.subr.bf16.mxu0 0
      %631 = vmatpush1.bf16.xpose.msra.mxu0 0
      %632 = vmatprep.subr.bf16.mxu0 0
      %633 = vmatpush1.bf16.xpose.msra.mxu0 %v616
      %634 = vmatprep.subr.bf16.mxu0 0
      %635 = vmatpush2.bf16.xpose.msra.mxu0 0
      %636 = vmatprep.subr.bf16.mxu0 0
      %637 = vmatpush2.bf16.xpose.msra.mxu0 0
      %638 = vmatprep.subr.bf16.mxu0 0
      %639 = vmatpush2.bf16.xpose.msra.mxu0 0
      %640 = vmatprep.subr.bf16.mxu0 0
      %641 = vmatpush2.bf16.xpose.msra.mxu0 0
      %642 = vmatprep.subr.bf16.mxu0 0
      %643 = vmatpush2.bf16.xpose.msra.mxu0 0
      %644 = vmatprep.subr.bf16.mxu0 0
      %645 = vmatpush2.bf16.xpose.msra.mxu0 0
      %646 = vmatprep.subr.bf16.mxu0 0
      %647 = vmatpush2.bf16.xpose.msra.mxu0 0
      %648 = vmatprep.subr.bf16.mxu0 0
      %649 = vmatpush2.bf16.xpose.msra.mxu0 0
      %650 = vmatprep.mubr.bf16.mxu0 0
      %651 = vmatmul.mubr.bf16.gmra.mxu0 %v613
      %v652 = vpop.f32.mrf.mxu0
      %v653 = vadd.f32 %v205, %v652
      %v654 = vpop.f32.mrf.mxu0
      %v655 = vpop.f32.mrf.mxu0
      %v656 = vpop.f32.mrf.mxu0
      %657 = vdwg.mxu0
      %v658 = vsel %vm253, %v653, -inf
      %659 = vmax.xlane.f32.xlu0 %v658
      %v660 = vpop.xlane.xlu0 %659
      %vm661 = vcmp.gt.f32.partialorder %v660, -5e+29
      %v662 = vsel %vm661, 1, 0
      %v663 = vcvt.s32.f32 %v662
      %v664 = vsub.f32 %v653, %v660
      %v665 = vmul.f32 %v664, 1.442695
      %v666 = vpow.pop %v665
      %v667 = vsel %vm253, %v666, 0.0
      %668 = vadd.xlane.f32.xlu0 %v667
      %v669 = vpop.xlane.xlu0 %668
      %v670 = vpack.c.bf16 %v666, %v666
      %v671 = vadd.f32 %v669, 1e-30
      %v672 = vrcp.pop %v671
      %v673 = vmul.f32 %v672, %v663
      %674 = vrot.lane.b32.xlu0 %v609, 72
      %v675 = vpop.permute.xlu0 %674
      %v677 = vsel %vm206, %v670, 0
      %v680 = vsel %vm278, %v675, 0
      %682 = vmatprep.subr.bf16.mxu0 0
      %683 = vmatpush1.bf16.msra.mxu0 0
      %684 = vmatprep.subr.bf16.mxu0 0
      %685 = vmatpush1.bf16.msra.mxu0 0
      %686 = vmatprep.subr.bf16.mxu0 0
      %687 = vmatpush1.bf16.msra.mxu0 0
      %688 = vmatprep.subr.bf16.mxu0 0
      %689 = vmatpush1.bf16.msra.mxu0 0
      %690 = vmatprep.subr.bf16.mxu0 0
      %691 = vmatpush1.bf16.msra.mxu0 0
      %692 = vmatprep.subr.bf16.mxu0 0
      %693 = vmatpush1.bf16.msra.mxu0 0
      %694 = vmatprep.subr.bf16.mxu0 0
      %695 = vmatpush1.bf16.msra.mxu0 0
      %696 = vmatprep.subr.bf16.mxu0 0
      %697 = vmatpush1.bf16.msra.mxu0 %v680
      %698 = vmatprep.subr.bf16.mxu0 0
      %699 = vmatpush2.bf16.msra.mxu0 0
      %700 = vmatprep.subr.bf16.mxu0 0
      %701 = vmatpush2.bf16.msra.mxu0 0
      %702 = vmatprep.subr.bf16.mxu0 0
      %703 = vmatpush2.bf16.msra.mxu0 0
      %704 = vmatprep.subr.bf16.mxu0 0
      %705 = vmatpush2.bf16.msra.mxu0 0
      %706 = vmatprep.subr.bf16.mxu0 0
      %707 = vmatpush2.bf16.msra.mxu0 0
      %708 = vmatprep.subr.bf16.mxu0 0
      %709 = vmatpush2.bf16.msra.mxu0 0
      %710 = vmatprep.subr.bf16.mxu0 0
      %711 = vmatpush2.bf16.msra.mxu0 0
      %712 = vmatprep.subr.bf16.mxu0 0
      %713 = vmatpush2.bf16.msra.mxu0 0
      %714 = vmatprep.mubr.bf16.mxu0 0
      %715 = vmatmul.mubr.bf16.gmra.mxu0 %v677
      %v716 = vpop.f32.mrf.mxu0
      %v717 = vadd.f32 0.0, %v716
      %v718 = vpop.f32.mrf.mxu0
      %v719 = vpop.f32.mrf.mxu0
      %v720 = vpop.f32.mrf.mxu0
      %721 = vdwg.mxu0
      %v722 = vmul.f32 %v717, %v673
      %v723 = vpack.c.bf16 %v722, %v722
      %v725 = vunpack.c.l.b16 %v723
      %v726 = vpack.c.b16 %v725, %v725
      %727 = vrot.lane.b32.xlu0 %v726, 24
      %v728 = vpop.permute.xlu0 %727
      %vm730 = vcmask 256192
      %vm731 = vmand %vm730, %vm325
      %v732 = vld [vmem:[%s196] sm:$0x7]
      %v733 = vsel %vm731, %v728, %v732
      %734 = vst [vmem:[%s196] sm:$0x7] %v733
      %p735 = scmp.lt.s32.totalorder %s14, 1
      %s736 = scalar_select %p735, %s14, 1
      %s737 = smul.addr %s736, 4
      %s738 = scalar_lea.vmem %s3, %s737
      // Predicated region
      $region33: #{raven_forward.44} parent=31 // pred_check
        %p739 = pneg %p110
      $region34: #{raven_forward.44} parent=31 // pred_check_branch
        %741 = sbr.rel (%p739) target = $region36
      $region35: #{raven_forward.44} parent=31 // pred_region
        _
      $region36: #{raven_forward.44} parent=31 // pred_fallthru
        _
    $region32: #{raven_forward.44} parent=5 // pred_fallthru
      _
    %p742 = scmp.le.s32.totalorder 2, %s9
    // Predicated region
    $region37: #{raven_forward.44} parent=5 // pred_check
      %p743 = pneg %p742
    $region38: #{raven_forward.44} parent=5 // pred_check_branch
      %745 = sbr.rel (%p743) target = $region40
    $region39: #{raven_forward.44} parent=5 // pred_region
      %s746 = ssub.s32 %s9, 2
      // Predicated region
      $region41: #{raven_forward.44} parent=39 // pred_check
        %p747 = pneg %p116
      $region42: #{raven_forward.44} parent=39 // pred_check_branch
        %749 = sbr.rel (%p747) target = $region44
      $region43: #{raven_forward.44} parent=39 // pred_region
        %p750 = scmp.lt.s32.totalorder %s15, 1
        %s751 = scalar_select %p750, %s15, 1
        %s752 = smul.addr %s751, 4
        %s753 = scalar_lea.vmem %s3, %s752
      $region44: #{raven_forward.44} parent=39 // pred_fallthru
        _
    $region40: #{raven_forward.44} parent=5 // pred_fallthru
      _
  $region6: #{raven_forward.44} parent=0 // loop_footer
    %s13 = sadd.s32 1, %s9
  $region7: #{raven_forward.44} parent=0 // loop_footer_branch
    %8 = sbr.rel target = $region3
  $region8: #{raven_forward.44} parent=0 // loop_exit
    _

// kernel: raven_forward.55
$region0: #{raven_forward.55}
  #allocation0 [shape = 'u32[]', space=smem, size = 0x4, offset = 0x4, fixed_abs, tag = 'smem constant byte address 0x4 - core index']
  #allocation1 [shape = 'u32[144,128]{1,0:T(1,128)}', space=vmem, size = 0x12000, scoped, tag = 'internal scratch']
  #allocation2 [shape = 'f32[10,6]{1,0:T(8,128)}', space=vmem, size = 0x2000, scoped, tag = 'scratch operand']
  %s0 = inlined_call_operand.vmem [shape: bf16[10,32], index: 0, kind: input, shape index: {}]
  %s1 = inlined_call_operand.vmem [shape: f32[1,32], index: 1, kind: input, shape index: {}]
  %s2 = inlined_call_operand.vmem [shape: f32[1,32], index: 2, kind: input, shape index: {}]
  %s3 = inlined_call_operand.vmem [shape: bf16[32,6], index: 3, kind: input, shape index: {}]
  %s4 = inlined_call_operand.vmem [shape: f32[1,6], index: 4, kind: input, shape index: {}]
  %s5 = inlined_call_operand.vmem [shape: f32[10,6], index: 5, kind: output, shape index: {}]
  %s6 = sld [smem:[#allocation0]]
  $region38: #{raven_forward.55} parent=0
    _
  %s8 = ssub.s32 1, %s6
  %s9 = scalar_select 0, %s8, %s6
  // Predicated region
  $region2: #{raven_forward.55} parent=0 // pred_check
    _
  $region3: #{raven_forward.55} parent=0 // pred_check_branch
    %11 = sbr.rel (0) target = $region5
  $region4: #{raven_forward.55} parent=0 // pred_region
    _
  $region5: #{raven_forward.55} parent=0 // pred_fallthru
    _
  // Predicated region
  $region6: #{raven_forward.55} parent=0 // pred_check
    _
  $region7: #{raven_forward.55} parent=0 // pred_check_branch
    %13 = sbr.rel (0) target = $region9
  $region8: #{raven_forward.55} parent=0 // pred_region
    _
  $region9: #{raven_forward.55} parent=0 // pred_fallthru
    _
  // Predicated region
  $region10: #{raven_forward.55} parent=0 // pred_check
    _
  $region11: #{raven_forward.55} parent=0 // pred_check_branch
    %15 = sbr.rel (0) target = $region13
  $region12: #{raven_forward.55} parent=0 // pred_region
    _
  $region13: #{raven_forward.55} parent=0 // pred_fallthru
    _
  // Predicated region
  $region14: #{raven_forward.55} parent=0 // pred_check
    _
  $region15: #{raven_forward.55} parent=0 // pred_check_branch
    %17 = sbr.rel (0) target = $region17
  $region16: #{raven_forward.55} parent=0 // pred_region
    _
  $region17: #{raven_forward.55} parent=0 // pred_fallthru
    _
  // Predicated region
  $region18: #{raven_forward.55} parent=0 // pred_check
    _
  $region19: #{raven_forward.55} parent=0 // pred_check_branch
    %19 = sbr.rel (0) target = $region21
  $region20: #{raven_forward.55} parent=0 // pred_region
    _
  $region21: #{raven_forward.55} parent=0 // pred_fallthru
    _
  %p21 = scmp.eq.s32.totalorder 0, 0
  // Predicated region
  $region22: #{raven_forward.55} parent=0 // pred_check
    %p22 = pneg %p21
  $region23: #{raven_forward.55} parent=0 // pred_check_branch
    %24 = sbr.rel (%p22) target = $region25
  $region24: #{raven_forward.55} parent=0 // pred_region
    %vm25 = vcmask 48128
    %26 = vst.msk [vmem:[#allocation2] sm:$0xff] %vm25, 0.0
    %vm27 = vcmask 41984
    %28 = vst.msk [vmem:[#allocation2 + $0x8] sm:$0x3] %vm27, 0.0
  $region25: #{raven_forward.55} parent=0 // pred_fallthru
    _
  %v29 = vld [vmem:[%s0] sm:$0xf]
  %v30 = vld [vmem:[%s0 + $0x4] sm:$0x1]
  %v31 = vunpack.c.l.bf16 %v29
  %v32 = vunpack.c.l.bf16 %v30
  %vm33 = vcmask 261120
  %v34 = vsel %vm33, %v31, 0.0
  %35 = vadd.xlane.f32.xlu0 %v34
  %v36 = vpop.xlane.xlu0 %35
  %vm37 = vcmask 254976
  %v38 = vsel %vm37, %v32, 0.0
  %39 = vadd.xlane.f32.xlu0 %v38
  %v40 = vpop.xlane.xlu0 %39
  %v41 = vrcp.pop 32.0
  %v42 = vmul.f32 %v36, %v41
  %v43 = vmul.f32 %v40, %v41
  %v44 = vsub.f32 %v31, %v42
  %v45 = vsub.f32 %v32, %v43
  %v46 = vmul.f32 %v44, %v44
  %v47 = vmul.f32 %v45, %v45
  %v48 = vsel %vm33, %v46, 0.0
  %49 = vadd.xlane.f32.xlu0 %v48
  %v50 = vpop.xlane.xlu0 %49
  %v51 = vsel %vm37, %v47, 0.0
  %52 = vadd.xlane.f32.xlu0 %v51
  %v53 = vpop.xlane.xlu0 %52
  %v54 = vmul.f32 %v50, %v41
  %v55 = vmul.f32 %v53, %v41
  %v56 = vadd.f32 %v54, 1e-12
  %v57 = vadd.f32 %v55, 1e-12
  %v58 = vrsqrt.pop %v56
  %v59 = vrsqrt.pop %v57
  %v60 = vmul.f32 %v44, %v58
  %v61 = vmul.f32 %v45, %v59
  %v62 = vld [vmem:[%s1] sm:$0x1]
  %v64 = vlaneseq
  %v65 = vshrl.u32 %v64, 7
  %v66 = vsub.s32 0, %v65
  %v67 = vrot.slane %v62, %v66
  %v69 = vmul.f32 %v60, %v67
  %v70 = vmul.f32 %v61, %v67
  %v71 = vld [vmem:[%s2] sm:$0x1]
  %v73 = vlaneseq
  %v74 = vshrl.u32 %v73, 7
  %v75 = vsub.s32 0, %v74
  %v76 = vrot.slane %v71, %v75
  %v78 = vadd.f32 %v69, %v76
  %v79 = vadd.f32 %v70, %v76
  %v80 = vpack.c.bf16 %v79, %v78
  %v81 = vld [vmem:[#allocation2] sm:$0xff]
  %v82 = vld [vmem:[#allocation2 + $0x8] sm:$0x3]
  %v83 = vld [vmem:[%s3] sm:$0xf]
  %v84 = vld [vmem:[%s3 + $0x4] sm:$0xf]
  %v85 = vld [vmem:[%s3 + $0x8] sm:$0xf]
  %v86 = vld [vmem:[%s3 + $0xc] sm:$0xf]
  %v91 = vunpack.c.l.b16 %v83
  %v92 = vunpack.c.l.b16 %v84
  %v93 = vunpack.c.l.b16 %v85
  %v94 = vunpack.c.l.b16 %v86
  %v95 = vpack.c.b16 %v92, %v91
  %v96 = vpack.c.b16 %v94, %v93
  %v100 = vsel %vm33, %v80, 0
  %102 = vmatprep.subr.bf16.mxu0 0
  %103 = vmatpush1.bf16.msra.mxu0 0
  %104 = vmatprep.subr.bf16.mxu0 0
  %105 = vmatpush1.bf16.msra.mxu0 0
  %106 = vmatprep.subr.bf16.mxu0 0
  %107 = vmatpush1.bf16.msra.mxu0 0
  %108 = vmatprep.subr.bf16.mxu0 0
  %109 = vmatpush1.bf16.msra.mxu0 0
  %110 = vmatprep.subr.bf16.mxu0 0
  %111 = vmatpush1.bf16.msra.mxu0 0
  %112 = vmatprep.subr.bf16.mxu0 0
  %113 = vmatpush1.bf16.msra.mxu0 0
  %114 = vmatprep.subr.bf16.mxu0 0
  %115 = vmatpush1.bf16.msra.mxu0 %v96
  %116 = vmatprep.subr.bf16.mxu0 0
  %117 = vmatpush1.bf16.msra.mxu0 %v95
  %118 = vmatprep.subr.bf16.mxu0 0
  %119 = vmatpush2.bf16.msra.mxu0 0
  %120 = vmatprep.subr.bf16.mxu0 0
  %121 = vmatpush2.bf16.msra.mxu0 0
  %122 = vmatprep.subr.bf16.mxu0 0
  %123 = vmatpush2.bf16.msra.mxu0 0
  %124 = vmatprep.subr.bf16.mxu0 0
  %125 = vmatpush2.bf16.msra.mxu0 0
  %126 = vmatprep.subr.bf16.mxu0 0
  %127 = vmatpush2.bf16.msra.mxu0 0
  %128 = vmatprep.subr.bf16.mxu0 0
  %129 = vmatpush2.bf16.msra.mxu0 0
  %130 = vmatprep.subr.bf16.mxu0 0
  %131 = vmatpush2.bf16.msra.mxu0 0
  %132 = vmatprep.subr.bf16.mxu0 0
  %133 = vmatpush2.bf16.msra.mxu0 0
  %134 = vmatprep.mubr.bf16.mxu0 0
  %135 = vmatmul.mubr.bf16.gmra.mxu0 %v100
  %v136 = vpop.f32.mrf.mxu0
  %v137 = vadd.f32 0.0, %v136
  %v138 = vpop.f32.mrf.mxu0
  %v139 = vpop.f32.mrf.mxu0
  %v140 = vadd.f32 0.0, %v139
  %v141 = vpop.f32.mrf.mxu0
  %142 = vdwg.mxu0
  %v143 = vadd.f32 %v81, %v137
  %v144 = vadd.f32 %v82, %v140
  %vm145 = vcmask 48128
  %146 = vst.msk [vmem:[#allocation2] sm:$0xff] %vm145, %v143
  %vm147 = vcmask 41984
  %148 = vst.msk [vmem:[#allocation2 + $0x8] sm:$0x3] %vm147, %v144
  // Predicated region
  $region26: #{raven_forward.55} parent=0 // pred_check
    %p149 = pneg %p21
  $region27: #{raven_forward.55} parent=0 // pred_check_branch
    %151 = sbr.rel (%p149) target = $region29
  $region28: #{raven_forward.55} parent=0 // pred_region
    %v152 = vld [vmem:[#allocation2] sm:$0xff]
    %v153 = vld [vmem:[#allocation2 + $0x8] sm:$0x3]
    %v154 = vld [vmem:[%s4] sm:$0x1]
    %v156 = vlaneseq
    %v157 = vshrl.u32 %v156, 7
    %v158 = vsub.s32 0, %v157
    %v159 = vrot.slane %v154, %v158
    %v161 = vadd.f32 %v152, %v159
    %v162 = vadd.f32 %v153, %v159
    %163 = vst.msk [vmem:[%s5] sm:$0xff] %vm145, %v161
    %164 = vst.msk [vmem:[%s5 + $0x8] sm:$0x3] %vm147, %v162
  $region29: #{raven_forward.55} parent=0 // pred_fallthru
    _
  // Predicated region
  $region30: #{raven_forward.55} parent=0 // pred_check
    _
  $region31: #{raven_forward.55} parent=0 // pred_check_branch
    %166 = sbr.rel (0) target = $region33
  $region32: #{raven_forward.55} parent=0 // pred_region
    _
  $region33: #{raven_forward.55} parent=0 // pred_fallthru
    _
  // Predicated region
  $region34: #{raven_forward.55} parent=0 // pred_check
    _
  $region35: #{raven_forward.55} parent=0 // pred_check_branch
    %168 = sbr.rel (0) target = $region37
  $region36: #{raven_forward.55} parent=0 // pred_region
    _
  $region37: #{raven_forward.55} parent=0 // pred_fallthru
    _

// kernel: raven_forward.38
$region0: #{raven_forward.38}
  #allocation0 [shape = 'u32[]', space=smem, size = 0x4, offset = 0x4, fixed_abs, tag = 'smem constant byte address 0x4 - core index']
  #allocation1 [shape = 'u32[144,128]{1,0:T(1,128)}', space=vmem, size = 0x12000, scoped, tag = 'internal scratch']
  #allocation2 [shape = 'f32[16,6]{1,0:T(8,128)}', space=vmem, size = 0x2000, scoped, tag = 'scratch operand']
  %s0 = inlined_call_operand.vmem [shape: bf16[16,32], index: 0, kind: input, shape index: {}]
  %s1 = inlined_call_operand.vmem [shape: bf16[32,6], index: 1, kind: input, shape index: {}]
  %s2 = inlined_call_operand.vmem [shape: f32[1,6], index: 2, kind: input, shape index: {}]
  %s3 = inlined_call_operand.vmem [shape: f32[16,6], index: 3, kind: output, shape index: {}]
  %s4 = sld [smem:[#allocation0]]
  $region30: #{raven_forward.38} parent=0
    _
  %s6 = ssub.s32 1, %s4
  %s7 = scalar_select 0, %s6, %s4
  // Predicated region
  $region2: #{raven_forward.38} parent=0 // pred_check
    _
  $region3: #{raven_forward.38} parent=0 // pred_check_branch
    %9 = sbr.rel (0) target = $region5
  $region4: #{raven_forward.38} parent=0 // pred_region
    _
  $region5: #{raven_forward.38} parent=0 // pred_fallthru
    _
  // Predicated region
  $region6: #{raven_forward.38} parent=0 // pred_check
    _
  $region7: #{raven_forward.38} parent=0 // pred_check_branch
    %11 = sbr.rel (0) target = $region9
  $region8: #{raven_forward.38} parent=0 // pred_region
    _
  $region9: #{raven_forward.38} parent=0 // pred_fallthru
    _
  // Predicated region
  $region10: #{raven_forward.38} parent=0 // pred_check
    _
  $region11: #{raven_forward.38} parent=0 // pred_check_branch
    %13 = sbr.rel (0) target = $region13
  $region12: #{raven_forward.38} parent=0 // pred_region
    _
  $region13: #{raven_forward.38} parent=0 // pred_fallthru
    _
  %p15 = scmp.eq.s32.totalorder 0, 0
  // Predicated region
  $region14: #{raven_forward.38} parent=0 // pred_check
    %p16 = pneg %p15
  $region15: #{raven_forward.38} parent=0 // pred_check_branch
    %18 = sbr.rel (%p16) target = $region17
  $region16: #{raven_forward.38} parent=0 // pred_region
    %vm19 = vcmask 48128
    %20 = vst.msk [vmem:[#allocation2] sm:$0xff] %vm19, 0.0
    %21 = vst.msk [vmem:[#allocation2 + $0x8] sm:$0xff] %vm19, 0.0
  $region17: #{raven_forward.38} parent=0 // pred_fallthru
    _
  %v22 = vld [vmem:[%s0] sm:$0xf]
  %v23 = vld [vmem:[%s0 + $0x4] sm:$0xf]
  %v24 = vld [vmem:[#allocation2] sm:$0xff]
  %v25 = vld [vmem:[#allocation2 + $0x8] sm:$0xff]
  %v26 = vld [vmem:[%s1] sm:$0xf]
  %v27 = vld [vmem:[%s1 + $0x4] sm:$0xf]
  %v28 = vld [vmem:[%s1 + $0x8] sm:$0xf]
  %v29 = vld [vmem:[%s1 + $0xc] sm:$0xf]
  %v32 = vunpack.c.l.b16 %v22
  %v33 = vunpack.c.l.b16 %v23
  %v34 = vpack.c.b16 %v33, %v32
  %v39 = vunpack.c.l.b16 %v26
  %v40 = vunpack.c.l.b16 %v27
  %v41 = vunpack.c.l.b16 %v28
  %v42 = vunpack.c.l.b16 %v29
  %v43 = vpack.c.b16 %v40, %v39
  %v44 = vpack.c.b16 %v42, %v41
  %vm47 = vcmask 261120
  %v49 = vsel %vm47, %v34, 0
  %51 = vmatprep.subr.bf16.mxu0 0
  %52 = vmatpush1.bf16.msra.mxu0 0
  %53 = vmatprep.subr.bf16.mxu0 0
  %54 = vmatpush1.bf16.msra.mxu0 0
  %55 = vmatprep.subr.bf16.mxu0 0
  %56 = vmatpush1.bf16.msra.mxu0 0
  %57 = vmatprep.subr.bf16.mxu0 0
  %58 = vmatpush1.bf16.msra.mxu0 0
  %59 = vmatprep.subr.bf16.mxu0 0
  %60 = vmatpush1.bf16.msra.mxu0 0
  %61 = vmatprep.subr.bf16.mxu0 0
  %62 = vmatpush1.bf16.msra.mxu0 0
  %63 = vmatprep.subr.bf16.mxu0 0
  %64 = vmatpush1.bf16.msra.mxu0 %v44
  %65 = vmatprep.subr.bf16.mxu0 0
  %66 = vmatpush1.bf16.msra.mxu0 %v43
  %67 = vmatprep.subr.bf16.mxu0 0
  %68 = vmatpush2.bf16.msra.mxu0 0
  %69 = vmatprep.subr.bf16.mxu0 0
  %70 = vmatpush2.bf16.msra.mxu0 0
  %71 = vmatprep.subr.bf16.mxu0 0
  %72 = vmatpush2.bf16.msra.mxu0 0
  %73 = vmatprep.subr.bf16.mxu0 0
  %74 = vmatpush2.bf16.msra.mxu0 0
  %75 = vmatprep.subr.bf16.mxu0 0
  %76 = vmatpush2.bf16.msra.mxu0 0
  %77 = vmatprep.subr.bf16.mxu0 0
  %78 = vmatpush2.bf16.msra.mxu0 0
  %79 = vmatprep.subr.bf16.mxu0 0
  %80 = vmatpush2.bf16.msra.mxu0 0
  %81 = vmatprep.subr.bf16.mxu0 0
  %82 = vmatpush2.bf16.msra.mxu0 0
  %83 = vmatprep.mubr.bf16.mxu0 0
  %84 = vmatmul.mubr.bf16.gmra.mxu0 %v49
  %v85 = vpop.f32.mrf.mxu0
  %v86 = vadd.f32 0.0, %v85
  %v87 = vpop.f32.mrf.mxu0
  %v88 = vpop.f32.mrf.mxu0
  %v89 = vadd.f32 0.0, %v88
  %v90 = vpop.f32.mrf.mxu0
  %91 = vdwg.mxu0
  %v92 = vadd.f32 %v24, %v86
  %v93 = vadd.f32 %v25, %v89
  %vm94 = vcmask 48128
  %95 = vst.msk [vmem:[#allocation2] sm:$0xff] %vm94, %v92
  %96 = vst.msk [vmem:[#allocation2 + $0x8] sm:$0xff] %vm94, %v93
  // Predicated region
  $region18: #{raven_forward.38} parent=0 // pred_check
    %p97 = pneg %p15
  $region19: #{raven_forward.38} parent=0 // pred_check_branch
    %99 = sbr.rel (%p97) target = $region21
  $region20: #{raven_forward.38} parent=0 // pred_region
    %v100 = vld [vmem:[#allocation2] sm:$0xff]
    %v101 = vld [vmem:[#allocation2 + $0x8] sm:$0xff]
    %v102 = vld [vmem:[%s2] sm:$0x1]
    %v104 = vlaneseq
    %v105 = vshrl.u32 %v104, 7
    %v106 = vsub.s32 0, %v105
    %v107 = vrot.slane %v102, %v106
    %v109 = vadd.f32 %v100, %v107
    %v110 = vadd.f32 %v101, %v107
    %v111 = vsel %vm94, %v109, -inf
    %112 = vmax.xlane.f32.xlu0 %v111
    %v113 = vpop.xlane.xlu0 %112
    %v114 = vsel %vm94, %v110, -inf
    %115 = vmax.xlane.f32.xlu0 %v114
    %v116 = vpop.xlane.xlu0 %115
    %v117 = vsub.f32 %v109, %v113
    %v118 = vsub.f32 %v110, %v116
    %v119 = vmul.f32 %v117, 1.442695
    %v120 = vpow.pop %v119
    %v121 = vmul.f32 %v118, 1.442695
    %v122 = vpow.pop %v121
    %v123 = vsel %vm94, %v120, 0.0
    %124 = vadd.xlane.f32.xlu0 %v123
    %v125 = vpop.xlane.xlu0 %124
    %v126 = vsel %vm94, %v122, 0.0
    %127 = vadd.xlane.f32.xlu0 %v126
    %v128 = vpop.xlane.xlu0 %127
    %v129 = vlog2.pop %v125
    %v130 = vmul.f32 %v129, 0.6931472
    %v131 = vlog2.pop %v128
    %v132 = vmul.f32 %v131, 0.6931472
    %v133 = vsub.f32 %v117, %v130
    %v134 = vsub.f32 %v118, %v132
    %135 = vst.msk [vmem:[%s3] sm:$0xff] %vm94, %v133
    %136 = vst.msk [vmem:[%s3 + $0x8] sm:$0xff] %vm94, %v134
  $region21: #{raven_forward.38} parent=0 // pred_fallthru
    _
  // Predicated region
  $region22: #{raven_forward.38} parent=0 // pred_check
    _
  $region23: #{raven_forward.38} parent=0 // pred_check_branch
    %138 = sbr.rel (0) target = $region25
  $region24: #{raven_forward.38} parent=0 // pred_region
    _
  $region25: #{raven_forward.38} parent=0 // pred_fallthru
    _
  // Predicated region
  $region26: #{raven_forward.38} parent=0 // pred_check
    _
  $region27: #{raven_forward.38} parent=0 // pred_check_branch
    %140 = sbr.rel (0) target = $region29
  $region28: #{raven_forward.38} parent=0 // pred_region
    _
  $region29: #{raven_forward.38} parent=0 // pred_fallthru
    _

</llo_original>
